<compile_context>
chip_gen: v7x
topology: tpu7x:2x2x1
jax: 0.10.0
libtpu: 0.0.40
codegen_flags: <defaults>
</compile_context>

<pallas_src>
import functools
import math

import jax
import jax.numpy as jnp
from jax.experimental import pallas as pl
from jax.experimental.pallas import tpu as pltpu


# ----------------------------------------------------------------------------
# Pallas fused GEMM kernel:  out = act(A @ B * scale + shift)
#   single full-K / full-N block, grid only over M  ->  no accumulator scratch
# ----------------------------------------------------------------------------
def _mm_fused_kernel(a_ref, b_ref, s_ref, t_ref, o_ref, *, act):
    acc = jnp.dot(a_ref[...], b_ref[...], preferred_element_type=jnp.float32)
    y = acc * s_ref[...] + t_ref[...]
    if act == "relu":
        y = jnp.maximum(y, 0.0)
    elif act == "sigmoid":
        y = jax.nn.sigmoid(y)
    o_ref[...] = y.astype(o_ref.dtype)


def _round_up(x, m):
    return ((x + m - 1) // m) * m


def _epilogue(y, act):
    if act == "relu":
        return jnp.maximum(y, 0.0)
    if act == "sigmoid":
        return jax.nn.sigmoid(y)
    return y


def matmul_fused(A, B, scale, shift, act="none", out_dtype=jnp.bfloat16):
    """A: (M, K), B: (K, N) weights; scale/shift: (N,) f32.
    Returns act((A @ B) * scale + shift) with f32 accumulation, cast to out_dtype."""
    M, K = A.shape
    N = B.shape[1]
    A = A.astype(jnp.bfloat16)
    B = B.astype(jnp.bfloat16)
    s = scale.reshape(1, N).astype(jnp.float32)
    t = shift.reshape(1, N).astype(jnp.float32)

    # Size threshold: tiny row counts (2x2 / 4x4 maps) and the final Cout=3 layer are
    # better served by a fused XLA dot than a padded Pallas launch.
    if M < 128 or N < 8:
        y = jnp.dot(A, B, preferred_element_type=jnp.float32) * s + t
        return _epilogue(y, act).astype(out_dtype)

    tm = M if M <= 1024 else 512
    Mp = _round_up(M, tm)
    if Mp != M:
        # Only triggers for im2col-produced A (the pad fuses with that gather);
        # 1x1-conv GEMMs always have M a power of two.
        A = jnp.pad(A, ((0, Mp - M), (0, 0)))

    out = pl.pallas_call(
        functools.partial(_mm_fused_kernel, act=act),
        out_shape=jax.ShapeDtypeStruct((Mp, N), out_dtype),
        grid_spec=pltpu.PrefetchScalarGridSpec(
            num_scalar_prefetch=0,
            grid=(Mp // tm,),
            in_specs=[
                pl.BlockSpec((tm, K), lambda i: (i, 0)),   # A row tile
                pl.BlockSpec((K, N), lambda i: (0, 0)),    # full B, stays resident
                pl.BlockSpec((1, N), lambda i: (0, 0)),    # per-channel scale
                pl.BlockSpec((1, N), lambda i: (0, 0)),    # per-channel shift
            ],
            out_specs=pl.BlockSpec((tm, N), lambda i: (i, 0)),
        ),
        compiler_params=pltpu.CompilerParams(
            dimension_semantics=("parallel",)),
    )(A, B, s, t)
    return out[:M] if Mp != M else out


# ----------------------------------------------------------------------------
# Convolution wrappers (NHWC)
# ----------------------------------------------------------------------------
def conv1x1(x, Wmat, scale, shift, act, out_dtype=jnp.bfloat16):
    """1x1 conv == plain GEMM, no im2col.  Wmat: (Cin, Cout)."""
    N, H, W, _ = x.shape
    out = matmul_fused(x.reshape(N * H * W, -1), Wmat, scale, shift, act, out_dtype)
    return out.reshape(N, H, W, -1)


def conv2d_im2col(x, Wmat, scale, shift, *, kh, kw, padding=0, act="none",
                  out_dtype=jnp.bfloat16):
    """Stride-1 kxk conv via (small) im2col + fused GEMM.  Wmat: (kh*kw*Cin, Cout),
    K ordered tap-major (i, j) with Cin minor."""
    if padding:
        x = jnp.pad(x, ((0, 0), (padding, padding), (padding, padding), (0, 0)))
    N, Hp, Wp, Cin = x.shape
    Ho, Wo = Hp - kh + 1, Wp - kw + 1
    cols = [x[:, i:i + Ho, j:j + Wo, :] for i in range(kh) for j in range(kw)]
    A = jnp.concatenate(cols, axis=-1).reshape(N * Ho * Wo, kh * kw * Cin)
    out = matmul_fused(A, Wmat, scale, shift, act, out_dtype)
    return out.reshape(N, Ho, Wo, -1)


def tconv3x3_s2(x, Wphase, scale4, shift4, *, padding, act, out_dtype=jnp.bfloat16):
    """Sub-pixel (output-phase) 3x3 / stride-2 transposed conv.

    One 2x2 stride-1 conv computes all 4 output parity phases (4*Cout channels) in a
    single GEMM, then a depth-to-space interleave assembles the upsampled output.
    Supports the two configurations used by the model:
      padding=1, output_padding=1  ->  (2H, 2W)
      padding=0, output_padding=0  ->  (2H+1, 2W+1)
    """
    N, H, W, _ = x.shape
    Cout = Wphase.shape[1] // 4
    if padding == 1:
        xp = jnp.pad(x, ((0, 0), (0, 1), (0, 1), (0, 0)))
        crop_h, crop_w = 2 * H, 2 * W
    else:
        xp = jnp.pad(x, ((0, 0), (1, 1), (1, 1), (0, 0)))
        crop_h, crop_w = 2 * H + 1, 2 * W + 1
    y = conv2d_im2col(xp, Wphase, scale4, shift4, kh=2, kw=2, act=act,
                      out_dtype=out_dtype)
    _, Ho, Wo, _ = y.shape
    y = y.reshape(N, Ho, Wo, 2, 2, Cout)
    y = jnp.transpose(y, (0, 1, 3, 2, 4, 5)).reshape(N, 2 * Ho, 2 * Wo, Cout)
    return y[:, :crop_h, :crop_w, :]


# ----------------------------------------------------------------------------
# Weight preparation (done once at init, constant under jit)
# ----------------------------------------------------------------------------
def _tconv3x3_phase_weight(w, padding):
    """w: (Cin, Cout, 3, 3) PyTorch ConvTranspose2d weight ->
    (4*Cin, 4*Cout) GEMM matrix of the equivalent 2x2 stride-1 'phase' conv.
    K rows ordered (tap_di, tap_dj, Cin); N cols ordered (phase_a, phase_b, Cout)."""
    Cin, Cout = w.shape[0], w.shape[1]
    base = 1 if padding == 1 else 2
    Wt = jnp.zeros((2, 2, Cin, 2, 2, Cout), jnp.float32)
    for di in range(2):
        for dj in range(2):
            for a in range(2):
                for b in range(2):
                    dy = a + base - 2 * di
                    dx = b + base - 2 * dj
                    if 0 <= dy <= 2 and 0 <= dx <= 2:
                        Wt = Wt.at[di, dj, :, a, b, :].set(w[:, :, dy, dx])
    return Wt.reshape(4 * Cin, 4 * Cout)


def _conv1x1_weight(w):      # w: (Cout, Cin, 1, 1) -> (Cin, Cout)
    return jnp.transpose(w[:, :, 0, 0])


def _convkxk_weight(w):      # w: (Cout, Cin, kh, kw) -> (kh*kw*Cin, Cout)
    Cout, Cin, kh, kw = w.shape
    return jnp.transpose(w, (2, 3, 1, 0)).reshape(kh * kw * Cin, Cout)


# ----------------------------------------------------------------------------
# Deterministic parameter initialization + BatchNorm folding
# ----------------------------------------------------------------------------
_BN_EPS = 1e-5


def _init_conv(key, cout, cin, kh, kw, transpose=False):
    k1, k2 = jax.random.split(key)
    fan_in = cin * kh * kw
    bound = 1.0 / math.sqrt(fan_in)
    shape = (cin, cout, kh, kw) if transpose else (cout, cin, kh, kw)
    w = jax.random.uniform(k1, shape, jnp.float32, -bound, bound)
    b = jax.random.uniform(k2, (cout,), jnp.float32, -bound, bound)
    return w, b


def _init_bn(key, c):
    k1, k2, k3, k4 = jax.random.split(key, 4)
    gamma = jax.random.uniform(k1, (c,), jnp.float32, 0.5, 1.5)
    beta = jax.random.uniform(k2, (c,), jnp.float32, -0.1, 0.1)
    mean = jax.random.uniform(k3, (c,), jnp.float32, -0.1, 0.1)
    var = jax.random.uniform(k4, (c,), jnp.float32, 0.5, 1.5)
    return gamma, beta, mean, var


def _fold_bn(conv_bias, gamma, beta, mean, var):
    s = gamma * jax.lax.rsqrt(var + _BN_EPS)
    return s, beta + s * (conv_bias - mean)


def init_deconv_block(key, cin, cout):
    mid = cin // 4
    ks = jax.random.split(key, 6)
    w1, b1 = _init_conv(ks[0], mid, cin, 1, 1)
    s1, eb1 = _fold_bn(b1, *_init_bn(ks[1], mid))
    wt, bt = _init_conv(ks[2], mid, mid, 3, 3, transpose=True)
    st, ebt = _fold_bn(bt, *_init_bn(ks[3], mid))
    w2, b2 = _init_conv(ks[4], cout, mid, 1, 1)
    s2, eb2 = _fold_bn(b2, *_init_bn(ks[5], cout))
    return dict(
        w1=_conv1x1_weight(w1).astype(jnp.bfloat16), s1=s1, b1=eb1,
        wt=_tconv3x3_phase_weight(wt, padding=1).astype(jnp.bfloat16),
        st=jnp.tile(st, 4), bt=jnp.tile(ebt, 4),
        w2=_conv1x1_weight(w2).astype(jnp.bfloat16), s2=s2, b2=eb2,
    )


def segmentation_init(key):
    ks = jax.random.split(key, 7)
    p = {
        "db5": init_deconv_block(ks[0], 256, 128),
        "db4": init_deconv_block(ks[1], 128, 128),
        "db3": init_deconv_block(ks[2], 128, 64),
        "db2": init_deconv_block(ks[3], 64, 64),
    }
    wt, bt = _init_conv(ks[4], 32, 64, 3, 3, transpose=True)
    p["tconv"] = dict(w=_tconv3x3_phase_weight(wt, padding=0).astype(jnp.bfloat16),
                      s=jnp.tile(jnp.ones((32,), jnp.float32), 4),
                      b=jnp.tile(bt, 4))
    w1, b1 = _init_conv(ks[5], 32, 32, 3, 3)
    p["conv1"] = dict(w=_convkxk_weight(w1).astype(jnp.bfloat16),
                      s=jnp.ones((32,), jnp.float32), b=b1)
    w2, b2 = _init_conv(ks[6], 3, 32, 2, 2)
    p["conv2"] = dict(w=_convkxk_weight(w2).astype(jnp.bfloat16),
                      s=jnp.ones((3,), jnp.float32), b=b2)
    return p


# ----------------------------------------------------------------------------
# Forward pass
# ----------------------------------------------------------------------------
def deconv_block_fwd(x, p):
    x = conv1x1(x, p["w1"], p["s1"], p["b1"], act="relu")                 # conv1+bn1+relu
    x = tconv3x3_s2(x, p["wt"], p["st"], p["bt"], padding=1, act="relu")  # tconv+bn+relu
    x = conv1x1(x, p["w2"], p["s2"], p["b2"], act="relu")                 # conv2+bn2+relu
    return x


def segmentation_forward(params, out_block2, out_block3, out_block4, out_block5):
    to_nhwc = lambda t: jnp.transpose(t, (0, 2, 3, 1)).astype(jnp.bfloat16)
    b2, b3, b4, b5 = map(to_nhwc, (out_block2, out_block3, out_block4, out_block5))

    x = deconv_block_fwd(b5, params["db5"])
    x = x + b4
    x = deconv_block_fwd(x, params["db4"])
    x = x + b3
    x = deconv_block_fwd(x, params["db3"])
    x = x + b2
    x = deconv_block_fwd(x, params["db2"])

    t = params["tconv"]
    x = tconv3x3_s2(x, t["w"], t["s"], t["b"], padding=0, act="relu")
    c1 = params["conv1"]
    x = conv2d_im2col(x, c1["w"], c1["s"], c1["b"], kh=3, kw=3, act="relu")
    c2 = params["conv2"]
    x = conv2d_im2col(x, c2["w"], c2["s"], c2["b"], kh=2, kw=2, padding=1,
                      act="sigmoid", out_dtype=jnp.float32)

    return jnp.transpose(x, (0, 3, 1, 2))  # back to NCHW, f32


# ----------------------------------------------------------------------------
if __name__ == "__main__":
    key = jax.random.PRNGKey(0)
    k5, k4, k3, k2 = jax.random.split(key, 4)
    # small shapes consistent with the module's channel counts & 2x upsampling chain
    out_block5 = jax.random.normal(k5, (2, 256, 2, 2), jnp.float32)
    out_block4 = jax.random.normal(k4, (2, 128, 4, 4), jnp.float32)
    out_block3 = jax.random.normal(k3, (2, 128, 8, 8), jnp.float32)
    out_block2 = jax.random.normal(k2, (2, 64, 16, 16), jnp.float32)

    params = segmentation_init(jax.random.PRNGKey(42))

    fwd = jax.jit(segmentation_forward)
    out = jax.block_until_ready(fwd(params, out_block2, out_block3, out_block4, out_block5))

    assert out.shape == (2, 3, 64, 64), out.shape
    assert out.dtype == jnp.float32
    assert bool(jnp.all(jnp.isfinite(out)))
    assert bool(jnp.all((out >= 0.0) & (out <= 1.0)))  # sigmoid output range
    print("KERNEL_OK")
</pallas_src>

<mosaic_0001>
module attributes {stable_mosaic.version = 11 : i64} {
  func.func @_mm_fused_kernel(%arg0: i32, %arg1: memref<128x32xbf16, #tpu.memory_space<vmem>>, %arg2: memref<32x128xbf16, #tpu.memory_space<vmem>>, %arg3: memref<1x128xf32, #tpu.memory_space<vmem>>, %arg4: memref<1x128xf32, #tpu.memory_space<vmem>>, %arg5: memref<128x128xbf16, #tpu.memory_space<vmem>>) attributes {dimension_semantics = [#tpu.dimension_semantics<parallel>], iteration_bounds = array<i64: 1>, scalar_prefetch = 0 : i64, scratch_operands = 0 : i64, tpu.core_type = #tpu.core_type<tc>, window_params = [{transform_indices = @transform_0, window_bounds = array<i64: 128, 32>}, {pipeline_mode = #tpu.pipeline_mode<synchronous>, transform_indices = @transform_1, window_bounds = array<i64: 32, 128>}, {pipeline_mode = #tpu.pipeline_mode<synchronous>, transform_indices = @transform_2, window_bounds = array<i64: 1, 128>}, {pipeline_mode = #tpu.pipeline_mode<synchronous>, transform_indices = @transform_3, window_bounds = array<i64: 1, 128>}, {transform_indices = @transform_4, window_bounds = array<i64: 128, 128>}]} {
    %c0 = arith.constant 0 : index
    %c0_0 = arith.constant 0 : index
    %0 = vector.load %arg1[%c0, %c0_0] : memref<128x32xbf16, #tpu.memory_space<vmem>>, vector<128x32xbf16>
    %c0_1 = arith.constant 0 : index
    %c0_2 = arith.constant 0 : index
    %1 = vector.load %arg2[%c0_1, %c0_2] : memref<32x128xbf16, #tpu.memory_space<vmem>>, vector<32x128xbf16>
    %cst = arith.constant dense<0.000000e+00> : vector<128x128xf32>
    %2 = tpu.matmul %0, %1, %cst {dimension_numbers = #tpu.dot_dimension_numbers<[1], [0], [0], [1], [0, 0, 1, 1], [], []>} : vector<128x32xbf16>, vector<32x128xbf16>, vector<128x128xf32> -> vector<128x128xf32>
    %c0_3 = arith.constant 0 : index
    %c0_4 = arith.constant 0 : index
    %3 = vector.load %arg3[%c0_3, %c0_4] : memref<1x128xf32, #tpu.memory_space<vmem>>, vector<1x128xf32>
    %4 = vector.broadcast %3 : vector<1x128xf32> to vector<128x128xf32>
    %5 = arith.mulf %2, %4 : vector<128x128xf32>
    %c0_5 = arith.constant 0 : index
    %c0_6 = arith.constant 0 : index
    %6 = vector.load %arg4[%c0_5, %c0_6] : memref<1x128xf32, #tpu.memory_space<vmem>>, vector<1x128xf32>
    %7 = vector.broadcast %6 : vector<1x128xf32> to vector<128x128xf32>
    %8 = arith.addf %5, %7 : vector<128x128xf32>
    %cst_7 = arith.constant 0.000000e+00 : f32
    %9 = vector.broadcast %cst_7 : f32 to vector<128x128xf32>
    %10 = arith.maximumf %8, %9 : vector<128x128xf32>
    %11 = arith.truncf %10 : vector<128x128xf32> to vector<128x128xbf16>
    %c0_8 = arith.constant 0 : index
    %c0_9 = arith.constant 0 : index
    %12 = vector.load %arg5[%c0_8, %c0_9] : memref<128x128xbf16, #tpu.memory_space<vmem>>, vector<128x128xbf16>
    tpu.vector_store %arg5[%c0_8, %c0_9], %11 {strides = array<i32>} : memref<128x128xbf16, #tpu.memory_space<vmem>>, vector<128x128xbf16>,
    return
  }
  func.func @transform_0(%arg0: i32) -> (i32, i32) {
    %c0_i32 = arith.constant 0 : i32
    %c0_i32_0 = arith.constant 0 : i32
    return %arg0, %c0_i32 : i32, i32
  }
  func.func @transform_1(%arg0: i32) -> (i32, i32) {
    %c0_i32 = arith.constant 0 : i32
    %c0_i32_0 = arith.constant 0 : i32
    %c0_i32_1 = arith.constant 0 : i32
    return %c0_i32, %c0_i32_0 : i32, i32
  }
  func.func @transform_2(%arg0: i32) -> (i32, i32) {
    %c0_i32 = arith.constant 0 : i32
    %c0_i32_0 = arith.constant 0 : i32
    %c0_i32_1 = arith.constant 0 : i32
    return %c0_i32, %c0_i32_0 : i32, i32
  }
  func.func @transform_3(%arg0: i32) -> (i32, i32) {
    %c0_i32 = arith.constant 0 : i32
    %c0_i32_0 = arith.constant 0 : i32
    %c0_i32_1 = arith.constant 0 : i32
    return %c0_i32, %c0_i32_0 : i32, i32
  }
  func.func @transform_4(%arg0: i32) -> (i32, i32) {
    %c0_i32 = arith.constant 0 : i32
    %c0_i32_0 = arith.constant 0 : i32
    return %arg0, %c0_i32 : i32, i32
  }
}

module attributes {stable_mosaic.version = 11 : i64} {
  func.func @_mm_fused_kernel(%arg0: i32, %arg1: memref<128x128xbf16, #tpu.memory_space<vmem>>, %arg2: memref<128x32xbf16, #tpu.memory_space<vmem>>, %arg3: memref<1x32xf32, #tpu.memory_space<vmem>>, %arg4: memref<1x32xf32, #tpu.memory_space<vmem>>, %arg5: memref<128x32xbf16, #tpu.memory_space<vmem>>) attributes {dimension_semantics = [#tpu.dimension_semantics<parallel>], iteration_bounds = array<i64: 1>, scalar_prefetch = 0 : i64, scratch_operands = 0 : i64, tpu.core_type = #tpu.core_type<tc>, window_params = [{transform_indices = @transform_0, window_bounds = array<i64: 128, 128>}, {pipeline_mode = #tpu.pipeline_mode<synchronous>, transform_indices = @transform_1, window_bounds = array<i64: 128, 32>}, {pipeline_mode = #tpu.pipeline_mode<synchronous>, transform_indices = @transform_2, window_bounds = array<i64: 1, 32>}, {pipeline_mode = #tpu.pipeline_mode<synchronous>, transform_indices = @transform_3, window_bounds = array<i64: 1, 32>}, {transform_indices = @transform_4, window_bounds = array<i64: 128, 32>}]} {
    %c0 = arith.constant 0 : index
    %c0_0 = arith.constant 0 : index
    %0 = vector.load %arg1[%c0, %c0_0] : memref<128x128xbf16, #tpu.memory_space<vmem>>, vector<128x128xbf16>
    %c0_1 = arith.constant 0 : index
    %c0_2 = arith.constant 0 : index
    %1 = vector.load %arg2[%c0_1, %c0_2] : memref<128x32xbf16, #tpu.memory_space<vmem>>, vector<128x32xbf16>
    %cst = arith.constant dense<0.000000e+00> : vector<128x32xf32>
    %2 = tpu.matmul %0, %1, %cst {dimension_numbers = #tpu.dot_dimension_numbers<[1], [0], [0], [1], [0, 0, 1, 1], [], []>} : vector<128x128xbf16>, vector<128x32xbf16>, vector<128x32xf32> -> vector<128x32xf32>
    %c0_3 = arith.constant 0 : index
    %c0_4 = arith.constant 0 : index
    %3 = vector.load %arg3[%c0_3, %c0_4] : memref<1x32xf32, #tpu.memory_space<vmem>>, vector<1x32xf32>
    %4 = vector.broadcast %3 : vector<1x32xf32> to vector<128x32xf32>
    %5 = arith.mulf %2, %4 : vector<128x32xf32>
    %c0_5 = arith.constant 0 : index
    %c0_6 = arith.constant 0 : index
    %6 = vector.load %arg4[%c0_5, %c0_6] : memref<1x32xf32, #tpu.memory_space<vmem>>, vector<1x32xf32>
    %7 = vector.broadcast %6 : vector<1x32xf32> to vector<128x32xf32>
    %8 = arith.addf %5, %7 : vector<128x32xf32>
    %cst_7 = arith.constant 0.000000e+00 : f32
    %9 = vector.broadcast %cst_7 : f32 to vector<128x32xf32>
    %10 = arith.maximumf %8, %9 : vector<128x32xf32>
    %11 = arith.truncf %10 : vector<128x32xf32> to vector<128x32xbf16>
    %c0_8 = arith.constant 0 : index
    %c0_9 = arith.constant 0 : index
    %12 = vector.load %arg5[%c0_8, %c0_9] : memref<128x32xbf16, #tpu.memory_space<vmem>>, vector<128x32xbf16>
    tpu.vector_store %arg5[%c0_8, %c0_9], %11 {strides = array<i32>} : memref<128x32xbf16, #tpu.memory_space<vmem>>, vector<128x32xbf16>,
    return
  }
  func.func @transform_0(%arg0: i32) -> (i32, i32) {
    %c0_i32 = arith.constant 0 : i32
    %c0_i32_0 = arith.constant 0 : i32
    return %arg0, %c0_i32 : i32, i32
  }
  func.func @transform_1(%arg0: i32) -> (i32, i32) {
    %c0_i32 = arith.constant 0 : i32
    %c0_i32_0 = arith.constant 0 : i32
    %c0_i32_1 = arith.constant 0 : i32
    return %c0_i32, %c0_i32_0 : i32, i32
  }
  func.func @transform_2(%arg0: i32) -> (i32, i32) {
    %c0_i32 = arith.constant 0 : i32
    %c0_i32_0 = arith.constant 0 : i32
    %c0_i32_1 = arith.constant 0 : i32
    return %c0_i32, %c0_i32_0 : i32, i32
  }
  func.func @transform_3(%arg0: i32) -> (i32, i32) {
    %c0_i32 = arith.constant 0 : i32
    %c0_i32_0 = arith.constant 0 : i32
    %c0_i32_1 = arith.constant 0 : i32
    return %c0_i32, %c0_i32_0 : i32, i32
  }
  func.func @transform_4(%arg0: i32) -> (i32, i32) {
    %c0_i32 = arith.constant 0 : i32
    %c0_i32_0 = arith.constant 0 : i32
    return %arg0, %c0_i32 : i32, i32
  }
}

module attributes {stable_mosaic.version = 11 : i64} {
  func.func @_mm_fused_kernel(%arg0: i32, %arg1: memref<128x128xbf16, #tpu.memory_space<vmem>>, %arg2: memref<128x128xbf16, #tpu.memory_space<vmem>>, %arg3: memref<1x128xf32, #tpu.memory_space<vmem>>, %arg4: memref<1x128xf32, #tpu.memory_space<vmem>>, %arg5: memref<128x128xbf16, #tpu.memory_space<vmem>>) attributes {dimension_semantics = [#tpu.dimension_semantics<parallel>], iteration_bounds = array<i64: 1>, scalar_prefetch = 0 : i64, scratch_operands = 0 : i64, tpu.core_type = #tpu.core_type<tc>, window_params = [{transform_indices = @transform_0, window_bounds = array<i64: 128, 128>}, {pipeline_mode = #tpu.pipeline_mode<synchronous>, transform_indices = @transform_1, window_bounds = array<i64: 128, 128>}, {pipeline_mode = #tpu.pipeline_mode<synchronous>, transform_indices = @transform_2, window_bounds = array<i64: 1, 128>}, {pipeline_mode = #tpu.pipeline_mode<synchronous>, transform_indices = @transform_3, window_bounds = array<i64: 1, 128>}, {transform_indices = @transform_4, window_bounds = array<i64: 128, 128>}]} {
    %c0 = arith.constant 0 : index
    %c0_0 = arith.constant 0 : index
    %0 = vector.load %arg1[%c0, %c0_0] : memref<128x128xbf16, #tpu.memory_space<vmem>>, vector<128x128xbf16>
    %c0_1 = arith.constant 0 : index
    %c0_2 = arith.constant 0 : index
    %1 = vector.load %arg2[%c0_1, %c0_2] : memref<128x128xbf16, #tpu.memory_space<vmem>>, vector<128x128xbf16>
    %cst = arith.constant dense<0.000000e+00> : vector<128x128xf32>
    %2 = tpu.matmul %0, %1, %cst {dimension_numbers = #tpu.dot_dimension_numbers<[1], [0], [0], [1], [0, 0, 1, 1], [], []>} : vector<128x128xbf16>, vector<128x128xbf16>, vector<128x128xf32> -> vector<128x128xf32>
    %c0_3 = arith.constant 0 : index
    %c0_4 = arith.constant 0 : index
    %3 = vector.load %arg3[%c0_3, %c0_4] : memref<1x128xf32, #tpu.memory_space<vmem>>, vector<1x128xf32>
    %4 = vector.broadcast %3 : vector<1x128xf32> to vector<128x128xf32>
    %5 = arith.mulf %2, %4 : vector<128x128xf32>
    %c0_5 = arith.constant 0 : index
    %c0_6 = arith.constant 0 : index
    %6 = vector.load %arg4[%c0_5, %c0_6] : memref<1x128xf32, #tpu.memory_space<vmem>>, vector<1x128xf32>
    %7 = vector.broadcast %6 : vector<1x128xf32> to vector<128x128xf32>
    %8 = arith.addf %5, %7 : vector<128x128xf32>
    %cst_7 = arith.constant 0.000000e+00 : f32
    %9 = vector.broadcast %cst_7 : f32 to vector<128x128xf32>
    %10 = arith.maximumf %8, %9 : vector<128x128xf32>
    %11 = arith.truncf %10 : vector<128x128xf32> to vector<128x128xbf16>
    %c0_8 = arith.constant 0 : index
    %c0_9 = arith.constant 0 : index
    %12 = vector.load %arg5[%c0_8, %c0_9] : memref<128x128xbf16, #tpu.memory_space<vmem>>, vector<128x128xbf16>
    tpu.vector_store %arg5[%c0_8, %c0_9], %11 {strides = array<i32>} : memref<128x128xbf16, #tpu.memory_space<vmem>>, vector<128x128xbf16>,
    return
  }
  func.func @transform_0(%arg0: i32) -> (i32, i32) {
    %c0_i32 = arith.constant 0 : i32
    %c0_i32_0 = arith.constant 0 : i32
    return %arg0, %c0_i32 : i32, i32
  }
  func.func @transform_1(%arg0: i32) -> (i32, i32) {
    %c0_i32 = arith.constant 0 : i32
    %c0_i32_0 = arith.constant 0 : i32
    %c0_i32_1 = arith.constant 0 : i32
    return %c0_i32, %c0_i32_0 : i32, i32
  }
  func.func @transform_2(%arg0: i32) -> (i32, i32) {
    %c0_i32 = arith.constant 0 : i32
    %c0_i32_0 = arith.constant 0 : i32
    %c0_i32_1 = arith.constant 0 : i32
    return %c0_i32, %c0_i32_0 : i32, i32
  }
  func.func @transform_3(%arg0: i32) -> (i32, i32) {
    %c0_i32 = arith.constant 0 : i32
    %c0_i32_0 = arith.constant 0 : i32
    %c0_i32_1 = arith.constant 0 : i32
    return %c0_i32, %c0_i32_0 : i32, i32
  }
  func.func @transform_4(%arg0: i32) -> (i32, i32) {
    %c0_i32 = arith.constant 0 : i32
    %c0_i32_0 = arith.constant 0 : i32
    return %arg0, %c0_i32 : i32, i32
  }
}

module attributes {stable_mosaic.version = 11 : i64} {
  func.func @_mm_fused_kernel(%arg0: i32, %arg1: memref<512x32xbf16, #tpu.memory_space<vmem>>, %arg2: memref<32x64xbf16, #tpu.memory_space<vmem>>, %arg3: memref<1x64xf32, #tpu.memory_space<vmem>>, %arg4: memref<1x64xf32, #tpu.memory_space<vmem>>, %arg5: memref<512x64xbf16, #tpu.memory_space<vmem>>) attributes {dimension_semantics = [#tpu.dimension_semantics<parallel>], iteration_bounds = array<i64: 1>, scalar_prefetch = 0 : i64, scratch_operands = 0 : i64, tpu.core_type = #tpu.core_type<tc>, window_params = [{transform_indices = @transform_0, window_bounds = array<i64: 512, 32>}, {pipeline_mode = #tpu.pipeline_mode<synchronous>, transform_indices = @transform_1, window_bounds = array<i64: 32, 64>}, {pipeline_mode = #tpu.pipeline_mode<synchronous>, transform_indices = @transform_2, window_bounds = array<i64: 1, 64>}, {pipeline_mode = #tpu.pipeline_mode<synchronous>, transform_indices = @transform_3, window_bounds = array<i64: 1, 64>}, {transform_indices = @transform_4, window_bounds = array<i64: 512, 64>}]} {
    %c0 = arith.constant 0 : index
    %c0_0 = arith.constant 0 : index
    %0 = vector.load %arg1[%c0, %c0_0] : memref<512x32xbf16, #tpu.memory_space<vmem>>, vector<512x32xbf16>
    %c0_1 = arith.constant 0 : index
    %c0_2 = arith.constant 0 : index
    %1 = vector.load %arg2[%c0_1, %c0_2] : memref<32x64xbf16, #tpu.memory_space<vmem>>, vector<32x64xbf16>
    %cst = arith.constant dense<0.000000e+00> : vector<512x64xf32>
    %2 = tpu.matmul %0, %1, %cst {dimension_numbers = #tpu.dot_dimension_numbers<[1], [0], [0], [1], [0, 0, 1, 1], [], []>} : vector<512x32xbf16>, vector<32x64xbf16>, vector<512x64xf32> -> vector<512x64xf32>
    %c0_3 = arith.constant 0 : index
    %c0_4 = arith.constant 0 : index
    %3 = vector.load %arg3[%c0_3, %c0_4] : memref<1x64xf32, #tpu.memory_space<vmem>>, vector<1x64xf32>
    %4 = vector.broadcast %3 : vector<1x64xf32> to vector<512x64xf32>
    %5 = arith.mulf %2, %4 : vector<512x64xf32>
    %c0_5 = arith.constant 0 : index
    %c0_6 = arith.constant 0 : index
    %6 = vector.load %arg4[%c0_5, %c0_6] : memref<1x64xf32, #tpu.memory_space<vmem>>, vector<1x64xf32>
    %7 = vector.broadcast %6 : vector<1x64xf32> to vector<512x64xf32>
    %8 = arith.addf %5, %7 : vector<512x64xf32>
    %cst_7 = arith.constant 0.000000e+00 : f32
    %9 = vector.broadcast %cst_7 : f32 to vector<512x64xf32>
    %10 = arith.maximumf %8, %9 : vector<512x64xf32>
    %11 = arith.truncf %10 : vector<512x64xf32> to vector<512x64xbf16>
    %c0_8 = arith.constant 0 : index
    %c0_9 = arith.constant 0 : index
    %12 = vector.load %arg5[%c0_8, %c0_9] : memref<512x64xbf16, #tpu.memory_space<vmem>>, vector<512x64xbf16>
    tpu.vector_store %arg5[%c0_8, %c0_9], %11 {strides = array<i32>} : memref<512x64xbf16, #tpu.memory_space<vmem>>, vector<512x64xbf16>,
    return
  }
  func.func @transform_0(%arg0: i32) -> (i32, i32) {
    %c0_i32 = arith.constant 0 : i32
    %c0_i32_0 = arith.constant 0 : i32
    return %arg0, %c0_i32 : i32, i32
  }
  func.func @transform_1(%arg0: i32) -> (i32, i32) {
    %c0_i32 = arith.constant 0 : i32
    %c0_i32_0 = arith.constant 0 : i32
    %c0_i32_1 = arith.constant 0 : i32
    return %c0_i32, %c0_i32_0 : i32, i32
  }
  func.func @transform_2(%arg0: i32) -> (i32, i32) {
    %c0_i32 = arith.constant 0 : i32
    %c0_i32_0 = arith.constant 0 : i32
    %c0_i32_1 = arith.constant 0 : i32
    return %c0_i32, %c0_i32_0 : i32, i32
  }
  func.func @transform_3(%arg0: i32) -> (i32, i32) {
    %c0_i32 = arith.constant 0 : i32
    %c0_i32_0 = arith.constant 0 : i32
    %c0_i32_1 = arith.constant 0 : i32
    return %c0_i32, %c0_i32_0 : i32, i32
  }
  func.func @transform_4(%arg0: i32) -> (i32, i32) {
    %c0_i32 = arith.constant 0 : i32
    %c0_i32_0 = arith.constant 0 : i32
    return %arg0, %c0_i32 : i32, i32
  }
}

module attributes {stable_mosaic.version = 11 : i64} {
  func.func @_mm_fused_kernel(%arg0: i32, %arg1: memref<512x64xbf16, #tpu.memory_space<vmem>>, %arg2: memref<64x16xbf16, #tpu.memory_space<vmem>>, %arg3: memref<1x16xf32, #tpu.memory_space<vmem>>, %arg4: memref<1x16xf32, #tpu.memory_space<vmem>>, %arg5: memref<512x16xbf16, #tpu.memory_space<vmem>>) attributes {dimension_semantics = [#tpu.dimension_semantics<parallel>], iteration_bounds = array<i64: 1>, scalar_prefetch = 0 : i64, scratch_operands = 0 : i64, tpu.core_type = #tpu.core_type<tc>, window_params = [{transform_indices = @transform_0, window_bounds = array<i64: 512, 64>}, {pipeline_mode = #tpu.pipeline_mode<synchronous>, transform_indices = @transform_1, window_bounds = array<i64: 64, 16>}, {pipeline_mode = #tpu.pipeline_mode<synchronous>, transform_indices = @transform_2, window_bounds = array<i64: 1, 16>}, {pipeline_mode = #tpu.pipeline_mode<synchronous>, transform_indices = @transform_3, window_bounds = array<i64: 1, 16>}, {transform_indices = @transform_4, window_bounds = array<i64: 512, 16>}]} {
    %c0 = arith.constant 0 : index
    %c0_0 = arith.constant 0 : index
    %0 = vector.load %arg1[%c0, %c0_0] : memref<512x64xbf16, #tpu.memory_space<vmem>>, vector<512x64xbf16>
    %c0_1 = arith.constant 0 : index
    %c0_2 = arith.constant 0 : index
    %1 = vector.load %arg2[%c0_1, %c0_2] : memref<64x16xbf16, #tpu.memory_space<vmem>>, vector<64x16xbf16>
    %cst = arith.constant dense<0.000000e+00> : vector<512x16xf32>
    %2 = tpu.matmul %0, %1, %cst {dimension_numbers = #tpu.dot_dimension_numbers<[1], [0], [0], [1], [0, 0, 1, 1], [], []>} : vector<512x64xbf16>, vector<64x16xbf16>, vector<512x16xf32> -> vector<512x16xf32>
    %c0_3 = arith.constant 0 : index
    %c0_4 = arith.constant 0 : index
    %3 = vector.load %arg3[%c0_3, %c0_4] : memref<1x16xf32, #tpu.memory_space<vmem>>, vector<1x16xf32>
    %4 = vector.broadcast %3 : vector<1x16xf32> to vector<512x16xf32>
    %5 = arith.mulf %2, %4 : vector<512x16xf32>
    %c0_5 = arith.constant 0 : index
    %c0_6 = arith.constant 0 : index
    %6 = vector.load %arg4[%c0_5, %c0_6] : memref<1x16xf32, #tpu.memory_space<vmem>>, vector<1x16xf32>
    %7 = vector.broadcast %6 : vector<1x16xf32> to vector<512x16xf32>
    %8 = arith.addf %5, %7 : vector<512x16xf32>
    %cst_7 = arith.constant 0.000000e+00 : f32
    %9 = vector.broadcast %cst_7 : f32 to vector<512x16xf32>
    %10 = arith.maximumf %8, %9 : vector<512x16xf32>
    %11 = arith.truncf %10 : vector<512x16xf32> to vector<512x16xbf16>
    %c0_8 = arith.constant 0 : index
    %c0_9 = arith.constant 0 : index
    %12 = vector.load %arg5[%c0_8, %c0_9] : memref<512x16xbf16, #tpu.memory_space<vmem>>, vector<512x16xbf16>
    tpu.vector_store %arg5[%c0_8, %c0_9], %11 {strides = array<i32>} : memref<512x16xbf16, #tpu.memory_space<vmem>>, vector<512x16xbf16>,
    return
  }
  func.func @transform_0(%arg0: i32) -> (i32, i32) {
    %c0_i32 = arith.constant 0 : i32
    %c0_i32_0 = arith.constant 0 : i32
    return %arg0, %c0_i32 : i32, i32
  }
  func.func @transform_1(%arg0: i32) -> (i32, i32) {
    %c0_i32 = arith.constant 0 : i32
    %c0_i32_0 = arith.constant 0 : i32
    %c0_i32_1 = arith.constant 0 : i32
    return %c0_i32, %c0_i32_0 : i32, i32
  }
  func.func @transform_2(%arg0: i32) -> (i32, i32) {
    %c0_i32 = arith.constant 0 : i32
    %c0_i32_0 = arith.constant 0 : i32
    %c0_i32_1 = arith.constant 0 : i32
    return %c0_i32, %c0_i32_0 : i32, i32
  }
  func.func @transform_3(%arg0: i32) -> (i32, i32) {
    %c0_i32 = arith.constant 0 : i32
    %c0_i32_0 = arith.constant 0 : i32
    %c0_i32_1 = arith.constant 0 : i32
    return %c0_i32, %c0_i32_0 : i32, i32
  }
  func.func @transform_4(%arg0: i32) -> (i32, i32) {
    %c0_i32 = arith.constant 0 : i32
    %c0_i32_0 = arith.constant 0 : i32
    return %arg0, %c0_i32 : i32, i32
  }
}

module attributes {stable_mosaic.version = 11 : i64} {
  func.func @_mm_fused_kernel(%arg0: i32, %arg1: memref<512x64xbf16, #tpu.memory_space<vmem>>, %arg2: memref<64x64xbf16, #tpu.memory_space<vmem>>, %arg3: memref<1x64xf32, #tpu.memory_space<vmem>>, %arg4: memref<1x64xf32, #tpu.memory_space<vmem>>, %arg5: memref<512x64xbf16, #tpu.memory_space<vmem>>) attributes {dimension_semantics = [#tpu.dimension_semantics<parallel>], iteration_bounds = array<i64: 1>, scalar_prefetch = 0 : i64, scratch_operands = 0 : i64, tpu.core_type = #tpu.core_type<tc>, window_params = [{transform_indices = @transform_0, window_bounds = array<i64: 512, 64>}, {pipeline_mode = #tpu.pipeline_mode<synchronous>, transform_indices = @transform_1, window_bounds = array<i64: 64, 64>}, {pipeline_mode = #tpu.pipeline_mode<synchronous>, transform_indices = @transform_2, window_bounds = array<i64: 1, 64>}, {pipeline_mode = #tpu.pipeline_mode<synchronous>, transform_indices = @transform_3, window_bounds = array<i64: 1, 64>}, {transform_indices = @transform_4, window_bounds = array<i64: 512, 64>}]} {
    %c0 = arith.constant 0 : index
    %c0_0 = arith.constant 0 : index
    %0 = vector.load %arg1[%c0, %c0_0] : memref<512x64xbf16, #tpu.memory_space<vmem>>, vector<512x64xbf16>
    %c0_1 = arith.constant 0 : index
    %c0_2 = arith.constant 0 : index
    %1 = vector.load %arg2[%c0_1, %c0_2] : memref<64x64xbf16, #tpu.memory_space<vmem>>, vector<64x64xbf16>
    %cst = arith.constant dense<0.000000e+00> : vector<512x64xf32>
    %2 = tpu.matmul %0, %1, %cst {dimension_numbers = #tpu.dot_dimension_numbers<[1], [0], [0], [1], [0, 0, 1, 1], [], []>} : vector<512x64xbf16>, vector<64x64xbf16>, vector<512x64xf32> -> vector<512x64xf32>
    %c0_3 = arith.constant 0 : index
    %c0_4 = arith.constant 0 : index
    %3 = vector.load %arg3[%c0_3, %c0_4] : memref<1x64xf32, #tpu.memory_space<vmem>>, vector<1x64xf32>
    %4 = vector.broadcast %3 : vector<1x64xf32> to vector<512x64xf32>
    %5 = arith.mulf %2, %4 : vector<512x64xf32>
    %c0_5 = arith.constant 0 : index
    %c0_6 = arith.constant 0 : index
    %6 = vector.load %arg4[%c0_5, %c0_6] : memref<1x64xf32, #tpu.memory_space<vmem>>, vector<1x64xf32>
    %7 = vector.broadcast %6 : vector<1x64xf32> to vector<512x64xf32>
    %8 = arith.addf %5, %7 : vector<512x64xf32>
    %cst_7 = arith.constant 0.000000e+00 : f32
    %9 = vector.broadcast %cst_7 : f32 to vector<512x64xf32>
    %10 = arith.maximumf %8, %9 : vector<512x64xf32>
    %11 = arith.truncf %10 : vector<512x64xf32> to vector<512x64xbf16>
    %c0_8 = arith.constant 0 : index
    %c0_9 = arith.constant 0 : index
    %12 = vector.load %arg5[%c0_8, %c0_9] : memref<512x64xbf16, #tpu.memory_space<vmem>>, vector<512x64xbf16>
    tpu.vector_store %arg5[%c0_8, %c0_9], %11 {strides = array<i32>} : memref<512x64xbf16, #tpu.memory_space<vmem>>, vector<512x64xbf16>,
    return
  }
  func.func @transform_0(%arg0: i32) -> (i32, i32) {
    %c0_i32 = arith.constant 0 : i32
    %c0_i32_0 = arith.constant 0 : i32
    return %arg0, %c0_i32 : i32, i32
  }
  func.func @transform_1(%arg0: i32) -> (i32, i32) {
    %c0_i32 = arith.constant 0 : i32
    %c0_i32_0 = arith.constant 0 : i32
    %c0_i32_1 = arith.constant 0 : i32
    return %c0_i32, %c0_i32_0 : i32, i32
  }
  func.func @transform_2(%arg0: i32) -> (i32, i32) {
    %c0_i32 = arith.constant 0 : i32
    %c0_i32_0 = arith.constant 0 : i32
    %c0_i32_1 = arith.constant 0 : i32
    return %c0_i32, %c0_i32_0 : i32, i32
  }
  func.func @transform_3(%arg0: i32) -> (i32, i32) {
    %c0_i32 = arith.constant 0 : i32
    %c0_i32_0 = arith.constant 0 : i32
    %c0_i32_1 = arith.constant 0 : i32
    return %c0_i32, %c0_i32_0 : i32, i32
  }
  func.func @transform_4(%arg0: i32) -> (i32, i32) {
    %c0_i32 = arith.constant 0 : i32
    %c0_i32_0 = arith.constant 0 : i32
    return %arg0, %c0_i32 : i32, i32
  }
}

module attributes {stable_mosaic.version = 11 : i64} {
  func.func @_mm_fused_kernel(%arg0: i32, %arg1: memref<512x16xbf16, #tpu.memory_space<vmem>>, %arg2: memref<16x64xbf16, #tpu.memory_space<vmem>>, %arg3: memref<1x64xf32, #tpu.memory_space<vmem>>, %arg4: memref<1x64xf32, #tpu.memory_space<vmem>>, %arg5: memref<512x64xbf16, #tpu.memory_space<vmem>>) attributes {dimension_semantics = [#tpu.dimension_semantics<parallel>], iteration_bounds = array<i64: 4>, scalar_prefetch = 0 : i64, scratch_operands = 0 : i64, tpu.core_type = #tpu.core_type<tc>, window_params = [{transform_indices = @transform_0, window_bounds = array<i64: 512, 16>}, {pipeline_mode = #tpu.pipeline_mode<synchronous>, transform_indices = @transform_1, window_bounds = array<i64: 16, 64>}, {pipeline_mode = #tpu.pipeline_mode<synchronous>, transform_indices = @transform_2, window_bounds = array<i64: 1, 64>}, {pipeline_mode = #tpu.pipeline_mode<synchronous>, transform_indices = @transform_3, window_bounds = array<i64: 1, 64>}, {transform_indices = @transform_4, window_bounds = array<i64: 512, 64>}]} {
    %c0 = arith.constant 0 : index
    %c0_0 = arith.constant 0 : index
    %0 = vector.load %arg1[%c0, %c0_0] : memref<512x16xbf16, #tpu.memory_space<vmem>>, vector<512x16xbf16>
    %c0_1 = arith.constant 0 : index
    %c0_2 = arith.constant 0 : index
    %1 = vector.load %arg2[%c0_1, %c0_2] : memref<16x64xbf16, #tpu.memory_space<vmem>>, vector<16x64xbf16>
    %cst = arith.constant dense<0.000000e+00> : vector<512x64xf32>
    %2 = tpu.matmul %0, %1, %cst {dimension_numbers = #tpu.dot_dimension_numbers<[1], [0], [0], [1], [0, 0, 1, 1], [], []>} : vector<512x16xbf16>, vector<16x64xbf16>, vector<512x64xf32> -> vector<512x64xf32>
    %c0_3 = arith.constant 0 : index
    %c0_4 = arith.constant 0 : index
    %3 = vector.load %arg3[%c0_3, %c0_4] : memref<1x64xf32, #tpu.memory_space<vmem>>, vector<1x64xf32>
    %4 = vector.broadcast %3 : vector<1x64xf32> to vector<512x64xf32>
    %5 = arith.mulf %2, %4 : vector<512x64xf32>
    %c0_5 = arith.constant 0 : index
    %c0_6 = arith.constant 0 : index
    %6 = vector.load %arg4[%c0_5, %c0_6] : memref<1x64xf32, #tpu.memory_space<vmem>>, vector<1x64xf32>
    %7 = vector.broadcast %6 : vector<1x64xf32> to vector<512x64xf32>
    %8 = arith.addf %5, %7 : vector<512x64xf32>
    %cst_7 = arith.constant 0.000000e+00 : f32
    %9 = vector.broadcast %cst_7 : f32 to vector<512x64xf32>
    %10 = arith.maximumf %8, %9 : vector<512x64xf32>
    %11 = arith.truncf %10 : vector<512x64xf32> to vector<512x64xbf16>
    %c0_8 = arith.constant 0 : index
    %c0_9 = arith.constant 0 : index
    %12 = vector.load %arg5[%c0_8, %c0_9] : memref<512x64xbf16, #tpu.memory_space<vmem>>, vector<512x64xbf16>
    tpu.vector_store %arg5[%c0_8, %c0_9], %11 {strides = array<i32>} : memref<512x64xbf16, #tpu.memory_space<vmem>>, vector<512x64xbf16>,
    return
  }
  func.func @transform_0(%arg0: i32) -> (i32, i32) {
    %c0_i32 = arith.constant 0 : i32
    %c0_i32_0 = arith.constant 0 : i32
    return %arg0, %c0_i32 : i32, i32
  }
  func.func @transform_1(%arg0: i32) -> (i32, i32) {
    %c0_i32 = arith.constant 0 : i32
    %c0_i32_0 = arith.constant 0 : i32
    %c0_i32_1 = arith.constant 0 : i32
    return %c0_i32, %c0_i32_0 : i32, i32
  }
  func.func @transform_2(%arg0: i32) -> (i32, i32) {
    %c0_i32 = arith.constant 0 : i32
    %c0_i32_0 = arith.constant 0 : i32
    %c0_i32_1 = arith.constant 0 : i32
    return %c0_i32, %c0_i32_0 : i32, i32
  }
  func.func @transform_3(%arg0: i32) -> (i32, i32) {
    %c0_i32 = arith.constant 0 : i32
    %c0_i32_0 = arith.constant 0 : i32
    %c0_i32_1 = arith.constant 0 : i32
    return %c0_i32, %c0_i32_0 : i32, i32
  }
  func.func @transform_4(%arg0: i32) -> (i32, i32) {
    %c0_i32 = arith.constant 0 : i32
    %c0_i32_0 = arith.constant 0 : i32
    return %arg0, %c0_i32 : i32, i32
  }
}

module attributes {stable_mosaic.version = 11 : i64} {
  func.func @_mm_fused_kernel(%arg0: i32, %arg1: memref<512x256xbf16, #tpu.memory_space<vmem>>, %arg2: memref<256x128xbf16, #tpu.memory_space<vmem>>, %arg3: memref<1x128xf32, #tpu.memory_space<vmem>>, %arg4: memref<1x128xf32, #tpu.memory_space<vmem>>, %arg5: memref<512x128xbf16, #tpu.memory_space<vmem>>) attributes {dimension_semantics = [#tpu.dimension_semantics<parallel>], iteration_bounds = array<i64: 5>, scalar_prefetch = 0 : i64, scratch_operands = 0 : i64, tpu.core_type = #tpu.core_type<tc>, window_params = [{transform_indices = @transform_0, window_bounds = array<i64: 512, 256>}, {pipeline_mode = #tpu.pipeline_mode<synchronous>, transform_indices = @transform_1, window_bounds = array<i64: 256, 128>}, {pipeline_mode = #tpu.pipeline_mode<synchronous>, transform_indices = @transform_2, window_bounds = array<i64: 1, 128>}, {pipeline_mode = #tpu.pipeline_mode<synchronous>, transform_indices = @transform_3, window_bounds = array<i64: 1, 128>}, {transform_indices = @transform_4, window_bounds = array<i64: 512, 128>}]} {
    %c0 = arith.constant 0 : index
    %c0_0 = arith.constant 0 : index
    %0 = vector.load %arg1[%c0, %c0_0] : memref<512x256xbf16, #tpu.memory_space<vmem>>, vector<512x256xbf16>
    %c0_1 = arith.constant 0 : index
    %c0_2 = arith.constant 0 : index
    %1 = vector.load %arg2[%c0_1, %c0_2] : memref<256x128xbf16, #tpu.memory_space<vmem>>, vector<256x128xbf16>
    %cst = arith.constant dense<0.000000e+00> : vector<512x128xf32>
    %2 = tpu.matmul %0, %1, %cst {dimension_numbers = #tpu.dot_dimension_numbers<[1], [0], [0], [1], [0, 0, 1, 1], [], []>} : vector<512x256xbf16>, vector<256x128xbf16>, vector<512x128xf32> -> vector<512x128xf32>
    %c0_3 = arith.constant 0 : index
    %c0_4 = arith.constant 0 : index
    %3 = vector.load %arg3[%c0_3, %c0_4] : memref<1x128xf32, #tpu.memory_space<vmem>>, vector<1x128xf32>
    %4 = vector.broadcast %3 : vector<1x128xf32> to vector<512x128xf32>
    %5 = arith.mulf %2, %4 : vector<512x128xf32>
    %c0_5 = arith.constant 0 : index
    %c0_6 = arith.constant 0 : index
    %6 = vector.load %arg4[%c0_5, %c0_6] : memref<1x128xf32, #tpu.memory_space<vmem>>, vector<1x128xf32>
    %7 = vector.broadcast %6 : vector<1x128xf32> to vector<512x128xf32>
    %8 = arith.addf %5, %7 : vector<512x128xf32>
    %cst_7 = arith.constant 0.000000e+00 : f32
    %9 = vector.broadcast %cst_7 : f32 to vector<512x128xf32>
    %10 = arith.maximumf %8, %9 : vector<512x128xf32>
    %11 = arith.truncf %10 : vector<512x128xf32> to vector<512x128xbf16>
    %c0_8 = arith.constant 0 : index
    %c0_9 = arith.constant 0 : index
    %12 = vector.load %arg5[%c0_8, %c0_9] : memref<512x128xbf16, #tpu.memory_space<vmem>>, vector<512x128xbf16>
    tpu.vector_store %arg5[%c0_8, %c0_9], %11 {strides = array<i32>} : memref<512x128xbf16, #tpu.memory_space<vmem>>, vector<512x128xbf16>,
    return
  }
  func.func @transform_0(%arg0: i32) -> (i32, i32) {
    %c0_i32 = arith.constant 0 : i32
    %c0_i32_0 = arith.constant 0 : i32
    return %arg0, %c0_i32 : i32, i32
  }
  func.func @transform_1(%arg0: i32) -> (i32, i32) {
    %c0_i32 = arith.constant 0 : i32
    %c0_i32_0 = arith.constant 0 : i32
    %c0_i32_1 = arith.constant 0 : i32
    return %c0_i32, %c0_i32_0 : i32, i32
  }
  func.func @transform_2(%arg0: i32) -> (i32, i32) {
    %c0_i32 = arith.constant 0 : i32
    %c0_i32_0 = arith.constant 0 : i32
    %c0_i32_1 = arith.constant 0 : i32
    return %c0_i32, %c0_i32_0 : i32, i32
  }
  func.func @transform_3(%arg0: i32) -> (i32, i32) {
    %c0_i32 = arith.constant 0 : i32
    %c0_i32_0 = arith.constant 0 : i32
    %c0_i32_1 = arith.constant 0 : i32
    return %c0_i32, %c0_i32_0 : i32, i32
  }
  func.func @transform_4(%arg0: i32) -> (i32, i32) {
    %c0_i32 = arith.constant 0 : i32
    %c0_i32_0 = arith.constant 0 : i32
    return %arg0, %c0_i32 : i32, i32
  }
}

module attributes {stable_mosaic.version = 11 : i64} {
  func.func @_mm_fused_kernel(%arg0: i32, %arg1: memref<512x288xbf16, #tpu.memory_space<vmem>>, %arg2: memref<288x32xbf16, #tpu.memory_space<vmem>>, %arg3: memref<1x32xf32, #tpu.memory_space<vmem>>, %arg4: memref<1x32xf32, #tpu.memory_space<vmem>>, %arg5: memref<512x32xbf16, #tpu.memory_space<vmem>>) attributes {dimension_semantics = [#tpu.dimension_semantics<parallel>], iteration_bounds = array<i64: 16>, scalar_prefetch = 0 : i64, scratch_operands = 0 : i64, tpu.core_type = #tpu.core_type<tc>, window_params = [{transform_indices = @transform_0, window_bounds = array<i64: 512, 288>}, {pipeline_mode = #tpu.pipeline_mode<synchronous>, transform_indices = @transform_1, window_bounds = array<i64: 288, 32>}, {pipeline_mode = #tpu.pipeline_mode<synchronous>, transform_indices = @transform_2, window_bounds = array<i64: 1, 32>}, {pipeline_mode = #tpu.pipeline_mode<synchronous>, transform_indices = @transform_3, window_bounds = array<i64: 1, 32>}, {transform_indices = @transform_4, window_bounds = array<i64: 512, 32>}]} {
    %c0 = arith.constant 0 : index
    %c0_0 = arith.constant 0 : index
    %0 = vector.load %arg1[%c0, %c0_0] : memref<512x288xbf16, #tpu.memory_space<vmem>>, vector<512x288xbf16>
    %c0_1 = arith.constant 0 : index
    %c0_2 = arith.constant 0 : index
    %1 = vector.load %arg2[%c0_1, %c0_2] : memref<288x32xbf16, #tpu.memory_space<vmem>>, vector<288x32xbf16>
    %cst = arith.constant dense<0.000000e+00> : vector<512x32xf32>
    %2 = tpu.matmul %0, %1, %cst {dimension_numbers = #tpu.dot_dimension_numbers<[1], [0], [0], [1], [0, 0, 1, 1], [], []>} : vector<512x288xbf16>, vector<288x32xbf16>, vector<512x32xf32> -> vector<512x32xf32>
    %c0_3 = arith.constant 0 : index
    %c0_4 = arith.constant 0 : index
    %3 = vector.load %arg3[%c0_3, %c0_4] : memref<1x32xf32, #tpu.memory_space<vmem>>, vector<1x32xf32>
    %4 = vector.broadcast %3 : vector<1x32xf32> to vector<512x32xf32>
    %5 = arith.mulf %2, %4 : vector<512x32xf32>
    %c0_5 = arith.constant 0 : index
    %c0_6 = arith.constant 0 : index
    %6 = vector.load %arg4[%c0_5, %c0_6] : memref<1x32xf32, #tpu.memory_space<vmem>>, vector<1x32xf32>
    %7 = vector.broadcast %6 : vector<1x32xf32> to vector<512x32xf32>
    %8 = arith.addf %5, %7 : vector<512x32xf32>
    %cst_7 = arith.constant 0.000000e+00 : f32
    %9 = vector.broadcast %cst_7 : f32 to vector<512x32xf32>
    %10 = arith.maximumf %8, %9 : vector<512x32xf32>
    %11 = arith.truncf %10 : vector<512x32xf32> to vector<512x32xbf16>
    %c0_8 = arith.constant 0 : index
    %c0_9 = arith.constant 0 : index
    %12 = vector.load %arg5[%c0_8, %c0_9] : memref<512x32xbf16, #tpu.memory_space<vmem>>, vector<512x32xbf16>
    tpu.vector_store %arg5[%c0_8, %c0_9], %11 {strides = array<i32>} : memref<512x32xbf16, #tpu.memory_space<vmem>>, vector<512x32xbf16>,
    return
  }
  func.func @transform_0(%arg0: i32) -> (i32, i32) {
    %c0_i32 = arith.constant 0 : i32
    %c0_i32_0 = arith.constant 0 : i32
    return %arg0, %c0_i32 : i32, i32
  }
  func.func @transform_1(%arg0: i32) -> (i32, i32) {
    %c0_i32 = arith.constant 0 : i32
    %c0_i32_0 = arith.constant 0 : i32
    %c0_i32_1 = arith.constant 0 : i32
    return %c0_i32, %c0_i32_0 : i32, i32
  }
  func.func @transform_2(%arg0: i32) -> (i32, i32) {
    %c0_i32 = arith.constant 0 : i32
    %c0_i32_0 = arith.constant 0 : i32
    %c0_i32_1 = arith.constant 0 : i32
    return %c0_i32, %c0_i32_0 : i32, i32
  }
  func.func @transform_3(%arg0: i32) -> (i32, i32) {
    %c0_i32 = arith.constant 0 : i32
    %c0_i32_0 = arith.constant 0 : i32
    %c0_i32_1 = arith.constant 0 : i32
    return %c0_i32, %c0_i32_0 : i32, i32
  }
  func.func @transform_4(%arg0: i32) -> (i32, i32) {
    %c0_i32 = arith.constant 0 : i32
    %c0_i32_0 = arith.constant 0 : i32
    return %arg0, %c0_i32 : i32, i32
  }
}

</mosaic_0001>

<llo_original>
// kernel: segmentation_forward.9
$region0: #{segmentation_forward.9}
  #allocation0 [shape = 'u32[]', space=smem, size = 0x4, offset = 0x4, fixed_abs, tag = 'smem constant byte address 0x4 - core index']
  #allocation1 [shape = 'u32[144,128]{1,0:T(1,128)}', space=vmem, size = 0x12000, scoped, tag = 'internal scratch']
  %s0 = inlined_call_operand.vmem [shape: bf16[128,32], index: 0, kind: input, shape index: {}]
  %s1 = inlined_call_operand.hbm [shape: bf16[32,128], index: 1, kind: input, shape index: {}]
  %s2 = inlined_call_operand.hbm [shape: f32[1,128], index: 2, kind: input, shape index: {}]
  %s3 = inlined_call_operand.hbm [shape: f32[1,128], index: 3, kind: input, shape index: {}]
  %s4 = inlined_call_operand.vmem [shape: bf16[128,128], index: 4, kind: output, shape index: {}]
  %s5 = sld [smem:[#allocation0]]
  $region38: #{segmentation_forward.9} parent=0
    _
  %s7 = ssub.s32 1, %s5
  %s8 = scalar_select 0, %s7, %s5
  $region1: #{segmentation_forward.9} parent=0
    #allocation2 [shape = 'u8[8192]{0}', space=vmem, size = 0x2000, scoped, tag = 'input window, operand 1, single buffered']
    #allocation3 [shape = 's32[1]{0}', space=sflag, size = 0x4, scoped, tag = 'scoped memory for segmentation_forward.9']
    #allocation4 [shape = 'u8[512]{0}', space=vmem, size = 0x400, scoped, tag = 'input window, operand 2, single buffered']
    #allocation5 [shape = 's32[1]{0}', space=sflag, size = 0x4, scoped, tag = 'scoped memory for segmentation_forward.9']
    #allocation6 [shape = 'u8[512]{0}', space=vmem, size = 0x400, scoped, tag = 'input window, operand 3, single buffered']
    %9 = vsyncpa [#allocation3], 0
    %10 = vsyncpa [#allocation5], 0
    // Predicated region
    $region2: #{segmentation_forward.9} parent=1 // pred_check
      _
    $region3: #{segmentation_forward.9} parent=1 // pred_check_branch
      %12 = sbr.rel (0) target = $region5
    $region4: #{segmentation_forward.9} parent=1 // pred_region
      _
    $region5: #{segmentation_forward.9} parent=1 // pred_fallthru
      _
    // Predicated region
    $region6: #{segmentation_forward.9} parent=1 // pred_check
      _
    $region7: #{segmentation_forward.9} parent=1 // pred_check_branch
      %14 = sbr.rel (0) target = $region9
    $region8: #{segmentation_forward.9} parent=1 // pred_region
      %s16 = ssub.s32 256, 256
      %17 = vsyncadd [#allocation3], %s16
      %s18 = sshll.u32 [#allocation2], 4
      %s19 = int_to_ptr.vmem [resolvable:$true] %s18
      %24 = dma.hbm_to_vmem [thread:$0]  %s1, 256, %s19, [#allocation3], 64, 64, 4
    $region9: #{segmentation_forward.9} parent=1 // pred_fallthru
      _
    // Predicated region
    $region10: #{segmentation_forward.9} parent=1 // pred_check
      _
    $region11: #{segmentation_forward.9} parent=1 // pred_check_branch
      %26 = sbr.rel (0) target = $region13
    $region12: #{segmentation_forward.9} parent=1 // pred_region
      %s28 = ssub.s32 16, 16
      %29 = vsyncadd [#allocation5], %s28
      %s31 = sshll.u32 [#allocation4], 4
      %s32 = int_to_ptr.vmem [resolvable:$true] %s31
      %34 = dma.hbm_to_vmem [thread:$0]  %s2, 16, %s32, [#allocation5]
    $region13: #{segmentation_forward.9} parent=1 // pred_fallthru
      _
    // Predicated region
    $region14: #{segmentation_forward.9} parent=1 // pred_check
      _
    $region15: #{segmentation_forward.9} parent=1 // pred_check_branch
      %36 = sbr.rel (0) target = $region17
    $region16: #{segmentation_forward.9} parent=1 // pred_region
      %s38 = ssub.s32 16, 16
      %39 = vsyncadd [#allocation5], %s38
      %s41 = sshll.u32 [#allocation6], 4
      %s42 = int_to_ptr.vmem [resolvable:$true] %s41
      %44 = dma.hbm_to_vmem [thread:$0]  %s3, 16, %s42, [#allocation5]
    $region17: #{segmentation_forward.9} parent=1 // pred_fallthru
      _
    // Predicated region
    $region18: #{segmentation_forward.9} parent=1 // pred_check
      _
    $region19: #{segmentation_forward.9} parent=1 // pred_check_branch
      %46 = sbr.rel (0) target = $region21
    $region20: #{segmentation_forward.9} parent=1 // pred_region
      %47 = dma.done [#allocation3], 256
    $region21: #{segmentation_forward.9} parent=1 // pred_fallthru
      _
    // Predicated region
    $region22: #{segmentation_forward.9} parent=1 // pred_check
      _
    $region23: #{segmentation_forward.9} parent=1 // pred_check_branch
      %49 = sbr.rel (0) target = $region25
    $region24: #{segmentation_forward.9} parent=1 // pred_region
      %50 = dma.done [#allocation5], 16
    $region25: #{segmentation_forward.9} parent=1 // pred_fallthru
      _
    // Predicated region
    $region26: #{segmentation_forward.9} parent=1 // pred_check
      _
    $region27: #{segmentation_forward.9} parent=1 // pred_check_branch
      %52 = sbr.rel (0) target = $region29
    $region28: #{segmentation_forward.9} parent=1 // pred_region
      %53 = dma.done [#allocation5], 16
    $region29: #{segmentation_forward.9} parent=1 // pred_fallthru
      _
    %v55 = vld [vmem:[%s0] sm:$0xf]
    %v56 = vld [vmem:[%s0 + $0x4] sm:$0xf]
    %v57 = vld [vmem:[%s0 + $0x8] sm:$0xf]
    %v58 = vld [vmem:[%s0 + $0xc] sm:$0xf]
    %v59 = vld [vmem:[%s0 + $0x10] sm:$0xf]
    %v60 = vld [vmem:[%s0 + $0x14] sm:$0xf]
    %v61 = vld [vmem:[%s0 + $0x18] sm:$0xf]
    %v62 = vld [vmem:[%s0 + $0x1c] sm:$0xf]
    %v63 = vld [vmem:[%s0 + $0x20] sm:$0xf]
    %v64 = vld [vmem:[%s0 + $0x24] sm:$0xf]
    %v65 = vld [vmem:[%s0 + $0x28] sm:$0xf]
    %v66 = vld [vmem:[%s0 + $0x2c] sm:$0xf]
    %v67 = vld [vmem:[%s0 + $0x30] sm:$0xf]
    %v68 = vld [vmem:[%s0 + $0x34] sm:$0xf]
    %v69 = vld [vmem:[%s0 + $0x38] sm:$0xf]
    %v70 = vld [vmem:[%s0 + $0x3c] sm:$0xf]
    %v71 = vld [vmem:[#allocation2] sm:$0xf]
    %v72 = vld [vmem:[#allocation2 + $0x4] sm:$0xf]
    %v73 = vld [vmem:[#allocation2 + $0x8] sm:$0xf]
    %v74 = vld [vmem:[#allocation2 + $0xc] sm:$0xf]
    %v91 = vunpack.c.l.b16 %v55
    %v92 = vunpack.c.l.b16 %v56
    %v93 = vunpack.c.l.b16 %v57
    %v94 = vunpack.c.l.b16 %v58
    %v95 = vunpack.c.l.b16 %v59
    %v96 = vunpack.c.l.b16 %v60
    %v97 = vunpack.c.l.b16 %v61
    %v98 = vunpack.c.l.b16 %v62
    %v99 = vunpack.c.l.b16 %v63
    %v100 = vunpack.c.l.b16 %v64
    %v101 = vunpack.c.l.b16 %v65
    %v102 = vunpack.c.l.b16 %v66
    %v103 = vunpack.c.l.b16 %v67
    %v104 = vunpack.c.l.b16 %v68
    %v105 = vunpack.c.l.b16 %v69
    %v106 = vunpack.c.l.b16 %v70
    %v107 = vpack.c.b16 %v92, %v91
    %v108 = vpack.c.b16 %v94, %v93
    %v109 = vpack.c.b16 %v96, %v95
    %v110 = vpack.c.b16 %v98, %v97
    %v111 = vpack.c.b16 %v100, %v99
    %v112 = vpack.c.b16 %v102, %v101
    %v113 = vpack.c.b16 %v104, %v103
    %v114 = vpack.c.b16 %v106, %v105
    %v119 = vunpack.c.l.b16 %v71
    %v120 = vunpack.c.l.b16 %v72
    %v121 = vunpack.c.l.b16 %v73
    %v122 = vunpack.c.l.b16 %v74
    %v123 = vpack.c.b16 %v120, %v119
    %v124 = vpack.c.b16 %v122, %v121
    %vm127 = vcmask 261120
    %v129 = vsel %vm127, %v107, 0
    %v132 = vsel %vm127, %v108, 0
    %v135 = vsel %vm127, %v109, 0
    %v138 = vsel %vm127, %v110, 0
    %v141 = vsel %vm127, %v111, 0
    %v144 = vsel %vm127, %v112, 0
    %v147 = vsel %vm127, %v113, 0
    %v150 = vsel %vm127, %v114, 0
    %152 = vmatprep.subr.bf16.mxu0 0
    %153 = vmatpush1.bf16.msra.mxu0 %v123
    %154 = vmatprep.subr.bf16.mxu0 0
    %155 = vmatpush1.bf16.msra.mxu0 %v124
    %156 = vmatprep.subr.bf16.mxu0 0
    %157 = vmatpush1.bf16.msra.mxu0 0
    %158 = vmatprep.subr.bf16.mxu0 0
    %159 = vmatpush1.bf16.msra.mxu0 0
    %160 = vmatprep.subr.bf16.mxu0 0
    %161 = vmatpush1.bf16.msra.mxu0 0
    %162 = vmatprep.subr.bf16.mxu0 0
    %163 = vmatpush1.bf16.msra.mxu0 0
    %164 = vmatprep.subr.bf16.mxu0 0
    %165 = vmatpush1.bf16.msra.mxu0 0
    %166 = vmatprep.subr.bf16.mxu0 0
    %167 = vmatpush1.bf16.msra.mxu0 0
    %168 = vmatprep.subr.bf16.mxu0 0
    %169 = vmatpush1.bf16.msra.mxu0 0
    %170 = vmatprep.subr.bf16.mxu0 0
    %171 = vmatpush1.bf16.msra.mxu0 0
    %172 = vmatprep.subr.bf16.mxu0 0
    %173 = vmatpush1.bf16.msra.mxu0 0
    %174 = vmatprep.subr.bf16.mxu0 0
    %175 = vmatpush1.bf16.msra.mxu0 0
    %176 = vmatprep.subr.bf16.mxu0 0
    %177 = vmatpush1.bf16.msra.mxu0 0
    %178 = vmatprep.subr.bf16.mxu0 0
    %179 = vmatpush1.bf16.msra.mxu0 0
    %180 = vmatprep.subr.bf16.mxu0 0
    %181 = vmatpush1.bf16.msra.mxu0 0
    %182 = vmatprep.subr.bf16.mxu0 0
    %183 = vmatpush1.bf16.msra.mxu0 0
    %184 = vmatprep.mubr.bf16.mxu0 0
    %185 = vmatmul.mubr.bf16.gmra.mrb[0].mxu0 %v129
    %v186 = vpop.f32.mrb[0].mxu0
    %v187 = vadd.f32 0.0, %v186
    %v188 = vpop.f32.mrb[0].mxu0
    %v189 = vpop.f32.mrb[0].mxu0
    %v190 = vadd.f32 0.0, %v189
    %v191 = vpop.f32.mrb[0].mxu0
    %192 = vmatprep.mubr.bf16.mxu0 0
    %193 = vmatmul.mubr.bf16.gmra.mrb[0].mxu0 %v132
    %v194 = vpop.f32.mrb[0].mxu0
    %v195 = vadd.f32 0.0, %v194
    %v196 = vpop.f32.mrb[0].mxu0
    %v197 = vpop.f32.mrb[0].mxu0
    %v198 = vadd.f32 0.0, %v197
    %v199 = vpop.f32.mrb[0].mxu0
    %200 = vmatprep.mubr.bf16.mxu0 0
    %201 = vmatmul.mubr.bf16.gmra.mrb[0].mxu0 %v135
    %v202 = vpop.f32.mrb[0].mxu0
    %v203 = vadd.f32 0.0, %v202
    %v204 = vpop.f32.mrb[0].mxu0
    %v205 = vpop.f32.mrb[0].mxu0
    %v206 = vadd.f32 0.0, %v205
    %v207 = vpop.f32.mrb[0].mxu0
    %208 = vmatprep.mubr.bf16.mxu0 0
    %209 = vmatmul.mubr.bf16.gmra.mrb[0].mxu0 %v138
    %v210 = vpop.f32.mrb[0].mxu0
    %v211 = vadd.f32 0.0, %v210
    %v212 = vpop.f32.mrb[0].mxu0
    %v213 = vpop.f32.mrb[0].mxu0
    %v214 = vadd.f32 0.0, %v213
    %v215 = vpop.f32.mrb[0].mxu0
    %216 = vmatprep.mubr.bf16.mxu0 0
    %217 = vmatmul.mubr.bf16.gmra.mrb[0].mxu0 %v141
    %v218 = vpop.f32.mrb[0].mxu0
    %v219 = vadd.f32 0.0, %v218
    %v220 = vpop.f32.mrb[0].mxu0
    %v221 = vpop.f32.mrb[0].mxu0
    %v222 = vadd.f32 0.0, %v221
    %v223 = vpop.f32.mrb[0].mxu0
    %224 = vmatprep.mubr.bf16.mxu0 0
    %225 = vmatmul.mubr.bf16.gmra.mrb[0].mxu0 %v144
    %v226 = vpop.f32.mrb[0].mxu0
    %v227 = vadd.f32 0.0, %v226
    %v228 = vpop.f32.mrb[0].mxu0
    %v229 = vpop.f32.mrb[0].mxu0
    %v230 = vadd.f32 0.0, %v229
    %v231 = vpop.f32.mrb[0].mxu0
    %232 = vmatprep.mubr.bf16.mxu0 0
    %233 = vmatmul.mubr.bf16.gmra.mrb[0].mxu0 %v147
    %v234 = vpop.f32.mrb[0].mxu0
    %v235 = vadd.f32 0.0, %v234
    %v236 = vpop.f32.mrb[0].mxu0
    %v237 = vpop.f32.mrb[0].mxu0
    %v238 = vadd.f32 0.0, %v237
    %v239 = vpop.f32.mrb[0].mxu0
    %240 = vmatprep.mubr.bf16.mxu0 0
    %241 = vmatmul.mubr.bf16.gmra.mrb[0].mxu0 %v150
    %v242 = vpop.f32.mrb[0].mxu0
    %v243 = vadd.f32 0.0, %v242
    %v244 = vpop.f32.mrb[0].mxu0
    %v245 = vpop.f32.mrb[0].mxu0
    %v246 = vadd.f32 0.0, %v245
    %v247 = vpop.f32.mrb[0].mxu0
    %248 = vdwg.mxu0
    %v249 = vld [vmem:[#allocation4] sm:$0x1]
    %v251 = vlaneseq
    %v252 = vshrl.u32 %v251, 7
    %v253 = vsub.s32 0, %v252
    %v254 = vrot.slane %v249, %v253
    %v256 = vmul.f32 %v187, %v254
    %v257 = vmul.f32 %v190, %v254
    %v258 = vmul.f32 %v195, %v254
    %v259 = vmul.f32 %v198, %v254
    %v260 = vmul.f32 %v203, %v254
    %v261 = vmul.f32 %v206, %v254
    %v262 = vmul.f32 %v211, %v254
    %v263 = vmul.f32 %v214, %v254
    %v264 = vmul.f32 %v219, %v254
    %v265 = vmul.f32 %v222, %v254
    %v266 = vmul.f32 %v227, %v254
    %v267 = vmul.f32 %v230, %v254
    %v268 = vmul.f32 %v235, %v254
    %v269 = vmul.f32 %v238, %v254
    %v270 = vmul.f32 %v243, %v254
    %v271 = vmul.f32 %v246, %v254
    %v272 = vld [vmem:[#allocation6] sm:$0x1]
    %v274 = vlaneseq
    %v275 = vshrl.u32 %v274, 7
    %v276 = vsub.s32 0, %v275
    %v277 = vrot.slane %v272, %v276
    %v279 = vadd.f32 %v256, %v277
    %v280 = vadd.f32 %v257, %v277
    %v281 = vadd.f32 %v258, %v277
    %v282 = vadd.f32 %v259, %v277
    %v283 = vadd.f32 %v260, %v277
    %v284 = vadd.f32 %v261, %v277
    %v285 = vadd.f32 %v262, %v277
    %v286 = vadd.f32 %v263, %v277
    %v287 = vadd.f32 %v264, %v277
    %v288 = vadd.f32 %v265, %v277
    %v289 = vadd.f32 %v266, %v277
    %v290 = vadd.f32 %v267, %v277
    %v291 = vadd.f32 %v268, %v277
    %v292 = vadd.f32 %v269, %v277
    %v293 = vadd.f32 %v270, %v277
    %v294 = vadd.f32 %v271, %v277
    %v295 = vmax.f32 %v279, 0.0
    %v296 = vmax.f32 %v280, 0.0
    %v297 = vmax.f32 %v281, 0.0
    %v298 = vmax.f32 %v282, 0.0
    %v299 = vmax.f32 %v283, 0.0
    %v300 = vmax.f32 %v284, 0.0
    %v301 = vmax.f32 %v285, 0.0
    %v302 = vmax.f32 %v286, 0.0
    %v303 = vmax.f32 %v287, 0.0
    %v304 = vmax.f32 %v288, 0.0
    %v305 = vmax.f32 %v289, 0.0
    %v306 = vmax.f32 %v290, 0.0
    %v307 = vmax.f32 %v291, 0.0
    %v308 = vmax.f32 %v292, 0.0
    %v309 = vmax.f32 %v293, 0.0
    %v310 = vmax.f32 %v294, 0.0
    %v311 = vpack.c.bf16 %v296, %v295
    %v312 = vpack.c.bf16 %v298, %v297
    %v313 = vpack.c.bf16 %v300, %v299
    %v314 = vpack.c.bf16 %v302, %v301
    %v315 = vpack.c.bf16 %v304, %v303
    %v316 = vpack.c.bf16 %v306, %v305
    %v317 = vpack.c.bf16 %v308, %v307
    %v318 = vpack.c.bf16 %v310, %v309
    %v327 = vunpack.c.l.b16 %v311
    %v328 = vunpack.c.h.b16 %v311
    %v329 = vunpack.c.l.b16 %v312
    %v330 = vunpack.c.h.b16 %v312
    %v331 = vunpack.c.l.b16 %v313
    %v332 = vunpack.c.h.b16 %v313
    %v333 = vunpack.c.l.b16 %v314
    %v334 = vunpack.c.h.b16 %v314
    %v335 = vunpack.c.l.b16 %v315
    %v336 = vunpack.c.h.b16 %v315
    %v337 = vunpack.c.l.b16 %v316
    %v338 = vunpack.c.h.b16 %v316
    %v339 = vunpack.c.l.b16 %v317
    %v340 = vunpack.c.h.b16 %v317
    %v341 = vunpack.c.l.b16 %v318
    %v342 = vunpack.c.h.b16 %v318
    %v343 = vpack.c.b16 %v327, %v327
    %v344 = vpack.c.b16 %v328, %v328
    %v345 = vpack.c.b16 %v329, %v329
    %v346 = vpack.c.b16 %v330, %v330
    %v347 = vpack.c.b16 %v331, %v331
    %v348 = vpack.c.b16 %v332, %v332
    %v349 = vpack.c.b16 %v333, %v333
    %v350 = vpack.c.b16 %v334, %v334
    %v351 = vpack.c.b16 %v335, %v335
    %v352 = vpack.c.b16 %v336, %v336
    %v353 = vpack.c.b16 %v337, %v337
    %v354 = vpack.c.b16 %v338, %v338
    %v355 = vpack.c.b16 %v339, %v339
    %v356 = vpack.c.b16 %v340, %v340
    %v357 = vpack.c.b16 %v341, %v341
    %v358 = vpack.c.b16 %v342, %v342
    %375 = vst [vmem:[%s4] sm:$0xf] %v343
    %376 = vst [vmem:[%s4 + $0x4] sm:$0xf] %v344
    %377 = vst [vmem:[%s4 + $0x8] sm:$0xf] %v345
    %378 = vst [vmem:[%s4 + $0xc] sm:$0xf] %v346
    %379 = vst [vmem:[%s4 + $0x10] sm:$0xf] %v347
    %380 = vst [vmem:[%s4 + $0x14] sm:$0xf] %v348
    %381 = vst [vmem:[%s4 + $0x18] sm:$0xf] %v349
    %382 = vst [vmem:[%s4 + $0x1c] sm:$0xf] %v350
    %383 = vst [vmem:[%s4 + $0x20] sm:$0xf] %v351
    %384 = vst [vmem:[%s4 + $0x24] sm:$0xf] %v352
    %385 = vst [vmem:[%s4 + $0x28] sm:$0xf] %v353
    %386 = vst [vmem:[%s4 + $0x2c] sm:$0xf] %v354
    %387 = vst [vmem:[%s4 + $0x30] sm:$0xf] %v355
    %388 = vst [vmem:[%s4 + $0x34] sm:$0xf] %v356
    %389 = vst [vmem:[%s4 + $0x38] sm:$0xf] %v357
    %390 = vst [vmem:[%s4 + $0x3c] sm:$0xf] %v358
    // Predicated region
    $region30: #{segmentation_forward.9} parent=1 // pred_check
      _
    $region31: #{segmentation_forward.9} parent=1 // pred_check_branch
      %392 = sbr.rel (0) target = $region33
    $region32: #{segmentation_forward.9} parent=1 // pred_region
      _
    $region33: #{segmentation_forward.9} parent=1 // pred_fallthru
      _
    // Predicated region
    $region34: #{segmentation_forward.9} parent=1 // pred_check
      _
    $region35: #{segmentation_forward.9} parent=1 // pred_check_branch
      %394 = sbr.rel (0) target = $region37
    $region36: #{segmentation_forward.9} parent=1 // pred_region
      _
    $region37: #{segmentation_forward.9} parent=1 // pred_fallthru
      _
    %395 = vsyncpa [#allocation3], 1
    %396 = vsyncpa [#allocation5], 1

// kernel: segmentation_forward.10
$region0: #{segmentation_forward.10}
  #allocation0 [shape = 'u32[]', space=smem, size = 0x4, offset = 0x4, fixed_abs, tag = 'smem constant byte address 0x4 - core index']
  #allocation1 [shape = 'u32[144,128]{1,0:T(1,128)}', space=vmem, size = 0x12000, scoped, tag = 'internal scratch']
  %s0 = inlined_call_operand.vmem [shape: bf16[128,128], index: 0, kind: input, shape index: {}]
  %s1 = inlined_call_operand.vmem [shape: bf16[128,32], index: 1, kind: input, shape index: {}]
  %s2 = inlined_call_operand.hbm [shape: f32[1,32], index: 2, kind: input, shape index: {}]
  %s3 = inlined_call_operand.hbm [shape: f32[1,32], index: 3, kind: input, shape index: {}]
  %s4 = inlined_call_operand.vmem [shape: bf16[128,32], index: 4, kind: output, shape index: {}]
  %s5 = sld [smem:[#allocation0]]
  $region34: #{segmentation_forward.10} parent=0
    _
  %s7 = ssub.s32 1, %s5
  %s8 = scalar_select 0, %s7, %s5
  $region1: #{segmentation_forward.10} parent=0
    #allocation2 [shape = 'u8[512]{0}', space=vmem, size = 0x400, scoped, tag = 'input window, operand 2, single buffered']
    #allocation3 [shape = 's32[1]{0}', space=sflag, size = 0x4, scoped, tag = 'scoped memory for segmentation_forward.10']
    #allocation4 [shape = 'u8[512]{0}', space=vmem, size = 0x400, scoped, tag = 'input window, operand 3, single buffered']
    #allocation5 [shape = 's32[1]{0}', space=sflag, size = 0x4, scoped, tag = 'scoped memory for segmentation_forward.10']
    %9 = vsyncpa [#allocation3], 0
    %10 = vsyncpa [#allocation5], 0
    // Predicated region
    $region2: #{segmentation_forward.10} parent=1 // pred_check
      _
    $region3: #{segmentation_forward.10} parent=1 // pred_check_branch
      %12 = sbr.rel (0) target = $region5
    $region4: #{segmentation_forward.10} parent=1 // pred_region
      _
    $region5: #{segmentation_forward.10} parent=1 // pred_fallthru
      _
    // Predicated region
    $region6: #{segmentation_forward.10} parent=1 // pred_check
      _
    $region7: #{segmentation_forward.10} parent=1 // pred_check_branch
      %14 = sbr.rel (0) target = $region9
    $region8: #{segmentation_forward.10} parent=1 // pred_region
      _
    $region9: #{segmentation_forward.10} parent=1 // pred_fallthru
      _
    // Predicated region
    $region10: #{segmentation_forward.10} parent=1 // pred_check
      _
    $region11: #{segmentation_forward.10} parent=1 // pred_check_branch
      %16 = sbr.rel (0) target = $region13
    $region12: #{segmentation_forward.10} parent=1 // pred_region
      %s18 = ssub.s32 16, 16
      %19 = vsyncadd [#allocation3], %s18
      %s21 = sshll.u32 [#allocation2], 4
      %s22 = int_to_ptr.vmem [resolvable:$true] %s21
      %24 = dma.hbm_to_vmem [thread:$0]  %s2, 16, %s22, [#allocation3]
    $region13: #{segmentation_forward.10} parent=1 // pred_fallthru
      _
    // Predicated region
    $region14: #{segmentation_forward.10} parent=1 // pred_check
      _
    $region15: #{segmentation_forward.10} parent=1 // pred_check_branch
      %26 = sbr.rel (0) target = $region17
    $region16: #{segmentation_forward.10} parent=1 // pred_region
      %s28 = ssub.s32 16, 16
      %29 = vsyncadd [#allocation5], %s28
      %s31 = sshll.u32 [#allocation4], 4
      %s32 = int_to_ptr.vmem [resolvable:$true] %s31
      %34 = dma.hbm_to_vmem [thread:$0]  %s3, 16, %s32, [#allocation5]
    $region17: #{segmentation_forward.10} parent=1 // pred_fallthru
      _
    // Predicated region
    $region18: #{segmentation_forward.10} parent=1 // pred_check
      _
    $region19: #{segmentation_forward.10} parent=1 // pred_check_branch
      %36 = sbr.rel (0) target = $region21
    $region20: #{segmentation_forward.10} parent=1 // pred_region
      %37 = dma.done [#allocation3], 16
    $region21: #{segmentation_forward.10} parent=1 // pred_fallthru
      _
    // Predicated region
    $region22: #{segmentation_forward.10} parent=1 // pred_check
      _
    $region23: #{segmentation_forward.10} parent=1 // pred_check_branch
      %39 = sbr.rel (0) target = $region25
    $region24: #{segmentation_forward.10} parent=1 // pred_region
      %40 = dma.done [#allocation5], 16
    $region25: #{segmentation_forward.10} parent=1 // pred_fallthru
      _
    %v42 = vld [vmem:[%s0] sm:$0xf]
    %v43 = vld [vmem:[%s0 + $0x4] sm:$0xf]
    %v44 = vld [vmem:[%s0 + $0x8] sm:$0xf]
    %v45 = vld [vmem:[%s0 + $0xc] sm:$0xf]
    %v46 = vld [vmem:[%s0 + $0x10] sm:$0xf]
    %v47 = vld [vmem:[%s0 + $0x14] sm:$0xf]
    %v48 = vld [vmem:[%s0 + $0x18] sm:$0xf]
    %v49 = vld [vmem:[%s0 + $0x1c] sm:$0xf]
    %v50 = vld [vmem:[%s0 + $0x20] sm:$0xf]
    %v51 = vld [vmem:[%s0 + $0x24] sm:$0xf]
    %v52 = vld [vmem:[%s0 + $0x28] sm:$0xf]
    %v53 = vld [vmem:[%s0 + $0x2c] sm:$0xf]
    %v54 = vld [vmem:[%s0 + $0x30] sm:$0xf]
    %v55 = vld [vmem:[%s0 + $0x34] sm:$0xf]
    %v56 = vld [vmem:[%s0 + $0x38] sm:$0xf]
    %v57 = vld [vmem:[%s0 + $0x3c] sm:$0xf]
    %v58 = vld [vmem:[%s1] sm:$0xf]
    %v59 = vld [vmem:[%s1 + $0x4] sm:$0xf]
    %v60 = vld [vmem:[%s1 + $0x8] sm:$0xf]
    %v61 = vld [vmem:[%s1 + $0xc] sm:$0xf]
    %v62 = vld [vmem:[%s1 + $0x10] sm:$0xf]
    %v63 = vld [vmem:[%s1 + $0x14] sm:$0xf]
    %v64 = vld [vmem:[%s1 + $0x18] sm:$0xf]
    %v65 = vld [vmem:[%s1 + $0x1c] sm:$0xf]
    %v66 = vld [vmem:[%s1 + $0x20] sm:$0xf]
    %v67 = vld [vmem:[%s1 + $0x24] sm:$0xf]
    %v68 = vld [vmem:[%s1 + $0x28] sm:$0xf]
    %v69 = vld [vmem:[%s1 + $0x2c] sm:$0xf]
    %v70 = vld [vmem:[%s1 + $0x30] sm:$0xf]
    %v71 = vld [vmem:[%s1 + $0x34] sm:$0xf]
    %v72 = vld [vmem:[%s1 + $0x38] sm:$0xf]
    %v73 = vld [vmem:[%s1 + $0x3c] sm:$0xf]
    %v90 = vunpack.c.l.b16 %v42
    %v91 = vunpack.c.l.b16 %v43
    %v92 = vunpack.c.l.b16 %v44
    %v93 = vunpack.c.l.b16 %v45
    %v94 = vunpack.c.l.b16 %v46
    %v95 = vunpack.c.l.b16 %v47
    %v96 = vunpack.c.l.b16 %v48
    %v97 = vunpack.c.l.b16 %v49
    %v98 = vunpack.c.l.b16 %v50
    %v99 = vunpack.c.l.b16 %v51
    %v100 = vunpack.c.l.b16 %v52
    %v101 = vunpack.c.l.b16 %v53
    %v102 = vunpack.c.l.b16 %v54
    %v103 = vunpack.c.l.b16 %v55
    %v104 = vunpack.c.l.b16 %v56
    %v105 = vunpack.c.l.b16 %v57
    %v106 = vpack.c.b16 %v91, %v90
    %v107 = vpack.c.b16 %v93, %v92
    %v108 = vpack.c.b16 %v95, %v94
    %v109 = vpack.c.b16 %v97, %v96
    %v110 = vpack.c.b16 %v99, %v98
    %v111 = vpack.c.b16 %v101, %v100
    %v112 = vpack.c.b16 %v103, %v102
    %v113 = vpack.c.b16 %v105, %v104
    %v138 = vunpack.c.l.b16 %v58
    %v139 = vunpack.c.l.b16 %v59
    %v140 = vunpack.c.l.b16 %v60
    %v141 = vunpack.c.l.b16 %v61
    %v142 = vunpack.c.l.b16 %v62
    %v143 = vunpack.c.l.b16 %v63
    %v144 = vunpack.c.l.b16 %v64
    %v145 = vunpack.c.l.b16 %v65
    %v146 = vunpack.c.l.b16 %v66
    %v147 = vunpack.c.l.b16 %v67
    %v148 = vunpack.c.l.b16 %v68
    %v149 = vunpack.c.l.b16 %v69
    %v150 = vunpack.c.l.b16 %v70
    %v151 = vunpack.c.l.b16 %v71
    %v152 = vunpack.c.l.b16 %v72
    %v153 = vunpack.c.l.b16 %v73
    %v154 = vpack.c.b16 %v139, %v138
    %v155 = vpack.c.b16 %v141, %v140
    %v156 = vpack.c.b16 %v143, %v142
    %v157 = vpack.c.b16 %v145, %v144
    %v158 = vpack.c.b16 %v147, %v146
    %v159 = vpack.c.b16 %v149, %v148
    %v160 = vpack.c.b16 %v151, %v150
    %v161 = vpack.c.b16 %v153, %v152
    %170 = vmatprep.subr.bf16.mxu0 0
    %171 = vmatpush1.bf16.msra.mxu0 %v154
    %172 = vmatprep.subr.bf16.mxu0 0
    %173 = vmatpush1.bf16.msra.mxu0 %v155
    %174 = vmatprep.subr.bf16.mxu0 0
    %175 = vmatpush1.bf16.msra.mxu0 %v156
    %176 = vmatprep.subr.bf16.mxu0 0
    %177 = vmatpush1.bf16.msra.mxu0 %v157
    %178 = vmatprep.subr.bf16.mxu0 0
    %179 = vmatpush1.bf16.msra.mxu0 %v158
    %180 = vmatprep.subr.bf16.mxu0 0
    %181 = vmatpush1.bf16.msra.mxu0 %v159
    %182 = vmatprep.subr.bf16.mxu0 0
    %183 = vmatpush1.bf16.msra.mxu0 %v160
    %184 = vmatprep.subr.bf16.mxu0 0
    %185 = vmatpush1.bf16.msra.mxu0 %v161
    %186 = vmatprep.subr.bf16.mxu0 0
    %187 = vmatpush1.bf16.msra.mxu0 0
    %188 = vmatprep.subr.bf16.mxu0 0
    %189 = vmatpush1.bf16.msra.mxu0 0
    %190 = vmatprep.subr.bf16.mxu0 0
    %191 = vmatpush1.bf16.msra.mxu0 0
    %192 = vmatprep.subr.bf16.mxu0 0
    %193 = vmatpush1.bf16.msra.mxu0 0
    %194 = vmatprep.subr.bf16.mxu0 0
    %195 = vmatpush1.bf16.msra.mxu0 0
    %196 = vmatprep.subr.bf16.mxu0 0
    %197 = vmatpush1.bf16.msra.mxu0 0
    %198 = vmatprep.subr.bf16.mxu0 0
    %199 = vmatpush1.bf16.msra.mxu0 0
    %200 = vmatprep.subr.bf16.mxu0 0
    %201 = vmatpush1.bf16.msra.mxu0 0
    %202 = vmatprep.mubr.bf16.mxu0 0
    %203 = vmatmul.mubr.bf16.gmra.mrb[0].mxu0 %v106
    %v204 = vpop.f32.mrb[0].mxu0
    %v205 = vadd.f32 0.0, %v204
    %v206 = vpop.f32.mrb[0].mxu0
    %v207 = vpop.f32.mrb[0].mxu0
    %v208 = vadd.f32 0.0, %v207
    %v209 = vpop.f32.mrb[0].mxu0
    %210 = vmatprep.mubr.bf16.mxu0 0
    %211 = vmatmul.mubr.bf16.gmra.mrb[0].mxu0 %v107
    %v212 = vpop.f32.mrb[0].mxu0
    %v213 = vadd.f32 0.0, %v212
    %v214 = vpop.f32.mrb[0].mxu0
    %v215 = vpop.f32.mrb[0].mxu0
    %v216 = vadd.f32 0.0, %v215
    %v217 = vpop.f32.mrb[0].mxu0
    %218 = vmatprep.mubr.bf16.mxu0 0
    %219 = vmatmul.mubr.bf16.gmra.mrb[0].mxu0 %v108
    %v220 = vpop.f32.mrb[0].mxu0
    %v221 = vadd.f32 0.0, %v220
    %v222 = vpop.f32.mrb[0].mxu0
    %v223 = vpop.f32.mrb[0].mxu0
    %v224 = vadd.f32 0.0, %v223
    %v225 = vpop.f32.mrb[0].mxu0
    %226 = vmatprep.mubr.bf16.mxu0 0
    %227 = vmatmul.mubr.bf16.gmra.mrb[0].mxu0 %v109
    %v228 = vpop.f32.mrb[0].mxu0
    %v229 = vadd.f32 0.0, %v228
    %v230 = vpop.f32.mrb[0].mxu0
    %v231 = vpop.f32.mrb[0].mxu0
    %v232 = vadd.f32 0.0, %v231
    %v233 = vpop.f32.mrb[0].mxu0
    %234 = vmatprep.mubr.bf16.mxu0 0
    %235 = vmatmul.mubr.bf16.gmra.mrb[0].mxu0 %v110
    %v236 = vpop.f32.mrb[0].mxu0
    %v237 = vadd.f32 0.0, %v236
    %v238 = vpop.f32.mrb[0].mxu0
    %v239 = vpop.f32.mrb[0].mxu0
    %v240 = vadd.f32 0.0, %v239
    %v241 = vpop.f32.mrb[0].mxu0
    %242 = vmatprep.mubr.bf16.mxu0 0
    %243 = vmatmul.mubr.bf16.gmra.mrb[0].mxu0 %v111
    %v244 = vpop.f32.mrb[0].mxu0
    %v245 = vadd.f32 0.0, %v244
    %v246 = vpop.f32.mrb[0].mxu0
    %v247 = vpop.f32.mrb[0].mxu0
    %v248 = vadd.f32 0.0, %v247
    %v249 = vpop.f32.mrb[0].mxu0
    %250 = vmatprep.mubr.bf16.mxu0 0
    %251 = vmatmul.mubr.bf16.gmra.mrb[0].mxu0 %v112
    %v252 = vpop.f32.mrb[0].mxu0
    %v253 = vadd.f32 0.0, %v252
    %v254 = vpop.f32.mrb[0].mxu0
    %v255 = vpop.f32.mrb[0].mxu0
    %v256 = vadd.f32 0.0, %v255
    %v257 = vpop.f32.mrb[0].mxu0
    %258 = vmatprep.mubr.bf16.mxu0 0
    %259 = vmatmul.mubr.bf16.gmra.mrb[0].mxu0 %v113
    %v260 = vpop.f32.mrb[0].mxu0
    %v261 = vadd.f32 0.0, %v260
    %v262 = vpop.f32.mrb[0].mxu0
    %v263 = vpop.f32.mrb[0].mxu0
    %v264 = vadd.f32 0.0, %v263
    %v265 = vpop.f32.mrb[0].mxu0
    %266 = vdwg.mxu0
    %v267 = vld [vmem:[#allocation2] sm:$0x1]
    %v269 = vlaneseq
    %v270 = vshrl.u32 %v269, 7
    %v271 = vsub.s32 0, %v270
    %v272 = vrot.slane %v267, %v271
    %v274 = vmul.f32 %v205, %v272
    %v275 = vmul.f32 %v208, %v272
    %v276 = vmul.f32 %v213, %v272
    %v277 = vmul.f32 %v216, %v272
    %v278 = vmul.f32 %v221, %v272
    %v279 = vmul.f32 %v224, %v272
    %v280 = vmul.f32 %v229, %v272
    %v281 = vmul.f32 %v232, %v272
    %v282 = vmul.f32 %v237, %v272
    %v283 = vmul.f32 %v240, %v272
    %v284 = vmul.f32 %v245, %v272
    %v285 = vmul.f32 %v248, %v272
    %v286 = vmul.f32 %v253, %v272
    %v287 = vmul.f32 %v256, %v272
    %v288 = vmul.f32 %v261, %v272
    %v289 = vmul.f32 %v264, %v272
    %v290 = vld [vmem:[#allocation4] sm:$0x1]
    %v292 = vlaneseq
    %v293 = vshrl.u32 %v292, 7
    %v294 = vsub.s32 0, %v293
    %v295 = vrot.slane %v290, %v294
    %v297 = vadd.f32 %v274, %v295
    %v298 = vadd.f32 %v275, %v295
    %v299 = vadd.f32 %v276, %v295
    %v300 = vadd.f32 %v277, %v295
    %v301 = vadd.f32 %v278, %v295
    %v302 = vadd.f32 %v279, %v295
    %v303 = vadd.f32 %v280, %v295
    %v304 = vadd.f32 %v281, %v295
    %v305 = vadd.f32 %v282, %v295
    %v306 = vadd.f32 %v283, %v295
    %v307 = vadd.f32 %v284, %v295
    %v308 = vadd.f32 %v285, %v295
    %v309 = vadd.f32 %v286, %v295
    %v310 = vadd.f32 %v287, %v295
    %v311 = vadd.f32 %v288, %v295
    %v312 = vadd.f32 %v289, %v295
    %v313 = vmax.f32 %v297, 0.0
    %v314 = vmax.f32 %v298, 0.0
    %v315 = vmax.f32 %v299, 0.0
    %v316 = vmax.f32 %v300, 0.0
    %v317 = vmax.f32 %v301, 0.0
    %v318 = vmax.f32 %v302, 0.0
    %v319 = vmax.f32 %v303, 0.0
    %v320 = vmax.f32 %v304, 0.0
    %v321 = vmax.f32 %v305, 0.0
    %v322 = vmax.f32 %v306, 0.0
    %v323 = vmax.f32 %v307, 0.0
    %v324 = vmax.f32 %v308, 0.0
    %v325 = vmax.f32 %v309, 0.0
    %v326 = vmax.f32 %v310, 0.0
    %v327 = vmax.f32 %v311, 0.0
    %v328 = vmax.f32 %v312, 0.0
    %v329 = vpack.c.bf16 %v314, %v313
    %v330 = vpack.c.bf16 %v316, %v315
    %v331 = vpack.c.bf16 %v318, %v317
    %v332 = vpack.c.bf16 %v320, %v319
    %v333 = vpack.c.bf16 %v322, %v321
    %v334 = vpack.c.bf16 %v324, %v323
    %v335 = vpack.c.bf16 %v326, %v325
    %v336 = vpack.c.bf16 %v328, %v327
    %v345 = vunpack.c.l.b16 %v329
    %v346 = vunpack.c.h.b16 %v329
    %v347 = vunpack.c.l.b16 %v330
    %v348 = vunpack.c.h.b16 %v330
    %v349 = vunpack.c.l.b16 %v331
    %v350 = vunpack.c.h.b16 %v331
    %v351 = vunpack.c.l.b16 %v332
    %v352 = vunpack.c.h.b16 %v332
    %v353 = vunpack.c.l.b16 %v333
    %v354 = vunpack.c.h.b16 %v333
    %v355 = vunpack.c.l.b16 %v334
    %v356 = vunpack.c.h.b16 %v334
    %v357 = vunpack.c.l.b16 %v335
    %v358 = vunpack.c.h.b16 %v335
    %v359 = vunpack.c.l.b16 %v336
    %v360 = vunpack.c.h.b16 %v336
    %v361 = vpack.c.b16 %v345, %v345
    %v362 = vpack.c.b16 %v346, %v346
    %v363 = vpack.c.b16 %v347, %v347
    %v364 = vpack.c.b16 %v348, %v348
    %v365 = vpack.c.b16 %v349, %v349
    %v366 = vpack.c.b16 %v350, %v350
    %v367 = vpack.c.b16 %v351, %v351
    %v368 = vpack.c.b16 %v352, %v352
    %v369 = vpack.c.b16 %v353, %v353
    %v370 = vpack.c.b16 %v354, %v354
    %v371 = vpack.c.b16 %v355, %v355
    %v372 = vpack.c.b16 %v356, %v356
    %v373 = vpack.c.b16 %v357, %v357
    %v374 = vpack.c.b16 %v358, %v358
    %v375 = vpack.c.b16 %v359, %v359
    %v376 = vpack.c.b16 %v360, %v360
    %vm393 = vcmask 257024
    %394 = vst.msk [vmem:[%s4] sm:$0xf] %vm393, %v361
    %395 = vst.msk [vmem:[%s4 + $0x4] sm:$0xf] %vm393, %v362
    %396 = vst.msk [vmem:[%s4 + $0x8] sm:$0xf] %vm393, %v363
    %397 = vst.msk [vmem:[%s4 + $0xc] sm:$0xf] %vm393, %v364
    %398 = vst.msk [vmem:[%s4 + $0x10] sm:$0xf] %vm393, %v365
    %399 = vst.msk [vmem:[%s4 + $0x14] sm:$0xf] %vm393, %v366
    %400 = vst.msk [vmem:[%s4 + $0x18] sm:$0xf] %vm393, %v367
    %401 = vst.msk [vmem:[%s4 + $0x1c] sm:$0xf] %vm393, %v368
    %402 = vst.msk [vmem:[%s4 + $0x20] sm:$0xf] %vm393, %v369
    %403 = vst.msk [vmem:[%s4 + $0x24] sm:$0xf] %vm393, %v370
    %404 = vst.msk [vmem:[%s4 + $0x28] sm:$0xf] %vm393, %v371
    %405 = vst.msk [vmem:[%s4 + $0x2c] sm:$0xf] %vm393, %v372
    %406 = vst.msk [vmem:[%s4 + $0x30] sm:$0xf] %vm393, %v373
    %407 = vst.msk [vmem:[%s4 + $0x34] sm:$0xf] %vm393, %v374
    %408 = vst.msk [vmem:[%s4 + $0x38] sm:$0xf] %vm393, %v375
    %409 = vst.msk [vmem:[%s4 + $0x3c] sm:$0xf] %vm393, %v376
    // Predicated region
    $region26: #{segmentation_forward.10} parent=1 // pred_check
      _
    $region27: #{segmentation_forward.10} parent=1 // pred_check_branch
      %411 = sbr.rel (0) target = $region29
    $region28: #{segmentation_forward.10} parent=1 // pred_region
      _
    $region29: #{segmentation_forward.10} parent=1 // pred_fallthru
      _
    // Predicated region
    $region30: #{segmentation_forward.10} parent=1 // pred_check
      _
    $region31: #{segmentation_forward.10} parent=1 // pred_check_branch
      %413 = sbr.rel (0) target = $region33
    $region32: #{segmentation_forward.10} parent=1 // pred_region
      _
    $region33: #{segmentation_forward.10} parent=1 // pred_fallthru
      _
    %414 = vsyncpa [#allocation3], 1
    %415 = vsyncpa [#allocation5], 1

// kernel: segmentation_forward.11
$region0: #{segmentation_forward.11}
  #allocation0 [shape = 'u32[]', space=smem, size = 0x4, offset = 0x4, fixed_abs, tag = 'smem constant byte address 0x4 - core index']
  #allocation1 [shape = 'u32[144,128]{1,0:T(1,128)}', space=vmem, size = 0x12000, scoped, tag = 'internal scratch']
  %s0 = inlined_call_operand.vmem [shape: bf16[128,128], index: 0, kind: input, shape index: {}]
  %s1 = inlined_call_operand.hbm [shape: bf16[128,128], index: 1, kind: input, shape index: {}]
  %s2 = inlined_call_operand.hbm [shape: f32[1,128], index: 2, kind: input, shape index: {}]
  %s3 = inlined_call_operand.hbm [shape: f32[1,128], index: 3, kind: input, shape index: {}]
  %s4 = inlined_call_operand.vmem [shape: bf16[128,128], index: 4, kind: output, shape index: {}]
  %s5 = sld [smem:[#allocation0]]
  $region38: #{segmentation_forward.11} parent=0
    _
  %s7 = ssub.s32 1, %s5
  %s8 = scalar_select 0, %s7, %s5
  $region1: #{segmentation_forward.11} parent=0
    #allocation2 [shape = 'u8[32768]{0}', space=vmem, size = 0x8000, scoped, tag = 'input window, operand 1, single buffered']
    #allocation3 [shape = 's32[1]{0}', space=sflag, size = 0x4, scoped, tag = 'scoped memory for segmentation_forward.11']
    #allocation4 [shape = 'u8[512]{0}', space=vmem, size = 0x400, scoped, tag = 'input window, operand 2, single buffered']
    #allocation5 [shape = 's32[1]{0}', space=sflag, size = 0x4, scoped, tag = 'scoped memory for segmentation_forward.11']
    #allocation6 [shape = 'u8[512]{0}', space=vmem, size = 0x400, scoped, tag = 'input window, operand 3, single buffered']
    %9 = vsyncpa [#allocation3], 0
    %10 = vsyncpa [#allocation5], 0
    // Predicated region
    $region2: #{segmentation_forward.11} parent=1 // pred_check
      _
    $region3: #{segmentation_forward.11} parent=1 // pred_check_branch
      %12 = sbr.rel (0) target = $region5
    $region4: #{segmentation_forward.11} parent=1 // pred_region
      _
    $region5: #{segmentation_forward.11} parent=1 // pred_fallthru
      _
    // Predicated region
    $region6: #{segmentation_forward.11} parent=1 // pred_check
      _
    $region7: #{segmentation_forward.11} parent=1 // pred_check_branch
      %14 = sbr.rel (0) target = $region9
    $region8: #{segmentation_forward.11} parent=1 // pred_region
      %s16 = ssub.s32 1024, 1024
      %17 = vsyncadd [#allocation3], %s16
      %s18 = sshll.u32 [#allocation2], 4
      %s19 = int_to_ptr.vmem [resolvable:$true] %s18
      %24 = dma.hbm_to_vmem [thread:$0]  %s1, 1024, %s19, [#allocation3], 64, 64, 4
    $region9: #{segmentation_forward.11} parent=1 // pred_fallthru
      _
    // Predicated region
    $region10: #{segmentation_forward.11} parent=1 // pred_check
      _
    $region11: #{segmentation_forward.11} parent=1 // pred_check_branch
      %26 = sbr.rel (0) target = $region13
    $region12: #{segmentation_forward.11} parent=1 // pred_region
      %s28 = ssub.s32 16, 16
      %29 = vsyncadd [#allocation5], %s28
      %s31 = sshll.u32 [#allocation4], 4
      %s32 = int_to_ptr.vmem [resolvable:$true] %s31
      %34 = dma.hbm_to_vmem [thread:$0]  %s2, 16, %s32, [#allocation5]
    $region13: #{segmentation_forward.11} parent=1 // pred_fallthru
      _
    // Predicated region
    $region14: #{segmentation_forward.11} parent=1 // pred_check
      _
    $region15: #{segmentation_forward.11} parent=1 // pred_check_branch
      %36 = sbr.rel (0) target = $region17
    $region16: #{segmentation_forward.11} parent=1 // pred_region
      %s38 = ssub.s32 16, 16
      %39 = vsyncadd [#allocation5], %s38
      %s41 = sshll.u32 [#allocation6], 4
      %s42 = int_to_ptr.vmem [resolvable:$true] %s41
      %44 = dma.hbm_to_vmem [thread:$0]  %s3, 16, %s42, [#allocation5]
    $region17: #{segmentation_forward.11} parent=1 // pred_fallthru
      _
    // Predicated region
    $region18: #{segmentation_forward.11} parent=1 // pred_check
      _
    $region19: #{segmentation_forward.11} parent=1 // pred_check_branch
      %46 = sbr.rel (0) target = $region21
    $region20: #{segmentation_forward.11} parent=1 // pred_region
      %47 = dma.done [#allocation3], 1024
    $region21: #{segmentation_forward.11} parent=1 // pred_fallthru
      _
    // Predicated region
    $region22: #{segmentation_forward.11} parent=1 // pred_check
      _
    $region23: #{segmentation_forward.11} parent=1 // pred_check_branch
      %49 = sbr.rel (0) target = $region25
    $region24: #{segmentation_forward.11} parent=1 // pred_region
      %50 = dma.done [#allocation5], 16
    $region25: #{segmentation_forward.11} parent=1 // pred_fallthru
      _
    // Predicated region
    $region26: #{segmentation_forward.11} parent=1 // pred_check
      _
    $region27: #{segmentation_forward.11} parent=1 // pred_check_branch
      %52 = sbr.rel (0) target = $region29
    $region28: #{segmentation_forward.11} parent=1 // pred_region
      %53 = dma.done [#allocation5], 16
    $region29: #{segmentation_forward.11} parent=1 // pred_fallthru
      _
    %v55 = vld [vmem:[%s0] sm:$0xf]
    %v56 = vld [vmem:[%s0 + $0x4] sm:$0xf]
    %v57 = vld [vmem:[%s0 + $0x8] sm:$0xf]
    %v58 = vld [vmem:[%s0 + $0xc] sm:$0xf]
    %v59 = vld [vmem:[%s0 + $0x10] sm:$0xf]
    %v60 = vld [vmem:[%s0 + $0x14] sm:$0xf]
    %v61 = vld [vmem:[%s0 + $0x18] sm:$0xf]
    %v62 = vld [vmem:[%s0 + $0x1c] sm:$0xf]
    %v63 = vld [vmem:[%s0 + $0x20] sm:$0xf]
    %v64 = vld [vmem:[%s0 + $0x24] sm:$0xf]
    %v65 = vld [vmem:[%s0 + $0x28] sm:$0xf]
    %v66 = vld [vmem:[%s0 + $0x2c] sm:$0xf]
    %v67 = vld [vmem:[%s0 + $0x30] sm:$0xf]
    %v68 = vld [vmem:[%s0 + $0x34] sm:$0xf]
    %v69 = vld [vmem:[%s0 + $0x38] sm:$0xf]
    %v70 = vld [vmem:[%s0 + $0x3c] sm:$0xf]
    %v71 = vld [vmem:[#allocation2] sm:$0xf]
    %v72 = vld [vmem:[#allocation2 + $0x4] sm:$0xf]
    %v73 = vld [vmem:[#allocation2 + $0x8] sm:$0xf]
    %v74 = vld [vmem:[#allocation2 + $0xc] sm:$0xf]
    %v75 = vld [vmem:[#allocation2 + $0x10] sm:$0xf]
    %v76 = vld [vmem:[#allocation2 + $0x14] sm:$0xf]
    %v77 = vld [vmem:[#allocation2 + $0x18] sm:$0xf]
    %v78 = vld [vmem:[#allocation2 + $0x1c] sm:$0xf]
    %v79 = vld [vmem:[#allocation2 + $0x20] sm:$0xf]
    %v80 = vld [vmem:[#allocation2 + $0x24] sm:$0xf]
    %v81 = vld [vmem:[#allocation2 + $0x28] sm:$0xf]
    %v82 = vld [vmem:[#allocation2 + $0x2c] sm:$0xf]
    %v83 = vld [vmem:[#allocation2 + $0x30] sm:$0xf]
    %v84 = vld [vmem:[#allocation2 + $0x34] sm:$0xf]
    %v85 = vld [vmem:[#allocation2 + $0x38] sm:$0xf]
    %v86 = vld [vmem:[#allocation2 + $0x3c] sm:$0xf]
    %v103 = vunpack.c.l.b16 %v55
    %v104 = vunpack.c.l.b16 %v56
    %v105 = vunpack.c.l.b16 %v57
    %v106 = vunpack.c.l.b16 %v58
    %v107 = vunpack.c.l.b16 %v59
    %v108 = vunpack.c.l.b16 %v60
    %v109 = vunpack.c.l.b16 %v61
    %v110 = vunpack.c.l.b16 %v62
    %v111 = vunpack.c.l.b16 %v63
    %v112 = vunpack.c.l.b16 %v64
    %v113 = vunpack.c.l.b16 %v65
    %v114 = vunpack.c.l.b16 %v66
    %v115 = vunpack.c.l.b16 %v67
    %v116 = vunpack.c.l.b16 %v68
    %v117 = vunpack.c.l.b16 %v69
    %v118 = vunpack.c.l.b16 %v70
    %v119 = vpack.c.b16 %v104, %v103
    %v120 = vpack.c.b16 %v106, %v105
    %v121 = vpack.c.b16 %v108, %v107
    %v122 = vpack.c.b16 %v110, %v109
    %v123 = vpack.c.b16 %v112, %v111
    %v124 = vpack.c.b16 %v114, %v113
    %v125 = vpack.c.b16 %v116, %v115
    %v126 = vpack.c.b16 %v118, %v117
    %v151 = vunpack.c.l.b16 %v71
    %v152 = vunpack.c.l.b16 %v72
    %v153 = vunpack.c.l.b16 %v73
    %v154 = vunpack.c.l.b16 %v74
    %v155 = vunpack.c.l.b16 %v75
    %v156 = vunpack.c.l.b16 %v76
    %v157 = vunpack.c.l.b16 %v77
    %v158 = vunpack.c.l.b16 %v78
    %v159 = vunpack.c.l.b16 %v79
    %v160 = vunpack.c.l.b16 %v80
    %v161 = vunpack.c.l.b16 %v81
    %v162 = vunpack.c.l.b16 %v82
    %v163 = vunpack.c.l.b16 %v83
    %v164 = vunpack.c.l.b16 %v84
    %v165 = vunpack.c.l.b16 %v85
    %v166 = vunpack.c.l.b16 %v86
    %v167 = vpack.c.b16 %v152, %v151
    %v168 = vpack.c.b16 %v154, %v153
    %v169 = vpack.c.b16 %v156, %v155
    %v170 = vpack.c.b16 %v158, %v157
    %v171 = vpack.c.b16 %v160, %v159
    %v172 = vpack.c.b16 %v162, %v161
    %v173 = vpack.c.b16 %v164, %v163
    %v174 = vpack.c.b16 %v166, %v165
    %183 = vmatprep.subr.bf16.mxu0 0
    %184 = vmatpush1.bf16.msra.mxu0 %v167
    %185 = vmatprep.subr.bf16.mxu0 0
    %186 = vmatpush1.bf16.msra.mxu0 %v168
    %187 = vmatprep.subr.bf16.mxu0 0
    %188 = vmatpush1.bf16.msra.mxu0 %v169
    %189 = vmatprep.subr.bf16.mxu0 0
    %190 = vmatpush1.bf16.msra.mxu0 %v170
    %191 = vmatprep.subr.bf16.mxu0 0
    %192 = vmatpush1.bf16.msra.mxu0 %v171
    %193 = vmatprep.subr.bf16.mxu0 0
    %194 = vmatpush1.bf16.msra.mxu0 %v172
    %195 = vmatprep.subr.bf16.mxu0 0
    %196 = vmatpush1.bf16.msra.mxu0 %v173
    %197 = vmatprep.subr.bf16.mxu0 0
    %198 = vmatpush1.bf16.msra.mxu0 %v174
    %199 = vmatprep.subr.bf16.mxu0 0
    %200 = vmatpush1.bf16.msra.mxu0 0
    %201 = vmatprep.subr.bf16.mxu0 0
    %202 = vmatpush1.bf16.msra.mxu0 0
    %203 = vmatprep.subr.bf16.mxu0 0
    %204 = vmatpush1.bf16.msra.mxu0 0
    %205 = vmatprep.subr.bf16.mxu0 0
    %206 = vmatpush1.bf16.msra.mxu0 0
    %207 = vmatprep.subr.bf16.mxu0 0
    %208 = vmatpush1.bf16.msra.mxu0 0
    %209 = vmatprep.subr.bf16.mxu0 0
    %210 = vmatpush1.bf16.msra.mxu0 0
    %211 = vmatprep.subr.bf16.mxu0 0
    %212 = vmatpush1.bf16.msra.mxu0 0
    %213 = vmatprep.subr.bf16.mxu0 0
    %214 = vmatpush1.bf16.msra.mxu0 0
    %215 = vmatprep.mubr.bf16.mxu0 0
    %216 = vmatmul.mubr.bf16.gmra.mrb[0].mxu0 %v119
    %v217 = vpop.f32.mrb[0].mxu0
    %v218 = vadd.f32 0.0, %v217
    %v219 = vpop.f32.mrb[0].mxu0
    %v220 = vpop.f32.mrb[0].mxu0
    %v221 = vadd.f32 0.0, %v220
    %v222 = vpop.f32.mrb[0].mxu0
    %223 = vmatprep.mubr.bf16.mxu0 0
    %224 = vmatmul.mubr.bf16.gmra.mrb[0].mxu0 %v120
    %v225 = vpop.f32.mrb[0].mxu0
    %v226 = vadd.f32 0.0, %v225
    %v227 = vpop.f32.mrb[0].mxu0
    %v228 = vpop.f32.mrb[0].mxu0
    %v229 = vadd.f32 0.0, %v228
    %v230 = vpop.f32.mrb[0].mxu0
    %231 = vmatprep.mubr.bf16.mxu0 0
    %232 = vmatmul.mubr.bf16.gmra.mrb[0].mxu0 %v121
    %v233 = vpop.f32.mrb[0].mxu0
    %v234 = vadd.f32 0.0, %v233
    %v235 = vpop.f32.mrb[0].mxu0
    %v236 = vpop.f32.mrb[0].mxu0
    %v237 = vadd.f32 0.0, %v236
    %v238 = vpop.f32.mrb[0].mxu0
    %239 = vmatprep.mubr.bf16.mxu0 0
    %240 = vmatmul.mubr.bf16.gmra.mrb[0].mxu0 %v122
    %v241 = vpop.f32.mrb[0].mxu0
    %v242 = vadd.f32 0.0, %v241
    %v243 = vpop.f32.mrb[0].mxu0
    %v244 = vpop.f32.mrb[0].mxu0
    %v245 = vadd.f32 0.0, %v244
    %v246 = vpop.f32.mrb[0].mxu0
    %247 = vmatprep.mubr.bf16.mxu0 0
    %248 = vmatmul.mubr.bf16.gmra.mrb[0].mxu0 %v123
    %v249 = vpop.f32.mrb[0].mxu0
    %v250 = vadd.f32 0.0, %v249
    %v251 = vpop.f32.mrb[0].mxu0
    %v252 = vpop.f32.mrb[0].mxu0
    %v253 = vadd.f32 0.0, %v252
    %v254 = vpop.f32.mrb[0].mxu0
    %255 = vmatprep.mubr.bf16.mxu0 0
    %256 = vmatmul.mubr.bf16.gmra.mrb[0].mxu0 %v124
    %v257 = vpop.f32.mrb[0].mxu0
    %v258 = vadd.f32 0.0, %v257
    %v259 = vpop.f32.mrb[0].mxu0
    %v260 = vpop.f32.mrb[0].mxu0
    %v261 = vadd.f32 0.0, %v260
    %v262 = vpop.f32.mrb[0].mxu0
    %263 = vmatprep.mubr.bf16.mxu0 0
    %264 = vmatmul.mubr.bf16.gmra.mrb[0].mxu0 %v125
    %v265 = vpop.f32.mrb[0].mxu0
    %v266 = vadd.f32 0.0, %v265
    %v267 = vpop.f32.mrb[0].mxu0
    %v268 = vpop.f32.mrb[0].mxu0
    %v269 = vadd.f32 0.0, %v268
    %v270 = vpop.f32.mrb[0].mxu0
    %271 = vmatprep.mubr.bf16.mxu0 0
    %272 = vmatmul.mubr.bf16.gmra.mrb[0].mxu0 %v126
    %v273 = vpop.f32.mrb[0].mxu0
    %v274 = vadd.f32 0.0, %v273
    %v275 = vpop.f32.mrb[0].mxu0
    %v276 = vpop.f32.mrb[0].mxu0
    %v277 = vadd.f32 0.0, %v276
    %v278 = vpop.f32.mrb[0].mxu0
    %279 = vdwg.mxu0
    %v280 = vld [vmem:[#allocation4] sm:$0x1]
    %v282 = vlaneseq
    %v283 = vshrl.u32 %v282, 7
    %v284 = vsub.s32 0, %v283
    %v285 = vrot.slane %v280, %v284
    %v287 = vmul.f32 %v218, %v285
    %v288 = vmul.f32 %v221, %v285
    %v289 = vmul.f32 %v226, %v285
    %v290 = vmul.f32 %v229, %v285
    %v291 = vmul.f32 %v234, %v285
    %v292 = vmul.f32 %v237, %v285
    %v293 = vmul.f32 %v242, %v285
    %v294 = vmul.f32 %v245, %v285
    %v295 = vmul.f32 %v250, %v285
    %v296 = vmul.f32 %v253, %v285
    %v297 = vmul.f32 %v258, %v285
    %v298 = vmul.f32 %v261, %v285
    %v299 = vmul.f32 %v266, %v285
    %v300 = vmul.f32 %v269, %v285
    %v301 = vmul.f32 %v274, %v285
    %v302 = vmul.f32 %v277, %v285
    %v303 = vld [vmem:[#allocation6] sm:$0x1]
    %v305 = vlaneseq
    %v306 = vshrl.u32 %v305, 7
    %v307 = vsub.s32 0, %v306
    %v308 = vrot.slane %v303, %v307
    %v310 = vadd.f32 %v287, %v308
    %v311 = vadd.f32 %v288, %v308
    %v312 = vadd.f32 %v289, %v308
    %v313 = vadd.f32 %v290, %v308
    %v314 = vadd.f32 %v291, %v308
    %v315 = vadd.f32 %v292, %v308
    %v316 = vadd.f32 %v293, %v308
    %v317 = vadd.f32 %v294, %v308
    %v318 = vadd.f32 %v295, %v308
    %v319 = vadd.f32 %v296, %v308
    %v320 = vadd.f32 %v297, %v308
    %v321 = vadd.f32 %v298, %v308
    %v322 = vadd.f32 %v299, %v308
    %v323 = vadd.f32 %v300, %v308
    %v324 = vadd.f32 %v301, %v308
    %v325 = vadd.f32 %v302, %v308
    %v326 = vmax.f32 %v310, 0.0
    %v327 = vmax.f32 %v311, 0.0
    %v328 = vmax.f32 %v312, 0.0
    %v329 = vmax.f32 %v313, 0.0
    %v330 = vmax.f32 %v314, 0.0
    %v331 = vmax.f32 %v315, 0.0
    %v332 = vmax.f32 %v316, 0.0
    %v333 = vmax.f32 %v317, 0.0
    %v334 = vmax.f32 %v318, 0.0
    %v335 = vmax.f32 %v319, 0.0
    %v336 = vmax.f32 %v320, 0.0
    %v337 = vmax.f32 %v321, 0.0
    %v338 = vmax.f32 %v322, 0.0
    %v339 = vmax.f32 %v323, 0.0
    %v340 = vmax.f32 %v324, 0.0
    %v341 = vmax.f32 %v325, 0.0
    %v342 = vpack.c.bf16 %v327, %v326
    %v343 = vpack.c.bf16 %v329, %v328
    %v344 = vpack.c.bf16 %v331, %v330
    %v345 = vpack.c.bf16 %v333, %v332
    %v346 = vpack.c.bf16 %v335, %v334
    %v347 = vpack.c.bf16 %v337, %v336
    %v348 = vpack.c.bf16 %v339, %v338
    %v349 = vpack.c.bf16 %v341, %v340
    %v358 = vunpack.c.l.b16 %v342
    %v359 = vunpack.c.h.b16 %v342
    %v360 = vunpack.c.l.b16 %v343
    %v361 = vunpack.c.h.b16 %v343
    %v362 = vunpack.c.l.b16 %v344
    %v363 = vunpack.c.h.b16 %v344
    %v364 = vunpack.c.l.b16 %v345
    %v365 = vunpack.c.h.b16 %v345
    %v366 = vunpack.c.l.b16 %v346
    %v367 = vunpack.c.h.b16 %v346
    %v368 = vunpack.c.l.b16 %v347
    %v369 = vunpack.c.h.b16 %v347
    %v370 = vunpack.c.l.b16 %v348
    %v371 = vunpack.c.h.b16 %v348
    %v372 = vunpack.c.l.b16 %v349
    %v373 = vunpack.c.h.b16 %v349
    %v374 = vpack.c.b16 %v358, %v358
    %v375 = vpack.c.b16 %v359, %v359
    %v376 = vpack.c.b16 %v360, %v360
    %v377 = vpack.c.b16 %v361, %v361
    %v378 = vpack.c.b16 %v362, %v362
    %v379 = vpack.c.b16 %v363, %v363
    %v380 = vpack.c.b16 %v364, %v364
    %v381 = vpack.c.b16 %v365, %v365
    %v382 = vpack.c.b16 %v366, %v366
    %v383 = vpack.c.b16 %v367, %v367
    %v384 = vpack.c.b16 %v368, %v368
    %v385 = vpack.c.b16 %v369, %v369
    %v386 = vpack.c.b16 %v370, %v370
    %v387 = vpack.c.b16 %v371, %v371
    %v388 = vpack.c.b16 %v372, %v372
    %v389 = vpack.c.b16 %v373, %v373
    %406 = vst [vmem:[%s4] sm:$0xf] %v374
    %407 = vst [vmem:[%s4 + $0x4] sm:$0xf] %v375
    %408 = vst [vmem:[%s4 + $0x8] sm:$0xf] %v376
    %409 = vst [vmem:[%s4 + $0xc] sm:$0xf] %v377
    %410 = vst [vmem:[%s4 + $0x10] sm:$0xf] %v378
    %411 = vst [vmem:[%s4 + $0x14] sm:$0xf] %v379
    %412 = vst [vmem:[%s4 + $0x18] sm:$0xf] %v380
    %413 = vst [vmem:[%s4 + $0x1c] sm:$0xf] %v381
    %414 = vst [vmem:[%s4 + $0x20] sm:$0xf] %v382
    %415 = vst [vmem:[%s4 + $0x24] sm:$0xf] %v383
    %416 = vst [vmem:[%s4 + $0x28] sm:$0xf] %v384
    %417 = vst [vmem:[%s4 + $0x2c] sm:$0xf] %v385
    %418 = vst [vmem:[%s4 + $0x30] sm:$0xf] %v386
    %419 = vst [vmem:[%s4 + $0x34] sm:$0xf] %v387
    %420 = vst [vmem:[%s4 + $0x38] sm:$0xf] %v388
    %421 = vst [vmem:[%s4 + $0x3c] sm:$0xf] %v389
    // Predicated region
    $region30: #{segmentation_forward.11} parent=1 // pred_check
      _
    $region31: #{segmentation_forward.11} parent=1 // pred_check_branch
      %423 = sbr.rel (0) target = $region33
    $region32: #{segmentation_forward.11} parent=1 // pred_region
      _
    $region33: #{segmentation_forward.11} parent=1 // pred_fallthru
      _
    // Predicated region
    $region34: #{segmentation_forward.11} parent=1 // pred_check
      _
    $region35: #{segmentation_forward.11} parent=1 // pred_check_branch
      %425 = sbr.rel (0) target = $region37
    $region36: #{segmentation_forward.11} parent=1 // pred_region
      _
    $region37: #{segmentation_forward.11} parent=1 // pred_fallthru
      _
    %426 = vsyncpa [#allocation3], 1
    %427 = vsyncpa [#allocation5], 1

// kernel: segmentation_forward.12
$region0: #{segmentation_forward.12}
  #allocation0 [shape = 'u32[]', space=smem, size = 0x4, offset = 0x4, fixed_abs, tag = 'smem constant byte address 0x4 - core index']
  #allocation1 [shape = 'u32[144,128]{1,0:T(1,128)}', space=vmem, size = 0x12000, scoped, tag = 'internal scratch']
  %s0 = inlined_call_operand.vmem [shape: bf16[512,32], index: 0, kind: input, shape index: {}]
  %s1 = inlined_call_operand.hbm [shape: bf16[32,64], index: 1, kind: input, shape index: {}]
  %s2 = inlined_call_operand.hbm [shape: f32[1,64], index: 2, kind: input, shape index: {}]
  %s3 = inlined_call_operand.hbm [shape: f32[1,64], index: 3, kind: input, shape index: {}]
  %s4 = inlined_call_operand.vmem [shape: bf16[512,64], index: 4, kind: output, shape index: {}]
  %s5 = sld [smem:[#allocation0]]
  $region38: #{segmentation_forward.12} parent=0
    _
  %s7 = ssub.s32 1, %s5
  %s8 = scalar_select 0, %s7, %s5
  $region1: #{segmentation_forward.12} parent=0
    #allocation2 [shape = 'u8[8192]{0}', space=vmem, size = 0x2000, scoped, tag = 'input window, operand 1, single buffered']
    #allocation3 [shape = 's32[1]{0}', space=sflag, size = 0x4, scoped, tag = 'scoped memory for segmentation_forward.12']
    #allocation4 [shape = 'u8[512]{0}', space=vmem, size = 0x400, scoped, tag = 'input window, operand 2, single buffered']
    #allocation5 [shape = 's32[1]{0}', space=sflag, size = 0x4, scoped, tag = 'scoped memory for segmentation_forward.12']
    #allocation6 [shape = 'u8[512]{0}', space=vmem, size = 0x400, scoped, tag = 'input window, operand 3, single buffered']
    %9 = vsyncpa [#allocation3], 0
    %10 = vsyncpa [#allocation5], 0
    // Predicated region
    $region2: #{segmentation_forward.12} parent=1 // pred_check
      _
    $region3: #{segmentation_forward.12} parent=1 // pred_check_branch
      %12 = sbr.rel (0) target = $region5
    $region4: #{segmentation_forward.12} parent=1 // pred_region
      _
    $region5: #{segmentation_forward.12} parent=1 // pred_fallthru
      _
    // Predicated region
    $region6: #{segmentation_forward.12} parent=1 // pred_check
      _
    $region7: #{segmentation_forward.12} parent=1 // pred_check_branch
      %14 = sbr.rel (0) target = $region9
    $region8: #{segmentation_forward.12} parent=1 // pred_region
      %s16 = ssub.s32 256, 256
      %17 = vsyncadd [#allocation3], %s16
      %s18 = sshll.u32 [#allocation2], 4
      %s19 = int_to_ptr.vmem [resolvable:$true] %s18
      %24 = dma.hbm_to_vmem [thread:$0]  %s1, 256, %s19, [#allocation3], 64, 64, 4
    $region9: #{segmentation_forward.12} parent=1 // pred_fallthru
      _
    // Predicated region
    $region10: #{segmentation_forward.12} parent=1 // pred_check
      _
    $region11: #{segmentation_forward.12} parent=1 // pred_check_branch
      %26 = sbr.rel (0) target = $region13
    $region12: #{segmentation_forward.12} parent=1 // pred_region
      %s28 = ssub.s32 16, 16
      %29 = vsyncadd [#allocation5], %s28
      %s31 = sshll.u32 [#allocation4], 4
      %s32 = int_to_ptr.vmem [resolvable:$true] %s31
      %34 = dma.hbm_to_vmem [thread:$0]  %s2, 16, %s32, [#allocation5]
    $region13: #{segmentation_forward.12} parent=1 // pred_fallthru
      _
    // Predicated region
    $region14: #{segmentation_forward.12} parent=1 // pred_check
      _
    $region15: #{segmentation_forward.12} parent=1 // pred_check_branch
      %36 = sbr.rel (0) target = $region17
    $region16: #{segmentation_forward.12} parent=1 // pred_region
      %s38 = ssub.s32 16, 16
      %39 = vsyncadd [#allocation5], %s38
      %s41 = sshll.u32 [#allocation6], 4
      %s42 = int_to_ptr.vmem [resolvable:$true] %s41
      %44 = dma.hbm_to_vmem [thread:$0]  %s3, 16, %s42, [#allocation5]
    $region17: #{segmentation_forward.12} parent=1 // pred_fallthru
      _
    // Predicated region
    $region18: #{segmentation_forward.12} parent=1 // pred_check
      _
    $region19: #{segmentation_forward.12} parent=1 // pred_check_branch
      %46 = sbr.rel (0) target = $region21
    $region20: #{segmentation_forward.12} parent=1 // pred_region
      %47 = dma.done [#allocation3], 256
    $region21: #{segmentation_forward.12} parent=1 // pred_fallthru
      _
    // Predicated region
    $region22: #{segmentation_forward.12} parent=1 // pred_check
      _
    $region23: #{segmentation_forward.12} parent=1 // pred_check_branch
      %49 = sbr.rel (0) target = $region25
    $region24: #{segmentation_forward.12} parent=1 // pred_region
      %50 = dma.done [#allocation5], 16
    $region25: #{segmentation_forward.12} parent=1 // pred_fallthru
      _
    // Predicated region
    $region26: #{segmentation_forward.12} parent=1 // pred_check
      _
    $region27: #{segmentation_forward.12} parent=1 // pred_check_branch
      %52 = sbr.rel (0) target = $region29
    $region28: #{segmentation_forward.12} parent=1 // pred_region
      %53 = dma.done [#allocation5], 16
    $region29: #{segmentation_forward.12} parent=1 // pred_fallthru
      _
    %v55 = vld [vmem:[%s0] sm:$0xf]
    %v56 = vld [vmem:[%s0 + $0x4] sm:$0xf]
    %v57 = vld [vmem:[%s0 + $0x8] sm:$0xf]
    %v58 = vld [vmem:[%s0 + $0xc] sm:$0xf]
    %v59 = vld [vmem:[%s0 + $0x10] sm:$0xf]
    %v60 = vld [vmem:[%s0 + $0x14] sm:$0xf]
    %v61 = vld [vmem:[%s0 + $0x18] sm:$0xf]
    %v62 = vld [vmem:[%s0 + $0x1c] sm:$0xf]
    %v63 = vld [vmem:[%s0 + $0x20] sm:$0xf]
    %v64 = vld [vmem:[%s0 + $0x24] sm:$0xf]
    %v65 = vld [vmem:[%s0 + $0x28] sm:$0xf]
    %v66 = vld [vmem:[%s0 + $0x2c] sm:$0xf]
    %v67 = vld [vmem:[%s0 + $0x30] sm:$0xf]
    %v68 = vld [vmem:[%s0 + $0x34] sm:$0xf]
    %v69 = vld [vmem:[%s0 + $0x38] sm:$0xf]
    %v70 = vld [vmem:[%s0 + $0x3c] sm:$0xf]
    %v71 = vld [vmem:[%s0 + $0x40] sm:$0xf]
    %v72 = vld [vmem:[%s0 + $0x44] sm:$0xf]
    %v73 = vld [vmem:[%s0 + $0x48] sm:$0xf]
    %v74 = vld [vmem:[%s0 + $0x4c] sm:$0xf]
    %v75 = vld [vmem:[%s0 + $0x50] sm:$0xf]
    %v76 = vld [vmem:[%s0 + $0x54] sm:$0xf]
    %v77 = vld [vmem:[%s0 + $0x58] sm:$0xf]
    %v78 = vld [vmem:[%s0 + $0x5c] sm:$0xf]
    %v79 = vld [vmem:[%s0 + $0x60] sm:$0xf]
    %v80 = vld [vmem:[%s0 + $0x64] sm:$0xf]
    %v81 = vld [vmem:[%s0 + $0x68] sm:$0xf]
    %v82 = vld [vmem:[%s0 + $0x6c] sm:$0xf]
    %v83 = vld [vmem:[%s0 + $0x70] sm:$0xf]
    %v84 = vld [vmem:[%s0 + $0x74] sm:$0xf]
    %v85 = vld [vmem:[%s0 + $0x78] sm:$0xf]
    %v86 = vld [vmem:[%s0 + $0x7c] sm:$0xf]
    %v87 = vld [vmem:[%s0 + $0x80] sm:$0xf]
    %v88 = vld [vmem:[%s0 + $0x84] sm:$0xf]
    %v89 = vld [vmem:[%s0 + $0x88] sm:$0xf]
    %v90 = vld [vmem:[%s0 + $0x8c] sm:$0xf]
    %v91 = vld [vmem:[%s0 + $0x90] sm:$0xf]
    %v92 = vld [vmem:[%s0 + $0x94] sm:$0xf]
    %v93 = vld [vmem:[%s0 + $0x98] sm:$0xf]
    %v94 = vld [vmem:[%s0 + $0x9c] sm:$0xf]
    %v95 = vld [vmem:[%s0 + $0xa0] sm:$0xf]
    %v96 = vld [vmem:[%s0 + $0xa4] sm:$0xf]
    %v97 = vld [vmem:[%s0 + $0xa8] sm:$0xf]
    %v98 = vld [vmem:[%s0 + $0xac] sm:$0xf]
    %v99 = vld [vmem:[%s0 + $0xb0] sm:$0xf]
    %v100 = vld [vmem:[%s0 + $0xb4] sm:$0xf]
    %v101 = vld [vmem:[%s0 + $0xb8] sm:$0xf]
    %v102 = vld [vmem:[%s0 + $0xbc] sm:$0xf]
    %v103 = vld [vmem:[%s0 + $0xc0] sm:$0xf]
    %v104 = vld [vmem:[%s0 + $0xc4] sm:$0xf]
    %v105 = vld [vmem:[%s0 + $0xc8] sm:$0xf]
    %v106 = vld [vmem:[%s0 + $0xcc] sm:$0xf]
    %v107 = vld [vmem:[%s0 + $0xd0] sm:$0xf]
    %v108 = vld [vmem:[%s0 + $0xd4] sm:$0xf]
    %v109 = vld [vmem:[%s0 + $0xd8] sm:$0xf]
    %v110 = vld [vmem:[%s0 + $0xdc] sm:$0xf]
    %v111 = vld [vmem:[%s0 + $0xe0] sm:$0xf]
    %v112 = vld [vmem:[%s0 + $0xe4] sm:$0xf]
    %v113 = vld [vmem:[%s0 + $0xe8] sm:$0xf]
    %v114 = vld [vmem:[%s0 + $0xec] sm:$0xf]
    %v115 = vld [vmem:[%s0 + $0xf0] sm:$0xf]
    %v116 = vld [vmem:[%s0 + $0xf4] sm:$0xf]
    %v117 = vld [vmem:[%s0 + $0xf8] sm:$0xf]
    %v118 = vld [vmem:[%s0 + $0xfc] sm:$0xf]
    %v119 = vld [vmem:[#allocation2] sm:$0xf]
    %v120 = vld [vmem:[#allocation2 + $0x4] sm:$0xf]
    %v121 = vld [vmem:[#allocation2 + $0x8] sm:$0xf]
    %v122 = vld [vmem:[#allocation2 + $0xc] sm:$0xf]
    %v187 = vunpack.c.l.b16 %v55
    %v188 = vunpack.c.l.b16 %v56
    %v189 = vunpack.c.l.b16 %v57
    %v190 = vunpack.c.l.b16 %v58
    %v191 = vunpack.c.l.b16 %v59
    %v192 = vunpack.c.l.b16 %v60
    %v193 = vunpack.c.l.b16 %v61
    %v194 = vunpack.c.l.b16 %v62
    %v195 = vunpack.c.l.b16 %v63
    %v196 = vunpack.c.l.b16 %v64
    %v197 = vunpack.c.l.b16 %v65
    %v198 = vunpack.c.l.b16 %v66
    %v199 = vunpack.c.l.b16 %v67
    %v200 = vunpack.c.l.b16 %v68
    %v201 = vunpack.c.l.b16 %v69
    %v202 = vunpack.c.l.b16 %v70
    %v203 = vunpack.c.l.b16 %v71
    %v204 = vunpack.c.l.b16 %v72
    %v205 = vunpack.c.l.b16 %v73
    %v206 = vunpack.c.l.b16 %v74
    %v207 = vunpack.c.l.b16 %v75
    %v208 = vunpack.c.l.b16 %v76
    %v209 = vunpack.c.l.b16 %v77
    %v210 = vunpack.c.l.b16 %v78
    %v211 = vunpack.c.l.b16 %v79
    %v212 = vunpack.c.l.b16 %v80
    %v213 = vunpack.c.l.b16 %v81
    %v214 = vunpack.c.l.b16 %v82
    %v215 = vunpack.c.l.b16 %v83
    %v216 = vunpack.c.l.b16 %v84
    %v217 = vunpack.c.l.b16 %v85
    %v218 = vunpack.c.l.b16 %v86
    %v219 = vunpack.c.l.b16 %v87
    %v220 = vunpack.c.l.b16 %v88
    %v221 = vunpack.c.l.b16 %v89
    %v222 = vunpack.c.l.b16 %v90
    %v223 = vunpack.c.l.b16 %v91
    %v224 = vunpack.c.l.b16 %v92
    %v225 = vunpack.c.l.b16 %v93
    %v226 = vunpack.c.l.b16 %v94
    %v227 = vunpack.c.l.b16 %v95
    %v228 = vunpack.c.l.b16 %v96
    %v229 = vunpack.c.l.b16 %v97
    %v230 = vunpack.c.l.b16 %v98
    %v231 = vunpack.c.l.b16 %v99
    %v232 = vunpack.c.l.b16 %v100
    %v233 = vunpack.c.l.b16 %v101
    %v234 = vunpack.c.l.b16 %v102
    %v235 = vunpack.c.l.b16 %v103
    %v236 = vunpack.c.l.b16 %v104
    %v237 = vunpack.c.l.b16 %v105
    %v238 = vunpack.c.l.b16 %v106
    %v239 = vunpack.c.l.b16 %v107
    %v240 = vunpack.c.l.b16 %v108
    %v241 = vunpack.c.l.b16 %v109
    %v242 = vunpack.c.l.b16 %v110
    %v243 = vunpack.c.l.b16 %v111
    %v244 = vunpack.c.l.b16 %v112
    %v245 = vunpack.c.l.b16 %v113
    %v246 = vunpack.c.l.b16 %v114
    %v247 = vunpack.c.l.b16 %v115
    %v248 = vunpack.c.l.b16 %v116
    %v249 = vunpack.c.l.b16 %v117
    %v250 = vunpack.c.l.b16 %v118
    %v251 = vpack.c.b16 %v188, %v187
    %v252 = vpack.c.b16 %v190, %v189
    %v253 = vpack.c.b16 %v192, %v191
    %v254 = vpack.c.b16 %v194, %v193
    %v255 = vpack.c.b16 %v196, %v195
    %v256 = vpack.c.b16 %v198, %v197
    %v257 = vpack.c.b16 %v200, %v199
    %v258 = vpack.c.b16 %v202, %v201
    %v259 = vpack.c.b16 %v204, %v203
    %v260 = vpack.c.b16 %v206, %v205
    %v261 = vpack.c.b16 %v208, %v207
    %v262 = vpack.c.b16 %v210, %v209
    %v263 = vpack.c.b16 %v212, %v211
    %v264 = vpack.c.b16 %v214, %v213
    %v265 = vpack.c.b16 %v216, %v215
    %v266 = vpack.c.b16 %v218, %v217
    %v267 = vpack.c.b16 %v220, %v219
    %v268 = vpack.c.b16 %v222, %v221
    %v269 = vpack.c.b16 %v224, %v223
    %v270 = vpack.c.b16 %v226, %v225
    %v271 = vpack.c.b16 %v228, %v227
    %v272 = vpack.c.b16 %v230, %v229
    %v273 = vpack.c.b16 %v232, %v231
    %v274 = vpack.c.b16 %v234, %v233
    %v275 = vpack.c.b16 %v236, %v235
    %v276 = vpack.c.b16 %v238, %v237
    %v277 = vpack.c.b16 %v240, %v239
    %v278 = vpack.c.b16 %v242, %v241
    %v279 = vpack.c.b16 %v244, %v243
    %v280 = vpack.c.b16 %v246, %v245
    %v281 = vpack.c.b16 %v248, %v247
    %v282 = vpack.c.b16 %v250, %v249
    %v287 = vunpack.c.l.b16 %v119
    %v288 = vunpack.c.l.b16 %v120
    %v289 = vunpack.c.l.b16 %v121
    %v290 = vunpack.c.l.b16 %v122
    %v291 = vpack.c.b16 %v288, %v287
    %v292 = vpack.c.b16 %v290, %v289
    %vm295 = vcmask 261120
    %v297 = vsel %vm295, %v251, 0
    %v300 = vsel %vm295, %v252, 0
    %v303 = vsel %vm295, %v253, 0
    %v306 = vsel %vm295, %v254, 0
    %v309 = vsel %vm295, %v255, 0
    %v312 = vsel %vm295, %v256, 0
    %v315 = vsel %vm295, %v257, 0
    %v318 = vsel %vm295, %v258, 0
    %v321 = vsel %vm295, %v259, 0
    %v324 = vsel %vm295, %v260, 0
    %v327 = vsel %vm295, %v261, 0
    %v330 = vsel %vm295, %v262, 0
    %v333 = vsel %vm295, %v263, 0
    %v336 = vsel %vm295, %v264, 0
    %v339 = vsel %vm295, %v265, 0
    %v342 = vsel %vm295, %v266, 0
    %v345 = vsel %vm295, %v267, 0
    %v348 = vsel %vm295, %v268, 0
    %v351 = vsel %vm295, %v269, 0
    %v354 = vsel %vm295, %v270, 0
    %v357 = vsel %vm295, %v271, 0
    %v360 = vsel %vm295, %v272, 0
    %v363 = vsel %vm295, %v273, 0
    %v366 = vsel %vm295, %v274, 0
    %v369 = vsel %vm295, %v275, 0
    %v372 = vsel %vm295, %v276, 0
    %v375 = vsel %vm295, %v277, 0
    %v378 = vsel %vm295, %v278, 0
    %v381 = vsel %vm295, %v279, 0
    %v384 = vsel %vm295, %v280, 0
    %v387 = vsel %vm295, %v281, 0
    %v390 = vsel %vm295, %v282, 0
    %392 = vmatprep.subr.bf16.mxu0 0
    %393 = vmatpush1.bf16.msra.mxu0 %v291
    %394 = vmatprep.subr.bf16.mxu0 0
    %395 = vmatpush1.bf16.msra.mxu0 %v292
    %396 = vmatprep.subr.bf16.mxu0 0
    %397 = vmatpush1.bf16.msra.mxu0 0
    %398 = vmatprep.subr.bf16.mxu0 0
    %399 = vmatpush1.bf16.msra.mxu0 0
    %400 = vmatprep.subr.bf16.mxu0 0
    %401 = vmatpush1.bf16.msra.mxu0 0
    %402 = vmatprep.subr.bf16.mxu0 0
    %403 = vmatpush1.bf16.msra.mxu0 0
    %404 = vmatprep.subr.bf16.mxu0 0
    %405 = vmatpush1.bf16.msra.mxu0 0
    %406 = vmatprep.subr.bf16.mxu0 0
    %407 = vmatpush1.bf16.msra.mxu0 0
    %408 = vmatprep.subr.bf16.mxu0 0
    %409 = vmatpush1.bf16.msra.mxu0 0
    %410 = vmatprep.subr.bf16.mxu0 0
    %411 = vmatpush1.bf16.msra.mxu0 0
    %412 = vmatprep.subr.bf16.mxu0 0
    %413 = vmatpush1.bf16.msra.mxu0 0
    %414 = vmatprep.subr.bf16.mxu0 0
    %415 = vmatpush1.bf16.msra.mxu0 0
    %416 = vmatprep.subr.bf16.mxu0 0
    %417 = vmatpush1.bf16.msra.mxu0 0
    %418 = vmatprep.subr.bf16.mxu0 0
    %419 = vmatpush1.bf16.msra.mxu0 0
    %420 = vmatprep.subr.bf16.mxu0 0
    %421 = vmatpush1.bf16.msra.mxu0 0
    %422 = vmatprep.subr.bf16.mxu0 0
    %423 = vmatpush1.bf16.msra.mxu0 0
    %424 = vmatprep.mubr.bf16.mxu0 0
    %425 = vmatmul.mubr.bf16.gmra.mrb[0].mxu0 %v297
    %v426 = vpop.f32.mrb[0].mxu0
    %v427 = vadd.f32 0.0, %v426
    %v428 = vpop.f32.mrb[0].mxu0
    %v429 = vpop.f32.mrb[0].mxu0
    %v430 = vadd.f32 0.0, %v429
    %v431 = vpop.f32.mrb[0].mxu0
    %432 = vmatprep.mubr.bf16.mxu0 0
    %433 = vmatmul.mubr.bf16.gmra.mrb[0].mxu0 %v300
    %v434 = vpop.f32.mrb[0].mxu0
    %v435 = vadd.f32 0.0, %v434
    %v436 = vpop.f32.mrb[0].mxu0
    %v437 = vpop.f32.mrb[0].mxu0
    %v438 = vadd.f32 0.0, %v437
    %v439 = vpop.f32.mrb[0].mxu0
    %440 = vmatprep.mubr.bf16.mxu0 0
    %441 = vmatmul.mubr.bf16.gmra.mrb[0].mxu0 %v303
    %v442 = vpop.f32.mrb[0].mxu0
    %v443 = vadd.f32 0.0, %v442
    %v444 = vpop.f32.mrb[0].mxu0
    %v445 = vpop.f32.mrb[0].mxu0
    %v446 = vadd.f32 0.0, %v445
    %v447 = vpop.f32.mrb[0].mxu0
    %448 = vmatprep.mubr.bf16.mxu0 0
    %449 = vmatmul.mubr.bf16.gmra.mrb[0].mxu0 %v306
    %v450 = vpop.f32.mrb[0].mxu0
    %v451 = vadd.f32 0.0, %v450
    %v452 = vpop.f32.mrb[0].mxu0
    %v453 = vpop.f32.mrb[0].mxu0
    %v454 = vadd.f32 0.0, %v453
    %v455 = vpop.f32.mrb[0].mxu0
    %456 = vmatprep.mubr.bf16.mxu0 0
    %457 = vmatmul.mubr.bf16.gmra.mrb[0].mxu0 %v309
    %v458 = vpop.f32.mrb[0].mxu0
    %v459 = vadd.f32 0.0, %v458
    %v460 = vpop.f32.mrb[0].mxu0
    %v461 = vpop.f32.mrb[0].mxu0
    %v462 = vadd.f32 0.0, %v461
    %v463 = vpop.f32.mrb[0].mxu0
    %464 = vmatprep.mubr.bf16.mxu0 0
    %465 = vmatmul.mubr.bf16.gmra.mrb[0].mxu0 %v312
    %v466 = vpop.f32.mrb[0].mxu0
    %v467 = vadd.f32 0.0, %v466
    %v468 = vpop.f32.mrb[0].mxu0
    %v469 = vpop.f32.mrb[0].mxu0
    %v470 = vadd.f32 0.0, %v469
    %v471 = vpop.f32.mrb[0].mxu0
    %472 = vmatprep.mubr.bf16.mxu0 0
    %473 = vmatmul.mubr.bf16.gmra.mrb[0].mxu0 %v315
    %v474 = vpop.f32.mrb[0].mxu0
    %v475 = vadd.f32 0.0, %v474
    %v476 = vpop.f32.mrb[0].mxu0
    %v477 = vpop.f32.mrb[0].mxu0
    %v478 = vadd.f32 0.0, %v477
    %v479 = vpop.f32.mrb[0].mxu0
    %480 = vmatprep.mubr.bf16.mxu0 0
    %481 = vmatmul.mubr.bf16.gmra.mrb[0].mxu0 %v318
    %v482 = vpop.f32.mrb[0].mxu0
    %v483 = vadd.f32 0.0, %v482
    %v484 = vpop.f32.mrb[0].mxu0
    %v485 = vpop.f32.mrb[0].mxu0
    %v486 = vadd.f32 0.0, %v485
    %v487 = vpop.f32.mrb[0].mxu0
    %488 = vmatprep.mubr.bf16.mxu0 0
    %489 = vmatmul.mubr.bf16.gmra.mrb[0].mxu0 %v321
    %v490 = vpop.f32.mrb[0].mxu0
    %v491 = vadd.f32 0.0, %v490
    %v492 = vpop.f32.mrb[0].mxu0
    %v493 = vpop.f32.mrb[0].mxu0
    %v494 = vadd.f32 0.0, %v493
    %v495 = vpop.f32.mrb[0].mxu0
    %496 = vmatprep.mubr.bf16.mxu0 0
    %497 = vmatmul.mubr.bf16.gmra.mrb[0].mxu0 %v324
    %v498 = vpop.f32.mrb[0].mxu0
    %v499 = vadd.f32 0.0, %v498
    %v500 = vpop.f32.mrb[0].mxu0
    %v501 = vpop.f32.mrb[0].mxu0
    %v502 = vadd.f32 0.0, %v501
    %v503 = vpop.f32.mrb[0].mxu0
    %504 = vmatprep.mubr.bf16.mxu0 0
    %505 = vmatmul.mubr.bf16.gmra.mrb[0].mxu0 %v327
    %v506 = vpop.f32.mrb[0].mxu0
    %v507 = vadd.f32 0.0, %v506
    %v508 = vpop.f32.mrb[0].mxu0
    %v509 = vpop.f32.mrb[0].mxu0
    %v510 = vadd.f32 0.0, %v509
    %v511 = vpop.f32.mrb[0].mxu0
    %512 = vmatprep.mubr.bf16.mxu0 0
    %513 = vmatmul.mubr.bf16.gmra.mrb[0].mxu0 %v330
    %v514 = vpop.f32.mrb[0].mxu0
    %v515 = vadd.f32 0.0, %v514
    %v516 = vpop.f32.mrb[0].mxu0
    %v517 = vpop.f32.mrb[0].mxu0
    %v518 = vadd.f32 0.0, %v517
    %v519 = vpop.f32.mrb[0].mxu0
    %520 = vmatprep.mubr.bf16.mxu0 0
    %521 = vmatmul.mubr.bf16.gmra.mrb[0].mxu0 %v333
    %v522 = vpop.f32.mrb[0].mxu0
    %v523 = vadd.f32 0.0, %v522
    %v524 = vpop.f32.mrb[0].mxu0
    %v525 = vpop.f32.mrb[0].mxu0
    %v526 = vadd.f32 0.0, %v525
    %v527 = vpop.f32.mrb[0].mxu0
    %528 = vmatprep.mubr.bf16.mxu0 0
    %529 = vmatmul.mubr.bf16.gmra.mrb[0].mxu0 %v336
    %v530 = vpop.f32.mrb[0].mxu0
    %v531 = vadd.f32 0.0, %v530
    %v532 = vpop.f32.mrb[0].mxu0
    %v533 = vpop.f32.mrb[0].mxu0
    %v534 = vadd.f32 0.0, %v533
    %v535 = vpop.f32.mrb[0].mxu0
    %536 = vmatprep.mubr.bf16.mxu0 0
    %537 = vmatmul.mubr.bf16.gmra.mrb[0].mxu0 %v339
    %v538 = vpop.f32.mrb[0].mxu0
    %v539 = vadd.f32 0.0, %v538
    %v540 = vpop.f32.mrb[0].mxu0
    %v541 = vpop.f32.mrb[0].mxu0
    %v542 = vadd.f32 0.0, %v541
    %v543 = vpop.f32.mrb[0].mxu0
    %544 = vmatprep.mubr.bf16.mxu0 0
    %545 = vmatmul.mubr.bf16.gmra.mrb[0].mxu0 %v342
    %v546 = vpop.f32.mrb[0].mxu0
    %v547 = vadd.f32 0.0, %v546
    %v548 = vpop.f32.mrb[0].mxu0
    %v549 = vpop.f32.mrb[0].mxu0
    %v550 = vadd.f32 0.0, %v549
    %v551 = vpop.f32.mrb[0].mxu0
    %552 = vmatprep.mubr.bf16.mxu0 0
    %553 = vmatmul.mubr.bf16.gmra.mrb[0].mxu0 %v345
    %v554 = vpop.f32.mrb[0].mxu0
    %v555 = vadd.f32 0.0, %v554
    %v556 = vpop.f32.mrb[0].mxu0
    %v557 = vpop.f32.mrb[0].mxu0
    %v558 = vadd.f32 0.0, %v557
    %v559 = vpop.f32.mrb[0].mxu0
    %560 = vmatprep.mubr.bf16.mxu0 0
    %561 = vmatmul.mubr.bf16.gmra.mrb[0].mxu0 %v348
    %v562 = vpop.f32.mrb[0].mxu0
    %v563 = vadd.f32 0.0, %v562
    %v564 = vpop.f32.mrb[0].mxu0
    %v565 = vpop.f32.mrb[0].mxu0
    %v566 = vadd.f32 0.0, %v565
    %v567 = vpop.f32.mrb[0].mxu0
    %568 = vmatprep.mubr.bf16.mxu0 0
    %569 = vmatmul.mubr.bf16.gmra.mrb[0].mxu0 %v351
    %v570 = vpop.f32.mrb[0].mxu0
    %v571 = vadd.f32 0.0, %v570
    %v572 = vpop.f32.mrb[0].mxu0
    %v573 = vpop.f32.mrb[0].mxu0
    %v574 = vadd.f32 0.0, %v573
    %v575 = vpop.f32.mrb[0].mxu0
    %576 = vmatprep.mubr.bf16.mxu0 0
    %577 = vmatmul.mubr.bf16.gmra.mrb[0].mxu0 %v354
    %v578 = vpop.f32.mrb[0].mxu0
    %v579 = vadd.f32 0.0, %v578
    %v580 = vpop.f32.mrb[0].mxu0
    %v581 = vpop.f32.mrb[0].mxu0
    %v582 = vadd.f32 0.0, %v581
    %v583 = vpop.f32.mrb[0].mxu0
    %584 = vmatprep.mubr.bf16.mxu0 0
    %585 = vmatmul.mubr.bf16.gmra.mrb[0].mxu0 %v357
    %v586 = vpop.f32.mrb[0].mxu0
    %v587 = vadd.f32 0.0, %v586
    %v588 = vpop.f32.mrb[0].mxu0
    %v589 = vpop.f32.mrb[0].mxu0
    %v590 = vadd.f32 0.0, %v589
    %v591 = vpop.f32.mrb[0].mxu0
    %592 = vmatprep.mubr.bf16.mxu0 0
    %593 = vmatmul.mubr.bf16.gmra.mrb[0].mxu0 %v360
    %v594 = vpop.f32.mrb[0].mxu0
    %v595 = vadd.f32 0.0, %v594
    %v596 = vpop.f32.mrb[0].mxu0
    %v597 = vpop.f32.mrb[0].mxu0
    %v598 = vadd.f32 0.0, %v597
    %v599 = vpop.f32.mrb[0].mxu0
    %600 = vmatprep.mubr.bf16.mxu0 0
    %601 = vmatmul.mubr.bf16.gmra.mrb[0].mxu0 %v363
    %v602 = vpop.f32.mrb[0].mxu0
    %v603 = vadd.f32 0.0, %v602
    %v604 = vpop.f32.mrb[0].mxu0
    %v605 = vpop.f32.mrb[0].mxu0
    %v606 = vadd.f32 0.0, %v605
    %v607 = vpop.f32.mrb[0].mxu0
    %608 = vmatprep.mubr.bf16.mxu0 0
    %609 = vmatmul.mubr.bf16.gmra.mrb[0].mxu0 %v366
    %v610 = vpop.f32.mrb[0].mxu0
    %v611 = vadd.f32 0.0, %v610
    %v612 = vpop.f32.mrb[0].mxu0
    %v613 = vpop.f32.mrb[0].mxu0
    %v614 = vadd.f32 0.0, %v613
    %v615 = vpop.f32.mrb[0].mxu0
    %616 = vmatprep.mubr.bf16.mxu0 0
    %617 = vmatmul.mubr.bf16.gmra.mrb[0].mxu0 %v369
    %v618 = vpop.f32.mrb[0].mxu0
    %v619 = vadd.f32 0.0, %v618
    %v620 = vpop.f32.mrb[0].mxu0
    %v621 = vpop.f32.mrb[0].mxu0
    %v622 = vadd.f32 0.0, %v621
    %v623 = vpop.f32.mrb[0].mxu0
    %624 = vmatprep.mubr.bf16.mxu0 0
    %625 = vmatmul.mubr.bf16.gmra.mrb[0].mxu0 %v372
    %v626 = vpop.f32.mrb[0].mxu0
    %v627 = vadd.f32 0.0, %v626
    %v628 = vpop.f32.mrb[0].mxu0
    %v629 = vpop.f32.mrb[0].mxu0
    %v630 = vadd.f32 0.0, %v629
    %v631 = vpop.f32.mrb[0].mxu0
    %632 = vmatprep.mubr.bf16.mxu0 0
    %633 = vmatmul.mubr.bf16.gmra.mrb[0].mxu0 %v375
    %v634 = vpop.f32.mrb[0].mxu0
    %v635 = vadd.f32 0.0, %v634
    %v636 = vpop.f32.mrb[0].mxu0
    %v637 = vpop.f32.mrb[0].mxu0
    %v638 = vadd.f32 0.0, %v637
    %v639 = vpop.f32.mrb[0].mxu0
    %640 = vmatprep.mubr.bf16.mxu0 0
    %641 = vmatmul.mubr.bf16.gmra.mrb[0].mxu0 %v378
    %v642 = vpop.f32.mrb[0].mxu0
    %v643 = vadd.f32 0.0, %v642
    %v644 = vpop.f32.mrb[0].mxu0
    %v645 = vpop.f32.mrb[0].mxu0
    %v646 = vadd.f32 0.0, %v645
    %v647 = vpop.f32.mrb[0].mxu0
    %648 = vmatprep.mubr.bf16.mxu0 0
    %649 = vmatmul.mubr.bf16.gmra.mrb[0].mxu0 %v381
    %v650 = vpop.f32.mrb[0].mxu0
    %v651 = vadd.f32 0.0, %v650
    %v652 = vpop.f32.mrb[0].mxu0
    %v653 = vpop.f32.mrb[0].mxu0
    %v654 = vadd.f32 0.0, %v653
    %v655 = vpop.f32.mrb[0].mxu0
    %656 = vmatprep.mubr.bf16.mxu0 0
    %657 = vmatmul.mubr.bf16.gmra.mrb[0].mxu0 %v384
    %v658 = vpop.f32.mrb[0].mxu0
    %v659 = vadd.f32 0.0, %v658
    %v660 = vpop.f32.mrb[0].mxu0
    %v661 = vpop.f32.mrb[0].mxu0
    %v662 = vadd.f32 0.0, %v661
    %v663 = vpop.f32.mrb[0].mxu0
    %664 = vmatprep.mubr.bf16.mxu0 0
    %665 = vmatmul.mubr.bf16.gmra.mrb[0].mxu0 %v387
    %v666 = vpop.f32.mrb[0].mxu0
    %v667 = vadd.f32 0.0, %v666
    %v668 = vpop.f32.mrb[0].mxu0
    %v669 = vpop.f32.mrb[0].mxu0
    %v670 = vadd.f32 0.0, %v669
    %v671 = vpop.f32.mrb[0].mxu0
    %672 = vmatprep.mubr.bf16.mxu0 0
    %673 = vmatmul.mubr.bf16.gmra.mrb[0].mxu0 %v390
    %v674 = vpop.f32.mrb[0].mxu0
    %v675 = vadd.f32 0.0, %v674
    %v676 = vpop.f32.mrb[0].mxu0
    %v677 = vpop.f32.mrb[0].mxu0
    %v678 = vadd.f32 0.0, %v677
    %v679 = vpop.f32.mrb[0].mxu0
    %680 = vdwg.mxu0
    %v681 = vld [vmem:[#allocation4] sm:$0x1]
    %v683 = vlaneseq
    %v684 = vshrl.u32 %v683, 7
    %v685 = vsub.s32 0, %v684
    %v686 = vrot.slane %v681, %v685
    %v688 = vmul.f32 %v427, %v686
    %v689 = vmul.f32 %v430, %v686
    %v690 = vmul.f32 %v435, %v686
    %v691 = vmul.f32 %v438, %v686
    %v692 = vmul.f32 %v443, %v686
    %v693 = vmul.f32 %v446, %v686
    %v694 = vmul.f32 %v451, %v686
    %v695 = vmul.f32 %v454, %v686
    %v696 = vmul.f32 %v459, %v686
    %v697 = vmul.f32 %v462, %v686
    %v698 = vmul.f32 %v467, %v686
    %v699 = vmul.f32 %v470, %v686
    %v700 = vmul.f32 %v475, %v686
    %v701 = vmul.f32 %v478, %v686
    %v702 = vmul.f32 %v483, %v686
    %v703 = vmul.f32 %v486, %v686
    %v704 = vmul.f32 %v491, %v686
    %v705 = vmul.f32 %v494, %v686
    %v706 = vmul.f32 %v499, %v686
    %v707 = vmul.f32 %v502, %v686
    %v708 = vmul.f32 %v507, %v686
    %v709 = vmul.f32 %v510, %v686
    %v710 = vmul.f32 %v515, %v686
    %v711 = vmul.f32 %v518, %v686
    %v712 = vmul.f32 %v523, %v686
    %v713 = vmul.f32 %v526, %v686
    %v714 = vmul.f32 %v531, %v686
    %v715 = vmul.f32 %v534, %v686
    %v716 = vmul.f32 %v539, %v686
    %v717 = vmul.f32 %v542, %v686
    %v718 = vmul.f32 %v547, %v686
    %v719 = vmul.f32 %v550, %v686
    %v720 = vmul.f32 %v555, %v686
    %v721 = vmul.f32 %v558, %v686
    %v722 = vmul.f32 %v563, %v686
    %v723 = vmul.f32 %v566, %v686
    %v724 = vmul.f32 %v571, %v686
    %v725 = vmul.f32 %v574, %v686
    %v726 = vmul.f32 %v579, %v686
    %v727 = vmul.f32 %v582, %v686
    %v728 = vmul.f32 %v587, %v686
    %v729 = vmul.f32 %v590, %v686
    %v730 = vmul.f32 %v595, %v686
    %v731 = vmul.f32 %v598, %v686
    %v732 = vmul.f32 %v603, %v686
    %v733 = vmul.f32 %v606, %v686
    %v734 = vmul.f32 %v611, %v686
    %v735 = vmul.f32 %v614, %v686
    %v736 = vmul.f32 %v619, %v686
    %v737 = vmul.f32 %v622, %v686
    %v738 = vmul.f32 %v627, %v686
    %v739 = vmul.f32 %v630, %v686
    %v740 = vmul.f32 %v635, %v686
    %v741 = vmul.f32 %v638, %v686
    %v742 = vmul.f32 %v643, %v686
    %v743 = vmul.f32 %v646, %v686
    %v744 = vmul.f32 %v651, %v686
    %v745 = vmul.f32 %v654, %v686
    %v746 = vmul.f32 %v659, %v686
    %v747 = vmul.f32 %v662, %v686
    %v748 = vmul.f32 %v667, %v686
    %v749 = vmul.f32 %v670, %v686
    %v750 = vmul.f32 %v675, %v686
    %v751 = vmul.f32 %v678, %v686
    %v752 = vld [vmem:[#allocation6] sm:$0x1]
    %v754 = vlaneseq
    %v755 = vshrl.u32 %v754, 7
    %v756 = vsub.s32 0, %v755
    %v757 = vrot.slane %v752, %v756
    %v759 = vadd.f32 %v688, %v757
    %v760 = vadd.f32 %v689, %v757
    %v761 = vadd.f32 %v690, %v757
    %v762 = vadd.f32 %v691, %v757
    %v763 = vadd.f32 %v692, %v757
    %v764 = vadd.f32 %v693, %v757
    %v765 = vadd.f32 %v694, %v757
    %v766 = vadd.f32 %v695, %v757
    %v767 = vadd.f32 %v696, %v757
    %v768 = vadd.f32 %v697, %v757
    %v769 = vadd.f32 %v698, %v757
    %v770 = vadd.f32 %v699, %v757
    %v771 = vadd.f32 %v700, %v757
    %v772 = vadd.f32 %v701, %v757
    %v773 = vadd.f32 %v702, %v757
    %v774 = vadd.f32 %v703, %v757
    %v775 = vadd.f32 %v704, %v757
    %v776 = vadd.f32 %v705, %v757
    %v777 = vadd.f32 %v706, %v757
    %v778 = vadd.f32 %v707, %v757
    %v779 = vadd.f32 %v708, %v757
    %v780 = vadd.f32 %v709, %v757
    %v781 = vadd.f32 %v710, %v757
    %v782 = vadd.f32 %v711, %v757
    %v783 = vadd.f32 %v712, %v757
    %v784 = vadd.f32 %v713, %v757
    %v785 = vadd.f32 %v714, %v757
    %v786 = vadd.f32 %v715, %v757
    %v787 = vadd.f32 %v716, %v757
    %v788 = vadd.f32 %v717, %v757
    %v789 = vadd.f32 %v718, %v757
    %v790 = vadd.f32 %v719, %v757
    %v791 = vadd.f32 %v720, %v757
    %v792 = vadd.f32 %v721, %v757
    %v793 = vadd.f32 %v722, %v757
    %v794 = vadd.f32 %v723, %v757
    %v795 = vadd.f32 %v724, %v757
    %v796 = vadd.f32 %v725, %v757
    %v797 = vadd.f32 %v726, %v757
    %v798 = vadd.f32 %v727, %v757
    %v799 = vadd.f32 %v728, %v757
    %v800 = vadd.f32 %v729, %v757
    %v801 = vadd.f32 %v730, %v757
    %v802 = vadd.f32 %v731, %v757
    %v803 = vadd.f32 %v732, %v757
    %v804 = vadd.f32 %v733, %v757
    %v805 = vadd.f32 %v734, %v757
    %v806 = vadd.f32 %v735, %v757
    %v807 = vadd.f32 %v736, %v757
    %v808 = vadd.f32 %v737, %v757
    %v809 = vadd.f32 %v738, %v757
    %v810 = vadd.f32 %v739, %v757
    %v811 = vadd.f32 %v740, %v757
    %v812 = vadd.f32 %v741, %v757
    %v813 = vadd.f32 %v742, %v757
    %v814 = vadd.f32 %v743, %v757
    %v815 = vadd.f32 %v744, %v757
    %v816 = vadd.f32 %v745, %v757
    %v817 = vadd.f32 %v746, %v757
    %v818 = vadd.f32 %v747, %v757
    %v819 = vadd.f32 %v748, %v757
    %v820 = vadd.f32 %v749, %v757
    %v821 = vadd.f32 %v750, %v757
    %v822 = vadd.f32 %v751, %v757
    %v823 = vmax.f32 %v759, 0.0
    %v824 = vmax.f32 %v760, 0.0
    %v825 = vmax.f32 %v761, 0.0
    %v826 = vmax.f32 %v762, 0.0
    %v827 = vmax.f32 %v763, 0.0
    %v828 = vmax.f32 %v764, 0.0
    %v829 = vmax.f32 %v765, 0.0
    %v830 = vmax.f32 %v766, 0.0
    %v831 = vmax.f32 %v767, 0.0
    %v832 = vmax.f32 %v768, 0.0
    %v833 = vmax.f32 %v769, 0.0
    %v834 = vmax.f32 %v770, 0.0
    %v835 = vmax.f32 %v771, 0.0
    %v836 = vmax.f32 %v772, 0.0
    %v837 = vmax.f32 %v773, 0.0
    %v838 = vmax.f32 %v774, 0.0
    %v839 = vmax.f32 %v775, 0.0
    %v840 = vmax.f32 %v776, 0.0
    %v841 = vmax.f32 %v777, 0.0
    %v842 = vmax.f32 %v778, 0.0
    %v843 = vmax.f32 %v779, 0.0
    %v844 = vmax.f32 %v780, 0.0
    %v845 = vmax.f32 %v781, 0.0
    %v846 = vmax.f32 %v782, 0.0
    %v847 = vmax.f32 %v783, 0.0
    %v848 = vmax.f32 %v784, 0.0
    %v849 = vmax.f32 %v785, 0.0
    %v850 = vmax.f32 %v786, 0.0
    %v851 = vmax.f32 %v787, 0.0
    %v852 = vmax.f32 %v788, 0.0
    %v853 = vmax.f32 %v789, 0.0
    %v854 = vmax.f32 %v790, 0.0
    %v855 = vmax.f32 %v791, 0.0
    %v856 = vmax.f32 %v792, 0.0
    %v857 = vmax.f32 %v793, 0.0
    %v858 = vmax.f32 %v794, 0.0
    %v859 = vmax.f32 %v795, 0.0
    %v860 = vmax.f32 %v796, 0.0
    %v861 = vmax.f32 %v797, 0.0
    %v862 = vmax.f32 %v798, 0.0
    %v863 = vmax.f32 %v799, 0.0
    %v864 = vmax.f32 %v800, 0.0
    %v865 = vmax.f32 %v801, 0.0
    %v866 = vmax.f32 %v802, 0.0
    %v867 = vmax.f32 %v803, 0.0
    %v868 = vmax.f32 %v804, 0.0
    %v869 = vmax.f32 %v805, 0.0
    %v870 = vmax.f32 %v806, 0.0
    %v871 = vmax.f32 %v807, 0.0
    %v872 = vmax.f32 %v808, 0.0
    %v873 = vmax.f32 %v809, 0.0
    %v874 = vmax.f32 %v810, 0.0
    %v875 = vmax.f32 %v811, 0.0
    %v876 = vmax.f32 %v812, 0.0
    %v877 = vmax.f32 %v813, 0.0
    %v878 = vmax.f32 %v814, 0.0
    %v879 = vmax.f32 %v815, 0.0
    %v880 = vmax.f32 %v816, 0.0
    %v881 = vmax.f32 %v817, 0.0
    %v882 = vmax.f32 %v818, 0.0
    %v883 = vmax.f32 %v819, 0.0
    %v884 = vmax.f32 %v820, 0.0
    %v885 = vmax.f32 %v821, 0.0
    %v886 = vmax.f32 %v822, 0.0
    %v887 = vpack.c.bf16 %v824, %v823
    %v888 = vpack.c.bf16 %v826, %v825
    %v889 = vpack.c.bf16 %v828, %v827
    %v890 = vpack.c.bf16 %v830, %v829
    %v891 = vpack.c.bf16 %v832, %v831
    %v892 = vpack.c.bf16 %v834, %v833
    %v893 = vpack.c.bf16 %v836, %v835
    %v894 = vpack.c.bf16 %v838, %v837
    %v895 = vpack.c.bf16 %v840, %v839
    %v896 = vpack.c.bf16 %v842, %v841
    %v897 = vpack.c.bf16 %v844, %v843
    %v898 = vpack.c.bf16 %v846, %v845
    %v899 = vpack.c.bf16 %v848, %v847
    %v900 = vpack.c.bf16 %v850, %v849
    %v901 = vpack.c.bf16 %v852, %v851
    %v902 = vpack.c.bf16 %v854, %v853
    %v903 = vpack.c.bf16 %v856, %v855
    %v904 = vpack.c.bf16 %v858, %v857
    %v905 = vpack.c.bf16 %v860, %v859
    %v906 = vpack.c.bf16 %v862, %v861
    %v907 = vpack.c.bf16 %v864, %v863
    %v908 = vpack.c.bf16 %v866, %v865
    %v909 = vpack.c.bf16 %v868, %v867
    %v910 = vpack.c.bf16 %v870, %v869
    %v911 = vpack.c.bf16 %v872, %v871
    %v912 = vpack.c.bf16 %v874, %v873
    %v913 = vpack.c.bf16 %v876, %v875
    %v914 = vpack.c.bf16 %v878, %v877
    %v915 = vpack.c.bf16 %v880, %v879
    %v916 = vpack.c.bf16 %v882, %v881
    %v917 = vpack.c.bf16 %v884, %v883
    %v918 = vpack.c.bf16 %v886, %v885
    %v951 = vunpack.c.l.b16 %v887
    %v952 = vunpack.c.h.b16 %v887
    %v953 = vunpack.c.l.b16 %v888
    %v954 = vunpack.c.h.b16 %v888
    %v955 = vunpack.c.l.b16 %v889
    %v956 = vunpack.c.h.b16 %v889
    %v957 = vunpack.c.l.b16 %v890
    %v958 = vunpack.c.h.b16 %v890
    %v959 = vunpack.c.l.b16 %v891
    %v960 = vunpack.c.h.b16 %v891
    %v961 = vunpack.c.l.b16 %v892
    %v962 = vunpack.c.h.b16 %v892
    %v963 = vunpack.c.l.b16 %v893
    %v964 = vunpack.c.h.b16 %v893
    %v965 = vunpack.c.l.b16 %v894
    %v966 = vunpack.c.h.b16 %v894
    %v967 = vunpack.c.l.b16 %v895
    %v968 = vunpack.c.h.b16 %v895
    %v969 = vunpack.c.l.b16 %v896
    %v970 = vunpack.c.h.b16 %v896
    %v971 = vunpack.c.l.b16 %v897
    %v972 = vunpack.c.h.b16 %v897
    %v973 = vunpack.c.l.b16 %v898
    %v974 = vunpack.c.h.b16 %v898
    %v975 = vunpack.c.l.b16 %v899
    %v976 = vunpack.c.h.b16 %v899
    %v977 = vunpack.c.l.b16 %v900
    %v978 = vunpack.c.h.b16 %v900
    %v979 = vunpack.c.l.b16 %v901
    %v980 = vunpack.c.h.b16 %v901
    %v981 = vunpack.c.l.b16 %v902
    %v982 = vunpack.c.h.b16 %v902
    %v983 = vunpack.c.l.b16 %v903
    %v984 = vunpack.c.h.b16 %v903
    %v985 = vunpack.c.l.b16 %v904
    %v986 = vunpack.c.h.b16 %v904
    %v987 = vunpack.c.l.b16 %v905
    %v988 = vunpack.c.h.b16 %v905
    %v989 = vunpack.c.l.b16 %v906
    %v990 = vunpack.c.h.b16 %v906
    %v991 = vunpack.c.l.b16 %v907
    %v992 = vunpack.c.h.b16 %v907
    %v993 = vunpack.c.l.b16 %v908
    %v994 = vunpack.c.h.b16 %v908
    %v995 = vunpack.c.l.b16 %v909
    %v996 = vunpack.c.h.b16 %v909
    %v997 = vunpack.c.l.b16 %v910
    %v998 = vunpack.c.h.b16 %v910
    %v999 = vunpack.c.l.b16 %v911
    %v1000 = vunpack.c.h.b16 %v911
    %v1001 = vunpack.c.l.b16 %v912
    %v1002 = vunpack.c.h.b16 %v912
    %v1003 = vunpack.c.l.b16 %v913
    %v1004 = vunpack.c.h.b16 %v913
    %v1005 = vunpack.c.l.b16 %v914
    %v1006 = vunpack.c.h.b16 %v914
    %v1007 = vunpack.c.l.b16 %v915
    %v1008 = vunpack.c.h.b16 %v915
    %v1009 = vunpack.c.l.b16 %v916
    %v1010 = vunpack.c.h.b16 %v916
    %v1011 = vunpack.c.l.b16 %v917
    %v1012 = vunpack.c.h.b16 %v917
    %v1013 = vunpack.c.l.b16 %v918
    %v1014 = vunpack.c.h.b16 %v918
    %v1015 = vpack.c.b16 %v951, %v951
    %v1016 = vpack.c.b16 %v952, %v952
    %v1017 = vpack.c.b16 %v953, %v953
    %v1018 = vpack.c.b16 %v954, %v954
    %v1019 = vpack.c.b16 %v955, %v955
    %v1020 = vpack.c.b16 %v956, %v956
    %v1021 = vpack.c.b16 %v957, %v957
    %v1022 = vpack.c.b16 %v958, %v958
    %v1023 = vpack.c.b16 %v959, %v959
    %v1024 = vpack.c.b16 %v960, %v960
    %v1025 = vpack.c.b16 %v961, %v961
    %v1026 = vpack.c.b16 %v962, %v962
    %v1027 = vpack.c.b16 %v963, %v963
    %v1028 = vpack.c.b16 %v964, %v964
    %v1029 = vpack.c.b16 %v965, %v965
    %v1030 = vpack.c.b16 %v966, %v966
    %v1031 = vpack.c.b16 %v967, %v967
    %v1032 = vpack.c.b16 %v968, %v968
    %v1033 = vpack.c.b16 %v969, %v969
    %v1034 = vpack.c.b16 %v970, %v970
    %v1035 = vpack.c.b16 %v971, %v971
    %v1036 = vpack.c.b16 %v972, %v972
    %v1037 = vpack.c.b16 %v973, %v973
    %v1038 = vpack.c.b16 %v974, %v974
    %v1039 = vpack.c.b16 %v975, %v975
    %v1040 = vpack.c.b16 %v976, %v976
    %v1041 = vpack.c.b16 %v977, %v977
    %v1042 = vpack.c.b16 %v978, %v978
    %v1043 = vpack.c.b16 %v979, %v979
    %v1044 = vpack.c.b16 %v980, %v980
    %v1045 = vpack.c.b16 %v981, %v981
    %v1046 = vpack.c.b16 %v982, %v982
    %v1047 = vpack.c.b16 %v983, %v983
    %v1048 = vpack.c.b16 %v984, %v984
    %v1049 = vpack.c.b16 %v985, %v985
    %v1050 = vpack.c.b16 %v986, %v986
    %v1051 = vpack.c.b16 %v987, %v987
    %v1052 = vpack.c.b16 %v988, %v988
    %v1053 = vpack.c.b16 %v989, %v989
    %v1054 = vpack.c.b16 %v990, %v990
    %v1055 = vpack.c.b16 %v991, %v991
    %v1056 = vpack.c.b16 %v992, %v992
    %v1057 = vpack.c.b16 %v993, %v993
    %v1058 = vpack.c.b16 %v994, %v994
    %v1059 = vpack.c.b16 %v995, %v995
    %v1060 = vpack.c.b16 %v996, %v996
    %v1061 = vpack.c.b16 %v997, %v997
    %v1062 = vpack.c.b16 %v998, %v998
    %v1063 = vpack.c.b16 %v999, %v999
    %v1064 = vpack.c.b16 %v1000, %v1000
    %v1065 = vpack.c.b16 %v1001, %v1001
    %v1066 = vpack.c.b16 %v1002, %v1002
    %v1067 = vpack.c.b16 %v1003, %v1003
    %v1068 = vpack.c.b16 %v1004, %v1004
    %v1069 = vpack.c.b16 %v1005, %v1005
    %v1070 = vpack.c.b16 %v1006, %v1006
    %v1071 = vpack.c.b16 %v1007, %v1007
    %v1072 = vpack.c.b16 %v1008, %v1008
    %v1073 = vpack.c.b16 %v1009, %v1009
    %v1074 = vpack.c.b16 %v1010, %v1010
    %v1075 = vpack.c.b16 %v1011, %v1011
    %v1076 = vpack.c.b16 %v1012, %v1012
    %v1077 = vpack.c.b16 %v1013, %v1013
    %v1078 = vpack.c.b16 %v1014, %v1014
    %vm1143 = vcmask 519168
    %1144 = vst.msk [vmem:[%s4] sm:$0xf] %vm1143, %v1015
    %1145 = vst.msk [vmem:[%s4 + $0x4] sm:$0xf] %vm1143, %v1016
    %1146 = vst.msk [vmem:[%s4 + $0x8] sm:$0xf] %vm1143, %v1017
    %1147 = vst.msk [vmem:[%s4 + $0xc] sm:$0xf] %vm1143, %v1018
    %1148 = vst.msk [vmem:[%s4 + $0x10] sm:$0xf] %vm1143, %v1019
    %1149 = vst.msk [vmem:[%s4 + $0x14] sm:$0xf] %vm1143, %v1020
    %1150 = vst.msk [vmem:[%s4 + $0x18] sm:$0xf] %vm1143, %v1021
    %1151 = vst.msk [vmem:[%s4 + $0x1c] sm:$0xf] %vm1143, %v1022
    %1152 = vst.msk [vmem:[%s4 + $0x20] sm:$0xf] %vm1143, %v1023
    %1153 = vst.msk [vmem:[%s4 + $0x24] sm:$0xf] %vm1143, %v1024
    %1154 = vst.msk [vmem:[%s4 + $0x28] sm:$0xf] %vm1143, %v1025
    %1155 = vst.msk [vmem:[%s4 + $0x2c] sm:$0xf] %vm1143, %v1026
    %1156 = vst.msk [vmem:[%s4 + $0x30] sm:$0xf] %vm1143, %v1027
    %1157 = vst.msk [vmem:[%s4 + $0x34] sm:$0xf] %vm1143, %v1028
    %1158 = vst.msk [vmem:[%s4 + $0x38] sm:$0xf] %vm1143, %v1029
    %1159 = vst.msk [vmem:[%s4 + $0x3c] sm:$0xf] %vm1143, %v1030
    %1160 = vst.msk [vmem:[%s4 + $0x40] sm:$0xf] %vm1143, %v1031
    %1161 = vst.msk [vmem:[%s4 + $0x44] sm:$0xf] %vm1143, %v1032
    %1162 = vst.msk [vmem:[%s4 + $0x48] sm:$0xf] %vm1143, %v1033
    %1163 = vst.msk [vmem:[%s4 + $0x4c] sm:$0xf] %vm1143, %v1034
    %1164 = vst.msk [vmem:[%s4 + $0x50] sm:$0xf] %vm1143, %v1035
    %1165 = vst.msk [vmem:[%s4 + $0x54] sm:$0xf] %vm1143, %v1036
    %1166 = vst.msk [vmem:[%s4 + $0x58] sm:$0xf] %vm1143, %v1037
    %1167 = vst.msk [vmem:[%s4 + $0x5c] sm:$0xf] %vm1143, %v1038
    %1168 = vst.msk [vmem:[%s4 + $0x60] sm:$0xf] %vm1143, %v1039
    %1169 = vst.msk [vmem:[%s4 + $0x64] sm:$0xf] %vm1143, %v1040
    %1170 = vst.msk [vmem:[%s4 + $0x68] sm:$0xf] %vm1143, %v1041
    %1171 = vst.msk [vmem:[%s4 + $0x6c] sm:$0xf] %vm1143, %v1042
    %1172 = vst.msk [vmem:[%s4 + $0x70] sm:$0xf] %vm1143, %v1043
    %1173 = vst.msk [vmem:[%s4 + $0x74] sm:$0xf] %vm1143, %v1044
    %1174 = vst.msk [vmem:[%s4 + $0x78] sm:$0xf] %vm1143, %v1045
    %1175 = vst.msk [vmem:[%s4 + $0x7c] sm:$0xf] %vm1143, %v1046
    %1176 = vst.msk [vmem:[%s4 + $0x80] sm:$0xf] %vm1143, %v1047
    %1177 = vst.msk [vmem:[%s4 + $0x84] sm:$0xf] %vm1143, %v1048
    %1178 = vst.msk [vmem:[%s4 + $0x88] sm:$0xf] %vm1143, %v1049
    %1179 = vst.msk [vmem:[%s4 + $0x8c] sm:$0xf] %vm1143, %v1050
    %1180 = vst.msk [vmem:[%s4 + $0x90] sm:$0xf] %vm1143, %v1051
    %1181 = vst.msk [vmem:[%s4 + $0x94] sm:$0xf] %vm1143, %v1052
    %1182 = vst.msk [vmem:[%s4 + $0x98] sm:$0xf] %vm1143, %v1053
    %1183 = vst.msk [vmem:[%s4 + $0x9c] sm:$0xf] %vm1143, %v1054
    %1184 = vst.msk [vmem:[%s4 + $0xa0] sm:$0xf] %vm1143, %v1055
    %1185 = vst.msk [vmem:[%s4 + $0xa4] sm:$0xf] %vm1143, %v1056
    %1186 = vst.msk [vmem:[%s4 + $0xa8] sm:$0xf] %vm1143, %v1057
    %1187 = vst.msk [vmem:[%s4 + $0xac] sm:$0xf] %vm1143, %v1058
    %1188 = vst.msk [vmem:[%s4 + $0xb0] sm:$0xf] %vm1143, %v1059
    %1189 = vst.msk [vmem:[%s4 + $0xb4] sm:$0xf] %vm1143, %v1060
    %1190 = vst.msk [vmem:[%s4 + $0xb8] sm:$0xf] %vm1143, %v1061
    %1191 = vst.msk [vmem:[%s4 + $0xbc] sm:$0xf] %vm1143, %v1062
    %1192 = vst.msk [vmem:[%s4 + $0xc0] sm:$0xf] %vm1143, %v1063
    %1193 = vst.msk [vmem:[%s4 + $0xc4] sm:$0xf] %vm1143, %v1064
    %1194 = vst.msk [vmem:[%s4 + $0xc8] sm:$0xf] %vm1143, %v1065
    %1195 = vst.msk [vmem:[%s4 + $0xcc] sm:$0xf] %vm1143, %v1066
    %1196 = vst.msk [vmem:[%s4 + $0xd0] sm:$0xf] %vm1143, %v1067
    %1197 = vst.msk [vmem:[%s4 + $0xd4] sm:$0xf] %vm1143, %v1068
    %1198 = vst.msk [vmem:[%s4 + $0xd8] sm:$0xf] %vm1143, %v1069
    %1199 = vst.msk [vmem:[%s4 + $0xdc] sm:$0xf] %vm1143, %v1070
    %1200 = vst.msk [vmem:[%s4 + $0xe0] sm:$0xf] %vm1143, %v1071
    %1201 = vst.msk [vmem:[%s4 + $0xe4] sm:$0xf] %vm1143, %v1072
    %1202 = vst.msk [vmem:[%s4 + $0xe8] sm:$0xf] %vm1143, %v1073
    %1203 = vst.msk [vmem:[%s4 + $0xec] sm:$0xf] %vm1143, %v1074
    %1204 = vst.msk [vmem:[%s4 + $0xf0] sm:$0xf] %vm1143, %v1075
    %1205 = vst.msk [vmem:[%s4 + $0xf4] sm:$0xf] %vm1143, %v1076
    %1206 = vst.msk [vmem:[%s4 + $0xf8] sm:$0xf] %vm1143, %v1077
    %1207 = vst.msk [vmem:[%s4 + $0xfc] sm:$0xf] %vm1143, %v1078
    // Predicated region
    $region30: #{segmentation_forward.12} parent=1 // pred_check
      _
    $region31: #{segmentation_forward.12} parent=1 // pred_check_branch
      %1209 = sbr.rel (0) target = $region33
    $region32: #{segmentation_forward.12} parent=1 // pred_region
      _
    $region33: #{segmentation_forward.12} parent=1 // pred_fallthru
      _
    // Predicated region
    $region34: #{segmentation_forward.12} parent=1 // pred_check
      _
    $region35: #{segmentation_forward.12} parent=1 // pred_check_branch
      %1211 = sbr.rel (0) target = $region37
    $region36: #{segmentation_forward.12} parent=1 // pred_region
      _
    $region37: #{segmentation_forward.12} parent=1 // pred_fallthru
      _
    %1212 = vsyncpa [#allocation3], 1
    %1213 = vsyncpa [#allocation5], 1

// kernel: segmentation_forward.13
$region0: #{segmentation_forward.13}
  #allocation0 [shape = 'u32[]', space=smem, size = 0x4, offset = 0x4, fixed_abs, tag = 'smem constant byte address 0x4 - core index']
  #allocation1 [shape = 'u32[144,128]{1,0:T(1,128)}', space=vmem, size = 0x12000, scoped, tag = 'internal scratch']
  %s0 = inlined_call_operand.vmem [shape: bf16[512,64], index: 0, kind: input, shape index: {}]
  %s1 = inlined_call_operand.vmem [shape: bf16[64,16], index: 1, kind: input, shape index: {}]
  %s2 = inlined_call_operand.vmem [shape: f32[1,16], index: 2, kind: input, shape index: {}]
  %s3 = inlined_call_operand.vmem [shape: f32[1,16], index: 3, kind: input, shape index: {}]
  %s4 = inlined_call_operand.vmem [shape: bf16[512,16], index: 4, kind: output, shape index: {}]
  %s5 = sld [smem:[#allocation0]]
  $region26: #{segmentation_forward.13} parent=0
    _
  %s7 = ssub.s32 1, %s5
  %s8 = scalar_select 0, %s7, %s5
  // Predicated region
  $region2: #{segmentation_forward.13} parent=0 // pred_check
    _
  $region3: #{segmentation_forward.13} parent=0 // pred_check_branch
    %10 = sbr.rel (0) target = $region5
  $region4: #{segmentation_forward.13} parent=0 // pred_region
    _
  $region5: #{segmentation_forward.13} parent=0 // pred_fallthru
    _
  // Predicated region
  $region6: #{segmentation_forward.13} parent=0 // pred_check
    _
  $region7: #{segmentation_forward.13} parent=0 // pred_check_branch
    %12 = sbr.rel (0) target = $region9
  $region8: #{segmentation_forward.13} parent=0 // pred_region
    _
  $region9: #{segmentation_forward.13} parent=0 // pred_fallthru
    _
  // Predicated region
  $region10: #{segmentation_forward.13} parent=0 // pred_check
    _
  $region11: #{segmentation_forward.13} parent=0 // pred_check_branch
    %14 = sbr.rel (0) target = $region13
  $region12: #{segmentation_forward.13} parent=0 // pred_region
    _
  $region13: #{segmentation_forward.13} parent=0 // pred_fallthru
    _
  // Predicated region
  $region14: #{segmentation_forward.13} parent=0 // pred_check
    _
  $region15: #{segmentation_forward.13} parent=0 // pred_check_branch
    %16 = sbr.rel (0) target = $region17
  $region16: #{segmentation_forward.13} parent=0 // pred_region
    _
  $region17: #{segmentation_forward.13} parent=0 // pred_fallthru
    _
  %v18 = vld [vmem:[%s0] sm:$0xf]
  %v19 = vld [vmem:[%s0 + $0x4] sm:$0xf]
  %v20 = vld [vmem:[%s0 + $0x8] sm:$0xf]
  %v21 = vld [vmem:[%s0 + $0xc] sm:$0xf]
  %v22 = vld [vmem:[%s0 + $0x10] sm:$0xf]
  %v23 = vld [vmem:[%s0 + $0x14] sm:$0xf]
  %v24 = vld [vmem:[%s0 + $0x18] sm:$0xf]
  %v25 = vld [vmem:[%s0 + $0x1c] sm:$0xf]
  %v26 = vld [vmem:[%s0 + $0x20] sm:$0xf]
  %v27 = vld [vmem:[%s0 + $0x24] sm:$0xf]
  %v28 = vld [vmem:[%s0 + $0x28] sm:$0xf]
  %v29 = vld [vmem:[%s0 + $0x2c] sm:$0xf]
  %v30 = vld [vmem:[%s0 + $0x30] sm:$0xf]
  %v31 = vld [vmem:[%s0 + $0x34] sm:$0xf]
  %v32 = vld [vmem:[%s0 + $0x38] sm:$0xf]
  %v33 = vld [vmem:[%s0 + $0x3c] sm:$0xf]
  %v34 = vld [vmem:[%s0 + $0x40] sm:$0xf]
  %v35 = vld [vmem:[%s0 + $0x44] sm:$0xf]
  %v36 = vld [vmem:[%s0 + $0x48] sm:$0xf]
  %v37 = vld [vmem:[%s0 + $0x4c] sm:$0xf]
  %v38 = vld [vmem:[%s0 + $0x50] sm:$0xf]
  %v39 = vld [vmem:[%s0 + $0x54] sm:$0xf]
  %v40 = vld [vmem:[%s0 + $0x58] sm:$0xf]
  %v41 = vld [vmem:[%s0 + $0x5c] sm:$0xf]
  %v42 = vld [vmem:[%s0 + $0x60] sm:$0xf]
  %v43 = vld [vmem:[%s0 + $0x64] sm:$0xf]
  %v44 = vld [vmem:[%s0 + $0x68] sm:$0xf]
  %v45 = vld [vmem:[%s0 + $0x6c] sm:$0xf]
  %v46 = vld [vmem:[%s0 + $0x70] sm:$0xf]
  %v47 = vld [vmem:[%s0 + $0x74] sm:$0xf]
  %v48 = vld [vmem:[%s0 + $0x78] sm:$0xf]
  %v49 = vld [vmem:[%s0 + $0x7c] sm:$0xf]
  %v50 = vld [vmem:[%s0 + $0x80] sm:$0xf]
  %v51 = vld [vmem:[%s0 + $0x84] sm:$0xf]
  %v52 = vld [vmem:[%s0 + $0x88] sm:$0xf]
  %v53 = vld [vmem:[%s0 + $0x8c] sm:$0xf]
  %v54 = vld [vmem:[%s0 + $0x90] sm:$0xf]
  %v55 = vld [vmem:[%s0 + $0x94] sm:$0xf]
  %v56 = vld [vmem:[%s0 + $0x98] sm:$0xf]
  %v57 = vld [vmem:[%s0 + $0x9c] sm:$0xf]
  %v58 = vld [vmem:[%s0 + $0xa0] sm:$0xf]
  %v59 = vld [vmem:[%s0 + $0xa4] sm:$0xf]
  %v60 = vld [vmem:[%s0 + $0xa8] sm:$0xf]
  %v61 = vld [vmem:[%s0 + $0xac] sm:$0xf]
  %v62 = vld [vmem:[%s0 + $0xb0] sm:$0xf]
  %v63 = vld [vmem:[%s0 + $0xb4] sm:$0xf]
  %v64 = vld [vmem:[%s0 + $0xb8] sm:$0xf]
  %v65 = vld [vmem:[%s0 + $0xbc] sm:$0xf]
  %v66 = vld [vmem:[%s0 + $0xc0] sm:$0xf]
  %v67 = vld [vmem:[%s0 + $0xc4] sm:$0xf]
  %v68 = vld [vmem:[%s0 + $0xc8] sm:$0xf]
  %v69 = vld [vmem:[%s0 + $0xcc] sm:$0xf]
  %v70 = vld [vmem:[%s0 + $0xd0] sm:$0xf]
  %v71 = vld [vmem:[%s0 + $0xd4] sm:$0xf]
  %v72 = vld [vmem:[%s0 + $0xd8] sm:$0xf]
  %v73 = vld [vmem:[%s0 + $0xdc] sm:$0xf]
  %v74 = vld [vmem:[%s0 + $0xe0] sm:$0xf]
  %v75 = vld [vmem:[%s0 + $0xe4] sm:$0xf]
  %v76 = vld [vmem:[%s0 + $0xe8] sm:$0xf]
  %v77 = vld [vmem:[%s0 + $0xec] sm:$0xf]
  %v78 = vld [vmem:[%s0 + $0xf0] sm:$0xf]
  %v79 = vld [vmem:[%s0 + $0xf4] sm:$0xf]
  %v80 = vld [vmem:[%s0 + $0xf8] sm:$0xf]
  %v81 = vld [vmem:[%s0 + $0xfc] sm:$0xf]
  %v82 = vld [vmem:[%s1] sm:$0xf]
  %v83 = vld [vmem:[%s1 + $0x4] sm:$0xf]
  %v84 = vld [vmem:[%s1 + $0x8] sm:$0xf]
  %v85 = vld [vmem:[%s1 + $0xc] sm:$0xf]
  %v86 = vld [vmem:[%s1 + $0x10] sm:$0xf]
  %v87 = vld [vmem:[%s1 + $0x14] sm:$0xf]
  %v88 = vld [vmem:[%s1 + $0x18] sm:$0xf]
  %v89 = vld [vmem:[%s1 + $0x1c] sm:$0xf]
  %v154 = vunpack.c.l.b16 %v18
  %v155 = vunpack.c.l.b16 %v19
  %v156 = vunpack.c.l.b16 %v20
  %v157 = vunpack.c.l.b16 %v21
  %v158 = vunpack.c.l.b16 %v22
  %v159 = vunpack.c.l.b16 %v23
  %v160 = vunpack.c.l.b16 %v24
  %v161 = vunpack.c.l.b16 %v25
  %v162 = vunpack.c.l.b16 %v26
  %v163 = vunpack.c.l.b16 %v27
  %v164 = vunpack.c.l.b16 %v28
  %v165 = vunpack.c.l.b16 %v29
  %v166 = vunpack.c.l.b16 %v30
  %v167 = vunpack.c.l.b16 %v31
  %v168 = vunpack.c.l.b16 %v32
  %v169 = vunpack.c.l.b16 %v33
  %v170 = vunpack.c.l.b16 %v34
  %v171 = vunpack.c.l.b16 %v35
  %v172 = vunpack.c.l.b16 %v36
  %v173 = vunpack.c.l.b16 %v37
  %v174 = vunpack.c.l.b16 %v38
  %v175 = vunpack.c.l.b16 %v39
  %v176 = vunpack.c.l.b16 %v40
  %v177 = vunpack.c.l.b16 %v41
  %v178 = vunpack.c.l.b16 %v42
  %v179 = vunpack.c.l.b16 %v43
  %v180 = vunpack.c.l.b16 %v44
  %v181 = vunpack.c.l.b16 %v45
  %v182 = vunpack.c.l.b16 %v46
  %v183 = vunpack.c.l.b16 %v47
  %v184 = vunpack.c.l.b16 %v48
  %v185 = vunpack.c.l.b16 %v49
  %v186 = vunpack.c.l.b16 %v50
  %v187 = vunpack.c.l.b16 %v51
  %v188 = vunpack.c.l.b16 %v52
  %v189 = vunpack.c.l.b16 %v53
  %v190 = vunpack.c.l.b16 %v54
  %v191 = vunpack.c.l.b16 %v55
  %v192 = vunpack.c.l.b16 %v56
  %v193 = vunpack.c.l.b16 %v57
  %v194 = vunpack.c.l.b16 %v58
  %v195 = vunpack.c.l.b16 %v59
  %v196 = vunpack.c.l.b16 %v60
  %v197 = vunpack.c.l.b16 %v61
  %v198 = vunpack.c.l.b16 %v62
  %v199 = vunpack.c.l.b16 %v63
  %v200 = vunpack.c.l.b16 %v64
  %v201 = vunpack.c.l.b16 %v65
  %v202 = vunpack.c.l.b16 %v66
  %v203 = vunpack.c.l.b16 %v67
  %v204 = vunpack.c.l.b16 %v68
  %v205 = vunpack.c.l.b16 %v69
  %v206 = vunpack.c.l.b16 %v70
  %v207 = vunpack.c.l.b16 %v71
  %v208 = vunpack.c.l.b16 %v72
  %v209 = vunpack.c.l.b16 %v73
  %v210 = vunpack.c.l.b16 %v74
  %v211 = vunpack.c.l.b16 %v75
  %v212 = vunpack.c.l.b16 %v76
  %v213 = vunpack.c.l.b16 %v77
  %v214 = vunpack.c.l.b16 %v78
  %v215 = vunpack.c.l.b16 %v79
  %v216 = vunpack.c.l.b16 %v80
  %v217 = vunpack.c.l.b16 %v81
  %v218 = vpack.c.b16 %v155, %v154
  %v219 = vpack.c.b16 %v157, %v156
  %v220 = vpack.c.b16 %v159, %v158
  %v221 = vpack.c.b16 %v161, %v160
  %v222 = vpack.c.b16 %v163, %v162
  %v223 = vpack.c.b16 %v165, %v164
  %v224 = vpack.c.b16 %v167, %v166
  %v225 = vpack.c.b16 %v169, %v168
  %v226 = vpack.c.b16 %v171, %v170
  %v227 = vpack.c.b16 %v173, %v172
  %v228 = vpack.c.b16 %v175, %v174
  %v229 = vpack.c.b16 %v177, %v176
  %v230 = vpack.c.b16 %v179, %v178
  %v231 = vpack.c.b16 %v181, %v180
  %v232 = vpack.c.b16 %v183, %v182
  %v233 = vpack.c.b16 %v185, %v184
  %v234 = vpack.c.b16 %v187, %v186
  %v235 = vpack.c.b16 %v189, %v188
  %v236 = vpack.c.b16 %v191, %v190
  %v237 = vpack.c.b16 %v193, %v192
  %v238 = vpack.c.b16 %v195, %v194
  %v239 = vpack.c.b16 %v197, %v196
  %v240 = vpack.c.b16 %v199, %v198
  %v241 = vpack.c.b16 %v201, %v200
  %v242 = vpack.c.b16 %v203, %v202
  %v243 = vpack.c.b16 %v205, %v204
  %v244 = vpack.c.b16 %v207, %v206
  %v245 = vpack.c.b16 %v209, %v208
  %v246 = vpack.c.b16 %v211, %v210
  %v247 = vpack.c.b16 %v213, %v212
  %v248 = vpack.c.b16 %v215, %v214
  %v249 = vpack.c.b16 %v217, %v216
  %v258 = vunpack.c.l.b16 %v82
  %v259 = vunpack.c.l.b16 %v83
  %v260 = vunpack.c.l.b16 %v84
  %v261 = vunpack.c.l.b16 %v85
  %v262 = vunpack.c.l.b16 %v86
  %v263 = vunpack.c.l.b16 %v87
  %v264 = vunpack.c.l.b16 %v88
  %v265 = vunpack.c.l.b16 %v89
  %v266 = vpack.c.b16 %v259, %v258
  %v267 = vpack.c.b16 %v261, %v260
  %v268 = vpack.c.b16 %v263, %v262
  %v269 = vpack.c.b16 %v265, %v264
  %vm274 = vcmask 523264
  %v276 = vsel %vm274, %v218, 0
  %v279 = vsel %vm274, %v219, 0
  %v282 = vsel %vm274, %v220, 0
  %v285 = vsel %vm274, %v221, 0
  %v288 = vsel %vm274, %v222, 0
  %v291 = vsel %vm274, %v223, 0
  %v294 = vsel %vm274, %v224, 0
  %v297 = vsel %vm274, %v225, 0
  %v300 = vsel %vm274, %v226, 0
  %v303 = vsel %vm274, %v227, 0
  %v306 = vsel %vm274, %v228, 0
  %v309 = vsel %vm274, %v229, 0
  %v312 = vsel %vm274, %v230, 0
  %v315 = vsel %vm274, %v231, 0
  %v318 = vsel %vm274, %v232, 0
  %v321 = vsel %vm274, %v233, 0
  %v324 = vsel %vm274, %v234, 0
  %v327 = vsel %vm274, %v235, 0
  %v330 = vsel %vm274, %v236, 0
  %v333 = vsel %vm274, %v237, 0
  %v336 = vsel %vm274, %v238, 0
  %v339 = vsel %vm274, %v239, 0
  %v342 = vsel %vm274, %v240, 0
  %v345 = vsel %vm274, %v241, 0
  %v348 = vsel %vm274, %v242, 0
  %v351 = vsel %vm274, %v243, 0
  %v354 = vsel %vm274, %v244, 0
  %v357 = vsel %vm274, %v245, 0
  %v360 = vsel %vm274, %v246, 0
  %v363 = vsel %vm274, %v247, 0
  %v366 = vsel %vm274, %v248, 0
  %v369 = vsel %vm274, %v249, 0
  %371 = vmatprep.subr.bf16.mxu0 0
  %372 = vmatpush1.bf16.msra.mxu0 %v266
  %373 = vmatprep.subr.bf16.mxu0 0
  %374 = vmatpush1.bf16.msra.mxu0 %v267
  %375 = vmatprep.subr.bf16.mxu0 0
  %376 = vmatpush1.bf16.msra.mxu0 %v268
  %377 = vmatprep.subr.bf16.mxu0 0
  %378 = vmatpush1.bf16.msra.mxu0 %v269
  %379 = vmatprep.subr.bf16.mxu0 0
  %380 = vmatpush1.bf16.msra.mxu0 0
  %381 = vmatprep.subr.bf16.mxu0 0
  %382 = vmatpush1.bf16.msra.mxu0 0
  %383 = vmatprep.subr.bf16.mxu0 0
  %384 = vmatpush1.bf16.msra.mxu0 0
  %385 = vmatprep.subr.bf16.mxu0 0
  %386 = vmatpush1.bf16.msra.mxu0 0
  %387 = vmatprep.subr.bf16.mxu0 0
  %388 = vmatpush1.bf16.msra.mxu0 0
  %389 = vmatprep.subr.bf16.mxu0 0
  %390 = vmatpush1.bf16.msra.mxu0 0
  %391 = vmatprep.subr.bf16.mxu0 0
  %392 = vmatpush1.bf16.msra.mxu0 0
  %393 = vmatprep.subr.bf16.mxu0 0
  %394 = vmatpush1.bf16.msra.mxu0 0
  %395 = vmatprep.subr.bf16.mxu0 0
  %396 = vmatpush1.bf16.msra.mxu0 0
  %397 = vmatprep.subr.bf16.mxu0 0
  %398 = vmatpush1.bf16.msra.mxu0 0
  %399 = vmatprep.subr.bf16.mxu0 0
  %400 = vmatpush1.bf16.msra.mxu0 0
  %401 = vmatprep.subr.bf16.mxu0 0
  %402 = vmatpush1.bf16.msra.mxu0 0
  %403 = vmatprep.mubr.bf16.mxu0 0
  %404 = vmatmul.mubr.bf16.gmra.mrb[0].mxu0 %v276
  %v405 = vpop.f32.mrb[0].mxu0
  %v406 = vadd.f32 0.0, %v405
  %v407 = vpop.f32.mrb[0].mxu0
  %v408 = vpop.f32.mrb[0].mxu0
  %v409 = vadd.f32 0.0, %v408
  %v410 = vpop.f32.mrb[0].mxu0
  %411 = vmatprep.mubr.bf16.mxu0 0
  %412 = vmatmul.mubr.bf16.gmra.mrb[0].mxu0 %v279
  %v413 = vpop.f32.mrb[0].mxu0
  %v414 = vadd.f32 0.0, %v413
  %v415 = vpop.f32.mrb[0].mxu0
  %v416 = vpop.f32.mrb[0].mxu0
  %v417 = vadd.f32 0.0, %v416
  %v418 = vpop.f32.mrb[0].mxu0
  %419 = vmatprep.mubr.bf16.mxu0 0
  %420 = vmatmul.mubr.bf16.gmra.mrb[0].mxu0 %v282
  %v421 = vpop.f32.mrb[0].mxu0
  %v422 = vadd.f32 0.0, %v421
  %v423 = vpop.f32.mrb[0].mxu0
  %v424 = vpop.f32.mrb[0].mxu0
  %v425 = vadd.f32 0.0, %v424
  %v426 = vpop.f32.mrb[0].mxu0
  %427 = vmatprep.mubr.bf16.mxu0 0
  %428 = vmatmul.mubr.bf16.gmra.mrb[0].mxu0 %v285
  %v429 = vpop.f32.mrb[0].mxu0
  %v430 = vadd.f32 0.0, %v429
  %v431 = vpop.f32.mrb[0].mxu0
  %v432 = vpop.f32.mrb[0].mxu0
  %v433 = vadd.f32 0.0, %v432
  %v434 = vpop.f32.mrb[0].mxu0
  %435 = vmatprep.mubr.bf16.mxu0 0
  %436 = vmatmul.mubr.bf16.gmra.mrb[0].mxu0 %v288
  %v437 = vpop.f32.mrb[0].mxu0
  %v438 = vadd.f32 0.0, %v437
  %v439 = vpop.f32.mrb[0].mxu0
  %v440 = vpop.f32.mrb[0].mxu0
  %v441 = vadd.f32 0.0, %v440
  %v442 = vpop.f32.mrb[0].mxu0
  %443 = vmatprep.mubr.bf16.mxu0 0
  %444 = vmatmul.mubr.bf16.gmra.mrb[0].mxu0 %v291
  %v445 = vpop.f32.mrb[0].mxu0
  %v446 = vadd.f32 0.0, %v445
  %v447 = vpop.f32.mrb[0].mxu0
  %v448 = vpop.f32.mrb[0].mxu0
  %v449 = vadd.f32 0.0, %v448
  %v450 = vpop.f32.mrb[0].mxu0
  %451 = vmatprep.mubr.bf16.mxu0 0
  %452 = vmatmul.mubr.bf16.gmra.mrb[0].mxu0 %v294
  %v453 = vpop.f32.mrb[0].mxu0
  %v454 = vadd.f32 0.0, %v453
  %v455 = vpop.f32.mrb[0].mxu0
  %v456 = vpop.f32.mrb[0].mxu0
  %v457 = vadd.f32 0.0, %v456
  %v458 = vpop.f32.mrb[0].mxu0
  %459 = vmatprep.mubr.bf16.mxu0 0
  %460 = vmatmul.mubr.bf16.gmra.mrb[0].mxu0 %v297
  %v461 = vpop.f32.mrb[0].mxu0
  %v462 = vadd.f32 0.0, %v461
  %v463 = vpop.f32.mrb[0].mxu0
  %v464 = vpop.f32.mrb[0].mxu0
  %v465 = vadd.f32 0.0, %v464
  %v466 = vpop.f32.mrb[0].mxu0
  %467 = vmatprep.mubr.bf16.mxu0 0
  %468 = vmatmul.mubr.bf16.gmra.mrb[0].mxu0 %v300
  %v469 = vpop.f32.mrb[0].mxu0
  %v470 = vadd.f32 0.0, %v469
  %v471 = vpop.f32.mrb[0].mxu0
  %v472 = vpop.f32.mrb[0].mxu0
  %v473 = vadd.f32 0.0, %v472
  %v474 = vpop.f32.mrb[0].mxu0
  %475 = vmatprep.mubr.bf16.mxu0 0
  %476 = vmatmul.mubr.bf16.gmra.mrb[0].mxu0 %v303
  %v477 = vpop.f32.mrb[0].mxu0
  %v478 = vadd.f32 0.0, %v477
  %v479 = vpop.f32.mrb[0].mxu0
  %v480 = vpop.f32.mrb[0].mxu0
  %v481 = vadd.f32 0.0, %v480
  %v482 = vpop.f32.mrb[0].mxu0
  %483 = vmatprep.mubr.bf16.mxu0 0
  %484 = vmatmul.mubr.bf16.gmra.mrb[0].mxu0 %v306
  %v485 = vpop.f32.mrb[0].mxu0
  %v486 = vadd.f32 0.0, %v485
  %v487 = vpop.f32.mrb[0].mxu0
  %v488 = vpop.f32.mrb[0].mxu0
  %v489 = vadd.f32 0.0, %v488
  %v490 = vpop.f32.mrb[0].mxu0
  %491 = vmatprep.mubr.bf16.mxu0 0
  %492 = vmatmul.mubr.bf16.gmra.mrb[0].mxu0 %v309
  %v493 = vpop.f32.mrb[0].mxu0
  %v494 = vadd.f32 0.0, %v493
  %v495 = vpop.f32.mrb[0].mxu0
  %v496 = vpop.f32.mrb[0].mxu0
  %v497 = vadd.f32 0.0, %v496
  %v498 = vpop.f32.mrb[0].mxu0
  %499 = vmatprep.mubr.bf16.mxu0 0
  %500 = vmatmul.mubr.bf16.gmra.mrb[0].mxu0 %v312
  %v501 = vpop.f32.mrb[0].mxu0
  %v502 = vadd.f32 0.0, %v501
  %v503 = vpop.f32.mrb[0].mxu0
  %v504 = vpop.f32.mrb[0].mxu0
  %v505 = vadd.f32 0.0, %v504
  %v506 = vpop.f32.mrb[0].mxu0
  %507 = vmatprep.mubr.bf16.mxu0 0
  %508 = vmatmul.mubr.bf16.gmra.mrb[0].mxu0 %v315
  %v509 = vpop.f32.mrb[0].mxu0
  %v510 = vadd.f32 0.0, %v509
  %v511 = vpop.f32.mrb[0].mxu0
  %v512 = vpop.f32.mrb[0].mxu0
  %v513 = vadd.f32 0.0, %v512
  %v514 = vpop.f32.mrb[0].mxu0
  %515 = vmatprep.mubr.bf16.mxu0 0
  %516 = vmatmul.mubr.bf16.gmra.mrb[0].mxu0 %v318
  %v517 = vpop.f32.mrb[0].mxu0
  %v518 = vadd.f32 0.0, %v517
  %v519 = vpop.f32.mrb[0].mxu0
  %v520 = vpop.f32.mrb[0].mxu0
  %v521 = vadd.f32 0.0, %v520
  %v522 = vpop.f32.mrb[0].mxu0
  %523 = vmatprep.mubr.bf16.mxu0 0
  %524 = vmatmul.mubr.bf16.gmra.mrb[0].mxu0 %v321
  %v525 = vpop.f32.mrb[0].mxu0
  %v526 = vadd.f32 0.0, %v525
  %v527 = vpop.f32.mrb[0].mxu0
  %v528 = vpop.f32.mrb[0].mxu0
  %v529 = vadd.f32 0.0, %v528
  %v530 = vpop.f32.mrb[0].mxu0
  %531 = vmatprep.mubr.bf16.mxu0 0
  %532 = vmatmul.mubr.bf16.gmra.mrb[0].mxu0 %v324
  %v533 = vpop.f32.mrb[0].mxu0
  %v534 = vadd.f32 0.0, %v533
  %v535 = vpop.f32.mrb[0].mxu0
  %v536 = vpop.f32.mrb[0].mxu0
  %v537 = vadd.f32 0.0, %v536
  %v538 = vpop.f32.mrb[0].mxu0
  %539 = vmatprep.mubr.bf16.mxu0 0
  %540 = vmatmul.mubr.bf16.gmra.mrb[0].mxu0 %v327
  %v541 = vpop.f32.mrb[0].mxu0
  %v542 = vadd.f32 0.0, %v541
  %v543 = vpop.f32.mrb[0].mxu0
  %v544 = vpop.f32.mrb[0].mxu0
  %v545 = vadd.f32 0.0, %v544
  %v546 = vpop.f32.mrb[0].mxu0
  %547 = vmatprep.mubr.bf16.mxu0 0
  %548 = vmatmul.mubr.bf16.gmra.mrb[0].mxu0 %v330
  %v549 = vpop.f32.mrb[0].mxu0
  %v550 = vadd.f32 0.0, %v549
  %v551 = vpop.f32.mrb[0].mxu0
  %v552 = vpop.f32.mrb[0].mxu0
  %v553 = vadd.f32 0.0, %v552
  %v554 = vpop.f32.mrb[0].mxu0
  %555 = vmatprep.mubr.bf16.mxu0 0
  %556 = vmatmul.mubr.bf16.gmra.mrb[0].mxu0 %v333
  %v557 = vpop.f32.mrb[0].mxu0
  %v558 = vadd.f32 0.0, %v557
  %v559 = vpop.f32.mrb[0].mxu0
  %v560 = vpop.f32.mrb[0].mxu0
  %v561 = vadd.f32 0.0, %v560
  %v562 = vpop.f32.mrb[0].mxu0
  %563 = vmatprep.mubr.bf16.mxu0 0
  %564 = vmatmul.mubr.bf16.gmra.mrb[0].mxu0 %v336
  %v565 = vpop.f32.mrb[0].mxu0
  %v566 = vadd.f32 0.0, %v565
  %v567 = vpop.f32.mrb[0].mxu0
  %v568 = vpop.f32.mrb[0].mxu0
  %v569 = vadd.f32 0.0, %v568
  %v570 = vpop.f32.mrb[0].mxu0
  %571 = vmatprep.mubr.bf16.mxu0 0
  %572 = vmatmul.mubr.bf16.gmra.mrb[0].mxu0 %v339
  %v573 = vpop.f32.mrb[0].mxu0
  %v574 = vadd.f32 0.0, %v573
  %v575 = vpop.f32.mrb[0].mxu0
  %v576 = vpop.f32.mrb[0].mxu0
  %v577 = vadd.f32 0.0, %v576
  %v578 = vpop.f32.mrb[0].mxu0
  %579 = vmatprep.mubr.bf16.mxu0 0
  %580 = vmatmul.mubr.bf16.gmra.mrb[0].mxu0 %v342
  %v581 = vpop.f32.mrb[0].mxu0
  %v582 = vadd.f32 0.0, %v581
  %v583 = vpop.f32.mrb[0].mxu0
  %v584 = vpop.f32.mrb[0].mxu0
  %v585 = vadd.f32 0.0, %v584
  %v586 = vpop.f32.mrb[0].mxu0
  %587 = vmatprep.mubr.bf16.mxu0 0
  %588 = vmatmul.mubr.bf16.gmra.mrb[0].mxu0 %v345
  %v589 = vpop.f32.mrb[0].mxu0
  %v590 = vadd.f32 0.0, %v589
  %v591 = vpop.f32.mrb[0].mxu0
  %v592 = vpop.f32.mrb[0].mxu0
  %v593 = vadd.f32 0.0, %v592
  %v594 = vpop.f32.mrb[0].mxu0
  %595 = vmatprep.mubr.bf16.mxu0 0
  %596 = vmatmul.mubr.bf16.gmra.mrb[0].mxu0 %v348
  %v597 = vpop.f32.mrb[0].mxu0
  %v598 = vadd.f32 0.0, %v597
  %v599 = vpop.f32.mrb[0].mxu0
  %v600 = vpop.f32.mrb[0].mxu0
  %v601 = vadd.f32 0.0, %v600
  %v602 = vpop.f32.mrb[0].mxu0
  %603 = vmatprep.mubr.bf16.mxu0 0
  %604 = vmatmul.mubr.bf16.gmra.mrb[0].mxu0 %v351
  %v605 = vpop.f32.mrb[0].mxu0
  %v606 = vadd.f32 0.0, %v605
  %v607 = vpop.f32.mrb[0].mxu0
  %v608 = vpop.f32.mrb[0].mxu0
  %v609 = vadd.f32 0.0, %v608
  %v610 = vpop.f32.mrb[0].mxu0
  %611 = vmatprep.mubr.bf16.mxu0 0
  %612 = vmatmul.mubr.bf16.gmra.mrb[0].mxu0 %v354
  %v613 = vpop.f32.mrb[0].mxu0
  %v614 = vadd.f32 0.0, %v613
  %v615 = vpop.f32.mrb[0].mxu0
  %v616 = vpop.f32.mrb[0].mxu0
  %v617 = vadd.f32 0.0, %v616
  %v618 = vpop.f32.mrb[0].mxu0
  %619 = vmatprep.mubr.bf16.mxu0 0
  %620 = vmatmul.mubr.bf16.gmra.mrb[0].mxu0 %v357
  %v621 = vpop.f32.mrb[0].mxu0
  %v622 = vadd.f32 0.0, %v621
  %v623 = vpop.f32.mrb[0].mxu0
  %v624 = vpop.f32.mrb[0].mxu0
  %v625 = vadd.f32 0.0, %v624
  %v626 = vpop.f32.mrb[0].mxu0
  %627 = vmatprep.mubr.bf16.mxu0 0
  %628 = vmatmul.mubr.bf16.gmra.mrb[0].mxu0 %v360
  %v629 = vpop.f32.mrb[0].mxu0
  %v630 = vadd.f32 0.0, %v629
  %v631 = vpop.f32.mrb[0].mxu0
  %v632 = vpop.f32.mrb[0].mxu0
  %v633 = vadd.f32 0.0, %v632
  %v634 = vpop.f32.mrb[0].mxu0
  %635 = vmatprep.mubr.bf16.mxu0 0
  %636 = vmatmul.mubr.bf16.gmra.mrb[0].mxu0 %v363
  %v637 = vpop.f32.mrb[0].mxu0
  %v638 = vadd.f32 0.0, %v637
  %v639 = vpop.f32.mrb[0].mxu0
  %v640 = vpop.f32.mrb[0].mxu0
  %v641 = vadd.f32 0.0, %v640
  %v642 = vpop.f32.mrb[0].mxu0
  %643 = vmatprep.mubr.bf16.mxu0 0
  %644 = vmatmul.mubr.bf16.gmra.mrb[0].mxu0 %v366
  %v645 = vpop.f32.mrb[0].mxu0
  %v646 = vadd.f32 0.0, %v645
  %v647 = vpop.f32.mrb[0].mxu0
  %v648 = vpop.f32.mrb[0].mxu0
  %v649 = vadd.f32 0.0, %v648
  %v650 = vpop.f32.mrb[0].mxu0
  %651 = vmatprep.mubr.bf16.mxu0 0
  %652 = vmatmul.mubr.bf16.gmra.mrb[0].mxu0 %v369
  %v653 = vpop.f32.mrb[0].mxu0
  %v654 = vadd.f32 0.0, %v653
  %v655 = vpop.f32.mrb[0].mxu0
  %v656 = vpop.f32.mrb[0].mxu0
  %v657 = vadd.f32 0.0, %v656
  %v658 = vpop.f32.mrb[0].mxu0
  %659 = vdwg.mxu0
  %v660 = vld [vmem:[%s2] sm:$0x1]
  %v662 = vlaneseq
  %v663 = vshrl.u32 %v662, 7
  %v664 = vsub.s32 0, %v663
  %v665 = vrot.slane %v660, %v664
  %v667 = vmul.f32 %v406, %v665
  %v668 = vmul.f32 %v409, %v665
  %v669 = vmul.f32 %v414, %v665
  %v670 = vmul.f32 %v417, %v665
  %v671 = vmul.f32 %v422, %v665
  %v672 = vmul.f32 %v425, %v665
  %v673 = vmul.f32 %v430, %v665
  %v674 = vmul.f32 %v433, %v665
  %v675 = vmul.f32 %v438, %v665
  %v676 = vmul.f32 %v441, %v665
  %v677 = vmul.f32 %v446, %v665
  %v678 = vmul.f32 %v449, %v665
  %v679 = vmul.f32 %v454, %v665
  %v680 = vmul.f32 %v457, %v665
  %v681 = vmul.f32 %v462, %v665
  %v682 = vmul.f32 %v465, %v665
  %v683 = vmul.f32 %v470, %v665
  %v684 = vmul.f32 %v473, %v665
  %v685 = vmul.f32 %v478, %v665
  %v686 = vmul.f32 %v481, %v665
  %v687 = vmul.f32 %v486, %v665
  %v688 = vmul.f32 %v489, %v665
  %v689 = vmul.f32 %v494, %v665
  %v690 = vmul.f32 %v497, %v665
  %v691 = vmul.f32 %v502, %v665
  %v692 = vmul.f32 %v505, %v665
  %v693 = vmul.f32 %v510, %v665
  %v694 = vmul.f32 %v513, %v665
  %v695 = vmul.f32 %v518, %v665
  %v696 = vmul.f32 %v521, %v665
  %v697 = vmul.f32 %v526, %v665
  %v698 = vmul.f32 %v529, %v665
  %v699 = vmul.f32 %v534, %v665
  %v700 = vmul.f32 %v537, %v665
  %v701 = vmul.f32 %v542, %v665
  %v702 = vmul.f32 %v545, %v665
  %v703 = vmul.f32 %v550, %v665
  %v704 = vmul.f32 %v553, %v665
  %v705 = vmul.f32 %v558, %v665
  %v706 = vmul.f32 %v561, %v665
  %v707 = vmul.f32 %v566, %v665
  %v708 = vmul.f32 %v569, %v665
  %v709 = vmul.f32 %v574, %v665
  %v710 = vmul.f32 %v577, %v665
  %v711 = vmul.f32 %v582, %v665
  %v712 = vmul.f32 %v585, %v665
  %v713 = vmul.f32 %v590, %v665
  %v714 = vmul.f32 %v593, %v665
  %v715 = vmul.f32 %v598, %v665
  %v716 = vmul.f32 %v601, %v665
  %v717 = vmul.f32 %v606, %v665
  %v718 = vmul.f32 %v609, %v665
  %v719 = vmul.f32 %v614, %v665
  %v720 = vmul.f32 %v617, %v665
  %v721 = vmul.f32 %v622, %v665
  %v722 = vmul.f32 %v625, %v665
  %v723 = vmul.f32 %v630, %v665
  %v724 = vmul.f32 %v633, %v665
  %v725 = vmul.f32 %v638, %v665
  %v726 = vmul.f32 %v641, %v665
  %v727 = vmul.f32 %v646, %v665
  %v728 = vmul.f32 %v649, %v665
  %v729 = vmul.f32 %v654, %v665
  %v730 = vmul.f32 %v657, %v665
  %v731 = vld [vmem:[%s3] sm:$0x1]
  %v733 = vlaneseq
  %v734 = vshrl.u32 %v733, 7
  %v735 = vsub.s32 0, %v734
  %v736 = vrot.slane %v731, %v735
  %v738 = vadd.f32 %v667, %v736
  %v739 = vadd.f32 %v668, %v736
  %v740 = vadd.f32 %v669, %v736
  %v741 = vadd.f32 %v670, %v736
  %v742 = vadd.f32 %v671, %v736
  %v743 = vadd.f32 %v672, %v736
  %v744 = vadd.f32 %v673, %v736
  %v745 = vadd.f32 %v674, %v736
  %v746 = vadd.f32 %v675, %v736
  %v747 = vadd.f32 %v676, %v736
  %v748 = vadd.f32 %v677, %v736
  %v749 = vadd.f32 %v678, %v736
  %v750 = vadd.f32 %v679, %v736
  %v751 = vadd.f32 %v680, %v736
  %v752 = vadd.f32 %v681, %v736
  %v753 = vadd.f32 %v682, %v736
  %v754 = vadd.f32 %v683, %v736
  %v755 = vadd.f32 %v684, %v736
  %v756 = vadd.f32 %v685, %v736
  %v757 = vadd.f32 %v686, %v736
  %v758 = vadd.f32 %v687, %v736
  %v759 = vadd.f32 %v688, %v736
  %v760 = vadd.f32 %v689, %v736
  %v761 = vadd.f32 %v690, %v736
  %v762 = vadd.f32 %v691, %v736
  %v763 = vadd.f32 %v692, %v736
  %v764 = vadd.f32 %v693, %v736
  %v765 = vadd.f32 %v694, %v736
  %v766 = vadd.f32 %v695, %v736
  %v767 = vadd.f32 %v696, %v736
  %v768 = vadd.f32 %v697, %v736
  %v769 = vadd.f32 %v698, %v736
  %v770 = vadd.f32 %v699, %v736
  %v771 = vadd.f32 %v700, %v736
  %v772 = vadd.f32 %v701, %v736
  %v773 = vadd.f32 %v702, %v736
  %v774 = vadd.f32 %v703, %v736
  %v775 = vadd.f32 %v704, %v736
  %v776 = vadd.f32 %v705, %v736
  %v777 = vadd.f32 %v706, %v736
  %v778 = vadd.f32 %v707, %v736
  %v779 = vadd.f32 %v708, %v736
  %v780 = vadd.f32 %v709, %v736
  %v781 = vadd.f32 %v710, %v736
  %v782 = vadd.f32 %v711, %v736
  %v783 = vadd.f32 %v712, %v736
  %v784 = vadd.f32 %v713, %v736
  %v785 = vadd.f32 %v714, %v736
  %v786 = vadd.f32 %v715, %v736
  %v787 = vadd.f32 %v716, %v736
  %v788 = vadd.f32 %v717, %v736
  %v789 = vadd.f32 %v718, %v736
  %v790 = vadd.f32 %v719, %v736
  %v791 = vadd.f32 %v720, %v736
  %v792 = vadd.f32 %v721, %v736
  %v793 = vadd.f32 %v722, %v736
  %v794 = vadd.f32 %v723, %v736
  %v795 = vadd.f32 %v724, %v736
  %v796 = vadd.f32 %v725, %v736
  %v797 = vadd.f32 %v726, %v736
  %v798 = vadd.f32 %v727, %v736
  %v799 = vadd.f32 %v728, %v736
  %v800 = vadd.f32 %v729, %v736
  %v801 = vadd.f32 %v730, %v736
  %v802 = vmax.f32 %v738, 0.0
  %v803 = vmax.f32 %v739, 0.0
  %v804 = vmax.f32 %v740, 0.0
  %v805 = vmax.f32 %v741, 0.0
  %v806 = vmax.f32 %v742, 0.0
  %v807 = vmax.f32 %v743, 0.0
  %v808 = vmax.f32 %v744, 0.0
  %v809 = vmax.f32 %v745, 0.0
  %v810 = vmax.f32 %v746, 0.0
  %v811 = vmax.f32 %v747, 0.0
  %v812 = vmax.f32 %v748, 0.0
  %v813 = vmax.f32 %v749, 0.0
  %v814 = vmax.f32 %v750, 0.0
  %v815 = vmax.f32 %v751, 0.0
  %v816 = vmax.f32 %v752, 0.0
  %v817 = vmax.f32 %v753, 0.0
  %v818 = vmax.f32 %v754, 0.0
  %v819 = vmax.f32 %v755, 0.0
  %v820 = vmax.f32 %v756, 0.0
  %v821 = vmax.f32 %v757, 0.0
  %v822 = vmax.f32 %v758, 0.0
  %v823 = vmax.f32 %v759, 0.0
  %v824 = vmax.f32 %v760, 0.0
  %v825 = vmax.f32 %v761, 0.0
  %v826 = vmax.f32 %v762, 0.0
  %v827 = vmax.f32 %v763, 0.0
  %v828 = vmax.f32 %v764, 0.0
  %v829 = vmax.f32 %v765, 0.0
  %v830 = vmax.f32 %v766, 0.0
  %v831 = vmax.f32 %v767, 0.0
  %v832 = vmax.f32 %v768, 0.0
  %v833 = vmax.f32 %v769, 0.0
  %v834 = vmax.f32 %v770, 0.0
  %v835 = vmax.f32 %v771, 0.0
  %v836 = vmax.f32 %v772, 0.0
  %v837 = vmax.f32 %v773, 0.0
  %v838 = vmax.f32 %v774, 0.0
  %v839 = vmax.f32 %v775, 0.0
  %v840 = vmax.f32 %v776, 0.0
  %v841 = vmax.f32 %v777, 0.0
  %v842 = vmax.f32 %v778, 0.0
  %v843 = vmax.f32 %v779, 0.0
  %v844 = vmax.f32 %v780, 0.0
  %v845 = vmax.f32 %v781, 0.0
  %v846 = vmax.f32 %v782, 0.0
  %v847 = vmax.f32 %v783, 0.0
  %v848 = vmax.f32 %v784, 0.0
  %v849 = vmax.f32 %v785, 0.0
  %v850 = vmax.f32 %v786, 0.0
  %v851 = vmax.f32 %v787, 0.0
  %v852 = vmax.f32 %v788, 0.0
  %v853 = vmax.f32 %v789, 0.0
  %v854 = vmax.f32 %v790, 0.0
  %v855 = vmax.f32 %v791, 0.0
  %v856 = vmax.f32 %v792, 0.0
  %v857 = vmax.f32 %v793, 0.0
  %v858 = vmax.f32 %v794, 0.0
  %v859 = vmax.f32 %v795, 0.0
  %v860 = vmax.f32 %v796, 0.0
  %v861 = vmax.f32 %v797, 0.0
  %v862 = vmax.f32 %v798, 0.0
  %v863 = vmax.f32 %v799, 0.0
  %v864 = vmax.f32 %v800, 0.0
  %v865 = vmax.f32 %v801, 0.0
  %v866 = vpack.c.bf16 %v803, %v802
  %v867 = vpack.c.bf16 %v805, %v804
  %v868 = vpack.c.bf16 %v807, %v806
  %v869 = vpack.c.bf16 %v809, %v808
  %v870 = vpack.c.bf16 %v811, %v810
  %v871 = vpack.c.bf16 %v813, %v812
  %v872 = vpack.c.bf16 %v815, %v814
  %v873 = vpack.c.bf16 %v817, %v816
  %v874 = vpack.c.bf16 %v819, %v818
  %v875 = vpack.c.bf16 %v821, %v820
  %v876 = vpack.c.bf16 %v823, %v822
  %v877 = vpack.c.bf16 %v825, %v824
  %v878 = vpack.c.bf16 %v827, %v826
  %v879 = vpack.c.bf16 %v829, %v828
  %v880 = vpack.c.bf16 %v831, %v830
  %v881 = vpack.c.bf16 %v833, %v832
  %v882 = vpack.c.bf16 %v835, %v834
  %v883 = vpack.c.bf16 %v837, %v836
  %v884 = vpack.c.bf16 %v839, %v838
  %v885 = vpack.c.bf16 %v841, %v840
  %v886 = vpack.c.bf16 %v843, %v842
  %v887 = vpack.c.bf16 %v845, %v844
  %v888 = vpack.c.bf16 %v847, %v846
  %v889 = vpack.c.bf16 %v849, %v848
  %v890 = vpack.c.bf16 %v851, %v850
  %v891 = vpack.c.bf16 %v853, %v852
  %v892 = vpack.c.bf16 %v855, %v854
  %v893 = vpack.c.bf16 %v857, %v856
  %v894 = vpack.c.bf16 %v859, %v858
  %v895 = vpack.c.bf16 %v861, %v860
  %v896 = vpack.c.bf16 %v863, %v862
  %v897 = vpack.c.bf16 %v865, %v864
  %v930 = vunpack.c.l.b16 %v866
  %v931 = vunpack.c.h.b16 %v866
  %v932 = vunpack.c.l.b16 %v867
  %v933 = vunpack.c.h.b16 %v867
  %v934 = vunpack.c.l.b16 %v868
  %v935 = vunpack.c.h.b16 %v868
  %v936 = vunpack.c.l.b16 %v869
  %v937 = vunpack.c.h.b16 %v869
  %v938 = vunpack.c.l.b16 %v870
  %v939 = vunpack.c.h.b16 %v870
  %v940 = vunpack.c.l.b16 %v871
  %v941 = vunpack.c.h.b16 %v871
  %v942 = vunpack.c.l.b16 %v872
  %v943 = vunpack.c.h.b16 %v872
  %v944 = vunpack.c.l.b16 %v873
  %v945 = vunpack.c.h.b16 %v873
  %v946 = vunpack.c.l.b16 %v874
  %v947 = vunpack.c.h.b16 %v874
  %v948 = vunpack.c.l.b16 %v875
  %v949 = vunpack.c.h.b16 %v875
  %v950 = vunpack.c.l.b16 %v876
  %v951 = vunpack.c.h.b16 %v876
  %v952 = vunpack.c.l.b16 %v877
  %v953 = vunpack.c.h.b16 %v877
  %v954 = vunpack.c.l.b16 %v878
  %v955 = vunpack.c.h.b16 %v878
  %v956 = vunpack.c.l.b16 %v879
  %v957 = vunpack.c.h.b16 %v879
  %v958 = vunpack.c.l.b16 %v880
  %v959 = vunpack.c.h.b16 %v880
  %v960 = vunpack.c.l.b16 %v881
  %v961 = vunpack.c.h.b16 %v881
  %v962 = vunpack.c.l.b16 %v882
  %v963 = vunpack.c.h.b16 %v882
  %v964 = vunpack.c.l.b16 %v883
  %v965 = vunpack.c.h.b16 %v883
  %v966 = vunpack.c.l.b16 %v884
  %v967 = vunpack.c.h.b16 %v884
  %v968 = vunpack.c.l.b16 %v885
  %v969 = vunpack.c.h.b16 %v885
  %v970 = vunpack.c.l.b16 %v886
  %v971 = vunpack.c.h.b16 %v886
  %v972 = vunpack.c.l.b16 %v887
  %v973 = vunpack.c.h.b16 %v887
  %v974 = vunpack.c.l.b16 %v888
  %v975 = vunpack.c.h.b16 %v888
  %v976 = vunpack.c.l.b16 %v889
  %v977 = vunpack.c.h.b16 %v889
  %v978 = vunpack.c.l.b16 %v890
  %v979 = vunpack.c.h.b16 %v890
  %v980 = vunpack.c.l.b16 %v891
  %v981 = vunpack.c.h.b16 %v891
  %v982 = vunpack.c.l.b16 %v892
  %v983 = vunpack.c.h.b16 %v892
  %v984 = vunpack.c.l.b16 %v893
  %v985 = vunpack.c.h.b16 %v893
  %v986 = vunpack.c.l.b16 %v894
  %v987 = vunpack.c.h.b16 %v894
  %v988 = vunpack.c.l.b16 %v895
  %v989 = vunpack.c.h.b16 %v895
  %v990 = vunpack.c.l.b16 %v896
  %v991 = vunpack.c.h.b16 %v896
  %v992 = vunpack.c.l.b16 %v897
  %v993 = vunpack.c.h.b16 %v897
  %v994 = vpack.c.b16 %v930, %v930
  %v995 = vpack.c.b16 %v931, %v931
  %v996 = vpack.c.b16 %v932, %v932
  %v997 = vpack.c.b16 %v933, %v933
  %v998 = vpack.c.b16 %v934, %v934
  %v999 = vpack.c.b16 %v935, %v935
  %v1000 = vpack.c.b16 %v936, %v936
  %v1001 = vpack.c.b16 %v937, %v937
  %v1002 = vpack.c.b16 %v938, %v938
  %v1003 = vpack.c.b16 %v939, %v939
  %v1004 = vpack.c.b16 %v940, %v940
  %v1005 = vpack.c.b16 %v941, %v941
  %v1006 = vpack.c.b16 %v942, %v942
  %v1007 = vpack.c.b16 %v943, %v943
  %v1008 = vpack.c.b16 %v944, %v944
  %v1009 = vpack.c.b16 %v945, %v945
  %v1010 = vpack.c.b16 %v946, %v946
  %v1011 = vpack.c.b16 %v947, %v947
  %v1012 = vpack.c.b16 %v948, %v948
  %v1013 = vpack.c.b16 %v949, %v949
  %v1014 = vpack.c.b16 %v950, %v950
  %v1015 = vpack.c.b16 %v951, %v951
  %v1016 = vpack.c.b16 %v952, %v952
  %v1017 = vpack.c.b16 %v953, %v953
  %v1018 = vpack.c.b16 %v954, %v954
  %v1019 = vpack.c.b16 %v955, %v955
  %v1020 = vpack.c.b16 %v956, %v956
  %v1021 = vpack.c.b16 %v957, %v957
  %v1022 = vpack.c.b16 %v958, %v958
  %v1023 = vpack.c.b16 %v959, %v959
  %v1024 = vpack.c.b16 %v960, %v960
  %v1025 = vpack.c.b16 %v961, %v961
  %v1026 = vpack.c.b16 %v962, %v962
  %v1027 = vpack.c.b16 %v963, %v963
  %v1028 = vpack.c.b16 %v964, %v964
  %v1029 = vpack.c.b16 %v965, %v965
  %v1030 = vpack.c.b16 %v966, %v966
  %v1031 = vpack.c.b16 %v967, %v967
  %v1032 = vpack.c.b16 %v968, %v968
  %v1033 = vpack.c.b16 %v969, %v969
  %v1034 = vpack.c.b16 %v970, %v970
  %v1035 = vpack.c.b16 %v971, %v971
  %v1036 = vpack.c.b16 %v972, %v972
  %v1037 = vpack.c.b16 %v973, %v973
  %v1038 = vpack.c.b16 %v974, %v974
  %v1039 = vpack.c.b16 %v975, %v975
  %v1040 = vpack.c.b16 %v976, %v976
  %v1041 = vpack.c.b16 %v977, %v977
  %v1042 = vpack.c.b16 %v978, %v978
  %v1043 = vpack.c.b16 %v979, %v979
  %v1044 = vpack.c.b16 %v980, %v980
  %v1045 = vpack.c.b16 %v981, %v981
  %v1046 = vpack.c.b16 %v982, %v982
  %v1047 = vpack.c.b16 %v983, %v983
  %v1048 = vpack.c.b16 %v984, %v984
  %v1049 = vpack.c.b16 %v985, %v985
  %v1050 = vpack.c.b16 %v986, %v986
  %v1051 = vpack.c.b16 %v987, %v987
  %v1052 = vpack.c.b16 %v988, %v988
  %v1053 = vpack.c.b16 %v989, %v989
  %v1054 = vpack.c.b16 %v990, %v990
  %v1055 = vpack.c.b16 %v991, %v991
  %v1056 = vpack.c.b16 %v992, %v992
  %v1057 = vpack.c.b16 %v993, %v993
  %vm1122 = vcmask 125952
  %1123 = vst.msk [vmem:[%s4] sm:$0xf] %vm1122, %v994
  %1124 = vst.msk [vmem:[%s4 + $0x4] sm:$0xf] %vm1122, %v995
  %1125 = vst.msk [vmem:[%s4 + $0x8] sm:$0xf] %vm1122, %v996
  %1126 = vst.msk [vmem:[%s4 + $0xc] sm:$0xf] %vm1122, %v997
  %1127 = vst.msk [vmem:[%s4 + $0x10] sm:$0xf] %vm1122, %v998
  %1128 = vst.msk [vmem:[%s4 + $0x14] sm:$0xf] %vm1122, %v999
  %1129 = vst.msk [vmem:[%s4 + $0x18] sm:$0xf] %vm1122, %v1000
  %1130 = vst.msk [vmem:[%s4 + $0x1c] sm:$0xf] %vm1122, %v1001
  %1131 = vst.msk [vmem:[%s4 + $0x20] sm:$0xf] %vm1122, %v1002
  %1132 = vst.msk [vmem:[%s4 + $0x24] sm:$0xf] %vm1122, %v1003
  %1133 = vst.msk [vmem:[%s4 + $0x28] sm:$0xf] %vm1122, %v1004
  %1134 = vst.msk [vmem:[%s4 + $0x2c] sm:$0xf] %vm1122, %v1005
  %1135 = vst.msk [vmem:[%s4 + $0x30] sm:$0xf] %vm1122, %v1006
  %1136 = vst.msk [vmem:[%s4 + $0x34] sm:$0xf] %vm1122, %v1007
  %1137 = vst.msk [vmem:[%s4 + $0x38] sm:$0xf] %vm1122, %v1008
  %1138 = vst.msk [vmem:[%s4 + $0x3c] sm:$0xf] %vm1122, %v1009
  %1139 = vst.msk [vmem:[%s4 + $0x40] sm:$0xf] %vm1122, %v1010
  %1140 = vst.msk [vmem:[%s4 + $0x44] sm:$0xf] %vm1122, %v1011
  %1141 = vst.msk [vmem:[%s4 + $0x48] sm:$0xf] %vm1122, %v1012
  %1142 = vst.msk [vmem:[%s4 + $0x4c] sm:$0xf] %vm1122, %v1013
  %1143 = vst.msk [vmem:[%s4 + $0x50] sm:$0xf] %vm1122, %v1014
  %1144 = vst.msk [vmem:[%s4 + $0x54] sm:$0xf] %vm1122, %v1015
  %1145 = vst.msk [vmem:[%s4 + $0x58] sm:$0xf] %vm1122, %v1016
  %1146 = vst.msk [vmem:[%s4 + $0x5c] sm:$0xf] %vm1122, %v1017
  %1147 = vst.msk [vmem:[%s4 + $0x60] sm:$0xf] %vm1122, %v1018
  %1148 = vst.msk [vmem:[%s4 + $0x64] sm:$0xf] %vm1122, %v1019
  %1149 = vst.msk [vmem:[%s4 + $0x68] sm:$0xf] %vm1122, %v1020
  %1150 = vst.msk [vmem:[%s4 + $0x6c] sm:$0xf] %vm1122, %v1021
  %1151 = vst.msk [vmem:[%s4 + $0x70] sm:$0xf] %vm1122, %v1022
  %1152 = vst.msk [vmem:[%s4 + $0x74] sm:$0xf] %vm1122, %v1023
  %1153 = vst.msk [vmem:[%s4 + $0x78] sm:$0xf] %vm1122, %v1024
  %1154 = vst.msk [vmem:[%s4 + $0x7c] sm:$0xf] %vm1122, %v1025
  %1155 = vst.msk [vmem:[%s4 + $0x80] sm:$0xf] %vm1122, %v1026
  %1156 = vst.msk [vmem:[%s4 + $0x84] sm:$0xf] %vm1122, %v1027
  %1157 = vst.msk [vmem:[%s4 + $0x88] sm:$0xf] %vm1122, %v1028
  %1158 = vst.msk [vmem:[%s4 + $0x8c] sm:$0xf] %vm1122, %v1029
  %1159 = vst.msk [vmem:[%s4 + $0x90] sm:$0xf] %vm1122, %v1030
  %1160 = vst.msk [vmem:[%s4 + $0x94] sm:$0xf] %vm1122, %v1031
  %1161 = vst.msk [vmem:[%s4 + $0x98] sm:$0xf] %vm1122, %v1032
  %1162 = vst.msk [vmem:[%s4 + $0x9c] sm:$0xf] %vm1122, %v1033
  %1163 = vst.msk [vmem:[%s4 + $0xa0] sm:$0xf] %vm1122, %v1034
  %1164 = vst.msk [vmem:[%s4 + $0xa4] sm:$0xf] %vm1122, %v1035
  %1165 = vst.msk [vmem:[%s4 + $0xa8] sm:$0xf] %vm1122, %v1036
  %1166 = vst.msk [vmem:[%s4 + $0xac] sm:$0xf] %vm1122, %v1037
  %1167 = vst.msk [vmem:[%s4 + $0xb0] sm:$0xf] %vm1122, %v1038
  %1168 = vst.msk [vmem:[%s4 + $0xb4] sm:$0xf] %vm1122, %v1039
  %1169 = vst.msk [vmem:[%s4 + $0xb8] sm:$0xf] %vm1122, %v1040
  %1170 = vst.msk [vmem:[%s4 + $0xbc] sm:$0xf] %vm1122, %v1041
  %1171 = vst.msk [vmem:[%s4 + $0xc0] sm:$0xf] %vm1122, %v1042
  %1172 = vst.msk [vmem:[%s4 + $0xc4] sm:$0xf] %vm1122, %v1043
  %1173 = vst.msk [vmem:[%s4 + $0xc8] sm:$0xf] %vm1122, %v1044
  %1174 = vst.msk [vmem:[%s4 + $0xcc] sm:$0xf] %vm1122, %v1045
  %1175 = vst.msk [vmem:[%s4 + $0xd0] sm:$0xf] %vm1122, %v1046
  %1176 = vst.msk [vmem:[%s4 + $0xd4] sm:$0xf] %vm1122, %v1047
  %1177 = vst.msk [vmem:[%s4 + $0xd8] sm:$0xf] %vm1122, %v1048
  %1178 = vst.msk [vmem:[%s4 + $0xdc] sm:$0xf] %vm1122, %v1049
  %1179 = vst.msk [vmem:[%s4 + $0xe0] sm:$0xf] %vm1122, %v1050
  %1180 = vst.msk [vmem:[%s4 + $0xe4] sm:$0xf] %vm1122, %v1051
  %1181 = vst.msk [vmem:[%s4 + $0xe8] sm:$0xf] %vm1122, %v1052
  %1182 = vst.msk [vmem:[%s4 + $0xec] sm:$0xf] %vm1122, %v1053
  %1183 = vst.msk [vmem:[%s4 + $0xf0] sm:$0xf] %vm1122, %v1054
  %1184 = vst.msk [vmem:[%s4 + $0xf4] sm:$0xf] %vm1122, %v1055
  %1185 = vst.msk [vmem:[%s4 + $0xf8] sm:$0xf] %vm1122, %v1056
  %1186 = vst.msk [vmem:[%s4 + $0xfc] sm:$0xf] %vm1122, %v1057
  // Predicated region
  $region18: #{segmentation_forward.13} parent=0 // pred_check
    _
  $region19: #{segmentation_forward.13} parent=0 // pred_check_branch
    %1188 = sbr.rel (0) target = $region21
  $region20: #{segmentation_forward.13} parent=0 // pred_region
    _
  $region21: #{segmentation_forward.13} parent=0 // pred_fallthru
    _
  // Predicated region
  $region22: #{segmentation_forward.13} parent=0 // pred_check
    _
  $region23: #{segmentation_forward.13} parent=0 // pred_check_branch
    %1190 = sbr.rel (0) target = $region25
  $region24: #{segmentation_forward.13} parent=0 // pred_region
    _
  $region25: #{segmentation_forward.13} parent=0 // pred_fallthru
    _

// kernel: segmentation_forward.14
$region0: #{segmentation_forward.14}
  #allocation0 [shape = 'u32[]', space=smem, size = 0x4, offset = 0x4, fixed_abs, tag = 'smem constant byte address 0x4 - core index']
  #allocation1 [shape = 'u32[144,128]{1,0:T(1,128)}', space=vmem, size = 0x12000, scoped, tag = 'internal scratch']
  %s0 = inlined_call_operand.vmem [shape: bf16[512,64], index: 0, kind: input, shape index: {}]
  %s1 = inlined_call_operand.vmem [shape: bf16[64,64], index: 1, kind: input, shape index: {}]
  %s2 = inlined_call_operand.vmem [shape: f32[1,64], index: 2, kind: input, shape index: {}]
  %s3 = inlined_call_operand.vmem [shape: f32[1,64], index: 3, kind: input, shape index: {}]
  %s4 = inlined_call_operand.vmem [shape: bf16[512,64], index: 4, kind: output, shape index: {}]
  %s5 = sld [smem:[#allocation0]]
  $region26: #{segmentation_forward.14} parent=0
    _
  %s7 = ssub.s32 1, %s5
  %s8 = scalar_select 0, %s7, %s5
  // Predicated region
  $region2: #{segmentation_forward.14} parent=0 // pred_check
    _
  $region3: #{segmentation_forward.14} parent=0 // pred_check_branch
    %10 = sbr.rel (0) target = $region5
  $region4: #{segmentation_forward.14} parent=0 // pred_region
    _
  $region5: #{segmentation_forward.14} parent=0 // pred_fallthru
    _
  // Predicated region
  $region6: #{segmentation_forward.14} parent=0 // pred_check
    _
  $region7: #{segmentation_forward.14} parent=0 // pred_check_branch
    %12 = sbr.rel (0) target = $region9
  $region8: #{segmentation_forward.14} parent=0 // pred_region
    _
  $region9: #{segmentation_forward.14} parent=0 // pred_fallthru
    _
  // Predicated region
  $region10: #{segmentation_forward.14} parent=0 // pred_check
    _
  $region11: #{segmentation_forward.14} parent=0 // pred_check_branch
    %14 = sbr.rel (0) target = $region13
  $region12: #{segmentation_forward.14} parent=0 // pred_region
    _
  $region13: #{segmentation_forward.14} parent=0 // pred_fallthru
    _
  // Predicated region
  $region14: #{segmentation_forward.14} parent=0 // pred_check
    _
  $region15: #{segmentation_forward.14} parent=0 // pred_check_branch
    %16 = sbr.rel (0) target = $region17
  $region16: #{segmentation_forward.14} parent=0 // pred_region
    _
  $region17: #{segmentation_forward.14} parent=0 // pred_fallthru
    _
  %v18 = vld [vmem:[%s0] sm:$0xf]
  %v19 = vld [vmem:[%s0 + $0x4] sm:$0xf]
  %v20 = vld [vmem:[%s0 + $0x8] sm:$0xf]
  %v21 = vld [vmem:[%s0 + $0xc] sm:$0xf]
  %v22 = vld [vmem:[%s0 + $0x10] sm:$0xf]
  %v23 = vld [vmem:[%s0 + $0x14] sm:$0xf]
  %v24 = vld [vmem:[%s0 + $0x18] sm:$0xf]
  %v25 = vld [vmem:[%s0 + $0x1c] sm:$0xf]
  %v26 = vld [vmem:[%s0 + $0x20] sm:$0xf]
  %v27 = vld [vmem:[%s0 + $0x24] sm:$0xf]
  %v28 = vld [vmem:[%s0 + $0x28] sm:$0xf]
  %v29 = vld [vmem:[%s0 + $0x2c] sm:$0xf]
  %v30 = vld [vmem:[%s0 + $0x30] sm:$0xf]
  %v31 = vld [vmem:[%s0 + $0x34] sm:$0xf]
  %v32 = vld [vmem:[%s0 + $0x38] sm:$0xf]
  %v33 = vld [vmem:[%s0 + $0x3c] sm:$0xf]
  %v34 = vld [vmem:[%s0 + $0x40] sm:$0xf]
  %v35 = vld [vmem:[%s0 + $0x44] sm:$0xf]
  %v36 = vld [vmem:[%s0 + $0x48] sm:$0xf]
  %v37 = vld [vmem:[%s0 + $0x4c] sm:$0xf]
  %v38 = vld [vmem:[%s0 + $0x50] sm:$0xf]
  %v39 = vld [vmem:[%s0 + $0x54] sm:$0xf]
  %v40 = vld [vmem:[%s0 + $0x58] sm:$0xf]
  %v41 = vld [vmem:[%s0 + $0x5c] sm:$0xf]
  %v42 = vld [vmem:[%s0 + $0x60] sm:$0xf]
  %v43 = vld [vmem:[%s0 + $0x64] sm:$0xf]
  %v44 = vld [vmem:[%s0 + $0x68] sm:$0xf]
  %v45 = vld [vmem:[%s0 + $0x6c] sm:$0xf]
  %v46 = vld [vmem:[%s0 + $0x70] sm:$0xf]
  %v47 = vld [vmem:[%s0 + $0x74] sm:$0xf]
  %v48 = vld [vmem:[%s0 + $0x78] sm:$0xf]
  %v49 = vld [vmem:[%s0 + $0x7c] sm:$0xf]
  %v50 = vld [vmem:[%s0 + $0x80] sm:$0xf]
  %v51 = vld [vmem:[%s0 + $0x84] sm:$0xf]
  %v52 = vld [vmem:[%s0 + $0x88] sm:$0xf]
  %v53 = vld [vmem:[%s0 + $0x8c] sm:$0xf]
  %v54 = vld [vmem:[%s0 + $0x90] sm:$0xf]
  %v55 = vld [vmem:[%s0 + $0x94] sm:$0xf]
  %v56 = vld [vmem:[%s0 + $0x98] sm:$0xf]
  %v57 = vld [vmem:[%s0 + $0x9c] sm:$0xf]
  %v58 = vld [vmem:[%s0 + $0xa0] sm:$0xf]
  %v59 = vld [vmem:[%s0 + $0xa4] sm:$0xf]
  %v60 = vld [vmem:[%s0 + $0xa8] sm:$0xf]
  %v61 = vld [vmem:[%s0 + $0xac] sm:$0xf]
  %v62 = vld [vmem:[%s0 + $0xb0] sm:$0xf]
  %v63 = vld [vmem:[%s0 + $0xb4] sm:$0xf]
  %v64 = vld [vmem:[%s0 + $0xb8] sm:$0xf]
  %v65 = vld [vmem:[%s0 + $0xbc] sm:$0xf]
  %v66 = vld [vmem:[%s0 + $0xc0] sm:$0xf]
  %v67 = vld [vmem:[%s0 + $0xc4] sm:$0xf]
  %v68 = vld [vmem:[%s0 + $0xc8] sm:$0xf]
  %v69 = vld [vmem:[%s0 + $0xcc] sm:$0xf]
  %v70 = vld [vmem:[%s0 + $0xd0] sm:$0xf]
  %v71 = vld [vmem:[%s0 + $0xd4] sm:$0xf]
  %v72 = vld [vmem:[%s0 + $0xd8] sm:$0xf]
  %v73 = vld [vmem:[%s0 + $0xdc] sm:$0xf]
  %v74 = vld [vmem:[%s0 + $0xe0] sm:$0xf]
  %v75 = vld [vmem:[%s0 + $0xe4] sm:$0xf]
  %v76 = vld [vmem:[%s0 + $0xe8] sm:$0xf]
  %v77 = vld [vmem:[%s0 + $0xec] sm:$0xf]
  %v78 = vld [vmem:[%s0 + $0xf0] sm:$0xf]
  %v79 = vld [vmem:[%s0 + $0xf4] sm:$0xf]
  %v80 = vld [vmem:[%s0 + $0xf8] sm:$0xf]
  %v81 = vld [vmem:[%s0 + $0xfc] sm:$0xf]
  %v82 = vld [vmem:[%s1] sm:$0xf]
  %v83 = vld [vmem:[%s1 + $0x4] sm:$0xf]
  %v84 = vld [vmem:[%s1 + $0x8] sm:$0xf]
  %v85 = vld [vmem:[%s1 + $0xc] sm:$0xf]
  %v86 = vld [vmem:[%s1 + $0x10] sm:$0xf]
  %v87 = vld [vmem:[%s1 + $0x14] sm:$0xf]
  %v88 = vld [vmem:[%s1 + $0x18] sm:$0xf]
  %v89 = vld [vmem:[%s1 + $0x1c] sm:$0xf]
  %v154 = vunpack.c.l.b16 %v18
  %v155 = vunpack.c.l.b16 %v19
  %v156 = vunpack.c.l.b16 %v20
  %v157 = vunpack.c.l.b16 %v21
  %v158 = vunpack.c.l.b16 %v22
  %v159 = vunpack.c.l.b16 %v23
  %v160 = vunpack.c.l.b16 %v24
  %v161 = vunpack.c.l.b16 %v25
  %v162 = vunpack.c.l.b16 %v26
  %v163 = vunpack.c.l.b16 %v27
  %v164 = vunpack.c.l.b16 %v28
  %v165 = vunpack.c.l.b16 %v29
  %v166 = vunpack.c.l.b16 %v30
  %v167 = vunpack.c.l.b16 %v31
  %v168 = vunpack.c.l.b16 %v32
  %v169 = vunpack.c.l.b16 %v33
  %v170 = vunpack.c.l.b16 %v34
  %v171 = vunpack.c.l.b16 %v35
  %v172 = vunpack.c.l.b16 %v36
  %v173 = vunpack.c.l.b16 %v37
  %v174 = vunpack.c.l.b16 %v38
  %v175 = vunpack.c.l.b16 %v39
  %v176 = vunpack.c.l.b16 %v40
  %v177 = vunpack.c.l.b16 %v41
  %v178 = vunpack.c.l.b16 %v42
  %v179 = vunpack.c.l.b16 %v43
  %v180 = vunpack.c.l.b16 %v44
  %v181 = vunpack.c.l.b16 %v45
  %v182 = vunpack.c.l.b16 %v46
  %v183 = vunpack.c.l.b16 %v47
  %v184 = vunpack.c.l.b16 %v48
  %v185 = vunpack.c.l.b16 %v49
  %v186 = vunpack.c.l.b16 %v50
  %v187 = vunpack.c.l.b16 %v51
  %v188 = vunpack.c.l.b16 %v52
  %v189 = vunpack.c.l.b16 %v53
  %v190 = vunpack.c.l.b16 %v54
  %v191 = vunpack.c.l.b16 %v55
  %v192 = vunpack.c.l.b16 %v56
  %v193 = vunpack.c.l.b16 %v57
  %v194 = vunpack.c.l.b16 %v58
  %v195 = vunpack.c.l.b16 %v59
  %v196 = vunpack.c.l.b16 %v60
  %v197 = vunpack.c.l.b16 %v61
  %v198 = vunpack.c.l.b16 %v62
  %v199 = vunpack.c.l.b16 %v63
  %v200 = vunpack.c.l.b16 %v64
  %v201 = vunpack.c.l.b16 %v65
  %v202 = vunpack.c.l.b16 %v66
  %v203 = vunpack.c.l.b16 %v67
  %v204 = vunpack.c.l.b16 %v68
  %v205 = vunpack.c.l.b16 %v69
  %v206 = vunpack.c.l.b16 %v70
  %v207 = vunpack.c.l.b16 %v71
  %v208 = vunpack.c.l.b16 %v72
  %v209 = vunpack.c.l.b16 %v73
  %v210 = vunpack.c.l.b16 %v74
  %v211 = vunpack.c.l.b16 %v75
  %v212 = vunpack.c.l.b16 %v76
  %v213 = vunpack.c.l.b16 %v77
  %v214 = vunpack.c.l.b16 %v78
  %v215 = vunpack.c.l.b16 %v79
  %v216 = vunpack.c.l.b16 %v80
  %v217 = vunpack.c.l.b16 %v81
  %v218 = vpack.c.b16 %v155, %v154
  %v219 = vpack.c.b16 %v157, %v156
  %v220 = vpack.c.b16 %v159, %v158
  %v221 = vpack.c.b16 %v161, %v160
  %v222 = vpack.c.b16 %v163, %v162
  %v223 = vpack.c.b16 %v165, %v164
  %v224 = vpack.c.b16 %v167, %v166
  %v225 = vpack.c.b16 %v169, %v168
  %v226 = vpack.c.b16 %v171, %v170
  %v227 = vpack.c.b16 %v173, %v172
  %v228 = vpack.c.b16 %v175, %v174
  %v229 = vpack.c.b16 %v177, %v176
  %v230 = vpack.c.b16 %v179, %v178
  %v231 = vpack.c.b16 %v181, %v180
  %v232 = vpack.c.b16 %v183, %v182
  %v233 = vpack.c.b16 %v185, %v184
  %v234 = vpack.c.b16 %v187, %v186
  %v235 = vpack.c.b16 %v189, %v188
  %v236 = vpack.c.b16 %v191, %v190
  %v237 = vpack.c.b16 %v193, %v192
  %v238 = vpack.c.b16 %v195, %v194
  %v239 = vpack.c.b16 %v197, %v196
  %v240 = vpack.c.b16 %v199, %v198
  %v241 = vpack.c.b16 %v201, %v200
  %v242 = vpack.c.b16 %v203, %v202
  %v243 = vpack.c.b16 %v205, %v204
  %v244 = vpack.c.b16 %v207, %v206
  %v245 = vpack.c.b16 %v209, %v208
  %v246 = vpack.c.b16 %v211, %v210
  %v247 = vpack.c.b16 %v213, %v212
  %v248 = vpack.c.b16 %v215, %v214
  %v249 = vpack.c.b16 %v217, %v216
  %v258 = vunpack.c.l.b16 %v82
  %v259 = vunpack.c.l.b16 %v83
  %v260 = vunpack.c.l.b16 %v84
  %v261 = vunpack.c.l.b16 %v85
  %v262 = vunpack.c.l.b16 %v86
  %v263 = vunpack.c.l.b16 %v87
  %v264 = vunpack.c.l.b16 %v88
  %v265 = vunpack.c.l.b16 %v89
  %v266 = vpack.c.b16 %v259, %v258
  %v267 = vpack.c.b16 %v261, %v260
  %v268 = vpack.c.b16 %v263, %v262
  %v269 = vpack.c.b16 %v265, %v264
  %vm274 = vcmask 523264
  %v276 = vsel %vm274, %v218, 0
  %v279 = vsel %vm274, %v219, 0
  %v282 = vsel %vm274, %v220, 0
  %v285 = vsel %vm274, %v221, 0
  %v288 = vsel %vm274, %v222, 0
  %v291 = vsel %vm274, %v223, 0
  %v294 = vsel %vm274, %v224, 0
  %v297 = vsel %vm274, %v225, 0
  %v300 = vsel %vm274, %v226, 0
  %v303 = vsel %vm274, %v227, 0
  %v306 = vsel %vm274, %v228, 0
  %v309 = vsel %vm274, %v229, 0
  %v312 = vsel %vm274, %v230, 0
  %v315 = vsel %vm274, %v231, 0
  %v318 = vsel %vm274, %v232, 0
  %v321 = vsel %vm274, %v233, 0
  %v324 = vsel %vm274, %v234, 0
  %v327 = vsel %vm274, %v235, 0
  %v330 = vsel %vm274, %v236, 0
  %v333 = vsel %vm274, %v237, 0
  %v336 = vsel %vm274, %v238, 0
  %v339 = vsel %vm274, %v239, 0
  %v342 = vsel %vm274, %v240, 0
  %v345 = vsel %vm274, %v241, 0
  %v348 = vsel %vm274, %v242, 0
  %v351 = vsel %vm274, %v243, 0
  %v354 = vsel %vm274, %v244, 0
  %v357 = vsel %vm274, %v245, 0
  %v360 = vsel %vm274, %v246, 0
  %v363 = vsel %vm274, %v247, 0
  %v366 = vsel %vm274, %v248, 0
  %v369 = vsel %vm274, %v249, 0
  %371 = vmatprep.subr.bf16.mxu0 0
  %372 = vmatpush1.bf16.msra.mxu0 %v266
  %373 = vmatprep.subr.bf16.mxu0 0
  %374 = vmatpush1.bf16.msra.mxu0 %v267
  %375 = vmatprep.subr.bf16.mxu0 0
  %376 = vmatpush1.bf16.msra.mxu0 %v268
  %377 = vmatprep.subr.bf16.mxu0 0
  %378 = vmatpush1.bf16.msra.mxu0 %v269
  %379 = vmatprep.subr.bf16.mxu0 0
  %380 = vmatpush1.bf16.msra.mxu0 0
  %381 = vmatprep.subr.bf16.mxu0 0
  %382 = vmatpush1.bf16.msra.mxu0 0
  %383 = vmatprep.subr.bf16.mxu0 0
  %384 = vmatpush1.bf16.msra.mxu0 0
  %385 = vmatprep.subr.bf16.mxu0 0
  %386 = vmatpush1.bf16.msra.mxu0 0
  %387 = vmatprep.subr.bf16.mxu0 0
  %388 = vmatpush1.bf16.msra.mxu0 0
  %389 = vmatprep.subr.bf16.mxu0 0
  %390 = vmatpush1.bf16.msra.mxu0 0
  %391 = vmatprep.subr.bf16.mxu0 0
  %392 = vmatpush1.bf16.msra.mxu0 0
  %393 = vmatprep.subr.bf16.mxu0 0
  %394 = vmatpush1.bf16.msra.mxu0 0
  %395 = vmatprep.subr.bf16.mxu0 0
  %396 = vmatpush1.bf16.msra.mxu0 0
  %397 = vmatprep.subr.bf16.mxu0 0
  %398 = vmatpush1.bf16.msra.mxu0 0
  %399 = vmatprep.subr.bf16.mxu0 0
  %400 = vmatpush1.bf16.msra.mxu0 0
  %401 = vmatprep.subr.bf16.mxu0 0
  %402 = vmatpush1.bf16.msra.mxu0 0
  %403 = vmatprep.mubr.bf16.mxu0 0
  %404 = vmatmul.mubr.bf16.gmra.mrb[0].mxu0 %v276
  %v405 = vpop.f32.mrb[0].mxu0
  %v406 = vadd.f32 0.0, %v405
  %v407 = vpop.f32.mrb[0].mxu0
  %v408 = vpop.f32.mrb[0].mxu0
  %v409 = vadd.f32 0.0, %v408
  %v410 = vpop.f32.mrb[0].mxu0
  %411 = vmatprep.mubr.bf16.mxu0 0
  %412 = vmatmul.mubr.bf16.gmra.mrb[0].mxu0 %v279
  %v413 = vpop.f32.mrb[0].mxu0
  %v414 = vadd.f32 0.0, %v413
  %v415 = vpop.f32.mrb[0].mxu0
  %v416 = vpop.f32.mrb[0].mxu0
  %v417 = vadd.f32 0.0, %v416
  %v418 = vpop.f32.mrb[0].mxu0
  %419 = vmatprep.mubr.bf16.mxu0 0
  %420 = vmatmul.mubr.bf16.gmra.mrb[0].mxu0 %v282
  %v421 = vpop.f32.mrb[0].mxu0
  %v422 = vadd.f32 0.0, %v421
  %v423 = vpop.f32.mrb[0].mxu0
  %v424 = vpop.f32.mrb[0].mxu0
  %v425 = vadd.f32 0.0, %v424
  %v426 = vpop.f32.mrb[0].mxu0
  %427 = vmatprep.mubr.bf16.mxu0 0
  %428 = vmatmul.mubr.bf16.gmra.mrb[0].mxu0 %v285
  %v429 = vpop.f32.mrb[0].mxu0
  %v430 = vadd.f32 0.0, %v429
  %v431 = vpop.f32.mrb[0].mxu0
  %v432 = vpop.f32.mrb[0].mxu0
  %v433 = vadd.f32 0.0, %v432
  %v434 = vpop.f32.mrb[0].mxu0
  %435 = vmatprep.mubr.bf16.mxu0 0
  %436 = vmatmul.mubr.bf16.gmra.mrb[0].mxu0 %v288
  %v437 = vpop.f32.mrb[0].mxu0
  %v438 = vadd.f32 0.0, %v437
  %v439 = vpop.f32.mrb[0].mxu0
  %v440 = vpop.f32.mrb[0].mxu0
  %v441 = vadd.f32 0.0, %v440
  %v442 = vpop.f32.mrb[0].mxu0
  %443 = vmatprep.mubr.bf16.mxu0 0
  %444 = vmatmul.mubr.bf16.gmra.mrb[0].mxu0 %v291
  %v445 = vpop.f32.mrb[0].mxu0
  %v446 = vadd.f32 0.0, %v445
  %v447 = vpop.f32.mrb[0].mxu0
  %v448 = vpop.f32.mrb[0].mxu0
  %v449 = vadd.f32 0.0, %v448
  %v450 = vpop.f32.mrb[0].mxu0
  %451 = vmatprep.mubr.bf16.mxu0 0
  %452 = vmatmul.mubr.bf16.gmra.mrb[0].mxu0 %v294
  %v453 = vpop.f32.mrb[0].mxu0
  %v454 = vadd.f32 0.0, %v453
  %v455 = vpop.f32.mrb[0].mxu0
  %v456 = vpop.f32.mrb[0].mxu0
  %v457 = vadd.f32 0.0, %v456
  %v458 = vpop.f32.mrb[0].mxu0
  %459 = vmatprep.mubr.bf16.mxu0 0
  %460 = vmatmul.mubr.bf16.gmra.mrb[0].mxu0 %v297
  %v461 = vpop.f32.mrb[0].mxu0
  %v462 = vadd.f32 0.0, %v461
  %v463 = vpop.f32.mrb[0].mxu0
  %v464 = vpop.f32.mrb[0].mxu0
  %v465 = vadd.f32 0.0, %v464
  %v466 = vpop.f32.mrb[0].mxu0
  %467 = vmatprep.mubr.bf16.mxu0 0
  %468 = vmatmul.mubr.bf16.gmra.mrb[0].mxu0 %v300
  %v469 = vpop.f32.mrb[0].mxu0
  %v470 = vadd.f32 0.0, %v469
  %v471 = vpop.f32.mrb[0].mxu0
  %v472 = vpop.f32.mrb[0].mxu0
  %v473 = vadd.f32 0.0, %v472
  %v474 = vpop.f32.mrb[0].mxu0
  %475 = vmatprep.mubr.bf16.mxu0 0
  %476 = vmatmul.mubr.bf16.gmra.mrb[0].mxu0 %v303
  %v477 = vpop.f32.mrb[0].mxu0
  %v478 = vadd.f32 0.0, %v477
  %v479 = vpop.f32.mrb[0].mxu0
  %v480 = vpop.f32.mrb[0].mxu0
  %v481 = vadd.f32 0.0, %v480
  %v482 = vpop.f32.mrb[0].mxu0
  %483 = vmatprep.mubr.bf16.mxu0 0
  %484 = vmatmul.mubr.bf16.gmra.mrb[0].mxu0 %v306
  %v485 = vpop.f32.mrb[0].mxu0
  %v486 = vadd.f32 0.0, %v485
  %v487 = vpop.f32.mrb[0].mxu0
  %v488 = vpop.f32.mrb[0].mxu0
  %v489 = vadd.f32 0.0, %v488
  %v490 = vpop.f32.mrb[0].mxu0
  %491 = vmatprep.mubr.bf16.mxu0 0
  %492 = vmatmul.mubr.bf16.gmra.mrb[0].mxu0 %v309
  %v493 = vpop.f32.mrb[0].mxu0
  %v494 = vadd.f32 0.0, %v493
  %v495 = vpop.f32.mrb[0].mxu0
  %v496 = vpop.f32.mrb[0].mxu0
  %v497 = vadd.f32 0.0, %v496
  %v498 = vpop.f32.mrb[0].mxu0
  %499 = vmatprep.mubr.bf16.mxu0 0
  %500 = vmatmul.mubr.bf16.gmra.mrb[0].mxu0 %v312
  %v501 = vpop.f32.mrb[0].mxu0
  %v502 = vadd.f32 0.0, %v501
  %v503 = vpop.f32.mrb[0].mxu0
  %v504 = vpop.f32.mrb[0].mxu0
  %v505 = vadd.f32 0.0, %v504
  %v506 = vpop.f32.mrb[0].mxu0
  %507 = vmatprep.mubr.bf16.mxu0 0
  %508 = vmatmul.mubr.bf16.gmra.mrb[0].mxu0 %v315
  %v509 = vpop.f32.mrb[0].mxu0
  %v510 = vadd.f32 0.0, %v509
  %v511 = vpop.f32.mrb[0].mxu0
  %v512 = vpop.f32.mrb[0].mxu0
  %v513 = vadd.f32 0.0, %v512
  %v514 = vpop.f32.mrb[0].mxu0
  %515 = vmatprep.mubr.bf16.mxu0 0
  %516 = vmatmul.mubr.bf16.gmra.mrb[0].mxu0 %v318
  %v517 = vpop.f32.mrb[0].mxu0
  %v518 = vadd.f32 0.0, %v517
  %v519 = vpop.f32.mrb[0].mxu0
  %v520 = vpop.f32.mrb[0].mxu0
  %v521 = vadd.f32 0.0, %v520
  %v522 = vpop.f32.mrb[0].mxu0
  %523 = vmatprep.mubr.bf16.mxu0 0
  %524 = vmatmul.mubr.bf16.gmra.mrb[0].mxu0 %v321
  %v525 = vpop.f32.mrb[0].mxu0
  %v526 = vadd.f32 0.0, %v525
  %v527 = vpop.f32.mrb[0].mxu0
  %v528 = vpop.f32.mrb[0].mxu0
  %v529 = vadd.f32 0.0, %v528
  %v530 = vpop.f32.mrb[0].mxu0
  %531 = vmatprep.mubr.bf16.mxu0 0
  %532 = vmatmul.mubr.bf16.gmra.mrb[0].mxu0 %v324
  %v533 = vpop.f32.mrb[0].mxu0
  %v534 = vadd.f32 0.0, %v533
  %v535 = vpop.f32.mrb[0].mxu0
  %v536 = vpop.f32.mrb[0].mxu0
  %v537 = vadd.f32 0.0, %v536
  %v538 = vpop.f32.mrb[0].mxu0
  %539 = vmatprep.mubr.bf16.mxu0 0
  %540 = vmatmul.mubr.bf16.gmra.mrb[0].mxu0 %v327
  %v541 = vpop.f32.mrb[0].mxu0
  %v542 = vadd.f32 0.0, %v541
  %v543 = vpop.f32.mrb[0].mxu0
  %v544 = vpop.f32.mrb[0].mxu0
  %v545 = vadd.f32 0.0, %v544
  %v546 = vpop.f32.mrb[0].mxu0
  %547 = vmatprep.mubr.bf16.mxu0 0
  %548 = vmatmul.mubr.bf16.gmra.mrb[0].mxu0 %v330
  %v549 = vpop.f32.mrb[0].mxu0
  %v550 = vadd.f32 0.0, %v549
  %v551 = vpop.f32.mrb[0].mxu0
  %v552 = vpop.f32.mrb[0].mxu0
  %v553 = vadd.f32 0.0, %v552
  %v554 = vpop.f32.mrb[0].mxu0
  %555 = vmatprep.mubr.bf16.mxu0 0
  %556 = vmatmul.mubr.bf16.gmra.mrb[0].mxu0 %v333
  %v557 = vpop.f32.mrb[0].mxu0
  %v558 = vadd.f32 0.0, %v557
  %v559 = vpop.f32.mrb[0].mxu0
  %v560 = vpop.f32.mrb[0].mxu0
  %v561 = vadd.f32 0.0, %v560
  %v562 = vpop.f32.mrb[0].mxu0
  %563 = vmatprep.mubr.bf16.mxu0 0
  %564 = vmatmul.mubr.bf16.gmra.mrb[0].mxu0 %v336
  %v565 = vpop.f32.mrb[0].mxu0
  %v566 = vadd.f32 0.0, %v565
  %v567 = vpop.f32.mrb[0].mxu0
  %v568 = vpop.f32.mrb[0].mxu0
  %v569 = vadd.f32 0.0, %v568
  %v570 = vpop.f32.mrb[0].mxu0
  %571 = vmatprep.mubr.bf16.mxu0 0
  %572 = vmatmul.mubr.bf16.gmra.mrb[0].mxu0 %v339
  %v573 = vpop.f32.mrb[0].mxu0
  %v574 = vadd.f32 0.0, %v573
  %v575 = vpop.f32.mrb[0].mxu0
  %v576 = vpop.f32.mrb[0].mxu0
  %v577 = vadd.f32 0.0, %v576
  %v578 = vpop.f32.mrb[0].mxu0
  %579 = vmatprep.mubr.bf16.mxu0 0
  %580 = vmatmul.mubr.bf16.gmra.mrb[0].mxu0 %v342
  %v581 = vpop.f32.mrb[0].mxu0
  %v582 = vadd.f32 0.0, %v581
  %v583 = vpop.f32.mrb[0].mxu0
  %v584 = vpop.f32.mrb[0].mxu0
  %v585 = vadd.f32 0.0, %v584
  %v586 = vpop.f32.mrb[0].mxu0
  %587 = vmatprep.mubr.bf16.mxu0 0
  %588 = vmatmul.mubr.bf16.gmra.mrb[0].mxu0 %v345
  %v589 = vpop.f32.mrb[0].mxu0
  %v590 = vadd.f32 0.0, %v589
  %v591 = vpop.f32.mrb[0].mxu0
  %v592 = vpop.f32.mrb[0].mxu0
  %v593 = vadd.f32 0.0, %v592
  %v594 = vpop.f32.mrb[0].mxu0
  %595 = vmatprep.mubr.bf16.mxu0 0
  %596 = vmatmul.mubr.bf16.gmra.mrb[0].mxu0 %v348
  %v597 = vpop.f32.mrb[0].mxu0
  %v598 = vadd.f32 0.0, %v597
  %v599 = vpop.f32.mrb[0].mxu0
  %v600 = vpop.f32.mrb[0].mxu0
  %v601 = vadd.f32 0.0, %v600
  %v602 = vpop.f32.mrb[0].mxu0
  %603 = vmatprep.mubr.bf16.mxu0 0
  %604 = vmatmul.mubr.bf16.gmra.mrb[0].mxu0 %v351
  %v605 = vpop.f32.mrb[0].mxu0
  %v606 = vadd.f32 0.0, %v605
  %v607 = vpop.f32.mrb[0].mxu0
  %v608 = vpop.f32.mrb[0].mxu0
  %v609 = vadd.f32 0.0, %v608
  %v610 = vpop.f32.mrb[0].mxu0
  %611 = vmatprep.mubr.bf16.mxu0 0
  %612 = vmatmul.mubr.bf16.gmra.mrb[0].mxu0 %v354
  %v613 = vpop.f32.mrb[0].mxu0
  %v614 = vadd.f32 0.0, %v613
  %v615 = vpop.f32.mrb[0].mxu0
  %v616 = vpop.f32.mrb[0].mxu0
  %v617 = vadd.f32 0.0, %v616
  %v618 = vpop.f32.mrb[0].mxu0
  %619 = vmatprep.mubr.bf16.mxu0 0
  %620 = vmatmul.mubr.bf16.gmra.mrb[0].mxu0 %v357
  %v621 = vpop.f32.mrb[0].mxu0
  %v622 = vadd.f32 0.0, %v621
  %v623 = vpop.f32.mrb[0].mxu0
  %v624 = vpop.f32.mrb[0].mxu0
  %v625 = vadd.f32 0.0, %v624
  %v626 = vpop.f32.mrb[0].mxu0
  %627 = vmatprep.mubr.bf16.mxu0 0
  %628 = vmatmul.mubr.bf16.gmra.mrb[0].mxu0 %v360
  %v629 = vpop.f32.mrb[0].mxu0
  %v630 = vadd.f32 0.0, %v629
  %v631 = vpop.f32.mrb[0].mxu0
  %v632 = vpop.f32.mrb[0].mxu0
  %v633 = vadd.f32 0.0, %v632
  %v634 = vpop.f32.mrb[0].mxu0
  %635 = vmatprep.mubr.bf16.mxu0 0
  %636 = vmatmul.mubr.bf16.gmra.mrb[0].mxu0 %v363
  %v637 = vpop.f32.mrb[0].mxu0
  %v638 = vadd.f32 0.0, %v637
  %v639 = vpop.f32.mrb[0].mxu0
  %v640 = vpop.f32.mrb[0].mxu0
  %v641 = vadd.f32 0.0, %v640
  %v642 = vpop.f32.mrb[0].mxu0
  %643 = vmatprep.mubr.bf16.mxu0 0
  %644 = vmatmul.mubr.bf16.gmra.mrb[0].mxu0 %v366
  %v645 = vpop.f32.mrb[0].mxu0
  %v646 = vadd.f32 0.0, %v645
  %v647 = vpop.f32.mrb[0].mxu0
  %v648 = vpop.f32.mrb[0].mxu0
  %v649 = vadd.f32 0.0, %v648
  %v650 = vpop.f32.mrb[0].mxu0
  %651 = vmatprep.mubr.bf16.mxu0 0
  %652 = vmatmul.mubr.bf16.gmra.mrb[0].mxu0 %v369
  %v653 = vpop.f32.mrb[0].mxu0
  %v654 = vadd.f32 0.0, %v653
  %v655 = vpop.f32.mrb[0].mxu0
  %v656 = vpop.f32.mrb[0].mxu0
  %v657 = vadd.f32 0.0, %v656
  %v658 = vpop.f32.mrb[0].mxu0
  %659 = vdwg.mxu0
  %v660 = vld [vmem:[%s2] sm:$0x1]
  %v662 = vlaneseq
  %v663 = vshrl.u32 %v662, 7
  %v664 = vsub.s32 0, %v663
  %v665 = vrot.slane %v660, %v664
  %v667 = vmul.f32 %v406, %v665
  %v668 = vmul.f32 %v409, %v665
  %v669 = vmul.f32 %v414, %v665
  %v670 = vmul.f32 %v417, %v665
  %v671 = vmul.f32 %v422, %v665
  %v672 = vmul.f32 %v425, %v665
  %v673 = vmul.f32 %v430, %v665
  %v674 = vmul.f32 %v433, %v665
  %v675 = vmul.f32 %v438, %v665
  %v676 = vmul.f32 %v441, %v665
  %v677 = vmul.f32 %v446, %v665
  %v678 = vmul.f32 %v449, %v665
  %v679 = vmul.f32 %v454, %v665
  %v680 = vmul.f32 %v457, %v665
  %v681 = vmul.f32 %v462, %v665
  %v682 = vmul.f32 %v465, %v665
  %v683 = vmul.f32 %v470, %v665
  %v684 = vmul.f32 %v473, %v665
  %v685 = vmul.f32 %v478, %v665
  %v686 = vmul.f32 %v481, %v665
  %v687 = vmul.f32 %v486, %v665
  %v688 = vmul.f32 %v489, %v665
  %v689 = vmul.f32 %v494, %v665
  %v690 = vmul.f32 %v497, %v665
  %v691 = vmul.f32 %v502, %v665
  %v692 = vmul.f32 %v505, %v665
  %v693 = vmul.f32 %v510, %v665
  %v694 = vmul.f32 %v513, %v665
  %v695 = vmul.f32 %v518, %v665
  %v696 = vmul.f32 %v521, %v665
  %v697 = vmul.f32 %v526, %v665
  %v698 = vmul.f32 %v529, %v665
  %v699 = vmul.f32 %v534, %v665
  %v700 = vmul.f32 %v537, %v665
  %v701 = vmul.f32 %v542, %v665
  %v702 = vmul.f32 %v545, %v665
  %v703 = vmul.f32 %v550, %v665
  %v704 = vmul.f32 %v553, %v665
  %v705 = vmul.f32 %v558, %v665
  %v706 = vmul.f32 %v561, %v665
  %v707 = vmul.f32 %v566, %v665
  %v708 = vmul.f32 %v569, %v665
  %v709 = vmul.f32 %v574, %v665
  %v710 = vmul.f32 %v577, %v665
  %v711 = vmul.f32 %v582, %v665
  %v712 = vmul.f32 %v585, %v665
  %v713 = vmul.f32 %v590, %v665
  %v714 = vmul.f32 %v593, %v665
  %v715 = vmul.f32 %v598, %v665
  %v716 = vmul.f32 %v601, %v665
  %v717 = vmul.f32 %v606, %v665
  %v718 = vmul.f32 %v609, %v665
  %v719 = vmul.f32 %v614, %v665
  %v720 = vmul.f32 %v617, %v665
  %v721 = vmul.f32 %v622, %v665
  %v722 = vmul.f32 %v625, %v665
  %v723 = vmul.f32 %v630, %v665
  %v724 = vmul.f32 %v633, %v665
  %v725 = vmul.f32 %v638, %v665
  %v726 = vmul.f32 %v641, %v665
  %v727 = vmul.f32 %v646, %v665
  %v728 = vmul.f32 %v649, %v665
  %v729 = vmul.f32 %v654, %v665
  %v730 = vmul.f32 %v657, %v665
  %v731 = vld [vmem:[%s3] sm:$0x1]
  %v733 = vlaneseq
  %v734 = vshrl.u32 %v733, 7
  %v735 = vsub.s32 0, %v734
  %v736 = vrot.slane %v731, %v735
  %v738 = vadd.f32 %v667, %v736
  %v739 = vadd.f32 %v668, %v736
  %v740 = vadd.f32 %v669, %v736
  %v741 = vadd.f32 %v670, %v736
  %v742 = vadd.f32 %v671, %v736
  %v743 = vadd.f32 %v672, %v736
  %v744 = vadd.f32 %v673, %v736
  %v745 = vadd.f32 %v674, %v736
  %v746 = vadd.f32 %v675, %v736
  %v747 = vadd.f32 %v676, %v736
  %v748 = vadd.f32 %v677, %v736
  %v749 = vadd.f32 %v678, %v736
  %v750 = vadd.f32 %v679, %v736
  %v751 = vadd.f32 %v680, %v736
  %v752 = vadd.f32 %v681, %v736
  %v753 = vadd.f32 %v682, %v736
  %v754 = vadd.f32 %v683, %v736
  %v755 = vadd.f32 %v684, %v736
  %v756 = vadd.f32 %v685, %v736
  %v757 = vadd.f32 %v686, %v736
  %v758 = vadd.f32 %v687, %v736
  %v759 = vadd.f32 %v688, %v736
  %v760 = vadd.f32 %v689, %v736
  %v761 = vadd.f32 %v690, %v736
  %v762 = vadd.f32 %v691, %v736
  %v763 = vadd.f32 %v692, %v736
  %v764 = vadd.f32 %v693, %v736
  %v765 = vadd.f32 %v694, %v736
  %v766 = vadd.f32 %v695, %v736
  %v767 = vadd.f32 %v696, %v736
  %v768 = vadd.f32 %v697, %v736
  %v769 = vadd.f32 %v698, %v736
  %v770 = vadd.f32 %v699, %v736
  %v771 = vadd.f32 %v700, %v736
  %v772 = vadd.f32 %v701, %v736
  %v773 = vadd.f32 %v702, %v736
  %v774 = vadd.f32 %v703, %v736
  %v775 = vadd.f32 %v704, %v736
  %v776 = vadd.f32 %v705, %v736
  %v777 = vadd.f32 %v706, %v736
  %v778 = vadd.f32 %v707, %v736
  %v779 = vadd.f32 %v708, %v736
  %v780 = vadd.f32 %v709, %v736
  %v781 = vadd.f32 %v710, %v736
  %v782 = vadd.f32 %v711, %v736
  %v783 = vadd.f32 %v712, %v736
  %v784 = vadd.f32 %v713, %v736
  %v785 = vadd.f32 %v714, %v736
  %v786 = vadd.f32 %v715, %v736
  %v787 = vadd.f32 %v716, %v736
  %v788 = vadd.f32 %v717, %v736
  %v789 = vadd.f32 %v718, %v736
  %v790 = vadd.f32 %v719, %v736
  %v791 = vadd.f32 %v720, %v736
  %v792 = vadd.f32 %v721, %v736
  %v793 = vadd.f32 %v722, %v736
  %v794 = vadd.f32 %v723, %v736
  %v795 = vadd.f32 %v724, %v736
  %v796 = vadd.f32 %v725, %v736
  %v797 = vadd.f32 %v726, %v736
  %v798 = vadd.f32 %v727, %v736
  %v799 = vadd.f32 %v728, %v736
  %v800 = vadd.f32 %v729, %v736
  %v801 = vadd.f32 %v730, %v736
  %v802 = vmax.f32 %v738, 0.0
  %v803 = vmax.f32 %v739, 0.0
  %v804 = vmax.f32 %v740, 0.0
  %v805 = vmax.f32 %v741, 0.0
  %v806 = vmax.f32 %v742, 0.0
  %v807 = vmax.f32 %v743, 0.0
  %v808 = vmax.f32 %v744, 0.0
  %v809 = vmax.f32 %v745, 0.0
  %v810 = vmax.f32 %v746, 0.0
  %v811 = vmax.f32 %v747, 0.0
  %v812 = vmax.f32 %v748, 0.0
  %v813 = vmax.f32 %v749, 0.0
  %v814 = vmax.f32 %v750, 0.0
  %v815 = vmax.f32 %v751, 0.0
  %v816 = vmax.f32 %v752, 0.0
  %v817 = vmax.f32 %v753, 0.0
  %v818 = vmax.f32 %v754, 0.0
  %v819 = vmax.f32 %v755, 0.0
  %v820 = vmax.f32 %v756, 0.0
  %v821 = vmax.f32 %v757, 0.0
  %v822 = vmax.f32 %v758, 0.0
  %v823 = vmax.f32 %v759, 0.0
  %v824 = vmax.f32 %v760, 0.0
  %v825 = vmax.f32 %v761, 0.0
  %v826 = vmax.f32 %v762, 0.0
  %v827 = vmax.f32 %v763, 0.0
  %v828 = vmax.f32 %v764, 0.0
  %v829 = vmax.f32 %v765, 0.0
  %v830 = vmax.f32 %v766, 0.0
  %v831 = vmax.f32 %v767, 0.0
  %v832 = vmax.f32 %v768, 0.0
  %v833 = vmax.f32 %v769, 0.0
  %v834 = vmax.f32 %v770, 0.0
  %v835 = vmax.f32 %v771, 0.0
  %v836 = vmax.f32 %v772, 0.0
  %v837 = vmax.f32 %v773, 0.0
  %v838 = vmax.f32 %v774, 0.0
  %v839 = vmax.f32 %v775, 0.0
  %v840 = vmax.f32 %v776, 0.0
  %v841 = vmax.f32 %v777, 0.0
  %v842 = vmax.f32 %v778, 0.0
  %v843 = vmax.f32 %v779, 0.0
  %v844 = vmax.f32 %v780, 0.0
  %v845 = vmax.f32 %v781, 0.0
  %v846 = vmax.f32 %v782, 0.0
  %v847 = vmax.f32 %v783, 0.0
  %v848 = vmax.f32 %v784, 0.0
  %v849 = vmax.f32 %v785, 0.0
  %v850 = vmax.f32 %v786, 0.0
  %v851 = vmax.f32 %v787, 0.0
  %v852 = vmax.f32 %v788, 0.0
  %v853 = vmax.f32 %v789, 0.0
  %v854 = vmax.f32 %v790, 0.0
  %v855 = vmax.f32 %v791, 0.0
  %v856 = vmax.f32 %v792, 0.0
  %v857 = vmax.f32 %v793, 0.0
  %v858 = vmax.f32 %v794, 0.0
  %v859 = vmax.f32 %v795, 0.0
  %v860 = vmax.f32 %v796, 0.0
  %v861 = vmax.f32 %v797, 0.0
  %v862 = vmax.f32 %v798, 0.0
  %v863 = vmax.f32 %v799, 0.0
  %v864 = vmax.f32 %v800, 0.0
  %v865 = vmax.f32 %v801, 0.0
  %v866 = vpack.c.bf16 %v803, %v802
  %v867 = vpack.c.bf16 %v805, %v804
  %v868 = vpack.c.bf16 %v807, %v806
  %v869 = vpack.c.bf16 %v809, %v808
  %v870 = vpack.c.bf16 %v811, %v810
  %v871 = vpack.c.bf16 %v813, %v812
  %v872 = vpack.c.bf16 %v815, %v814
  %v873 = vpack.c.bf16 %v817, %v816
  %v874 = vpack.c.bf16 %v819, %v818
  %v875 = vpack.c.bf16 %v821, %v820
  %v876 = vpack.c.bf16 %v823, %v822
  %v877 = vpack.c.bf16 %v825, %v824
  %v878 = vpack.c.bf16 %v827, %v826
  %v879 = vpack.c.bf16 %v829, %v828
  %v880 = vpack.c.bf16 %v831, %v830
  %v881 = vpack.c.bf16 %v833, %v832
  %v882 = vpack.c.bf16 %v835, %v834
  %v883 = vpack.c.bf16 %v837, %v836
  %v884 = vpack.c.bf16 %v839, %v838
  %v885 = vpack.c.bf16 %v841, %v840
  %v886 = vpack.c.bf16 %v843, %v842
  %v887 = vpack.c.bf16 %v845, %v844
  %v888 = vpack.c.bf16 %v847, %v846
  %v889 = vpack.c.bf16 %v849, %v848
  %v890 = vpack.c.bf16 %v851, %v850
  %v891 = vpack.c.bf16 %v853, %v852
  %v892 = vpack.c.bf16 %v855, %v854
  %v893 = vpack.c.bf16 %v857, %v856
  %v894 = vpack.c.bf16 %v859, %v858
  %v895 = vpack.c.bf16 %v861, %v860
  %v896 = vpack.c.bf16 %v863, %v862
  %v897 = vpack.c.bf16 %v865, %v864
  %v930 = vunpack.c.l.b16 %v866
  %v931 = vunpack.c.h.b16 %v866
  %v932 = vunpack.c.l.b16 %v867
  %v933 = vunpack.c.h.b16 %v867
  %v934 = vunpack.c.l.b16 %v868
  %v935 = vunpack.c.h.b16 %v868
  %v936 = vunpack.c.l.b16 %v869
  %v937 = vunpack.c.h.b16 %v869
  %v938 = vunpack.c.l.b16 %v870
  %v939 = vunpack.c.h.b16 %v870
  %v940 = vunpack.c.l.b16 %v871
  %v941 = vunpack.c.h.b16 %v871
  %v942 = vunpack.c.l.b16 %v872
  %v943 = vunpack.c.h.b16 %v872
  %v944 = vunpack.c.l.b16 %v873
  %v945 = vunpack.c.h.b16 %v873
  %v946 = vunpack.c.l.b16 %v874
  %v947 = vunpack.c.h.b16 %v874
  %v948 = vunpack.c.l.b16 %v875
  %v949 = vunpack.c.h.b16 %v875
  %v950 = vunpack.c.l.b16 %v876
  %v951 = vunpack.c.h.b16 %v876
  %v952 = vunpack.c.l.b16 %v877
  %v953 = vunpack.c.h.b16 %v877
  %v954 = vunpack.c.l.b16 %v878
  %v955 = vunpack.c.h.b16 %v878
  %v956 = vunpack.c.l.b16 %v879
  %v957 = vunpack.c.h.b16 %v879
  %v958 = vunpack.c.l.b16 %v880
  %v959 = vunpack.c.h.b16 %v880
  %v960 = vunpack.c.l.b16 %v881
  %v961 = vunpack.c.h.b16 %v881
  %v962 = vunpack.c.l.b16 %v882
  %v963 = vunpack.c.h.b16 %v882
  %v964 = vunpack.c.l.b16 %v883
  %v965 = vunpack.c.h.b16 %v883
  %v966 = vunpack.c.l.b16 %v884
  %v967 = vunpack.c.h.b16 %v884
  %v968 = vunpack.c.l.b16 %v885
  %v969 = vunpack.c.h.b16 %v885
  %v970 = vunpack.c.l.b16 %v886
  %v971 = vunpack.c.h.b16 %v886
  %v972 = vunpack.c.l.b16 %v887
  %v973 = vunpack.c.h.b16 %v887
  %v974 = vunpack.c.l.b16 %v888
  %v975 = vunpack.c.h.b16 %v888
  %v976 = vunpack.c.l.b16 %v889
  %v977 = vunpack.c.h.b16 %v889
  %v978 = vunpack.c.l.b16 %v890
  %v979 = vunpack.c.h.b16 %v890
  %v980 = vunpack.c.l.b16 %v891
  %v981 = vunpack.c.h.b16 %v891
  %v982 = vunpack.c.l.b16 %v892
  %v983 = vunpack.c.h.b16 %v892
  %v984 = vunpack.c.l.b16 %v893
  %v985 = vunpack.c.h.b16 %v893
  %v986 = vunpack.c.l.b16 %v894
  %v987 = vunpack.c.h.b16 %v894
  %v988 = vunpack.c.l.b16 %v895
  %v989 = vunpack.c.h.b16 %v895
  %v990 = vunpack.c.l.b16 %v896
  %v991 = vunpack.c.h.b16 %v896
  %v992 = vunpack.c.l.b16 %v897
  %v993 = vunpack.c.h.b16 %v897
  %v994 = vpack.c.b16 %v930, %v930
  %v995 = vpack.c.b16 %v931, %v931
  %v996 = vpack.c.b16 %v932, %v932
  %v997 = vpack.c.b16 %v933, %v933
  %v998 = vpack.c.b16 %v934, %v934
  %v999 = vpack.c.b16 %v935, %v935
  %v1000 = vpack.c.b16 %v936, %v936
  %v1001 = vpack.c.b16 %v937, %v937
  %v1002 = vpack.c.b16 %v938, %v938
  %v1003 = vpack.c.b16 %v939, %v939
  %v1004 = vpack.c.b16 %v940, %v940
  %v1005 = vpack.c.b16 %v941, %v941
  %v1006 = vpack.c.b16 %v942, %v942
  %v1007 = vpack.c.b16 %v943, %v943
  %v1008 = vpack.c.b16 %v944, %v944
  %v1009 = vpack.c.b16 %v945, %v945
  %v1010 = vpack.c.b16 %v946, %v946
  %v1011 = vpack.c.b16 %v947, %v947
  %v1012 = vpack.c.b16 %v948, %v948
  %v1013 = vpack.c.b16 %v949, %v949
  %v1014 = vpack.c.b16 %v950, %v950
  %v1015 = vpack.c.b16 %v951, %v951
  %v1016 = vpack.c.b16 %v952, %v952
  %v1017 = vpack.c.b16 %v953, %v953
  %v1018 = vpack.c.b16 %v954, %v954
  %v1019 = vpack.c.b16 %v955, %v955
  %v1020 = vpack.c.b16 %v956, %v956
  %v1021 = vpack.c.b16 %v957, %v957
  %v1022 = vpack.c.b16 %v958, %v958
  %v1023 = vpack.c.b16 %v959, %v959
  %v1024 = vpack.c.b16 %v960, %v960
  %v1025 = vpack.c.b16 %v961, %v961
  %v1026 = vpack.c.b16 %v962, %v962
  %v1027 = vpack.c.b16 %v963, %v963
  %v1028 = vpack.c.b16 %v964, %v964
  %v1029 = vpack.c.b16 %v965, %v965
  %v1030 = vpack.c.b16 %v966, %v966
  %v1031 = vpack.c.b16 %v967, %v967
  %v1032 = vpack.c.b16 %v968, %v968
  %v1033 = vpack.c.b16 %v969, %v969
  %v1034 = vpack.c.b16 %v970, %v970
  %v1035 = vpack.c.b16 %v971, %v971
  %v1036 = vpack.c.b16 %v972, %v972
  %v1037 = vpack.c.b16 %v973, %v973
  %v1038 = vpack.c.b16 %v974, %v974
  %v1039 = vpack.c.b16 %v975, %v975
  %v1040 = vpack.c.b16 %v976, %v976
  %v1041 = vpack.c.b16 %v977, %v977
  %v1042 = vpack.c.b16 %v978, %v978
  %v1043 = vpack.c.b16 %v979, %v979
  %v1044 = vpack.c.b16 %v980, %v980
  %v1045 = vpack.c.b16 %v981, %v981
  %v1046 = vpack.c.b16 %v982, %v982
  %v1047 = vpack.c.b16 %v983, %v983
  %v1048 = vpack.c.b16 %v984, %v984
  %v1049 = vpack.c.b16 %v985, %v985
  %v1050 = vpack.c.b16 %v986, %v986
  %v1051 = vpack.c.b16 %v987, %v987
  %v1052 = vpack.c.b16 %v988, %v988
  %v1053 = vpack.c.b16 %v989, %v989
  %v1054 = vpack.c.b16 %v990, %v990
  %v1055 = vpack.c.b16 %v991, %v991
  %v1056 = vpack.c.b16 %v992, %v992
  %v1057 = vpack.c.b16 %v993, %v993
  %vm1122 = vcmask 519168
  %1123 = vst.msk [vmem:[%s4] sm:$0xf] %vm1122, %v994
  %1124 = vst.msk [vmem:[%s4 + $0x4] sm:$0xf] %vm1122, %v995
  %1125 = vst.msk [vmem:[%s4 + $0x8] sm:$0xf] %vm1122, %v996
  %1126 = vst.msk [vmem:[%s4 + $0xc] sm:$0xf] %vm1122, %v997
  %1127 = vst.msk [vmem:[%s4 + $0x10] sm:$0xf] %vm1122, %v998
  %1128 = vst.msk [vmem:[%s4 + $0x14] sm:$0xf] %vm1122, %v999
  %1129 = vst.msk [vmem:[%s4 + $0x18] sm:$0xf] %vm1122, %v1000
  %1130 = vst.msk [vmem:[%s4 + $0x1c] sm:$0xf] %vm1122, %v1001
  %1131 = vst.msk [vmem:[%s4 + $0x20] sm:$0xf] %vm1122, %v1002
  %1132 = vst.msk [vmem:[%s4 + $0x24] sm:$0xf] %vm1122, %v1003
  %1133 = vst.msk [vmem:[%s4 + $0x28] sm:$0xf] %vm1122, %v1004
  %1134 = vst.msk [vmem:[%s4 + $0x2c] sm:$0xf] %vm1122, %v1005
  %1135 = vst.msk [vmem:[%s4 + $0x30] sm:$0xf] %vm1122, %v1006
  %1136 = vst.msk [vmem:[%s4 + $0x34] sm:$0xf] %vm1122, %v1007
  %1137 = vst.msk [vmem:[%s4 + $0x38] sm:$0xf] %vm1122, %v1008
  %1138 = vst.msk [vmem:[%s4 + $0x3c] sm:$0xf] %vm1122, %v1009
  %1139 = vst.msk [vmem:[%s4 + $0x40] sm:$0xf] %vm1122, %v1010
  %1140 = vst.msk [vmem:[%s4 + $0x44] sm:$0xf] %vm1122, %v1011
  %1141 = vst.msk [vmem:[%s4 + $0x48] sm:$0xf] %vm1122, %v1012
  %1142 = vst.msk [vmem:[%s4 + $0x4c] sm:$0xf] %vm1122, %v1013
  %1143 = vst.msk [vmem:[%s4 + $0x50] sm:$0xf] %vm1122, %v1014
  %1144 = vst.msk [vmem:[%s4 + $0x54] sm:$0xf] %vm1122, %v1015
  %1145 = vst.msk [vmem:[%s4 + $0x58] sm:$0xf] %vm1122, %v1016
  %1146 = vst.msk [vmem:[%s4 + $0x5c] sm:$0xf] %vm1122, %v1017
  %1147 = vst.msk [vmem:[%s4 + $0x60] sm:$0xf] %vm1122, %v1018
  %1148 = vst.msk [vmem:[%s4 + $0x64] sm:$0xf] %vm1122, %v1019
  %1149 = vst.msk [vmem:[%s4 + $0x68] sm:$0xf] %vm1122, %v1020
  %1150 = vst.msk [vmem:[%s4 + $0x6c] sm:$0xf] %vm1122, %v1021
  %1151 = vst.msk [vmem:[%s4 + $0x70] sm:$0xf] %vm1122, %v1022
  %1152 = vst.msk [vmem:[%s4 + $0x74] sm:$0xf] %vm1122, %v1023
  %1153 = vst.msk [vmem:[%s4 + $0x78] sm:$0xf] %vm1122, %v1024
  %1154 = vst.msk [vmem:[%s4 + $0x7c] sm:$0xf] %vm1122, %v1025
  %1155 = vst.msk [vmem:[%s4 + $0x80] sm:$0xf] %vm1122, %v1026
  %1156 = vst.msk [vmem:[%s4 + $0x84] sm:$0xf] %vm1122, %v1027
  %1157 = vst.msk [vmem:[%s4 + $0x88] sm:$0xf] %vm1122, %v1028
  %1158 = vst.msk [vmem:[%s4 + $0x8c] sm:$0xf] %vm1122, %v1029
  %1159 = vst.msk [vmem:[%s4 + $0x90] sm:$0xf] %vm1122, %v1030
  %1160 = vst.msk [vmem:[%s4 + $0x94] sm:$0xf] %vm1122, %v1031
  %1161 = vst.msk [vmem:[%s4 + $0x98] sm:$0xf] %vm1122, %v1032
  %1162 = vst.msk [vmem:[%s4 + $0x9c] sm:$0xf] %vm1122, %v1033
  %1163 = vst.msk [vmem:[%s4 + $0xa0] sm:$0xf] %vm1122, %v1034
  %1164 = vst.msk [vmem:[%s4 + $0xa4] sm:$0xf] %vm1122, %v1035
  %1165 = vst.msk [vmem:[%s4 + $0xa8] sm:$0xf] %vm1122, %v1036
  %1166 = vst.msk [vmem:[%s4 + $0xac] sm:$0xf] %vm1122, %v1037
  %1167 = vst.msk [vmem:[%s4 + $0xb0] sm:$0xf] %vm1122, %v1038
  %1168 = vst.msk [vmem:[%s4 + $0xb4] sm:$0xf] %vm1122, %v1039
  %1169 = vst.msk [vmem:[%s4 + $0xb8] sm:$0xf] %vm1122, %v1040
  %1170 = vst.msk [vmem:[%s4 + $0xbc] sm:$0xf] %vm1122, %v1041
  %1171 = vst.msk [vmem:[%s4 + $0xc0] sm:$0xf] %vm1122, %v1042
  %1172 = vst.msk [vmem:[%s4 + $0xc4] sm:$0xf] %vm1122, %v1043
  %1173 = vst.msk [vmem:[%s4 + $0xc8] sm:$0xf] %vm1122, %v1044
  %1174 = vst.msk [vmem:[%s4 + $0xcc] sm:$0xf] %vm1122, %v1045
  %1175 = vst.msk [vmem:[%s4 + $0xd0] sm:$0xf] %vm1122, %v1046
  %1176 = vst.msk [vmem:[%s4 + $0xd4] sm:$0xf] %vm1122, %v1047
  %1177 = vst.msk [vmem:[%s4 + $0xd8] sm:$0xf] %vm1122, %v1048
  %1178 = vst.msk [vmem:[%s4 + $0xdc] sm:$0xf] %vm1122, %v1049
  %1179 = vst.msk [vmem:[%s4 + $0xe0] sm:$0xf] %vm1122, %v1050
  %1180 = vst.msk [vmem:[%s4 + $0xe4] sm:$0xf] %vm1122, %v1051
  %1181 = vst.msk [vmem:[%s4 + $0xe8] sm:$0xf] %vm1122, %v1052
  %1182 = vst.msk [vmem:[%s4 + $0xec] sm:$0xf] %vm1122, %v1053
  %1183 = vst.msk [vmem:[%s4 + $0xf0] sm:$0xf] %vm1122, %v1054
  %1184 = vst.msk [vmem:[%s4 + $0xf4] sm:$0xf] %vm1122, %v1055
  %1185 = vst.msk [vmem:[%s4 + $0xf8] sm:$0xf] %vm1122, %v1056
  %1186 = vst.msk [vmem:[%s4 + $0xfc] sm:$0xf] %vm1122, %v1057
  // Predicated region
  $region18: #{segmentation_forward.14} parent=0 // pred_check
    _
  $region19: #{segmentation_forward.14} parent=0 // pred_check_branch
    %1188 = sbr.rel (0) target = $region21
  $region20: #{segmentation_forward.14} parent=0 // pred_region
    _
  $region21: #{segmentation_forward.14} parent=0 // pred_fallthru
    _
  // Predicated region
  $region22: #{segmentation_forward.14} parent=0 // pred_check
    _
  $region23: #{segmentation_forward.14} parent=0 // pred_check_branch
    %1190 = sbr.rel (0) target = $region25
  $region24: #{segmentation_forward.14} parent=0 // pred_region
    _
  $region25: #{segmentation_forward.14} parent=0 // pred_fallthru
    _

// kernel: segmentation_forward.15
$region0: #{segmentation_forward.15}
  #allocation0 [shape = 'u32[]', space=smem, size = 0x4, offset = 0x4, fixed_abs, tag = 'smem constant byte address 0x4 - core index']
  #allocation1 [shape = 'u32[144,128]{1,0:T(1,128)}', space=vmem, size = 0x12000, scoped, tag = 'internal scratch']
  %s0 = inlined_call_operand.vmem [shape: bf16[2048,16], index: 0, kind: input, shape index: {}]
  %s1 = inlined_call_operand.vmem [shape: bf16[16,64], index: 1, kind: input, shape index: {}]
  %s2 = inlined_call_operand.vmem [shape: f32[1,64], index: 2, kind: input, shape index: {}]
  %s3 = inlined_call_operand.vmem [shape: f32[1,64], index: 3, kind: input, shape index: {}]
  %s4 = inlined_call_operand.vmem [shape: bf16[2048,64], index: 4, kind: output, shape index: {}]
  %s5 = sld [smem:[#allocation0]]
  $region49: #{segmentation_forward.15} parent=0
    _
  %s7 = ssub.s32 1, %s5
  %s8 = scalar_select 0, %s7, %s5
  loop: start=0, step=1, limit=6
  $region2: #{segmentation_forward.15} parent=0 // loop_pre_header
    _
  $region3: #{segmentation_forward.15} parent=0 // loop_header
    %s10 = sphi 0, %s14
    %p11 = scmp.ge.s32.totalorder %s10, 6
    %s20 = sphi 0, %s22
    %s23 = sphi 0, %s20
    %s24 = sphi 0, %s23
    %s40 = sphi 0, %s24
    %s44 = sphi 0, %s44
    %s46 = sphi 0, %s44
    %s47 = sphi 0, %s46
    %s61 = sphi 0, %s47
    %s65 = sphi 0, %s65
    %s67 = sphi 0, %s65
    %s68 = sphi 0, %s67
    %s82 = sphi 0, %s68
    %s86 = sphi 0, %s86
    %s88 = sphi 0, %s86
    %s89 = sphi 0, %s88
    %s103 = sphi 0, %s89
    %s109 = sphi 0, %s111
    %s112 = sphi 0, %s109
    %s113 = sphi 0, %s112
    %s129 = sphi 0, %s113
  $region4: #{segmentation_forward.15} parent=0 // loop_header_branch
    %13 = sbr.rel (%p11) target = $region8
  $region5: #{segmentation_forward.15} parent=0 // loop_body
    %s15 = ssub.s32 %s10, 1
    %s16 = ssub.s32 %s10, 2
    %s17 = sadd.s32 %s10, 1
    %s18 = ssub.s32 %s10, %s17
    %p19 = scmp.eq.s32.totalorder %s18, 0
    %s21 = sadd.s32 %s20, 1
    %s22 = scalar_select %p19, %s20, %s21
    %p25 = pneg %p19
    %p26 = scmp.eq.s32.totalorder %s10, 3
    %p27 = por %p25, %p26
    %p28 = scmp.ne.s32.totalorder %s20, %s23
    %p29 = scmp.eq.s32.totalorder %s10, 0
    %p30 = por %p28, %p29
    %p31 = scmp.ne.s32.totalorder %s20, %s23
    %p32 = scmp.eq.s32.totalorder %s15, 3
    %p33 = por %p31, %p32
    %p34 = scmp.ne.s32.totalorder %s23, %s24
    %p35 = scmp.eq.s32.totalorder %s15, 0
    %p36 = por %p34, %p35
    %p37 = scmp.ne.s32.totalorder %s23, %s24
    %p38 = scmp.eq.s32.totalorder %s16, 3
    %p39 = por %p37, %p38
    %p41 = scmp.ne.s32.totalorder %s24, %s40
    %p42 = scmp.eq.s32.totalorder %s16, 0
    %p43 = por %p41, %p42
    %s45 = sadd.s32 %s44, 1
    %p48 = scmp.eq.s32.totalorder %s10, 3
    %p49 = scmp.ne.s32.totalorder %s44, %s46
    %p50 = scmp.eq.s32.totalorder %s10, 0
    %p51 = por %p49, %p50
    %p52 = scmp.ne.s32.totalorder %s44, %s46
    %p53 = scmp.eq.s32.totalorder %s15, 3
    %p54 = por %p52, %p53
    %p55 = scmp.ne.s32.totalorder %s46, %s47
    %p56 = scmp.eq.s32.totalorder %s15, 0
    %p57 = por %p55, %p56
    %p58 = scmp.ne.s32.totalorder %s46, %s47
    %p59 = scmp.eq.s32.totalorder %s16, 3
    %p60 = por %p58, %p59
    %p62 = scmp.ne.s32.totalorder %s47, %s61
    %p63 = scmp.eq.s32.totalorder %s16, 0
    %p64 = por %p62, %p63
    %s66 = sadd.s32 %s65, 1
    %p69 = scmp.eq.s32.totalorder %s10, 3
    %p70 = scmp.ne.s32.totalorder %s65, %s67
    %p71 = scmp.eq.s32.totalorder %s10, 0
    %p72 = por %p70, %p71
    %p73 = scmp.ne.s32.totalorder %s65, %s67
    %p74 = scmp.eq.s32.totalorder %s15, 3
    %p75 = por %p73, %p74
    %p76 = scmp.ne.s32.totalorder %s67, %s68
    %p77 = scmp.eq.s32.totalorder %s15, 0
    %p78 = por %p76, %p77
    %p79 = scmp.ne.s32.totalorder %s67, %s68
    %p80 = scmp.eq.s32.totalorder %s16, 3
    %p81 = por %p79, %p80
    %p83 = scmp.ne.s32.totalorder %s68, %s82
    %p84 = scmp.eq.s32.totalorder %s16, 0
    %p85 = por %p83, %p84
    %s87 = sadd.s32 %s86, 1
    %p90 = scmp.eq.s32.totalorder %s10, 3
    %p91 = scmp.ne.s32.totalorder %s86, %s88
    %p92 = scmp.eq.s32.totalorder %s10, 0
    %p93 = por %p91, %p92
    %p94 = scmp.ne.s32.totalorder %s86, %s88
    %p95 = scmp.eq.s32.totalorder %s15, 3
    %p96 = por %p94, %p95
    %p97 = scmp.ne.s32.totalorder %s88, %s89
    %p98 = scmp.eq.s32.totalorder %s15, 0
    %p99 = por %p97, %p98
    %p100 = scmp.ne.s32.totalorder %s88, %s89
    %p101 = scmp.eq.s32.totalorder %s16, 3
    %p102 = por %p100, %p101
    %p104 = scmp.ne.s32.totalorder %s89, %s103
    %p105 = scmp.eq.s32.totalorder %s16, 0
    %p106 = por %p104, %p105
    %s107 = ssub.s32 %s10, %s17
    %p108 = scmp.eq.s32.totalorder %s107, 0
    %s110 = sadd.s32 %s109, 1
    %s111 = scalar_select %p108, %s109, %s110
    %p114 = pneg %p108
    %p115 = scmp.eq.s32.totalorder %s10, 3
    %p116 = por %p114, %p115
    %p117 = scmp.ne.s32.totalorder %s109, %s112
    %p118 = scmp.eq.s32.totalorder %s10, 0
    %p119 = por %p117, %p118
    %p120 = scmp.ne.s32.totalorder %s109, %s112
    %p121 = scmp.eq.s32.totalorder %s15, 3
    %p122 = por %p120, %p121
    %p123 = scmp.ne.s32.totalorder %s112, %s113
    %p124 = scmp.eq.s32.totalorder %s15, 0
    %p125 = por %p123, %p124
    %p126 = scmp.ne.s32.totalorder %s112, %s113
    %p127 = scmp.eq.s32.totalorder %s16, 3
    %p128 = por %p126, %p127
    %p130 = scmp.ne.s32.totalorder %s113, %s129
    %p131 = scmp.eq.s32.totalorder %s16, 0
    %p132 = por %p130, %p131
    %p133 = scmp.le.s32.totalorder 1, %s10
    %p134 = scmp.lt.s32.totalorder %s10, 5
    %p135 = pnand %p133, %p134
    %p136 = pneg %p135
    // Predicated region
    $region9: #{segmentation_forward.15} parent=5 // pred_check
      _
    $region10: #{segmentation_forward.15} parent=5 // pred_check_branch
      %138 = sbr.rel (%p135) target = $region12
    $region11: #{segmentation_forward.15} parent=5 // pred_region
      %s139 = ssub.s32 %s10, 1
      // Predicated region
      $region13: #{segmentation_forward.15} parent=11 // pred_check
        %p140 = pneg %p57
      $region14: #{segmentation_forward.15} parent=11 // pred_check_branch
        %142 = sbr.rel (%p140) target = $region16
      $region15: #{segmentation_forward.15} parent=11 // pred_region
        _
      $region16: #{segmentation_forward.15} parent=11 // pred_fallthru
        _
      // Predicated region
      $region17: #{segmentation_forward.15} parent=11 // pred_check
        %p143 = pneg %p78
      $region18: #{segmentation_forward.15} parent=11 // pred_check_branch
        %145 = sbr.rel (%p143) target = $region20
      $region19: #{segmentation_forward.15} parent=11 // pred_region
        _
      $region20: #{segmentation_forward.15} parent=11 // pred_fallthru
        _
      // Predicated region
      $region21: #{segmentation_forward.15} parent=11 // pred_check
        %p146 = pneg %p99
      $region22: #{segmentation_forward.15} parent=11 // pred_check_branch
        %148 = sbr.rel (%p146) target = $region24
      $region23: #{segmentation_forward.15} parent=11 // pred_region
        _
      $region24: #{segmentation_forward.15} parent=11 // pred_fallthru
        _
    $region12: #{segmentation_forward.15} parent=5 // pred_fallthru
      _
    %p149 = scmp.lt.s32.totalorder %s10, 4
    // Predicated region
    $region25: #{segmentation_forward.15} parent=5 // pred_check
      %p150 = pneg %p149
    $region26: #{segmentation_forward.15} parent=5 // pred_check_branch
      %152 = sbr.rel (%p150) target = $region28
    $region27: #{segmentation_forward.15} parent=5 // pred_region
      // Predicated region
      $region29: #{segmentation_forward.15} parent=27 // pred_check
        %p153 = pneg %p30
      $region30: #{segmentation_forward.15} parent=27 // pred_check_branch
        %155 = sbr.rel (%p153) target = $region32
      $region31: #{segmentation_forward.15} parent=27 // pred_region
        %s156 = smul.u32 64, %s10
        %p157 = scmp.lt.s32.totalorder %s156, 255
        %s158 = scalar_select %p157, %s156, 255
        %s159 = smul.addr %s158, 4
        %s160 = scalar_lea.vmem %s0, %s159
        %s161 = smul.u32 64, %s10
      $region32: #{segmentation_forward.15} parent=27 // pred_fallthru
        _
    $region28: #{segmentation_forward.15} parent=5 // pred_fallthru
      _
    %p162 = scmp.le.s32.totalorder 1, %s10
    %p163 = scmp.lt.s32.totalorder %s10, 5
    %p164 = pnand %p162, %p163
    %p165 = pneg %p164
    // Predicated region
    $region33: #{segmentation_forward.15} parent=5 // pred_check
      _
    $region34: #{segmentation_forward.15} parent=5 // pred_check_branch
      %167 = sbr.rel (%p164) target = $region36
    $region35: #{segmentation_forward.15} parent=5 // pred_region
      %s168 = ssub.s32 %s10, 1
      %s169 = smul.u32 64, %s15
      %p170 = scmp.lt.s32.totalorder %s169, 255
      %s171 = scalar_select %p170, %s169, 255
      %s172 = smul.addr %s171, 4
      %s173 = scalar_lea.vmem %s0, %s172
      %p174 = pneg %p36
      %p175 = pneg %p33
      %p176 = pneg %p57
      %p177 = pneg %p54
      %p178 = pneg %p78
      %p179 = pneg %p75
      %p180 = pneg %p99
      %p181 = pneg %p96
      %p182 = pneg %p125
      %p183 = pneg %p122
      %s184 = smul.u32 64, %s15
      %p185 = scmp.lt.s32.totalorder %s184, 255
      %s186 = scalar_select %p185, %s184, 255
      %s187 = smul.addr %s186, 4
      %s188 = scalar_lea.vmem %s4, %s187
      %s189 = smul.u32 64, %s15
      %p190 = scmp.lt.s32.totalorder %s189, 255
      %s191 = scalar_select %p190, %s189, 255
      %s192 = smul.addr %s191, 4
      %s193 = scalar_lea.vmem %s0, %s192
      %s194 = smul.u32 64, %s15
      %s195 = smul.u32 64, %s15
      %p196 = scmp.lt.s32.totalorder %s195, 255
      %s197 = scalar_select %p196, %s195, 255
      %s198 = smul.addr %s197, 4
      %s199 = scalar_lea.vmem %s4, %s198
      %s200 = smul.u32 64, %s15
      %v202 = vld [vmem:[%s193] sm:$0xf]
      %v203 = vld [vmem:[%s193 + $0x4] sm:$0xf]
      %v204 = vld [vmem:[%s193 + $0x8] sm:$0xf]
      %v205 = vld [vmem:[%s193 + $0xc] sm:$0xf]
      %v206 = vld [vmem:[%s193 + $0x10] sm:$0xf]
      %v207 = vld [vmem:[%s193 + $0x14] sm:$0xf]
      %v208 = vld [vmem:[%s193 + $0x18] sm:$0xf]
      %v209 = vld [vmem:[%s193 + $0x1c] sm:$0xf]
      %v210 = vld [vmem:[%s193 + $0x20] sm:$0xf]
      %v211 = vld [vmem:[%s193 + $0x24] sm:$0xf]
      %v212 = vld [vmem:[%s193 + $0x28] sm:$0xf]
      %v213 = vld [vmem:[%s193 + $0x2c] sm:$0xf]
      %v214 = vld [vmem:[%s193 + $0x30] sm:$0xf]
      %v215 = vld [vmem:[%s193 + $0x34] sm:$0xf]
      %v216 = vld [vmem:[%s193 + $0x38] sm:$0xf]
      %v217 = vld [vmem:[%s193 + $0x3c] sm:$0xf]
      %v218 = vld [vmem:[%s193 + $0x40] sm:$0xf]
      %v219 = vld [vmem:[%s193 + $0x44] sm:$0xf]
      %v220 = vld [vmem:[%s193 + $0x48] sm:$0xf]
      %v221 = vld [vmem:[%s193 + $0x4c] sm:$0xf]
      %v222 = vld [vmem:[%s193 + $0x50] sm:$0xf]
      %v223 = vld [vmem:[%s193 + $0x54] sm:$0xf]
      %v224 = vld [vmem:[%s193 + $0x58] sm:$0xf]
      %v225 = vld [vmem:[%s193 + $0x5c] sm:$0xf]
      %v226 = vld [vmem:[%s193 + $0x60] sm:$0xf]
      %v227 = vld [vmem:[%s193 + $0x64] sm:$0xf]
      %v228 = vld [vmem:[%s193 + $0x68] sm:$0xf]
      %v229 = vld [vmem:[%s193 + $0x6c] sm:$0xf]
      %v230 = vld [vmem:[%s193 + $0x70] sm:$0xf]
      %v231 = vld [vmem:[%s193 + $0x74] sm:$0xf]
      %v232 = vld [vmem:[%s193 + $0x78] sm:$0xf]
      %v233 = vld [vmem:[%s193 + $0x7c] sm:$0xf]
      %v234 = vld [vmem:[%s193 + $0x80] sm:$0xf]
      %v235 = vld [vmem:[%s193 + $0x84] sm:$0xf]
      %v236 = vld [vmem:[%s193 + $0x88] sm:$0xf]
      %v237 = vld [vmem:[%s193 + $0x8c] sm:$0xf]
      %v238 = vld [vmem:[%s193 + $0x90] sm:$0xf]
      %v239 = vld [vmem:[%s193 + $0x94] sm:$0xf]
      %v240 = vld [vmem:[%s193 + $0x98] sm:$0xf]
      %v241 = vld [vmem:[%s193 + $0x9c] sm:$0xf]
      %v242 = vld [vmem:[%s193 + $0xa0] sm:$0xf]
      %v243 = vld [vmem:[%s193 + $0xa4] sm:$0xf]
      %v244 = vld [vmem:[%s193 + $0xa8] sm:$0xf]
      %v245 = vld [vmem:[%s193 + $0xac] sm:$0xf]
      %v246 = vld [vmem:[%s193 + $0xb0] sm:$0xf]
      %v247 = vld [vmem:[%s193 + $0xb4] sm:$0xf]
      %v248 = vld [vmem:[%s193 + $0xb8] sm:$0xf]
      %v249 = vld [vmem:[%s193 + $0xbc] sm:$0xf]
      %v250 = vld [vmem:[%s193 + $0xc0] sm:$0xf]
      %v251 = vld [vmem:[%s193 + $0xc4] sm:$0xf]
      %v252 = vld [vmem:[%s193 + $0xc8] sm:$0xf]
      %v253 = vld [vmem:[%s193 + $0xcc] sm:$0xf]
      %v254 = vld [vmem:[%s193 + $0xd0] sm:$0xf]
      %v255 = vld [vmem:[%s193 + $0xd4] sm:$0xf]
      %v256 = vld [vmem:[%s193 + $0xd8] sm:$0xf]
      %v257 = vld [vmem:[%s193 + $0xdc] sm:$0xf]
      %v258 = vld [vmem:[%s193 + $0xe0] sm:$0xf]
      %v259 = vld [vmem:[%s193 + $0xe4] sm:$0xf]
      %v260 = vld [vmem:[%s193 + $0xe8] sm:$0xf]
      %v261 = vld [vmem:[%s193 + $0xec] sm:$0xf]
      %v262 = vld [vmem:[%s193 + $0xf0] sm:$0xf]
      %v263 = vld [vmem:[%s193 + $0xf4] sm:$0xf]
      %v264 = vld [vmem:[%s193 + $0xf8] sm:$0xf]
      %v265 = vld [vmem:[%s193 + $0xfc] sm:$0xf]
      %v266 = vld [vmem:[%s1] sm:$0xf]
      %v267 = vld [vmem:[%s1 + $0x4] sm:$0xf]
      %v332 = vunpack.c.l.b16 %v202
      %v333 = vunpack.c.l.b16 %v203
      %v334 = vunpack.c.l.b16 %v204
      %v335 = vunpack.c.l.b16 %v205
      %v336 = vunpack.c.l.b16 %v206
      %v337 = vunpack.c.l.b16 %v207
      %v338 = vunpack.c.l.b16 %v208
      %v339 = vunpack.c.l.b16 %v209
      %v340 = vunpack.c.l.b16 %v210
      %v341 = vunpack.c.l.b16 %v211
      %v342 = vunpack.c.l.b16 %v212
      %v343 = vunpack.c.l.b16 %v213
      %v344 = vunpack.c.l.b16 %v214
      %v345 = vunpack.c.l.b16 %v215
      %v346 = vunpack.c.l.b16 %v216
      %v347 = vunpack.c.l.b16 %v217
      %v348 = vunpack.c.l.b16 %v218
      %v349 = vunpack.c.l.b16 %v219
      %v350 = vunpack.c.l.b16 %v220
      %v351 = vunpack.c.l.b16 %v221
      %v352 = vunpack.c.l.b16 %v222
      %v353 = vunpack.c.l.b16 %v223
      %v354 = vunpack.c.l.b16 %v224
      %v355 = vunpack.c.l.b16 %v225
      %v356 = vunpack.c.l.b16 %v226
      %v357 = vunpack.c.l.b16 %v227
      %v358 = vunpack.c.l.b16 %v228
      %v359 = vunpack.c.l.b16 %v229
      %v360 = vunpack.c.l.b16 %v230
      %v361 = vunpack.c.l.b16 %v231
      %v362 = vunpack.c.l.b16 %v232
      %v363 = vunpack.c.l.b16 %v233
      %v364 = vunpack.c.l.b16 %v234
      %v365 = vunpack.c.l.b16 %v235
      %v366 = vunpack.c.l.b16 %v236
      %v367 = vunpack.c.l.b16 %v237
      %v368 = vunpack.c.l.b16 %v238
      %v369 = vunpack.c.l.b16 %v239
      %v370 = vunpack.c.l.b16 %v240
      %v371 = vunpack.c.l.b16 %v241
      %v372 = vunpack.c.l.b16 %v242
      %v373 = vunpack.c.l.b16 %v243
      %v374 = vunpack.c.l.b16 %v244
      %v375 = vunpack.c.l.b16 %v245
      %v376 = vunpack.c.l.b16 %v246
      %v377 = vunpack.c.l.b16 %v247
      %v378 = vunpack.c.l.b16 %v248
      %v379 = vunpack.c.l.b16 %v249
      %v380 = vunpack.c.l.b16 %v250
      %v381 = vunpack.c.l.b16 %v251
      %v382 = vunpack.c.l.b16 %v252
      %v383 = vunpack.c.l.b16 %v253
      %v384 = vunpack.c.l.b16 %v254
      %v385 = vunpack.c.l.b16 %v255
      %v386 = vunpack.c.l.b16 %v256
      %v387 = vunpack.c.l.b16 %v257
      %v388 = vunpack.c.l.b16 %v258
      %v389 = vunpack.c.l.b16 %v259
      %v390 = vunpack.c.l.b16 %v260
      %v391 = vunpack.c.l.b16 %v261
      %v392 = vunpack.c.l.b16 %v262
      %v393 = vunpack.c.l.b16 %v263
      %v394 = vunpack.c.l.b16 %v264
      %v395 = vunpack.c.l.b16 %v265
      %v396 = vpack.c.b16 %v333, %v332
      %v397 = vpack.c.b16 %v335, %v334
      %v398 = vpack.c.b16 %v337, %v336
      %v399 = vpack.c.b16 %v339, %v338
      %v400 = vpack.c.b16 %v341, %v340
      %v401 = vpack.c.b16 %v343, %v342
      %v402 = vpack.c.b16 %v345, %v344
      %v403 = vpack.c.b16 %v347, %v346
      %v404 = vpack.c.b16 %v349, %v348
      %v405 = vpack.c.b16 %v351, %v350
      %v406 = vpack.c.b16 %v353, %v352
      %v407 = vpack.c.b16 %v355, %v354
      %v408 = vpack.c.b16 %v357, %v356
      %v409 = vpack.c.b16 %v359, %v358
      %v410 = vpack.c.b16 %v361, %v360
      %v411 = vpack.c.b16 %v363, %v362
      %v412 = vpack.c.b16 %v365, %v364
      %v413 = vpack.c.b16 %v367, %v366
      %v414 = vpack.c.b16 %v369, %v368
      %v415 = vpack.c.b16 %v371, %v370
      %v416 = vpack.c.b16 %v373, %v372
      %v417 = vpack.c.b16 %v375, %v374
      %v418 = vpack.c.b16 %v377, %v376
      %v419 = vpack.c.b16 %v379, %v378
      %v420 = vpack.c.b16 %v381, %v380
      %v421 = vpack.c.b16 %v383, %v382
      %v422 = vpack.c.b16 %v385, %v384
      %v423 = vpack.c.b16 %v387, %v386
      %v424 = vpack.c.b16 %v389, %v388
      %v425 = vpack.c.b16 %v391, %v390
      %v426 = vpack.c.b16 %v393, %v392
      %v427 = vpack.c.b16 %v395, %v394
      %v430 = vunpack.c.l.b16 %v266
      %v431 = vunpack.c.l.b16 %v267
      %v432 = vpack.c.b16 %v431, %v430
      %vm434 = vcmask 130048
      %v436 = vsel %vm434, %v396, 0
      %v439 = vsel %vm434, %v397, 0
      %v442 = vsel %vm434, %v398, 0
      %v445 = vsel %vm434, %v399, 0
      %v448 = vsel %vm434, %v400, 0
      %v451 = vsel %vm434, %v401, 0
      %v454 = vsel %vm434, %v402, 0
      %v457 = vsel %vm434, %v403, 0
      %v460 = vsel %vm434, %v404, 0
      %v463 = vsel %vm434, %v405, 0
      %v466 = vsel %vm434, %v406, 0
      %v469 = vsel %vm434, %v407, 0
      %v472 = vsel %vm434, %v408, 0
      %v475 = vsel %vm434, %v409, 0
      %v478 = vsel %vm434, %v410, 0
      %v481 = vsel %vm434, %v411, 0
      %v484 = vsel %vm434, %v412, 0
      %v487 = vsel %vm434, %v413, 0
      %v490 = vsel %vm434, %v414, 0
      %v493 = vsel %vm434, %v415, 0
      %v496 = vsel %vm434, %v416, 0
      %v499 = vsel %vm434, %v417, 0
      %v502 = vsel %vm434, %v418, 0
      %v505 = vsel %vm434, %v419, 0
      %v508 = vsel %vm434, %v420, 0
      %v511 = vsel %vm434, %v421, 0
      %v514 = vsel %vm434, %v422, 0
      %v517 = vsel %vm434, %v423, 0
      %v520 = vsel %vm434, %v424, 0
      %v523 = vsel %vm434, %v425, 0
      %v526 = vsel %vm434, %v426, 0
      %v529 = vsel %vm434, %v427, 0
      %531 = vmatprep.subr.bf16.mxu0 0
      %532 = vmatpush1.bf16.msra.mxu0 %v432
      %533 = vmatprep.subr.bf16.mxu0 0
      %534 = vmatpush1.bf16.msra.mxu0 0
      %535 = vmatprep.subr.bf16.mxu0 0
      %536 = vmatpush1.bf16.msra.mxu0 0
      %537 = vmatprep.subr.bf16.mxu0 0
      %538 = vmatpush1.bf16.msra.mxu0 0
      %539 = vmatprep.subr.bf16.mxu0 0
      %540 = vmatpush1.bf16.msra.mxu0 0
      %541 = vmatprep.subr.bf16.mxu0 0
      %542 = vmatpush1.bf16.msra.mxu0 0
      %543 = vmatprep.subr.bf16.mxu0 0
      %544 = vmatpush1.bf16.msra.mxu0 0
      %545 = vmatprep.subr.bf16.mxu0 0
      %546 = vmatpush1.bf16.msra.mxu0 0
      %547 = vmatprep.subr.bf16.mxu0 0
      %548 = vmatpush1.bf16.msra.mxu0 0
      %549 = vmatprep.subr.bf16.mxu0 0
      %550 = vmatpush1.bf16.msra.mxu0 0
      %551 = vmatprep.subr.bf16.mxu0 0
      %552 = vmatpush1.bf16.msra.mxu0 0
      %553 = vmatprep.subr.bf16.mxu0 0
      %554 = vmatpush1.bf16.msra.mxu0 0
      %555 = vmatprep.subr.bf16.mxu0 0
      %556 = vmatpush1.bf16.msra.mxu0 0
      %557 = vmatprep.subr.bf16.mxu0 0
      %558 = vmatpush1.bf16.msra.mxu0 0
      %559 = vmatprep.subr.bf16.mxu0 0
      %560 = vmatpush1.bf16.msra.mxu0 0
      %561 = vmatprep.subr.bf16.mxu0 0
      %562 = vmatpush1.bf16.msra.mxu0 0
      %563 = vmatprep.mubr.bf16.mxu0 0
      %564 = vmatmul.mubr.bf16.gmra.mrb[0].mxu0 %v436
      %v565 = vpop.f32.mrb[0].mxu0
      %v566 = vadd.f32 0.0, %v565
      %v567 = vpop.f32.mrb[0].mxu0
      %v568 = vpop.f32.mrb[0].mxu0
      %v569 = vadd.f32 0.0, %v568
      %v570 = vpop.f32.mrb[0].mxu0
      %571 = vmatprep.mubr.bf16.mxu0 0
      %572 = vmatmul.mubr.bf16.gmra.mrb[0].mxu0 %v439
      %v573 = vpop.f32.mrb[0].mxu0
      %v574 = vadd.f32 0.0, %v573
      %v575 = vpop.f32.mrb[0].mxu0
      %v576 = vpop.f32.mrb[0].mxu0
      %v577 = vadd.f32 0.0, %v576
      %v578 = vpop.f32.mrb[0].mxu0
      %579 = vmatprep.mubr.bf16.mxu0 0
      %580 = vmatmul.mubr.bf16.gmra.mrb[0].mxu0 %v442
      %v581 = vpop.f32.mrb[0].mxu0
      %v582 = vadd.f32 0.0, %v581
      %v583 = vpop.f32.mrb[0].mxu0
      %v584 = vpop.f32.mrb[0].mxu0
      %v585 = vadd.f32 0.0, %v584
      %v586 = vpop.f32.mrb[0].mxu0
      %587 = vmatprep.mubr.bf16.mxu0 0
      %588 = vmatmul.mubr.bf16.gmra.mrb[0].mxu0 %v445
      %v589 = vpop.f32.mrb[0].mxu0
      %v590 = vadd.f32 0.0, %v589
      %v591 = vpop.f32.mrb[0].mxu0
      %v592 = vpop.f32.mrb[0].mxu0
      %v593 = vadd.f32 0.0, %v592
      %v594 = vpop.f32.mrb[0].mxu0
      %595 = vmatprep.mubr.bf16.mxu0 0
      %596 = vmatmul.mubr.bf16.gmra.mrb[0].mxu0 %v448
      %v597 = vpop.f32.mrb[0].mxu0
      %v598 = vadd.f32 0.0, %v597
      %v599 = vpop.f32.mrb[0].mxu0
      %v600 = vpop.f32.mrb[0].mxu0
      %v601 = vadd.f32 0.0, %v600
      %v602 = vpop.f32.mrb[0].mxu0
      %603 = vmatprep.mubr.bf16.mxu0 0
      %604 = vmatmul.mubr.bf16.gmra.mrb[0].mxu0 %v451
      %v605 = vpop.f32.mrb[0].mxu0
      %v606 = vadd.f32 0.0, %v605
      %v607 = vpop.f32.mrb[0].mxu0
      %v608 = vpop.f32.mrb[0].mxu0
      %v609 = vadd.f32 0.0, %v608
      %v610 = vpop.f32.mrb[0].mxu0
      %611 = vmatprep.mubr.bf16.mxu0 0
      %612 = vmatmul.mubr.bf16.gmra.mrb[0].mxu0 %v454
      %v613 = vpop.f32.mrb[0].mxu0
      %v614 = vadd.f32 0.0, %v613
      %v615 = vpop.f32.mrb[0].mxu0
      %v616 = vpop.f32.mrb[0].mxu0
      %v617 = vadd.f32 0.0, %v616
      %v618 = vpop.f32.mrb[0].mxu0
      %619 = vmatprep.mubr.bf16.mxu0 0
      %620 = vmatmul.mubr.bf16.gmra.mrb[0].mxu0 %v457
      %v621 = vpop.f32.mrb[0].mxu0
      %v622 = vadd.f32 0.0, %v621
      %v623 = vpop.f32.mrb[0].mxu0
      %v624 = vpop.f32.mrb[0].mxu0
      %v625 = vadd.f32 0.0, %v624
      %v626 = vpop.f32.mrb[0].mxu0
      %627 = vmatprep.mubr.bf16.mxu0 0
      %628 = vmatmul.mubr.bf16.gmra.mrb[0].mxu0 %v460
      %v629 = vpop.f32.mrb[0].mxu0
      %v630 = vadd.f32 0.0, %v629
      %v631 = vpop.f32.mrb[0].mxu0
      %v632 = vpop.f32.mrb[0].mxu0
      %v633 = vadd.f32 0.0, %v632
      %v634 = vpop.f32.mrb[0].mxu0
      %635 = vmatprep.mubr.bf16.mxu0 0
      %636 = vmatmul.mubr.bf16.gmra.mrb[0].mxu0 %v463
      %v637 = vpop.f32.mrb[0].mxu0
      %v638 = vadd.f32 0.0, %v637
      %v639 = vpop.f32.mrb[0].mxu0
      %v640 = vpop.f32.mrb[0].mxu0
      %v641 = vadd.f32 0.0, %v640
      %v642 = vpop.f32.mrb[0].mxu0
      %643 = vmatprep.mubr.bf16.mxu0 0
      %644 = vmatmul.mubr.bf16.gmra.mrb[0].mxu0 %v466
      %v645 = vpop.f32.mrb[0].mxu0
      %v646 = vadd.f32 0.0, %v645
      %v647 = vpop.f32.mrb[0].mxu0
      %v648 = vpop.f32.mrb[0].mxu0
      %v649 = vadd.f32 0.0, %v648
      %v650 = vpop.f32.mrb[0].mxu0
      %651 = vmatprep.mubr.bf16.mxu0 0
      %652 = vmatmul.mubr.bf16.gmra.mrb[0].mxu0 %v469
      %v653 = vpop.f32.mrb[0].mxu0
      %v654 = vadd.f32 0.0, %v653
      %v655 = vpop.f32.mrb[0].mxu0
      %v656 = vpop.f32.mrb[0].mxu0
      %v657 = vadd.f32 0.0, %v656
      %v658 = vpop.f32.mrb[0].mxu0
      %659 = vmatprep.mubr.bf16.mxu0 0
      %660 = vmatmul.mubr.bf16.gmra.mrb[0].mxu0 %v472
      %v661 = vpop.f32.mrb[0].mxu0
      %v662 = vadd.f32 0.0, %v661
      %v663 = vpop.f32.mrb[0].mxu0
      %v664 = vpop.f32.mrb[0].mxu0
      %v665 = vadd.f32 0.0, %v664
      %v666 = vpop.f32.mrb[0].mxu0
      %667 = vmatprep.mubr.bf16.mxu0 0
      %668 = vmatmul.mubr.bf16.gmra.mrb[0].mxu0 %v475
      %v669 = vpop.f32.mrb[0].mxu0
      %v670 = vadd.f32 0.0, %v669
      %v671 = vpop.f32.mrb[0].mxu0
      %v672 = vpop.f32.mrb[0].mxu0
      %v673 = vadd.f32 0.0, %v672
      %v674 = vpop.f32.mrb[0].mxu0
      %675 = vmatprep.mubr.bf16.mxu0 0
      %676 = vmatmul.mubr.bf16.gmra.mrb[0].mxu0 %v478
      %v677 = vpop.f32.mrb[0].mxu0
      %v678 = vadd.f32 0.0, %v677
      %v679 = vpop.f32.mrb[0].mxu0
      %v680 = vpop.f32.mrb[0].mxu0
      %v681 = vadd.f32 0.0, %v680
      %v682 = vpop.f32.mrb[0].mxu0
      %683 = vmatprep.mubr.bf16.mxu0 0
      %684 = vmatmul.mubr.bf16.gmra.mrb[0].mxu0 %v481
      %v685 = vpop.f32.mrb[0].mxu0
      %v686 = vadd.f32 0.0, %v685
      %v687 = vpop.f32.mrb[0].mxu0
      %v688 = vpop.f32.mrb[0].mxu0
      %v689 = vadd.f32 0.0, %v688
      %v690 = vpop.f32.mrb[0].mxu0
      %691 = vmatprep.mubr.bf16.mxu0 0
      %692 = vmatmul.mubr.bf16.gmra.mrb[0].mxu0 %v484
      %v693 = vpop.f32.mrb[0].mxu0
      %v694 = vadd.f32 0.0, %v693
      %v695 = vpop.f32.mrb[0].mxu0
      %v696 = vpop.f32.mrb[0].mxu0
      %v697 = vadd.f32 0.0, %v696
      %v698 = vpop.f32.mrb[0].mxu0
      %699 = vmatprep.mubr.bf16.mxu0 0
      %700 = vmatmul.mubr.bf16.gmra.mrb[0].mxu0 %v487
      %v701 = vpop.f32.mrb[0].mxu0
      %v702 = vadd.f32 0.0, %v701
      %v703 = vpop.f32.mrb[0].mxu0
      %v704 = vpop.f32.mrb[0].mxu0
      %v705 = vadd.f32 0.0, %v704
      %v706 = vpop.f32.mrb[0].mxu0
      %707 = vmatprep.mubr.bf16.mxu0 0
      %708 = vmatmul.mubr.bf16.gmra.mrb[0].mxu0 %v490
      %v709 = vpop.f32.mrb[0].mxu0
      %v710 = vadd.f32 0.0, %v709
      %v711 = vpop.f32.mrb[0].mxu0
      %v712 = vpop.f32.mrb[0].mxu0
      %v713 = vadd.f32 0.0, %v712
      %v714 = vpop.f32.mrb[0].mxu0
      %715 = vmatprep.mubr.bf16.mxu0 0
      %716 = vmatmul.mubr.bf16.gmra.mrb[0].mxu0 %v493
      %v717 = vpop.f32.mrb[0].mxu0
      %v718 = vadd.f32 0.0, %v717
      %v719 = vpop.f32.mrb[0].mxu0
      %v720 = vpop.f32.mrb[0].mxu0
      %v721 = vadd.f32 0.0, %v720
      %v722 = vpop.f32.mrb[0].mxu0
      %723 = vmatprep.mubr.bf16.mxu0 0
      %724 = vmatmul.mubr.bf16.gmra.mrb[0].mxu0 %v496
      %v725 = vpop.f32.mrb[0].mxu0
      %v726 = vadd.f32 0.0, %v725
      %v727 = vpop.f32.mrb[0].mxu0
      %v728 = vpop.f32.mrb[0].mxu0
      %v729 = vadd.f32 0.0, %v728
      %v730 = vpop.f32.mrb[0].mxu0
      %731 = vmatprep.mubr.bf16.mxu0 0
      %732 = vmatmul.mubr.bf16.gmra.mrb[0].mxu0 %v499
      %v733 = vpop.f32.mrb[0].mxu0
      %v734 = vadd.f32 0.0, %v733
      %v735 = vpop.f32.mrb[0].mxu0
      %v736 = vpop.f32.mrb[0].mxu0
      %v737 = vadd.f32 0.0, %v736
      %v738 = vpop.f32.mrb[0].mxu0
      %739 = vmatprep.mubr.bf16.mxu0 0
      %740 = vmatmul.mubr.bf16.gmra.mrb[0].mxu0 %v502
      %v741 = vpop.f32.mrb[0].mxu0
      %v742 = vadd.f32 0.0, %v741
      %v743 = vpop.f32.mrb[0].mxu0
      %v744 = vpop.f32.mrb[0].mxu0
      %v745 = vadd.f32 0.0, %v744
      %v746 = vpop.f32.mrb[0].mxu0
      %747 = vmatprep.mubr.bf16.mxu0 0
      %748 = vmatmul.mubr.bf16.gmra.mrb[0].mxu0 %v505
      %v749 = vpop.f32.mrb[0].mxu0
      %v750 = vadd.f32 0.0, %v749
      %v751 = vpop.f32.mrb[0].mxu0
      %v752 = vpop.f32.mrb[0].mxu0
      %v753 = vadd.f32 0.0, %v752
      %v754 = vpop.f32.mrb[0].mxu0
      %755 = vmatprep.mubr.bf16.mxu0 0
      %756 = vmatmul.mubr.bf16.gmra.mrb[0].mxu0 %v508
      %v757 = vpop.f32.mrb[0].mxu0
      %v758 = vadd.f32 0.0, %v757
      %v759 = vpop.f32.mrb[0].mxu0
      %v760 = vpop.f32.mrb[0].mxu0
      %v761 = vadd.f32 0.0, %v760
      %v762 = vpop.f32.mrb[0].mxu0
      %763 = vmatprep.mubr.bf16.mxu0 0
      %764 = vmatmul.mubr.bf16.gmra.mrb[0].mxu0 %v511
      %v765 = vpop.f32.mrb[0].mxu0
      %v766 = vadd.f32 0.0, %v765
      %v767 = vpop.f32.mrb[0].mxu0
      %v768 = vpop.f32.mrb[0].mxu0
      %v769 = vadd.f32 0.0, %v768
      %v770 = vpop.f32.mrb[0].mxu0
      %771 = vmatprep.mubr.bf16.mxu0 0
      %772 = vmatmul.mubr.bf16.gmra.mrb[0].mxu0 %v514
      %v773 = vpop.f32.mrb[0].mxu0
      %v774 = vadd.f32 0.0, %v773
      %v775 = vpop.f32.mrb[0].mxu0
      %v776 = vpop.f32.mrb[0].mxu0
      %v777 = vadd.f32 0.0, %v776
      %v778 = vpop.f32.mrb[0].mxu0
      %779 = vmatprep.mubr.bf16.mxu0 0
      %780 = vmatmul.mubr.bf16.gmra.mrb[0].mxu0 %v517
      %v781 = vpop.f32.mrb[0].mxu0
      %v782 = vadd.f32 0.0, %v781
      %v783 = vpop.f32.mrb[0].mxu0
      %v784 = vpop.f32.mrb[0].mxu0
      %v785 = vadd.f32 0.0, %v784
      %v786 = vpop.f32.mrb[0].mxu0
      %787 = vmatprep.mubr.bf16.mxu0 0
      %788 = vmatmul.mubr.bf16.gmra.mrb[0].mxu0 %v520
      %v789 = vpop.f32.mrb[0].mxu0
      %v790 = vadd.f32 0.0, %v789
      %v791 = vpop.f32.mrb[0].mxu0
      %v792 = vpop.f32.mrb[0].mxu0
      %v793 = vadd.f32 0.0, %v792
      %v794 = vpop.f32.mrb[0].mxu0
      %795 = vmatprep.mubr.bf16.mxu0 0
      %796 = vmatmul.mubr.bf16.gmra.mrb[0].mxu0 %v523
      %v797 = vpop.f32.mrb[0].mxu0
      %v798 = vadd.f32 0.0, %v797
      %v799 = vpop.f32.mrb[0].mxu0
      %v800 = vpop.f32.mrb[0].mxu0
      %v801 = vadd.f32 0.0, %v800
      %v802 = vpop.f32.mrb[0].mxu0
      %803 = vmatprep.mubr.bf16.mxu0 0
      %804 = vmatmul.mubr.bf16.gmra.mrb[0].mxu0 %v526
      %v805 = vpop.f32.mrb[0].mxu0
      %v806 = vadd.f32 0.0, %v805
      %v807 = vpop.f32.mrb[0].mxu0
      %v808 = vpop.f32.mrb[0].mxu0
      %v809 = vadd.f32 0.0, %v808
      %v810 = vpop.f32.mrb[0].mxu0
      %811 = vmatprep.mubr.bf16.mxu0 0
      %812 = vmatmul.mubr.bf16.gmra.mrb[0].mxu0 %v529
      %v813 = vpop.f32.mrb[0].mxu0
      %v814 = vadd.f32 0.0, %v813
      %v815 = vpop.f32.mrb[0].mxu0
      %v816 = vpop.f32.mrb[0].mxu0
      %v817 = vadd.f32 0.0, %v816
      %v818 = vpop.f32.mrb[0].mxu0
      %819 = vdwg.mxu0
      %v820 = vld [vmem:[%s2] sm:$0x1]
      %v822 = vlaneseq
      %v823 = vshrl.u32 %v822, 7
      %v824 = vsub.s32 0, %v823
      %v825 = vrot.slane %v820, %v824
      %v827 = vmul.f32 %v566, %v825
      %v828 = vmul.f32 %v569, %v825
      %v829 = vmul.f32 %v574, %v825
      %v830 = vmul.f32 %v577, %v825
      %v831 = vmul.f32 %v582, %v825
      %v832 = vmul.f32 %v585, %v825
      %v833 = vmul.f32 %v590, %v825
      %v834 = vmul.f32 %v593, %v825
      %v835 = vmul.f32 %v598, %v825
      %v836 = vmul.f32 %v601, %v825
      %v837 = vmul.f32 %v606, %v825
      %v838 = vmul.f32 %v609, %v825
      %v839 = vmul.f32 %v614, %v825
      %v840 = vmul.f32 %v617, %v825
      %v841 = vmul.f32 %v622, %v825
      %v842 = vmul.f32 %v625, %v825
      %v843 = vmul.f32 %v630, %v825
      %v844 = vmul.f32 %v633, %v825
      %v845 = vmul.f32 %v638, %v825
      %v846 = vmul.f32 %v641, %v825
      %v847 = vmul.f32 %v646, %v825
      %v848 = vmul.f32 %v649, %v825
      %v849 = vmul.f32 %v654, %v825
      %v850 = vmul.f32 %v657, %v825
      %v851 = vmul.f32 %v662, %v825
      %v852 = vmul.f32 %v665, %v825
      %v853 = vmul.f32 %v670, %v825
      %v854 = vmul.f32 %v673, %v825
      %v855 = vmul.f32 %v678, %v825
      %v856 = vmul.f32 %v681, %v825
      %v857 = vmul.f32 %v686, %v825
      %v858 = vmul.f32 %v689, %v825
      %v859 = vmul.f32 %v694, %v825
      %v860 = vmul.f32 %v697, %v825
      %v861 = vmul.f32 %v702, %v825
      %v862 = vmul.f32 %v705, %v825
      %v863 = vmul.f32 %v710, %v825
      %v864 = vmul.f32 %v713, %v825
      %v865 = vmul.f32 %v718, %v825
      %v866 = vmul.f32 %v721, %v825
      %v867 = vmul.f32 %v726, %v825
      %v868 = vmul.f32 %v729, %v825
      %v869 = vmul.f32 %v734, %v825
      %v870 = vmul.f32 %v737, %v825
      %v871 = vmul.f32 %v742, %v825
      %v872 = vmul.f32 %v745, %v825
      %v873 = vmul.f32 %v750, %v825
      %v874 = vmul.f32 %v753, %v825
      %v875 = vmul.f32 %v758, %v825
      %v876 = vmul.f32 %v761, %v825
      %v877 = vmul.f32 %v766, %v825
      %v878 = vmul.f32 %v769, %v825
      %v879 = vmul.f32 %v774, %v825
      %v880 = vmul.f32 %v777, %v825
      %v881 = vmul.f32 %v782, %v825
      %v882 = vmul.f32 %v785, %v825
      %v883 = vmul.f32 %v790, %v825
      %v884 = vmul.f32 %v793, %v825
      %v885 = vmul.f32 %v798, %v825
      %v886 = vmul.f32 %v801, %v825
      %v887 = vmul.f32 %v806, %v825
      %v888 = vmul.f32 %v809, %v825
      %v889 = vmul.f32 %v814, %v825
      %v890 = vmul.f32 %v817, %v825
      %v891 = vld [vmem:[%s3] sm:$0x1]
      %v893 = vlaneseq
      %v894 = vshrl.u32 %v893, 7
      %v895 = vsub.s32 0, %v894
      %v896 = vrot.slane %v891, %v895
      %v898 = vadd.f32 %v827, %v896
      %v899 = vadd.f32 %v828, %v896
      %v900 = vadd.f32 %v829, %v896
      %v901 = vadd.f32 %v830, %v896
      %v902 = vadd.f32 %v831, %v896
      %v903 = vadd.f32 %v832, %v896
      %v904 = vadd.f32 %v833, %v896
      %v905 = vadd.f32 %v834, %v896
      %v906 = vadd.f32 %v835, %v896
      %v907 = vadd.f32 %v836, %v896
      %v908 = vadd.f32 %v837, %v896
      %v909 = vadd.f32 %v838, %v896
      %v910 = vadd.f32 %v839, %v896
      %v911 = vadd.f32 %v840, %v896
      %v912 = vadd.f32 %v841, %v896
      %v913 = vadd.f32 %v842, %v896
      %v914 = vadd.f32 %v843, %v896
      %v915 = vadd.f32 %v844, %v896
      %v916 = vadd.f32 %v845, %v896
      %v917 = vadd.f32 %v846, %v896
      %v918 = vadd.f32 %v847, %v896
      %v919 = vadd.f32 %v848, %v896
      %v920 = vadd.f32 %v849, %v896
      %v921 = vadd.f32 %v850, %v896
      %v922 = vadd.f32 %v851, %v896
      %v923 = vadd.f32 %v852, %v896
      %v924 = vadd.f32 %v853, %v896
      %v925 = vadd.f32 %v854, %v896
      %v926 = vadd.f32 %v855, %v896
      %v927 = vadd.f32 %v856, %v896
      %v928 = vadd.f32 %v857, %v896
      %v929 = vadd.f32 %v858, %v896
      %v930 = vadd.f32 %v859, %v896
      %v931 = vadd.f32 %v860, %v896
      %v932 = vadd.f32 %v861, %v896
      %v933 = vadd.f32 %v862, %v896
      %v934 = vadd.f32 %v863, %v896
      %v935 = vadd.f32 %v864, %v896
      %v936 = vadd.f32 %v865, %v896
      %v937 = vadd.f32 %v866, %v896
      %v938 = vadd.f32 %v867, %v896
      %v939 = vadd.f32 %v868, %v896
      %v940 = vadd.f32 %v869, %v896
      %v941 = vadd.f32 %v870, %v896
      %v942 = vadd.f32 %v871, %v896
      %v943 = vadd.f32 %v872, %v896
      %v944 = vadd.f32 %v873, %v896
      %v945 = vadd.f32 %v874, %v896
      %v946 = vadd.f32 %v875, %v896
      %v947 = vadd.f32 %v876, %v896
      %v948 = vadd.f32 %v877, %v896
      %v949 = vadd.f32 %v878, %v896
      %v950 = vadd.f32 %v879, %v896
      %v951 = vadd.f32 %v880, %v896
      %v952 = vadd.f32 %v881, %v896
      %v953 = vadd.f32 %v882, %v896
      %v954 = vadd.f32 %v883, %v896
      %v955 = vadd.f32 %v884, %v896
      %v956 = vadd.f32 %v885, %v896
      %v957 = vadd.f32 %v886, %v896
      %v958 = vadd.f32 %v887, %v896
      %v959 = vadd.f32 %v888, %v896
      %v960 = vadd.f32 %v889, %v896
      %v961 = vadd.f32 %v890, %v896
      %v962 = vmax.f32 %v898, 0.0
      %v963 = vmax.f32 %v899, 0.0
      %v964 = vmax.f32 %v900, 0.0
      %v965 = vmax.f32 %v901, 0.0
      %v966 = vmax.f32 %v902, 0.0
      %v967 = vmax.f32 %v903, 0.0
      %v968 = vmax.f32 %v904, 0.0
      %v969 = vmax.f32 %v905, 0.0
      %v970 = vmax.f32 %v906, 0.0
      %v971 = vmax.f32 %v907, 0.0
      %v972 = vmax.f32 %v908, 0.0
      %v973 = vmax.f32 %v909, 0.0
      %v974 = vmax.f32 %v910, 0.0
      %v975 = vmax.f32 %v911, 0.0
      %v976 = vmax.f32 %v912, 0.0
      %v977 = vmax.f32 %v913, 0.0
      %v978 = vmax.f32 %v914, 0.0
      %v979 = vmax.f32 %v915, 0.0
      %v980 = vmax.f32 %v916, 0.0
      %v981 = vmax.f32 %v917, 0.0
      %v982 = vmax.f32 %v918, 0.0
      %v983 = vmax.f32 %v919, 0.0
      %v984 = vmax.f32 %v920, 0.0
      %v985 = vmax.f32 %v921, 0.0
      %v986 = vmax.f32 %v922, 0.0
      %v987 = vmax.f32 %v923, 0.0
      %v988 = vmax.f32 %v924, 0.0
      %v989 = vmax.f32 %v925, 0.0
      %v990 = vmax.f32 %v926, 0.0
      %v991 = vmax.f32 %v927, 0.0
      %v992 = vmax.f32 %v928, 0.0
      %v993 = vmax.f32 %v929, 0.0
      %v994 = vmax.f32 %v930, 0.0
      %v995 = vmax.f32 %v931, 0.0
      %v996 = vmax.f32 %v932, 0.0
      %v997 = vmax.f32 %v933, 0.0
      %v998 = vmax.f32 %v934, 0.0
      %v999 = vmax.f32 %v935, 0.0
      %v1000 = vmax.f32 %v936, 0.0
      %v1001 = vmax.f32 %v937, 0.0
      %v1002 = vmax.f32 %v938, 0.0
      %v1003 = vmax.f32 %v939, 0.0
      %v1004 = vmax.f32 %v940, 0.0
      %v1005 = vmax.f32 %v941, 0.0
      %v1006 = vmax.f32 %v942, 0.0
      %v1007 = vmax.f32 %v943, 0.0
      %v1008 = vmax.f32 %v944, 0.0
      %v1009 = vmax.f32 %v945, 0.0
      %v1010 = vmax.f32 %v946, 0.0
      %v1011 = vmax.f32 %v947, 0.0
      %v1012 = vmax.f32 %v948, 0.0
      %v1013 = vmax.f32 %v949, 0.0
      %v1014 = vmax.f32 %v950, 0.0
      %v1015 = vmax.f32 %v951, 0.0
      %v1016 = vmax.f32 %v952, 0.0
      %v1017 = vmax.f32 %v953, 0.0
      %v1018 = vmax.f32 %v954, 0.0
      %v1019 = vmax.f32 %v955, 0.0
      %v1020 = vmax.f32 %v956, 0.0
      %v1021 = vmax.f32 %v957, 0.0
      %v1022 = vmax.f32 %v958, 0.0
      %v1023 = vmax.f32 %v959, 0.0
      %v1024 = vmax.f32 %v960, 0.0
      %v1025 = vmax.f32 %v961, 0.0
      %v1026 = vpack.c.bf16 %v963, %v962
      %v1027 = vpack.c.bf16 %v965, %v964
      %v1028 = vpack.c.bf16 %v967, %v966
      %v1029 = vpack.c.bf16 %v969, %v968
      %v1030 = vpack.c.bf16 %v971, %v970
      %v1031 = vpack.c.bf16 %v973, %v972
      %v1032 = vpack.c.bf16 %v975, %v974
      %v1033 = vpack.c.bf16 %v977, %v976
      %v1034 = vpack.c.bf16 %v979, %v978
      %v1035 = vpack.c.bf16 %v981, %v980
      %v1036 = vpack.c.bf16 %v983, %v982
      %v1037 = vpack.c.bf16 %v985, %v984
      %v1038 = vpack.c.bf16 %v987, %v986
      %v1039 = vpack.c.bf16 %v989, %v988
      %v1040 = vpack.c.bf16 %v991, %v990
      %v1041 = vpack.c.bf16 %v993, %v992
      %v1042 = vpack.c.bf16 %v995, %v994
      %v1043 = vpack.c.bf16 %v997, %v996
      %v1044 = vpack.c.bf16 %v999, %v998
      %v1045 = vpack.c.bf16 %v1001, %v1000
      %v1046 = vpack.c.bf16 %v1003, %v1002
      %v1047 = vpack.c.bf16 %v1005, %v1004
      %v1048 = vpack.c.bf16 %v1007, %v1006
      %v1049 = vpack.c.bf16 %v1009, %v1008
      %v1050 = vpack.c.bf16 %v1011, %v1010
      %v1051 = vpack.c.bf16 %v1013, %v1012
      %v1052 = vpack.c.bf16 %v1015, %v1014
      %v1053 = vpack.c.bf16 %v1017, %v1016
      %v1054 = vpack.c.bf16 %v1019, %v1018
      %v1055 = vpack.c.bf16 %v1021, %v1020
      %v1056 = vpack.c.bf16 %v1023, %v1022
      %v1057 = vpack.c.bf16 %v1025, %v1024
      %v1090 = vunpack.c.l.b16 %v1026
      %v1091 = vunpack.c.h.b16 %v1026
      %v1092 = vunpack.c.l.b16 %v1027
      %v1093 = vunpack.c.h.b16 %v1027
      %v1094 = vunpack.c.l.b16 %v1028
      %v1095 = vunpack.c.h.b16 %v1028
      %v1096 = vunpack.c.l.b16 %v1029
      %v1097 = vunpack.c.h.b16 %v1029
      %v1098 = vunpack.c.l.b16 %v1030
      %v1099 = vunpack.c.h.b16 %v1030
      %v1100 = vunpack.c.l.b16 %v1031
      %v1101 = vunpack.c.h.b16 %v1031
      %v1102 = vunpack.c.l.b16 %v1032
      %v1103 = vunpack.c.h.b16 %v1032
      %v1104 = vunpack.c.l.b16 %v1033
      %v1105 = vunpack.c.h.b16 %v1033
      %v1106 = vunpack.c.l.b16 %v1034
      %v1107 = vunpack.c.h.b16 %v1034
      %v1108 = vunpack.c.l.b16 %v1035
      %v1109 = vunpack.c.h.b16 %v1035
      %v1110 = vunpack.c.l.b16 %v1036
      %v1111 = vunpack.c.h.b16 %v1036
      %v1112 = vunpack.c.l.b16 %v1037
      %v1113 = vunpack.c.h.b16 %v1037
      %v1114 = vunpack.c.l.b16 %v1038
      %v1115 = vunpack.c.h.b16 %v1038
      %v1116 = vunpack.c.l.b16 %v1039
      %v1117 = vunpack.c.h.b16 %v1039
      %v1118 = vunpack.c.l.b16 %v1040
      %v1119 = vunpack.c.h.b16 %v1040
      %v1120 = vunpack.c.l.b16 %v1041
      %v1121 = vunpack.c.h.b16 %v1041
      %v1122 = vunpack.c.l.b16 %v1042
      %v1123 = vunpack.c.h.b16 %v1042
      %v1124 = vunpack.c.l.b16 %v1043
      %v1125 = vunpack.c.h.b16 %v1043
      %v1126 = vunpack.c.l.b16 %v1044
      %v1127 = vunpack.c.h.b16 %v1044
      %v1128 = vunpack.c.l.b16 %v1045
      %v1129 = vunpack.c.h.b16 %v1045
      %v1130 = vunpack.c.l.b16 %v1046
      %v1131 = vunpack.c.h.b16 %v1046
      %v1132 = vunpack.c.l.b16 %v1047
      %v1133 = vunpack.c.h.b16 %v1047
      %v1134 = vunpack.c.l.b16 %v1048
      %v1135 = vunpack.c.h.b16 %v1048
      %v1136 = vunpack.c.l.b16 %v1049
      %v1137 = vunpack.c.h.b16 %v1049
      %v1138 = vunpack.c.l.b16 %v1050
      %v1139 = vunpack.c.h.b16 %v1050
      %v1140 = vunpack.c.l.b16 %v1051
      %v1141 = vunpack.c.h.b16 %v1051
      %v1142 = vunpack.c.l.b16 %v1052
      %v1143 = vunpack.c.h.b16 %v1052
      %v1144 = vunpack.c.l.b16 %v1053
      %v1145 = vunpack.c.h.b16 %v1053
      %v1146 = vunpack.c.l.b16 %v1054
      %v1147 = vunpack.c.h.b16 %v1054
      %v1148 = vunpack.c.l.b16 %v1055
      %v1149 = vunpack.c.h.b16 %v1055
      %v1150 = vunpack.c.l.b16 %v1056
      %v1151 = vunpack.c.h.b16 %v1056
      %v1152 = vunpack.c.l.b16 %v1057
      %v1153 = vunpack.c.h.b16 %v1057
      %v1154 = vpack.c.b16 %v1090, %v1090
      %v1155 = vpack.c.b16 %v1091, %v1091
      %v1156 = vpack.c.b16 %v1092, %v1092
      %v1157 = vpack.c.b16 %v1093, %v1093
      %v1158 = vpack.c.b16 %v1094, %v1094
      %v1159 = vpack.c.b16 %v1095, %v1095
      %v1160 = vpack.c.b16 %v1096, %v1096
      %v1161 = vpack.c.b16 %v1097, %v1097
      %v1162 = vpack.c.b16 %v1098, %v1098
      %v1163 = vpack.c.b16 %v1099, %v1099
      %v1164 = vpack.c.b16 %v1100, %v1100
      %v1165 = vpack.c.b16 %v1101, %v1101
      %v1166 = vpack.c.b16 %v1102, %v1102
      %v1167 = vpack.c.b16 %v1103, %v1103
      %v1168 = vpack.c.b16 %v1104, %v1104
      %v1169 = vpack.c.b16 %v1105, %v1105
      %v1170 = vpack.c.b16 %v1106, %v1106
      %v1171 = vpack.c.b16 %v1107, %v1107
      %v1172 = vpack.c.b16 %v1108, %v1108
      %v1173 = vpack.c.b16 %v1109, %v1109
      %v1174 = vpack.c.b16 %v1110, %v1110
      %v1175 = vpack.c.b16 %v1111, %v1111
      %v1176 = vpack.c.b16 %v1112, %v1112
      %v1177 = vpack.c.b16 %v1113, %v1113
      %v1178 = vpack.c.b16 %v1114, %v1114
      %v1179 = vpack.c.b16 %v1115, %v1115
      %v1180 = vpack.c.b16 %v1116, %v1116
      %v1181 = vpack.c.b16 %v1117, %v1117
      %v1182 = vpack.c.b16 %v1118, %v1118
      %v1183 = vpack.c.b16 %v1119, %v1119
      %v1184 = vpack.c.b16 %v1120, %v1120
      %v1185 = vpack.c.b16 %v1121, %v1121
      %v1186 = vpack.c.b16 %v1122, %v1122
      %v1187 = vpack.c.b16 %v1123, %v1123
      %v1188 = vpack.c.b16 %v1124, %v1124
      %v1189 = vpack.c.b16 %v1125, %v1125
      %v1190 = vpack.c.b16 %v1126, %v1126
      %v1191 = vpack.c.b16 %v1127, %v1127
      %v1192 = vpack.c.b16 %v1128, %v1128
      %v1193 = vpack.c.b16 %v1129, %v1129
      %v1194 = vpack.c.b16 %v1130, %v1130
      %v1195 = vpack.c.b16 %v1131, %v1131
      %v1196 = vpack.c.b16 %v1132, %v1132
      %v1197 = vpack.c.b16 %v1133, %v1133
      %v1198 = vpack.c.b16 %v1134, %v1134
      %v1199 = vpack.c.b16 %v1135, %v1135
      %v1200 = vpack.c.b16 %v1136, %v1136
      %v1201 = vpack.c.b16 %v1137, %v1137
      %v1202 = vpack.c.b16 %v1138, %v1138
      %v1203 = vpack.c.b16 %v1139, %v1139
      %v1204 = vpack.c.b16 %v1140, %v1140
      %v1205 = vpack.c.b16 %v1141, %v1141
      %v1206 = vpack.c.b16 %v1142, %v1142
      %v1207 = vpack.c.b16 %v1143, %v1143
      %v1208 = vpack.c.b16 %v1144, %v1144
      %v1209 = vpack.c.b16 %v1145, %v1145
      %v1210 = vpack.c.b16 %v1146, %v1146
      %v1211 = vpack.c.b16 %v1147, %v1147
      %v1212 = vpack.c.b16 %v1148, %v1148
      %v1213 = vpack.c.b16 %v1149, %v1149
      %v1214 = vpack.c.b16 %v1150, %v1150
      %v1215 = vpack.c.b16 %v1151, %v1151
      %v1216 = vpack.c.b16 %v1152, %v1152
      %v1217 = vpack.c.b16 %v1153, %v1153
      %vm1282 = vcmask 519168
      %1283 = vst.msk [vmem:[%s199] sm:$0xf] %vm1282, %v1154
      %1284 = vst.msk [vmem:[%s199 + $0x4] sm:$0xf] %vm1282, %v1155
      %1285 = vst.msk [vmem:[%s199 + $0x8] sm:$0xf] %vm1282, %v1156
      %1286 = vst.msk [vmem:[%s199 + $0xc] sm:$0xf] %vm1282, %v1157
      %1287 = vst.msk [vmem:[%s199 + $0x10] sm:$0xf] %vm1282, %v1158
      %1288 = vst.msk [vmem:[%s199 + $0x14] sm:$0xf] %vm1282, %v1159
      %1289 = vst.msk [vmem:[%s199 + $0x18] sm:$0xf] %vm1282, %v1160
      %1290 = vst.msk [vmem:[%s199 + $0x1c] sm:$0xf] %vm1282, %v1161
      %1291 = vst.msk [vmem:[%s199 + $0x20] sm:$0xf] %vm1282, %v1162
      %1292 = vst.msk [vmem:[%s199 + $0x24] sm:$0xf] %vm1282, %v1163
      %1293 = vst.msk [vmem:[%s199 + $0x28] sm:$0xf] %vm1282, %v1164
      %1294 = vst.msk [vmem:[%s199 + $0x2c] sm:$0xf] %vm1282, %v1165
      %1295 = vst.msk [vmem:[%s199 + $0x30] sm:$0xf] %vm1282, %v1166
      %1296 = vst.msk [vmem:[%s199 + $0x34] sm:$0xf] %vm1282, %v1167
      %1297 = vst.msk [vmem:[%s199 + $0x38] sm:$0xf] %vm1282, %v1168
      %1298 = vst.msk [vmem:[%s199 + $0x3c] sm:$0xf] %vm1282, %v1169
      %1299 = vst.msk [vmem:[%s199 + $0x40] sm:$0xf] %vm1282, %v1170
      %1300 = vst.msk [vmem:[%s199 + $0x44] sm:$0xf] %vm1282, %v1171
      %1301 = vst.msk [vmem:[%s199 + $0x48] sm:$0xf] %vm1282, %v1172
      %1302 = vst.msk [vmem:[%s199 + $0x4c] sm:$0xf] %vm1282, %v1173
      %1303 = vst.msk [vmem:[%s199 + $0x50] sm:$0xf] %vm1282, %v1174
      %1304 = vst.msk [vmem:[%s199 + $0x54] sm:$0xf] %vm1282, %v1175
      %1305 = vst.msk [vmem:[%s199 + $0x58] sm:$0xf] %vm1282, %v1176
      %1306 = vst.msk [vmem:[%s199 + $0x5c] sm:$0xf] %vm1282, %v1177
      %1307 = vst.msk [vmem:[%s199 + $0x60] sm:$0xf] %vm1282, %v1178
      %1308 = vst.msk [vmem:[%s199 + $0x64] sm:$0xf] %vm1282, %v1179
      %1309 = vst.msk [vmem:[%s199 + $0x68] sm:$0xf] %vm1282, %v1180
      %1310 = vst.msk [vmem:[%s199 + $0x6c] sm:$0xf] %vm1282, %v1181
      %1311 = vst.msk [vmem:[%s199 + $0x70] sm:$0xf] %vm1282, %v1182
      %1312 = vst.msk [vmem:[%s199 + $0x74] sm:$0xf] %vm1282, %v1183
      %1313 = vst.msk [vmem:[%s199 + $0x78] sm:$0xf] %vm1282, %v1184
      %1314 = vst.msk [vmem:[%s199 + $0x7c] sm:$0xf] %vm1282, %v1185
      %1315 = vst.msk [vmem:[%s199 + $0x80] sm:$0xf] %vm1282, %v1186
      %1316 = vst.msk [vmem:[%s199 + $0x84] sm:$0xf] %vm1282, %v1187
      %1317 = vst.msk [vmem:[%s199 + $0x88] sm:$0xf] %vm1282, %v1188
      %1318 = vst.msk [vmem:[%s199 + $0x8c] sm:$0xf] %vm1282, %v1189
      %1319 = vst.msk [vmem:[%s199 + $0x90] sm:$0xf] %vm1282, %v1190
      %1320 = vst.msk [vmem:[%s199 + $0x94] sm:$0xf] %vm1282, %v1191
      %1321 = vst.msk [vmem:[%s199 + $0x98] sm:$0xf] %vm1282, %v1192
      %1322 = vst.msk [vmem:[%s199 + $0x9c] sm:$0xf] %vm1282, %v1193
      %1323 = vst.msk [vmem:[%s199 + $0xa0] sm:$0xf] %vm1282, %v1194
      %1324 = vst.msk [vmem:[%s199 + $0xa4] sm:$0xf] %vm1282, %v1195
      %1325 = vst.msk [vmem:[%s199 + $0xa8] sm:$0xf] %vm1282, %v1196
      %1326 = vst.msk [vmem:[%s199 + $0xac] sm:$0xf] %vm1282, %v1197
      %1327 = vst.msk [vmem:[%s199 + $0xb0] sm:$0xf] %vm1282, %v1198
      %1328 = vst.msk [vmem:[%s199 + $0xb4] sm:$0xf] %vm1282, %v1199
      %1329 = vst.msk [vmem:[%s199 + $0xb8] sm:$0xf] %vm1282, %v1200
      %1330 = vst.msk [vmem:[%s199 + $0xbc] sm:$0xf] %vm1282, %v1201
      %1331 = vst.msk [vmem:[%s199 + $0xc0] sm:$0xf] %vm1282, %v1202
      %1332 = vst.msk [vmem:[%s199 + $0xc4] sm:$0xf] %vm1282, %v1203
      %1333 = vst.msk [vmem:[%s199 + $0xc8] sm:$0xf] %vm1282, %v1204
      %1334 = vst.msk [vmem:[%s199 + $0xcc] sm:$0xf] %vm1282, %v1205
      %1335 = vst.msk [vmem:[%s199 + $0xd0] sm:$0xf] %vm1282, %v1206
      %1336 = vst.msk [vmem:[%s199 + $0xd4] sm:$0xf] %vm1282, %v1207
      %1337 = vst.msk [vmem:[%s199 + $0xd8] sm:$0xf] %vm1282, %v1208
      %1338 = vst.msk [vmem:[%s199 + $0xdc] sm:$0xf] %vm1282, %v1209
      %1339 = vst.msk [vmem:[%s199 + $0xe0] sm:$0xf] %vm1282, %v1210
      %1340 = vst.msk [vmem:[%s199 + $0xe4] sm:$0xf] %vm1282, %v1211
      %1341 = vst.msk [vmem:[%s199 + $0xe8] sm:$0xf] %vm1282, %v1212
      %1342 = vst.msk [vmem:[%s199 + $0xec] sm:$0xf] %vm1282, %v1213
      %1343 = vst.msk [vmem:[%s199 + $0xf0] sm:$0xf] %vm1282, %v1214
      %1344 = vst.msk [vmem:[%s199 + $0xf4] sm:$0xf] %vm1282, %v1215
      %1345 = vst.msk [vmem:[%s199 + $0xf8] sm:$0xf] %vm1282, %v1216
      %1346 = vst.msk [vmem:[%s199 + $0xfc] sm:$0xf] %vm1282, %v1217
      %s1347 = smul.u32 64, %s15
      %p1348 = scmp.lt.s32.totalorder %s1347, 255
      %s1349 = scalar_select %p1348, %s1347, 255
      %s1350 = smul.addr %s1349, 4
      %s1351 = scalar_lea.vmem %s4, %s1350
      // Predicated region
      $region37: #{segmentation_forward.15} parent=35 // pred_check
        %p1352 = pneg %p122
      $region38: #{segmentation_forward.15} parent=35 // pred_check_branch
        %1354 = sbr.rel (%p1352) target = $region40
      $region39: #{segmentation_forward.15} parent=35 // pred_region
        %s1355 = smul.u32 64, %s15
      $region40: #{segmentation_forward.15} parent=35 // pred_fallthru
        _
    $region36: #{segmentation_forward.15} parent=5 // pred_fallthru
      _
    %p1356 = scmp.le.s32.totalorder 2, %s10
    // Predicated region
    $region41: #{segmentation_forward.15} parent=5 // pred_check
      %p1357 = pneg %p1356
    $region42: #{segmentation_forward.15} parent=5 // pred_check_branch
      %1359 = sbr.rel (%p1357) target = $region44
    $region43: #{segmentation_forward.15} parent=5 // pred_region
      %s1360 = ssub.s32 %s10, 2
      // Predicated region
      $region45: #{segmentation_forward.15} parent=43 // pred_check
        %p1361 = pneg %p128
      $region46: #{segmentation_forward.15} parent=43 // pred_check_branch
        %1363 = sbr.rel (%p1361) target = $region48
      $region47: #{segmentation_forward.15} parent=43 // pred_region
        %s1364 = smul.u32 64, %s16
        %p1365 = scmp.lt.s32.totalorder %s1364, 255
        %s1366 = scalar_select %p1365, %s1364, 255
        %s1367 = smul.addr %s1366, 4
        %s1368 = scalar_lea.vmem %s4, %s1367
      $region48: #{segmentation_forward.15} parent=43 // pred_fallthru
        _
    $region44: #{segmentation_forward.15} parent=5 // pred_fallthru
      _
  $region6: #{segmentation_forward.15} parent=0 // loop_footer
    %s14 = sadd.s32 1, %s10
  $region7: #{segmentation_forward.15} parent=0 // loop_footer_branch
    %9 = sbr.rel target = $region3
  $region8: #{segmentation_forward.15} parent=0 // loop_exit
    _

// kernel: segmentation_forward.16
$region0: #{segmentation_forward.16}
  #allocation0 [shape = 'u32[]', space=smem, size = 0x4, offset = 0x4, fixed_abs, tag = 'smem constant byte address 0x4 - core index']
  #allocation1 [shape = 'u32[144,128]{1,0:T(1,128)}', space=vmem, size = 0x12000, scoped, tag = 'internal scratch']
  %s0 = inlined_call_operand.vmem [shape: bf16[2560,256], index: 0, kind: input, shape index: {}]
  %s1 = inlined_call_operand.vmem [shape: bf16[256,128], index: 1, kind: input, shape index: {}]
  %s2 = inlined_call_operand.vmem [shape: f32[1,128], index: 2, kind: input, shape index: {}]
  %s3 = inlined_call_operand.vmem [shape: f32[1,128], index: 3, kind: input, shape index: {}]
  %s4 = inlined_call_operand.vmem [shape: bf16[2560,128], index: 4, kind: output, shape index: {}]
  %s5 = sld [smem:[#allocation0]]
  $region49: #{segmentation_forward.16} parent=0
    _
  %s7 = ssub.s32 1, %s5
  %s8 = scalar_select 0, %s7, %s5
  loop: start=0, step=1, limit=7
  $region2: #{segmentation_forward.16} parent=0 // loop_pre_header
    _
  $region3: #{segmentation_forward.16} parent=0 // loop_header
    %s10 = sphi 0, %s14
    %p11 = scmp.ge.s32.totalorder %s10, 7
    %s20 = sphi 0, %s22
    %s23 = sphi 0, %s20
    %s24 = sphi 0, %s23
    %s40 = sphi 0, %s24
    %s44 = sphi 0, %s44
    %s46 = sphi 0, %s44
    %s47 = sphi 0, %s46
    %s61 = sphi 0, %s47
    %s65 = sphi 0, %s65
    %s67 = sphi 0, %s65
    %s68 = sphi 0, %s67
    %s82 = sphi 0, %s68
    %s86 = sphi 0, %s86
    %s88 = sphi 0, %s86
    %s89 = sphi 0, %s88
    %s103 = sphi 0, %s89
    %s109 = sphi 0, %s111
    %s112 = sphi 0, %s109
    %s113 = sphi 0, %s112
    %s129 = sphi 0, %s113
  $region4: #{segmentation_forward.16} parent=0 // loop_header_branch
    %13 = sbr.rel (%p11) target = $region8
  $region5: #{segmentation_forward.16} parent=0 // loop_body
    %s15 = ssub.s32 %s10, 1
    %s16 = ssub.s32 %s10, 2
    %s17 = sadd.s32 %s10, 1
    %s18 = ssub.s32 %s10, %s17
    %p19 = scmp.eq.s32.totalorder %s18, 0
    %s21 = sadd.s32 %s20, 1
    %s22 = scalar_select %p19, %s20, %s21
    %p25 = pneg %p19
    %p26 = scmp.eq.s32.totalorder %s10, 4
    %p27 = por %p25, %p26
    %p28 = scmp.ne.s32.totalorder %s20, %s23
    %p29 = scmp.eq.s32.totalorder %s10, 0
    %p30 = por %p28, %p29
    %p31 = scmp.ne.s32.totalorder %s20, %s23
    %p32 = scmp.eq.s32.totalorder %s15, 4
    %p33 = por %p31, %p32
    %p34 = scmp.ne.s32.totalorder %s23, %s24
    %p35 = scmp.eq.s32.totalorder %s15, 0
    %p36 = por %p34, %p35
    %p37 = scmp.ne.s32.totalorder %s23, %s24
    %p38 = scmp.eq.s32.totalorder %s16, 4
    %p39 = por %p37, %p38
    %p41 = scmp.ne.s32.totalorder %s24, %s40
    %p42 = scmp.eq.s32.totalorder %s16, 0
    %p43 = por %p41, %p42
    %s45 = sadd.s32 %s44, 1
    %p48 = scmp.eq.s32.totalorder %s10, 4
    %p49 = scmp.ne.s32.totalorder %s44, %s46
    %p50 = scmp.eq.s32.totalorder %s10, 0
    %p51 = por %p49, %p50
    %p52 = scmp.ne.s32.totalorder %s44, %s46
    %p53 = scmp.eq.s32.totalorder %s15, 4
    %p54 = por %p52, %p53
    %p55 = scmp.ne.s32.totalorder %s46, %s47
    %p56 = scmp.eq.s32.totalorder %s15, 0
    %p57 = por %p55, %p56
    %p58 = scmp.ne.s32.totalorder %s46, %s47
    %p59 = scmp.eq.s32.totalorder %s16, 4
    %p60 = por %p58, %p59
    %p62 = scmp.ne.s32.totalorder %s47, %s61
    %p63 = scmp.eq.s32.totalorder %s16, 0
    %p64 = por %p62, %p63
    %s66 = sadd.s32 %s65, 1
    %p69 = scmp.eq.s32.totalorder %s10, 4
    %p70 = scmp.ne.s32.totalorder %s65, %s67
    %p71 = scmp.eq.s32.totalorder %s10, 0
    %p72 = por %p70, %p71
    %p73 = scmp.ne.s32.totalorder %s65, %s67
    %p74 = scmp.eq.s32.totalorder %s15, 4
    %p75 = por %p73, %p74
    %p76 = scmp.ne.s32.totalorder %s67, %s68
    %p77 = scmp.eq.s32.totalorder %s15, 0
    %p78 = por %p76, %p77
    %p79 = scmp.ne.s32.totalorder %s67, %s68
    %p80 = scmp.eq.s32.totalorder %s16, 4
    %p81 = por %p79, %p80
    %p83 = scmp.ne.s32.totalorder %s68, %s82
    %p84 = scmp.eq.s32.totalorder %s16, 0
    %p85 = por %p83, %p84
    %s87 = sadd.s32 %s86, 1
    %p90 = scmp.eq.s32.totalorder %s10, 4
    %p91 = scmp.ne.s32.totalorder %s86, %s88
    %p92 = scmp.eq.s32.totalorder %s10, 0
    %p93 = por %p91, %p92
    %p94 = scmp.ne.s32.totalorder %s86, %s88
    %p95 = scmp.eq.s32.totalorder %s15, 4
    %p96 = por %p94, %p95
    %p97 = scmp.ne.s32.totalorder %s88, %s89
    %p98 = scmp.eq.s32.totalorder %s15, 0
    %p99 = por %p97, %p98
    %p100 = scmp.ne.s32.totalorder %s88, %s89
    %p101 = scmp.eq.s32.totalorder %s16, 4
    %p102 = por %p100, %p101
    %p104 = scmp.ne.s32.totalorder %s89, %s103
    %p105 = scmp.eq.s32.totalorder %s16, 0
    %p106 = por %p104, %p105
    %s107 = ssub.s32 %s10, %s17
    %p108 = scmp.eq.s32.totalorder %s107, 0
    %s110 = sadd.s32 %s109, 1
    %s111 = scalar_select %p108, %s109, %s110
    %p114 = pneg %p108
    %p115 = scmp.eq.s32.totalorder %s10, 4
    %p116 = por %p114, %p115
    %p117 = scmp.ne.s32.totalorder %s109, %s112
    %p118 = scmp.eq.s32.totalorder %s10, 0
    %p119 = por %p117, %p118
    %p120 = scmp.ne.s32.totalorder %s109, %s112
    %p121 = scmp.eq.s32.totalorder %s15, 4
    %p122 = por %p120, %p121
    %p123 = scmp.ne.s32.totalorder %s112, %s113
    %p124 = scmp.eq.s32.totalorder %s15, 0
    %p125 = por %p123, %p124
    %p126 = scmp.ne.s32.totalorder %s112, %s113
    %p127 = scmp.eq.s32.totalorder %s16, 4
    %p128 = por %p126, %p127
    %p130 = scmp.ne.s32.totalorder %s113, %s129
    %p131 = scmp.eq.s32.totalorder %s16, 0
    %p132 = por %p130, %p131
    %p133 = scmp.le.s32.totalorder 1, %s10
    %p134 = scmp.lt.s32.totalorder %s10, 6
    %p135 = pnand %p133, %p134
    %p136 = pneg %p135
    // Predicated region
    $region9: #{segmentation_forward.16} parent=5 // pred_check
      _
    $region10: #{segmentation_forward.16} parent=5 // pred_check_branch
      %138 = sbr.rel (%p135) target = $region12
    $region11: #{segmentation_forward.16} parent=5 // pred_region
      %s139 = ssub.s32 %s10, 1
      // Predicated region
      $region13: #{segmentation_forward.16} parent=11 // pred_check
        %p140 = pneg %p57
      $region14: #{segmentation_forward.16} parent=11 // pred_check_branch
        %142 = sbr.rel (%p140) target = $region16
      $region15: #{segmentation_forward.16} parent=11 // pred_region
        _
      $region16: #{segmentation_forward.16} parent=11 // pred_fallthru
        _
      // Predicated region
      $region17: #{segmentation_forward.16} parent=11 // pred_check
        %p143 = pneg %p78
      $region18: #{segmentation_forward.16} parent=11 // pred_check_branch
        %145 = sbr.rel (%p143) target = $region20
      $region19: #{segmentation_forward.16} parent=11 // pred_region
        _
      $region20: #{segmentation_forward.16} parent=11 // pred_fallthru
        _
      // Predicated region
      $region21: #{segmentation_forward.16} parent=11 // pred_check
        %p146 = pneg %p99
      $region22: #{segmentation_forward.16} parent=11 // pred_check_branch
        %148 = sbr.rel (%p146) target = $region24
      $region23: #{segmentation_forward.16} parent=11 // pred_region
        _
      $region24: #{segmentation_forward.16} parent=11 // pred_fallthru
        _
    $region12: #{segmentation_forward.16} parent=5 // pred_fallthru
      _
    %p149 = scmp.lt.s32.totalorder %s10, 5
    // Predicated region
    $region25: #{segmentation_forward.16} parent=5 // pred_check
      %p150 = pneg %p149
    $region26: #{segmentation_forward.16} parent=5 // pred_check_branch
      %152 = sbr.rel (%p150) target = $region28
    $region27: #{segmentation_forward.16} parent=5 // pred_region
      // Predicated region
      $region29: #{segmentation_forward.16} parent=27 // pred_check
        %p153 = pneg %p30
      $region30: #{segmentation_forward.16} parent=27 // pred_check_branch
        %155 = sbr.rel (%p153) target = $region32
      $region31: #{segmentation_forward.16} parent=27 // pred_region
        %s156 = smul.u32 64, %s10
        %p157 = scmp.lt.s32.totalorder %s156, 319
        %s158 = scalar_select %p157, %s156, 319
        %s159 = smul.addr %s158, 2
        %s160 = smul.addr %s159, 4
        %s161 = scalar_lea.vmem %s0, %s160
        %s162 = smul.u32 64, %s10
      $region32: #{segmentation_forward.16} parent=27 // pred_fallthru
        _
    $region28: #{segmentation_forward.16} parent=5 // pred_fallthru
      _
    %p163 = scmp.le.s32.totalorder 1, %s10
    %p164 = scmp.lt.s32.totalorder %s10, 6
    %p165 = pnand %p163, %p164
    %p166 = pneg %p165
    // Predicated region
    $region33: #{segmentation_forward.16} parent=5 // pred_check
      _
    $region34: #{segmentation_forward.16} parent=5 // pred_check_branch
      %168 = sbr.rel (%p165) target = $region36
    $region35: #{segmentation_forward.16} parent=5 // pred_region
      %s169 = ssub.s32 %s10, 1
      %s170 = smul.u32 64, %s15
      %p171 = scmp.lt.s32.totalorder %s170, 319
      %s172 = scalar_select %p171, %s170, 319
      %s173 = smul.addr %s172, 2
      %s174 = smul.addr %s173, 4
      %s175 = scalar_lea.vmem %s0, %s174
      %p176 = pneg %p36
      %p177 = pneg %p33
      %p178 = pneg %p57
      %p179 = pneg %p54
      %p180 = pneg %p78
      %p181 = pneg %p75
      %p182 = pneg %p99
      %p183 = pneg %p96
      %p184 = pneg %p125
      %p185 = pneg %p122
      %s186 = smul.u32 64, %s15
      %p187 = scmp.lt.s32.totalorder %s186, 319
      %s188 = scalar_select %p187, %s186, 319
      %s189 = smul.addr %s188, 4
      %s190 = scalar_lea.vmem %s4, %s189
      %s191 = smul.u32 64, %s15
      %p192 = scmp.lt.s32.totalorder %s191, 319
      %s193 = scalar_select %p192, %s191, 319
      %s194 = smul.addr %s193, 2
      %s195 = smul.addr %s194, 4
      %s196 = scalar_lea.vmem %s0, %s195
      %s197 = smul.u32 64, %s15
      %s198 = smul.u32 64, %s15
      %p199 = scmp.lt.s32.totalorder %s198, 319
      %s200 = scalar_select %p199, %s198, 319
      %s201 = smul.addr %s200, 4
      %s202 = scalar_lea.vmem %s4, %s201
      %s203 = smul.u32 64, %s15
      %v205 = vld [vmem:[%s196] sm:$0xff]
      %v206 = vld [vmem:[%s196 + $0x8] sm:$0xff]
      %v207 = vld [vmem:[%s196 + $0x10] sm:$0xff]
      %v208 = vld [vmem:[%s196 + $0x18] sm:$0xff]
      %v209 = vld [vmem:[%s196 + $0x20] sm:$0xff]
      %v210 = vld [vmem:[%s196 + $0x28] sm:$0xff]
      %v211 = vld [vmem:[%s196 + $0x30] sm:$0xff]
      %v212 = vld [vmem:[%s196 + $0x38] sm:$0xff]
      %v213 = vld [vmem:[%s196 + $0x40] sm:$0xff]
      %v214 = vld [vmem:[%s196 + $0x48] sm:$0xff]
      %v215 = vld [vmem:[%s196 + $0x50] sm:$0xff]
      %v216 = vld [vmem:[%s196 + $0x58] sm:$0xff]
      %v217 = vld [vmem:[%s196 + $0x60] sm:$0xff]
      %v218 = vld [vmem:[%s196 + $0x68] sm:$0xff]
      %v219 = vld [vmem:[%s196 + $0x70] sm:$0xff]
      %v220 = vld [vmem:[%s196 + $0x78] sm:$0xff]
      %v221 = vld [vmem:[%s196 + $0x80] sm:$0xff]
      %v222 = vld [vmem:[%s196 + $0x88] sm:$0xff]
      %v223 = vld [vmem:[%s196 + $0x90] sm:$0xff]
      %v224 = vld [vmem:[%s196 + $0x98] sm:$0xff]
      %v225 = vld [vmem:[%s196 + $0xa0] sm:$0xff]
      %v226 = vld [vmem:[%s196 + $0xa8] sm:$0xff]
      %v227 = vld [vmem:[%s196 + $0xb0] sm:$0xff]
      %v228 = vld [vmem:[%s196 + $0xb8] sm:$0xff]
      %v229 = vld [vmem:[%s196 + $0xc0] sm:$0xff]
      %v230 = vld [vmem:[%s196 + $0xc8] sm:$0xff]
      %v231 = vld [vmem:[%s196 + $0xd0] sm:$0xff]
      %v232 = vld [vmem:[%s196 + $0xd8] sm:$0xff]
      %v233 = vld [vmem:[%s196 + $0xe0] sm:$0xff]
      %v234 = vld [vmem:[%s196 + $0xe8] sm:$0xff]
      %v235 = vld [vmem:[%s196 + $0xf0] sm:$0xff]
      %v236 = vld [vmem:[%s196 + $0xf8] sm:$0xff]
      %v237 = vld [vmem:[%s196 + $0x100] sm:$0xff]
      %v238 = vld [vmem:[%s196 + $0x108] sm:$0xff]
      %v239 = vld [vmem:[%s196 + $0x110] sm:$0xff]
      %v240 = vld [vmem:[%s196 + $0x118] sm:$0xff]
      %v241 = vld [vmem:[%s196 + $0x120] sm:$0xff]
      %v242 = vld [vmem:[%s196 + $0x128] sm:$0xff]
      %v243 = vld [vmem:[%s196 + $0x130] sm:$0xff]
      %v244 = vld [vmem:[%s196 + $0x138] sm:$0xff]
      %v245 = vld [vmem:[%s196 + $0x140] sm:$0xff]
      %v246 = vld [vmem:[%s196 + $0x148] sm:$0xff]
      %v247 = vld [vmem:[%s196 + $0x150] sm:$0xff]
      %v248 = vld [vmem:[%s196 + $0x158] sm:$0xff]
      %v249 = vld [vmem:[%s196 + $0x160] sm:$0xff]
      %v250 = vld [vmem:[%s196 + $0x168] sm:$0xff]
      %v251 = vld [vmem:[%s196 + $0x170] sm:$0xff]
      %v252 = vld [vmem:[%s196 + $0x178] sm:$0xff]
      %v253 = vld [vmem:[%s196 + $0x180] sm:$0xff]
      %v254 = vld [vmem:[%s196 + $0x188] sm:$0xff]
      %v255 = vld [vmem:[%s196 + $0x190] sm:$0xff]
      %v256 = vld [vmem:[%s196 + $0x198] sm:$0xff]
      %v257 = vld [vmem:[%s196 + $0x1a0] sm:$0xff]
      %v258 = vld [vmem:[%s196 + $0x1a8] sm:$0xff]
      %v259 = vld [vmem:[%s196 + $0x1b0] sm:$0xff]
      %v260 = vld [vmem:[%s196 + $0x1b8] sm:$0xff]
      %v261 = vld [vmem:[%s196 + $0x1c0] sm:$0xff]
      %v262 = vld [vmem:[%s196 + $0x1c8] sm:$0xff]
      %v263 = vld [vmem:[%s196 + $0x1d0] sm:$0xff]
      %v264 = vld [vmem:[%s196 + $0x1d8] sm:$0xff]
      %v265 = vld [vmem:[%s196 + $0x1e0] sm:$0xff]
      %v266 = vld [vmem:[%s196 + $0x1e8] sm:$0xff]
      %v267 = vld [vmem:[%s196 + $0x1f0] sm:$0xff]
      %v268 = vld [vmem:[%s196 + $0x1f8] sm:$0xff]
      %v269 = vld [vmem:[%s1] sm:$0xf]
      %v270 = vld [vmem:[%s1 + $0x4] sm:$0xf]
      %v271 = vld [vmem:[%s1 + $0x8] sm:$0xf]
      %v272 = vld [vmem:[%s1 + $0xc] sm:$0xf]
      %v273 = vld [vmem:[%s1 + $0x10] sm:$0xf]
      %v274 = vld [vmem:[%s1 + $0x14] sm:$0xf]
      %v275 = vld [vmem:[%s1 + $0x18] sm:$0xf]
      %v276 = vld [vmem:[%s1 + $0x1c] sm:$0xf]
      %v277 = vld [vmem:[%s1 + $0x20] sm:$0xf]
      %v278 = vld [vmem:[%s1 + $0x24] sm:$0xf]
      %v279 = vld [vmem:[%s1 + $0x28] sm:$0xf]
      %v280 = vld [vmem:[%s1 + $0x2c] sm:$0xf]
      %v281 = vld [vmem:[%s1 + $0x30] sm:$0xf]
      %v282 = vld [vmem:[%s1 + $0x34] sm:$0xf]
      %v283 = vld [vmem:[%s1 + $0x38] sm:$0xf]
      %v284 = vld [vmem:[%s1 + $0x3c] sm:$0xf]
      %v285 = vld [vmem:[%s1 + $0x40] sm:$0xf]
      %v286 = vld [vmem:[%s1 + $0x44] sm:$0xf]
      %v287 = vld [vmem:[%s1 + $0x48] sm:$0xf]
      %v288 = vld [vmem:[%s1 + $0x4c] sm:$0xf]
      %v289 = vld [vmem:[%s1 + $0x50] sm:$0xf]
      %v290 = vld [vmem:[%s1 + $0x54] sm:$0xf]
      %v291 = vld [vmem:[%s1 + $0x58] sm:$0xf]
      %v292 = vld [vmem:[%s1 + $0x5c] sm:$0xf]
      %v293 = vld [vmem:[%s1 + $0x60] sm:$0xf]
      %v294 = vld [vmem:[%s1 + $0x64] sm:$0xf]
      %v295 = vld [vmem:[%s1 + $0x68] sm:$0xf]
      %v296 = vld [vmem:[%s1 + $0x6c] sm:$0xf]
      %v297 = vld [vmem:[%s1 + $0x70] sm:$0xf]
      %v298 = vld [vmem:[%s1 + $0x74] sm:$0xf]
      %v299 = vld [vmem:[%s1 + $0x78] sm:$0xf]
      %v300 = vld [vmem:[%s1 + $0x7c] sm:$0xf]
      %v365 = vunpack.c.l.b16 %v205
      %v366 = vunpack.c.h.b16 %v205
      %v367 = vunpack.c.l.b16 %v206
      %v368 = vunpack.c.h.b16 %v206
      %v369 = vunpack.c.l.b16 %v207
      %v370 = vunpack.c.h.b16 %v207
      %v371 = vunpack.c.l.b16 %v208
      %v372 = vunpack.c.h.b16 %v208
      %v373 = vunpack.c.l.b16 %v209
      %v374 = vunpack.c.h.b16 %v209
      %v375 = vunpack.c.l.b16 %v210
      %v376 = vunpack.c.h.b16 %v210
      %v377 = vunpack.c.l.b16 %v211
      %v378 = vunpack.c.h.b16 %v211
      %v379 = vunpack.c.l.b16 %v212
      %v380 = vunpack.c.h.b16 %v212
      %v381 = vunpack.c.l.b16 %v213
      %v382 = vunpack.c.h.b16 %v213
      %v383 = vunpack.c.l.b16 %v214
      %v384 = vunpack.c.h.b16 %v214
      %v385 = vunpack.c.l.b16 %v215
      %v386 = vunpack.c.h.b16 %v215
      %v387 = vunpack.c.l.b16 %v216
      %v388 = vunpack.c.h.b16 %v216
      %v389 = vunpack.c.l.b16 %v217
      %v390 = vunpack.c.h.b16 %v217
      %v391 = vunpack.c.l.b16 %v218
      %v392 = vunpack.c.h.b16 %v218
      %v393 = vunpack.c.l.b16 %v219
      %v394 = vunpack.c.h.b16 %v219
      %v395 = vunpack.c.l.b16 %v220
      %v396 = vunpack.c.h.b16 %v220
      %v397 = vunpack.c.l.b16 %v221
      %v398 = vunpack.c.h.b16 %v221
      %v399 = vunpack.c.l.b16 %v222
      %v400 = vunpack.c.h.b16 %v222
      %v401 = vunpack.c.l.b16 %v223
      %v402 = vunpack.c.h.b16 %v223
      %v403 = vunpack.c.l.b16 %v224
      %v404 = vunpack.c.h.b16 %v224
      %v405 = vunpack.c.l.b16 %v225
      %v406 = vunpack.c.h.b16 %v225
      %v407 = vunpack.c.l.b16 %v226
      %v408 = vunpack.c.h.b16 %v226
      %v409 = vunpack.c.l.b16 %v227
      %v410 = vunpack.c.h.b16 %v227
      %v411 = vunpack.c.l.b16 %v228
      %v412 = vunpack.c.h.b16 %v228
      %v413 = vunpack.c.l.b16 %v229
      %v414 = vunpack.c.h.b16 %v229
      %v415 = vunpack.c.l.b16 %v230
      %v416 = vunpack.c.h.b16 %v230
      %v417 = vunpack.c.l.b16 %v231
      %v418 = vunpack.c.h.b16 %v231
      %v419 = vunpack.c.l.b16 %v232
      %v420 = vunpack.c.h.b16 %v232
      %v421 = vunpack.c.l.b16 %v233
      %v422 = vunpack.c.h.b16 %v233
      %v423 = vunpack.c.l.b16 %v234
      %v424 = vunpack.c.h.b16 %v234
      %v425 = vunpack.c.l.b16 %v235
      %v426 = vunpack.c.h.b16 %v235
      %v427 = vunpack.c.l.b16 %v236
      %v428 = vunpack.c.h.b16 %v236
      %v429 = vunpack.c.l.b16 %v237
      %v430 = vunpack.c.h.b16 %v237
      %v431 = vunpack.c.l.b16 %v238
      %v432 = vunpack.c.h.b16 %v238
      %v433 = vunpack.c.l.b16 %v239
      %v434 = vunpack.c.h.b16 %v239
      %v435 = vunpack.c.l.b16 %v240
      %v436 = vunpack.c.h.b16 %v240
      %v437 = vunpack.c.l.b16 %v241
      %v438 = vunpack.c.h.b16 %v241
      %v439 = vunpack.c.l.b16 %v242
      %v440 = vunpack.c.h.b16 %v242
      %v441 = vunpack.c.l.b16 %v243
      %v442 = vunpack.c.h.b16 %v243
      %v443 = vunpack.c.l.b16 %v244
      %v444 = vunpack.c.h.b16 %v244
      %v445 = vunpack.c.l.b16 %v245
      %v446 = vunpack.c.h.b16 %v245
      %v447 = vunpack.c.l.b16 %v246
      %v448 = vunpack.c.h.b16 %v246
      %v449 = vunpack.c.l.b16 %v247
      %v450 = vunpack.c.h.b16 %v247
      %v451 = vunpack.c.l.b16 %v248
      %v452 = vunpack.c.h.b16 %v248
      %v453 = vunpack.c.l.b16 %v249
      %v454 = vunpack.c.h.b16 %v249
      %v455 = vunpack.c.l.b16 %v250
      %v456 = vunpack.c.h.b16 %v250
      %v457 = vunpack.c.l.b16 %v251
      %v458 = vunpack.c.h.b16 %v251
      %v459 = vunpack.c.l.b16 %v252
      %v460 = vunpack.c.h.b16 %v252
      %v461 = vunpack.c.l.b16 %v253
      %v462 = vunpack.c.h.b16 %v253
      %v463 = vunpack.c.l.b16 %v254
      %v464 = vunpack.c.h.b16 %v254
      %v465 = vunpack.c.l.b16 %v255
      %v466 = vunpack.c.h.b16 %v255
      %v467 = vunpack.c.l.b16 %v256
      %v468 = vunpack.c.h.b16 %v256
      %v469 = vunpack.c.l.b16 %v257
      %v470 = vunpack.c.h.b16 %v257
      %v471 = vunpack.c.l.b16 %v258
      %v472 = vunpack.c.h.b16 %v258
      %v473 = vunpack.c.l.b16 %v259
      %v474 = vunpack.c.h.b16 %v259
      %v475 = vunpack.c.l.b16 %v260
      %v476 = vunpack.c.h.b16 %v260
      %v477 = vunpack.c.l.b16 %v261
      %v478 = vunpack.c.h.b16 %v261
      %v479 = vunpack.c.l.b16 %v262
      %v480 = vunpack.c.h.b16 %v262
      %v481 = vunpack.c.l.b16 %v263
      %v482 = vunpack.c.h.b16 %v263
      %v483 = vunpack.c.l.b16 %v264
      %v484 = vunpack.c.h.b16 %v264
      %v485 = vunpack.c.l.b16 %v265
      %v486 = vunpack.c.h.b16 %v265
      %v487 = vunpack.c.l.b16 %v266
      %v488 = vunpack.c.h.b16 %v266
      %v489 = vunpack.c.l.b16 %v267
      %v490 = vunpack.c.h.b16 %v267
      %v491 = vunpack.c.l.b16 %v268
      %v492 = vunpack.c.h.b16 %v268
      %v493 = vpack.c.b16 %v367, %v365
      %v494 = vpack.c.b16 %v368, %v366
      %v495 = vpack.c.b16 %v371, %v369
      %v496 = vpack.c.b16 %v372, %v370
      %v497 = vpack.c.b16 %v375, %v373
      %v498 = vpack.c.b16 %v376, %v374
      %v499 = vpack.c.b16 %v379, %v377
      %v500 = vpack.c.b16 %v380, %v378
      %v501 = vpack.c.b16 %v383, %v381
      %v502 = vpack.c.b16 %v384, %v382
      %v503 = vpack.c.b16 %v387, %v385
      %v504 = vpack.c.b16 %v388, %v386
      %v505 = vpack.c.b16 %v391, %v389
      %v506 = vpack.c.b16 %v392, %v390
      %v507 = vpack.c.b16 %v395, %v393
      %v508 = vpack.c.b16 %v396, %v394
      %v509 = vpack.c.b16 %v399, %v397
      %v510 = vpack.c.b16 %v400, %v398
      %v511 = vpack.c.b16 %v403, %v401
      %v512 = vpack.c.b16 %v404, %v402
      %v513 = vpack.c.b16 %v407, %v405
      %v514 = vpack.c.b16 %v408, %v406
      %v515 = vpack.c.b16 %v411, %v409
      %v516 = vpack.c.b16 %v412, %v410
      %v517 = vpack.c.b16 %v415, %v413
      %v518 = vpack.c.b16 %v416, %v414
      %v519 = vpack.c.b16 %v419, %v417
      %v520 = vpack.c.b16 %v420, %v418
      %v521 = vpack.c.b16 %v423, %v421
      %v522 = vpack.c.b16 %v424, %v422
      %v523 = vpack.c.b16 %v427, %v425
      %v524 = vpack.c.b16 %v428, %v426
      %v525 = vpack.c.b16 %v431, %v429
      %v526 = vpack.c.b16 %v432, %v430
      %v527 = vpack.c.b16 %v435, %v433
      %v528 = vpack.c.b16 %v436, %v434
      %v529 = vpack.c.b16 %v439, %v437
      %v530 = vpack.c.b16 %v440, %v438
      %v531 = vpack.c.b16 %v443, %v441
      %v532 = vpack.c.b16 %v444, %v442
      %v533 = vpack.c.b16 %v447, %v445
      %v534 = vpack.c.b16 %v448, %v446
      %v535 = vpack.c.b16 %v451, %v449
      %v536 = vpack.c.b16 %v452, %v450
      %v537 = vpack.c.b16 %v455, %v453
      %v538 = vpack.c.b16 %v456, %v454
      %v539 = vpack.c.b16 %v459, %v457
      %v540 = vpack.c.b16 %v460, %v458
      %v541 = vpack.c.b16 %v463, %v461
      %v542 = vpack.c.b16 %v464, %v462
      %v543 = vpack.c.b16 %v467, %v465
      %v544 = vpack.c.b16 %v468, %v466
      %v545 = vpack.c.b16 %v471, %v469
      %v546 = vpack.c.b16 %v472, %v470
      %v547 = vpack.c.b16 %v475, %v473
      %v548 = vpack.c.b16 %v476, %v474
      %v549 = vpack.c.b16 %v479, %v477
      %v550 = vpack.c.b16 %v480, %v478
      %v551 = vpack.c.b16 %v483, %v481
      %v552 = vpack.c.b16 %v484, %v482
      %v553 = vpack.c.b16 %v487, %v485
      %v554 = vpack.c.b16 %v488, %v486
      %v555 = vpack.c.b16 %v491, %v489
      %v556 = vpack.c.b16 %v492, %v490
      %v653 = vunpack.c.l.b16 %v269
      %v654 = vunpack.c.l.b16 %v270
      %v655 = vunpack.c.l.b16 %v271
      %v656 = vunpack.c.l.b16 %v272
      %v657 = vunpack.c.l.b16 %v273
      %v658 = vunpack.c.l.b16 %v274
      %v659 = vunpack.c.l.b16 %v275
      %v660 = vunpack.c.l.b16 %v276
      %v661 = vunpack.c.l.b16 %v277
      %v662 = vunpack.c.l.b16 %v278
      %v663 = vunpack.c.l.b16 %v279
      %v664 = vunpack.c.l.b16 %v280
      %v665 = vunpack.c.l.b16 %v281
      %v666 = vunpack.c.l.b16 %v282
      %v667 = vunpack.c.l.b16 %v283
      %v668 = vunpack.c.l.b16 %v284
      %v669 = vunpack.c.l.b16 %v285
      %v670 = vunpack.c.l.b16 %v286
      %v671 = vunpack.c.l.b16 %v287
      %v672 = vunpack.c.l.b16 %v288
      %v673 = vunpack.c.l.b16 %v289
      %v674 = vunpack.c.l.b16 %v290
      %v675 = vunpack.c.l.b16 %v291
      %v676 = vunpack.c.l.b16 %v292
      %v677 = vunpack.c.l.b16 %v293
      %v678 = vunpack.c.l.b16 %v294
      %v679 = vunpack.c.l.b16 %v295
      %v680 = vunpack.c.l.b16 %v296
      %v681 = vunpack.c.l.b16 %v297
      %v682 = vunpack.c.l.b16 %v298
      %v683 = vunpack.c.l.b16 %v299
      %v684 = vunpack.c.l.b16 %v300
      %v685 = vpack.c.b16 %v654, %v653
      %v686 = vpack.c.b16 %v656, %v655
      %v687 = vpack.c.b16 %v658, %v657
      %v688 = vpack.c.b16 %v660, %v659
      %v689 = vpack.c.b16 %v662, %v661
      %v690 = vpack.c.b16 %v664, %v663
      %v691 = vpack.c.b16 %v666, %v665
      %v692 = vpack.c.b16 %v668, %v667
      %v693 = vpack.c.b16 %v670, %v669
      %v694 = vpack.c.b16 %v672, %v671
      %v695 = vpack.c.b16 %v674, %v673
      %v696 = vpack.c.b16 %v676, %v675
      %v697 = vpack.c.b16 %v678, %v677
      %v698 = vpack.c.b16 %v680, %v679
      %v699 = vpack.c.b16 %v682, %v681
      %v700 = vpack.c.b16 %v684, %v683
      %717 = vmatprep.subr.bf16.mxu0 0
      %718 = vmatpush1.bf16.msra.mxu0 %v685
      %719 = vmatprep.subr.bf16.mxu0 0
      %720 = vmatpush1.bf16.msra.mxu0 %v686
      %721 = vmatprep.subr.bf16.mxu0 0
      %722 = vmatpush1.bf16.msra.mxu0 %v687
      %723 = vmatprep.subr.bf16.mxu0 0
      %724 = vmatpush1.bf16.msra.mxu0 %v688
      %725 = vmatprep.subr.bf16.mxu0 0
      %726 = vmatpush1.bf16.msra.mxu0 %v689
      %727 = vmatprep.subr.bf16.mxu0 0
      %728 = vmatpush1.bf16.msra.mxu0 %v690
      %729 = vmatprep.subr.bf16.mxu0 0
      %730 = vmatpush1.bf16.msra.mxu0 %v691
      %731 = vmatprep.subr.bf16.mxu0 0
      %732 = vmatpush1.bf16.msra.mxu0 %v692
      %733 = vmatprep.subr.bf16.mxu0 0
      %734 = vmatpush1.bf16.msra.mxu0 %v693
      %735 = vmatprep.subr.bf16.mxu0 0
      %736 = vmatpush1.bf16.msra.mxu0 %v694
      %737 = vmatprep.subr.bf16.mxu0 0
      %738 = vmatpush1.bf16.msra.mxu0 %v695
      %739 = vmatprep.subr.bf16.mxu0 0
      %740 = vmatpush1.bf16.msra.mxu0 %v696
      %741 = vmatprep.subr.bf16.mxu0 0
      %742 = vmatpush1.bf16.msra.mxu0 %v697
      %743 = vmatprep.subr.bf16.mxu0 0
      %744 = vmatpush1.bf16.msra.mxu0 %v698
      %745 = vmatprep.subr.bf16.mxu0 0
      %746 = vmatpush1.bf16.msra.mxu0 %v699
      %747 = vmatprep.subr.bf16.mxu0 0
      %748 = vmatpush1.bf16.msra.mxu0 %v700
      %749 = vmatprep.mubr.bf16.mxu0 %v494
      %750 = vmatmul.mubr.bf16.gmra.mrb[0].mxu0 %v493
      %v751 = vpop.f32.mrb[0].mxu0
      %v752 = vadd.f32 0.0, %v751
      %v753 = vpop.f32.mrb[0].mxu0
      %v754 = vpop.f32.mrb[0].mxu0
      %v755 = vadd.f32 0.0, %v754
      %v756 = vpop.f32.mrb[0].mxu0
      %757 = vmatprep.mubr.bf16.mxu0 %v496
      %758 = vmatmul.mubr.bf16.gmra.mrb[0].mxu0 %v495
      %v759 = vpop.f32.mrb[0].mxu0
      %v760 = vadd.f32 0.0, %v759
      %v761 = vpop.f32.mrb[0].mxu0
      %v762 = vpop.f32.mrb[0].mxu0
      %v763 = vadd.f32 0.0, %v762
      %v764 = vpop.f32.mrb[0].mxu0
      %765 = vmatprep.mubr.bf16.mxu0 %v498
      %766 = vmatmul.mubr.bf16.gmra.mrb[0].mxu0 %v497
      %v767 = vpop.f32.mrb[0].mxu0
      %v768 = vadd.f32 0.0, %v767
      %v769 = vpop.f32.mrb[0].mxu0
      %v770 = vpop.f32.mrb[0].mxu0
      %v771 = vadd.f32 0.0, %v770
      %v772 = vpop.f32.mrb[0].mxu0
      %773 = vmatprep.mubr.bf16.mxu0 %v500
      %774 = vmatmul.mubr.bf16.gmra.mrb[0].mxu0 %v499
      %v775 = vpop.f32.mrb[0].mxu0
      %v776 = vadd.f32 0.0, %v775
      %v777 = vpop.f32.mrb[0].mxu0
      %v778 = vpop.f32.mrb[0].mxu0
      %v779 = vadd.f32 0.0, %v778
      %v780 = vpop.f32.mrb[0].mxu0
      %781 = vmatprep.mubr.bf16.mxu0 %v502
      %782 = vmatmul.mubr.bf16.gmra.mrb[0].mxu0 %v501
      %v783 = vpop.f32.mrb[0].mxu0
      %v784 = vadd.f32 0.0, %v783
      %v785 = vpop.f32.mrb[0].mxu0
      %v786 = vpop.f32.mrb[0].mxu0
      %v787 = vadd.f32 0.0, %v786
      %v788 = vpop.f32.mrb[0].mxu0
      %789 = vmatprep.mubr.bf16.mxu0 %v504
      %790 = vmatmul.mubr.bf16.gmra.mrb[0].mxu0 %v503
      %v791 = vpop.f32.mrb[0].mxu0
      %v792 = vadd.f32 0.0, %v791
      %v793 = vpop.f32.mrb[0].mxu0
      %v794 = vpop.f32.mrb[0].mxu0
      %v795 = vadd.f32 0.0, %v794
      %v796 = vpop.f32.mrb[0].mxu0
      %797 = vmatprep.mubr.bf16.mxu0 %v506
      %798 = vmatmul.mubr.bf16.gmra.mrb[0].mxu0 %v505
      %v799 = vpop.f32.mrb[0].mxu0
      %v800 = vadd.f32 0.0, %v799
      %v801 = vpop.f32.mrb[0].mxu0
      %v802 = vpop.f32.mrb[0].mxu0
      %v803 = vadd.f32 0.0, %v802
      %v804 = vpop.f32.mrb[0].mxu0
      %805 = vmatprep.mubr.bf16.mxu0 %v508
      %806 = vmatmul.mubr.bf16.gmra.mrb[0].mxu0 %v507
      %v807 = vpop.f32.mrb[0].mxu0
      %v808 = vadd.f32 0.0, %v807
      %v809 = vpop.f32.mrb[0].mxu0
      %v810 = vpop.f32.mrb[0].mxu0
      %v811 = vadd.f32 0.0, %v810
      %v812 = vpop.f32.mrb[0].mxu0
      %813 = vmatprep.mubr.bf16.mxu0 %v510
      %814 = vmatmul.mubr.bf16.gmra.mrb[0].mxu0 %v509
      %v815 = vpop.f32.mrb[0].mxu0
      %v816 = vadd.f32 0.0, %v815
      %v817 = vpop.f32.mrb[0].mxu0
      %v818 = vpop.f32.mrb[0].mxu0
      %v819 = vadd.f32 0.0, %v818
      %v820 = vpop.f32.mrb[0].mxu0
      %821 = vmatprep.mubr.bf16.mxu0 %v512
      %822 = vmatmul.mubr.bf16.gmra.mrb[0].mxu0 %v511
      %v823 = vpop.f32.mrb[0].mxu0
      %v824 = vadd.f32 0.0, %v823
      %v825 = vpop.f32.mrb[0].mxu0
      %v826 = vpop.f32.mrb[0].mxu0
      %v827 = vadd.f32 0.0, %v826
      %v828 = vpop.f32.mrb[0].mxu0
      %829 = vmatprep.mubr.bf16.mxu0 %v514
      %830 = vmatmul.mubr.bf16.gmra.mrb[0].mxu0 %v513
      %v831 = vpop.f32.mrb[0].mxu0
      %v832 = vadd.f32 0.0, %v831
      %v833 = vpop.f32.mrb[0].mxu0
      %v834 = vpop.f32.mrb[0].mxu0
      %v835 = vadd.f32 0.0, %v834
      %v836 = vpop.f32.mrb[0].mxu0
      %837 = vmatprep.mubr.bf16.mxu0 %v516
      %838 = vmatmul.mubr.bf16.gmra.mrb[0].mxu0 %v515
      %v839 = vpop.f32.mrb[0].mxu0
      %v840 = vadd.f32 0.0, %v839
      %v841 = vpop.f32.mrb[0].mxu0
      %v842 = vpop.f32.mrb[0].mxu0
      %v843 = vadd.f32 0.0, %v842
      %v844 = vpop.f32.mrb[0].mxu0
      %845 = vmatprep.mubr.bf16.mxu0 %v518
      %846 = vmatmul.mubr.bf16.gmra.mrb[0].mxu0 %v517
      %v847 = vpop.f32.mrb[0].mxu0
      %v848 = vadd.f32 0.0, %v847
      %v849 = vpop.f32.mrb[0].mxu0
      %v850 = vpop.f32.mrb[0].mxu0
      %v851 = vadd.f32 0.0, %v850
      %v852 = vpop.f32.mrb[0].mxu0
      %853 = vmatprep.mubr.bf16.mxu0 %v520
      %854 = vmatmul.mubr.bf16.gmra.mrb[0].mxu0 %v519
      %v855 = vpop.f32.mrb[0].mxu0
      %v856 = vadd.f32 0.0, %v855
      %v857 = vpop.f32.mrb[0].mxu0
      %v858 = vpop.f32.mrb[0].mxu0
      %v859 = vadd.f32 0.0, %v858
      %v860 = vpop.f32.mrb[0].mxu0
      %861 = vmatprep.mubr.bf16.mxu0 %v522
      %862 = vmatmul.mubr.bf16.gmra.mrb[0].mxu0 %v521
      %v863 = vpop.f32.mrb[0].mxu0
      %v864 = vadd.f32 0.0, %v863
      %v865 = vpop.f32.mrb[0].mxu0
      %v866 = vpop.f32.mrb[0].mxu0
      %v867 = vadd.f32 0.0, %v866
      %v868 = vpop.f32.mrb[0].mxu0
      %869 = vmatprep.mubr.bf16.mxu0 %v524
      %870 = vmatmul.mubr.bf16.gmra.mrb[0].mxu0 %v523
      %v871 = vpop.f32.mrb[0].mxu0
      %v872 = vadd.f32 0.0, %v871
      %v873 = vpop.f32.mrb[0].mxu0
      %v874 = vpop.f32.mrb[0].mxu0
      %v875 = vadd.f32 0.0, %v874
      %v876 = vpop.f32.mrb[0].mxu0
      %877 = vmatprep.mubr.bf16.mxu0 %v526
      %878 = vmatmul.mubr.bf16.gmra.mrb[0].mxu0 %v525
      %v879 = vpop.f32.mrb[0].mxu0
      %v880 = vadd.f32 0.0, %v879
      %v881 = vpop.f32.mrb[0].mxu0
      %v882 = vpop.f32.mrb[0].mxu0
      %v883 = vadd.f32 0.0, %v882
      %v884 = vpop.f32.mrb[0].mxu0
      %885 = vmatprep.mubr.bf16.mxu0 %v528
      %886 = vmatmul.mubr.bf16.gmra.mrb[0].mxu0 %v527
      %v887 = vpop.f32.mrb[0].mxu0
      %v888 = vadd.f32 0.0, %v887
      %v889 = vpop.f32.mrb[0].mxu0
      %v890 = vpop.f32.mrb[0].mxu0
      %v891 = vadd.f32 0.0, %v890
      %v892 = vpop.f32.mrb[0].mxu0
      %893 = vmatprep.mubr.bf16.mxu0 %v530
      %894 = vmatmul.mubr.bf16.gmra.mrb[0].mxu0 %v529
      %v895 = vpop.f32.mrb[0].mxu0
      %v896 = vadd.f32 0.0, %v895
      %v897 = vpop.f32.mrb[0].mxu0
      %v898 = vpop.f32.mrb[0].mxu0
      %v899 = vadd.f32 0.0, %v898
      %v900 = vpop.f32.mrb[0].mxu0
      %901 = vmatprep.mubr.bf16.mxu0 %v532
      %902 = vmatmul.mubr.bf16.gmra.mrb[0].mxu0 %v531
      %v903 = vpop.f32.mrb[0].mxu0
      %v904 = vadd.f32 0.0, %v903
      %v905 = vpop.f32.mrb[0].mxu0
      %v906 = vpop.f32.mrb[0].mxu0
      %v907 = vadd.f32 0.0, %v906
      %v908 = vpop.f32.mrb[0].mxu0
      %909 = vmatprep.mubr.bf16.mxu0 %v534
      %910 = vmatmul.mubr.bf16.gmra.mrb[0].mxu0 %v533
      %v911 = vpop.f32.mrb[0].mxu0
      %v912 = vadd.f32 0.0, %v911
      %v913 = vpop.f32.mrb[0].mxu0
      %v914 = vpop.f32.mrb[0].mxu0
      %v915 = vadd.f32 0.0, %v914
      %v916 = vpop.f32.mrb[0].mxu0
      %917 = vmatprep.mubr.bf16.mxu0 %v536
      %918 = vmatmul.mubr.bf16.gmra.mrb[0].mxu0 %v535
      %v919 = vpop.f32.mrb[0].mxu0
      %v920 = vadd.f32 0.0, %v919
      %v921 = vpop.f32.mrb[0].mxu0
      %v922 = vpop.f32.mrb[0].mxu0
      %v923 = vadd.f32 0.0, %v922
      %v924 = vpop.f32.mrb[0].mxu0
      %925 = vmatprep.mubr.bf16.mxu0 %v538
      %926 = vmatmul.mubr.bf16.gmra.mrb[0].mxu0 %v537
      %v927 = vpop.f32.mrb[0].mxu0
      %v928 = vadd.f32 0.0, %v927
      %v929 = vpop.f32.mrb[0].mxu0
      %v930 = vpop.f32.mrb[0].mxu0
      %v931 = vadd.f32 0.0, %v930
      %v932 = vpop.f32.mrb[0].mxu0
      %933 = vmatprep.mubr.bf16.mxu0 %v540
      %934 = vmatmul.mubr.bf16.gmra.mrb[0].mxu0 %v539
      %v935 = vpop.f32.mrb[0].mxu0
      %v936 = vadd.f32 0.0, %v935
      %v937 = vpop.f32.mrb[0].mxu0
      %v938 = vpop.f32.mrb[0].mxu0
      %v939 = vadd.f32 0.0, %v938
      %v940 = vpop.f32.mrb[0].mxu0
      %941 = vmatprep.mubr.bf16.mxu0 %v542
      %942 = vmatmul.mubr.bf16.gmra.mrb[0].mxu0 %v541
      %v943 = vpop.f32.mrb[0].mxu0
      %v944 = vadd.f32 0.0, %v943
      %v945 = vpop.f32.mrb[0].mxu0
      %v946 = vpop.f32.mrb[0].mxu0
      %v947 = vadd.f32 0.0, %v946
      %v948 = vpop.f32.mrb[0].mxu0
      %949 = vmatprep.mubr.bf16.mxu0 %v544
      %950 = vmatmul.mubr.bf16.gmra.mrb[0].mxu0 %v543
      %v951 = vpop.f32.mrb[0].mxu0
      %v952 = vadd.f32 0.0, %v951
      %v953 = vpop.f32.mrb[0].mxu0
      %v954 = vpop.f32.mrb[0].mxu0
      %v955 = vadd.f32 0.0, %v954
      %v956 = vpop.f32.mrb[0].mxu0
      %957 = vmatprep.mubr.bf16.mxu0 %v546
      %958 = vmatmul.mubr.bf16.gmra.mrb[0].mxu0 %v545
      %v959 = vpop.f32.mrb[0].mxu0
      %v960 = vadd.f32 0.0, %v959
      %v961 = vpop.f32.mrb[0].mxu0
      %v962 = vpop.f32.mrb[0].mxu0
      %v963 = vadd.f32 0.0, %v962
      %v964 = vpop.f32.mrb[0].mxu0
      %965 = vmatprep.mubr.bf16.mxu0 %v548
      %966 = vmatmul.mubr.bf16.gmra.mrb[0].mxu0 %v547
      %v967 = vpop.f32.mrb[0].mxu0
      %v968 = vadd.f32 0.0, %v967
      %v969 = vpop.f32.mrb[0].mxu0
      %v970 = vpop.f32.mrb[0].mxu0
      %v971 = vadd.f32 0.0, %v970
      %v972 = vpop.f32.mrb[0].mxu0
      %973 = vmatprep.mubr.bf16.mxu0 %v550
      %974 = vmatmul.mubr.bf16.gmra.mrb[0].mxu0 %v549
      %v975 = vpop.f32.mrb[0].mxu0
      %v976 = vadd.f32 0.0, %v975
      %v977 = vpop.f32.mrb[0].mxu0
      %v978 = vpop.f32.mrb[0].mxu0
      %v979 = vadd.f32 0.0, %v978
      %v980 = vpop.f32.mrb[0].mxu0
      %981 = vmatprep.mubr.bf16.mxu0 %v552
      %982 = vmatmul.mubr.bf16.gmra.mrb[0].mxu0 %v551
      %v983 = vpop.f32.mrb[0].mxu0
      %v984 = vadd.f32 0.0, %v983
      %v985 = vpop.f32.mrb[0].mxu0
      %v986 = vpop.f32.mrb[0].mxu0
      %v987 = vadd.f32 0.0, %v986
      %v988 = vpop.f32.mrb[0].mxu0
      %989 = vmatprep.mubr.bf16.mxu0 %v554
      %990 = vmatmul.mubr.bf16.gmra.mrb[0].mxu0 %v553
      %v991 = vpop.f32.mrb[0].mxu0
      %v992 = vadd.f32 0.0, %v991
      %v993 = vpop.f32.mrb[0].mxu0
      %v994 = vpop.f32.mrb[0].mxu0
      %v995 = vadd.f32 0.0, %v994
      %v996 = vpop.f32.mrb[0].mxu0
      %997 = vmatprep.mubr.bf16.mxu0 %v556
      %998 = vmatmul.mubr.bf16.gmra.mrb[0].mxu0 %v555
      %v999 = vpop.f32.mrb[0].mxu0
      %v1000 = vadd.f32 0.0, %v999
      %v1001 = vpop.f32.mrb[0].mxu0
      %v1002 = vpop.f32.mrb[0].mxu0
      %v1003 = vadd.f32 0.0, %v1002
      %v1004 = vpop.f32.mrb[0].mxu0
      %1005 = vdwg.mxu0
      %v1006 = vld [vmem:[%s2] sm:$0x1]
      %v1008 = vlaneseq
      %v1009 = vshrl.u32 %v1008, 7
      %v1010 = vsub.s32 0, %v1009
      %v1011 = vrot.slane %v1006, %v1010
      %v1013 = vmul.f32 %v752, %v1011
      %v1014 = vmul.f32 %v755, %v1011
      %v1015 = vmul.f32 %v760, %v1011
      %v1016 = vmul.f32 %v763, %v1011
      %v1017 = vmul.f32 %v768, %v1011
      %v1018 = vmul.f32 %v771, %v1011
      %v1019 = vmul.f32 %v776, %v1011
      %v1020 = vmul.f32 %v779, %v1011
      %v1021 = vmul.f32 %v784, %v1011
      %v1022 = vmul.f32 %v787, %v1011
      %v1023 = vmul.f32 %v792, %v1011
      %v1024 = vmul.f32 %v795, %v1011
      %v1025 = vmul.f32 %v800, %v1011
      %v1026 = vmul.f32 %v803, %v1011
      %v1027 = vmul.f32 %v808, %v1011
      %v1028 = vmul.f32 %v811, %v1011
      %v1029 = vmul.f32 %v816, %v1011
      %v1030 = vmul.f32 %v819, %v1011
      %v1031 = vmul.f32 %v824, %v1011
      %v1032 = vmul.f32 %v827, %v1011
      %v1033 = vmul.f32 %v832, %v1011
      %v1034 = vmul.f32 %v835, %v1011
      %v1035 = vmul.f32 %v840, %v1011
      %v1036 = vmul.f32 %v843, %v1011
      %v1037 = vmul.f32 %v848, %v1011
      %v1038 = vmul.f32 %v851, %v1011
      %v1039 = vmul.f32 %v856, %v1011
      %v1040 = vmul.f32 %v859, %v1011
      %v1041 = vmul.f32 %v864, %v1011
      %v1042 = vmul.f32 %v867, %v1011
      %v1043 = vmul.f32 %v872, %v1011
      %v1044 = vmul.f32 %v875, %v1011
      %v1045 = vmul.f32 %v880, %v1011
      %v1046 = vmul.f32 %v883, %v1011
      %v1047 = vmul.f32 %v888, %v1011
      %v1048 = vmul.f32 %v891, %v1011
      %v1049 = vmul.f32 %v896, %v1011
      %v1050 = vmul.f32 %v899, %v1011
      %v1051 = vmul.f32 %v904, %v1011
      %v1052 = vmul.f32 %v907, %v1011
      %v1053 = vmul.f32 %v912, %v1011
      %v1054 = vmul.f32 %v915, %v1011
      %v1055 = vmul.f32 %v920, %v1011
      %v1056 = vmul.f32 %v923, %v1011
      %v1057 = vmul.f32 %v928, %v1011
      %v1058 = vmul.f32 %v931, %v1011
      %v1059 = vmul.f32 %v936, %v1011
      %v1060 = vmul.f32 %v939, %v1011
      %v1061 = vmul.f32 %v944, %v1011
      %v1062 = vmul.f32 %v947, %v1011
      %v1063 = vmul.f32 %v952, %v1011
      %v1064 = vmul.f32 %v955, %v1011
      %v1065 = vmul.f32 %v960, %v1011
      %v1066 = vmul.f32 %v963, %v1011
      %v1067 = vmul.f32 %v968, %v1011
      %v1068 = vmul.f32 %v971, %v1011
      %v1069 = vmul.f32 %v976, %v1011
      %v1070 = vmul.f32 %v979, %v1011
      %v1071 = vmul.f32 %v984, %v1011
      %v1072 = vmul.f32 %v987, %v1011
      %v1073 = vmul.f32 %v992, %v1011
      %v1074 = vmul.f32 %v995, %v1011
      %v1075 = vmul.f32 %v1000, %v1011
      %v1076 = vmul.f32 %v1003, %v1011
      %v1077 = vld [vmem:[%s3] sm:$0x1]
      %v1079 = vlaneseq
      %v1080 = vshrl.u32 %v1079, 7
      %v1081 = vsub.s32 0, %v1080
      %v1082 = vrot.slane %v1077, %v1081
      %v1084 = vadd.f32 %v1013, %v1082
      %v1085 = vadd.f32 %v1014, %v1082
      %v1086 = vadd.f32 %v1015, %v1082
      %v1087 = vadd.f32 %v1016, %v1082
      %v1088 = vadd.f32 %v1017, %v1082
      %v1089 = vadd.f32 %v1018, %v1082
      %v1090 = vadd.f32 %v1019, %v1082
      %v1091 = vadd.f32 %v1020, %v1082
      %v1092 = vadd.f32 %v1021, %v1082
      %v1093 = vadd.f32 %v1022, %v1082
      %v1094 = vadd.f32 %v1023, %v1082
      %v1095 = vadd.f32 %v1024, %v1082
      %v1096 = vadd.f32 %v1025, %v1082
      %v1097 = vadd.f32 %v1026, %v1082
      %v1098 = vadd.f32 %v1027, %v1082
      %v1099 = vadd.f32 %v1028, %v1082
      %v1100 = vadd.f32 %v1029, %v1082
      %v1101 = vadd.f32 %v1030, %v1082
      %v1102 = vadd.f32 %v1031, %v1082
      %v1103 = vadd.f32 %v1032, %v1082
      %v1104 = vadd.f32 %v1033, %v1082
      %v1105 = vadd.f32 %v1034, %v1082
      %v1106 = vadd.f32 %v1035, %v1082
      %v1107 = vadd.f32 %v1036, %v1082
      %v1108 = vadd.f32 %v1037, %v1082
      %v1109 = vadd.f32 %v1038, %v1082
      %v1110 = vadd.f32 %v1039, %v1082
      %v1111 = vadd.f32 %v1040, %v1082
      %v1112 = vadd.f32 %v1041, %v1082
      %v1113 = vadd.f32 %v1042, %v1082
      %v1114 = vadd.f32 %v1043, %v1082
      %v1115 = vadd.f32 %v1044, %v1082
      %v1116 = vadd.f32 %v1045, %v1082
      %v1117 = vadd.f32 %v1046, %v1082
      %v1118 = vadd.f32 %v1047, %v1082
      %v1119 = vadd.f32 %v1048, %v1082
      %v1120 = vadd.f32 %v1049, %v1082
      %v1121 = vadd.f32 %v1050, %v1082
      %v1122 = vadd.f32 %v1051, %v1082
      %v1123 = vadd.f32 %v1052, %v1082
      %v1124 = vadd.f32 %v1053, %v1082
      %v1125 = vadd.f32 %v1054, %v1082
      %v1126 = vadd.f32 %v1055, %v1082
      %v1127 = vadd.f32 %v1056, %v1082
      %v1128 = vadd.f32 %v1057, %v1082
      %v1129 = vadd.f32 %v1058, %v1082
      %v1130 = vadd.f32 %v1059, %v1082
      %v1131 = vadd.f32 %v1060, %v1082
      %v1132 = vadd.f32 %v1061, %v1082
      %v1133 = vadd.f32 %v1062, %v1082
      %v1134 = vadd.f32 %v1063, %v1082
      %v1135 = vadd.f32 %v1064, %v1082
      %v1136 = vadd.f32 %v1065, %v1082
      %v1137 = vadd.f32 %v1066, %v1082
      %v1138 = vadd.f32 %v1067, %v1082
      %v1139 = vadd.f32 %v1068, %v1082
      %v1140 = vadd.f32 %v1069, %v1082
      %v1141 = vadd.f32 %v1070, %v1082
      %v1142 = vadd.f32 %v1071, %v1082
      %v1143 = vadd.f32 %v1072, %v1082
      %v1144 = vadd.f32 %v1073, %v1082
      %v1145 = vadd.f32 %v1074, %v1082
      %v1146 = vadd.f32 %v1075, %v1082
      %v1147 = vadd.f32 %v1076, %v1082
      %v1148 = vmax.f32 %v1084, 0.0
      %v1149 = vmax.f32 %v1085, 0.0
      %v1150 = vmax.f32 %v1086, 0.0
      %v1151 = vmax.f32 %v1087, 0.0
      %v1152 = vmax.f32 %v1088, 0.0
      %v1153 = vmax.f32 %v1089, 0.0
      %v1154 = vmax.f32 %v1090, 0.0
      %v1155 = vmax.f32 %v1091, 0.0
      %v1156 = vmax.f32 %v1092, 0.0
      %v1157 = vmax.f32 %v1093, 0.0
      %v1158 = vmax.f32 %v1094, 0.0
      %v1159 = vmax.f32 %v1095, 0.0
      %v1160 = vmax.f32 %v1096, 0.0
      %v1161 = vmax.f32 %v1097, 0.0
      %v1162 = vmax.f32 %v1098, 0.0
      %v1163 = vmax.f32 %v1099, 0.0
      %v1164 = vmax.f32 %v1100, 0.0
      %v1165 = vmax.f32 %v1101, 0.0
      %v1166 = vmax.f32 %v1102, 0.0
      %v1167 = vmax.f32 %v1103, 0.0
      %v1168 = vmax.f32 %v1104, 0.0
      %v1169 = vmax.f32 %v1105, 0.0
      %v1170 = vmax.f32 %v1106, 0.0
      %v1171 = vmax.f32 %v1107, 0.0
      %v1172 = vmax.f32 %v1108, 0.0
      %v1173 = vmax.f32 %v1109, 0.0
      %v1174 = vmax.f32 %v1110, 0.0
      %v1175 = vmax.f32 %v1111, 0.0
      %v1176 = vmax.f32 %v1112, 0.0
      %v1177 = vmax.f32 %v1113, 0.0
      %v1178 = vmax.f32 %v1114, 0.0
      %v1179 = vmax.f32 %v1115, 0.0
      %v1180 = vmax.f32 %v1116, 0.0
      %v1181 = vmax.f32 %v1117, 0.0
      %v1182 = vmax.f32 %v1118, 0.0
      %v1183 = vmax.f32 %v1119, 0.0
      %v1184 = vmax.f32 %v1120, 0.0
      %v1185 = vmax.f32 %v1121, 0.0
      %v1186 = vmax.f32 %v1122, 0.0
      %v1187 = vmax.f32 %v1123, 0.0
      %v1188 = vmax.f32 %v1124, 0.0
      %v1189 = vmax.f32 %v1125, 0.0
      %v1190 = vmax.f32 %v1126, 0.0
      %v1191 = vmax.f32 %v1127, 0.0
      %v1192 = vmax.f32 %v1128, 0.0
      %v1193 = vmax.f32 %v1129, 0.0
      %v1194 = vmax.f32 %v1130, 0.0
      %v1195 = vmax.f32 %v1131, 0.0
      %v1196 = vmax.f32 %v1132, 0.0
      %v1197 = vmax.f32 %v1133, 0.0
      %v1198 = vmax.f32 %v1134, 0.0
      %v1199 = vmax.f32 %v1135, 0.0
      %v1200 = vmax.f32 %v1136, 0.0
      %v1201 = vmax.f32 %v1137, 0.0
      %v1202 = vmax.f32 %v1138, 0.0
      %v1203 = vmax.f32 %v1139, 0.0
      %v1204 = vmax.f32 %v1140, 0.0
      %v1205 = vmax.f32 %v1141, 0.0
      %v1206 = vmax.f32 %v1142, 0.0
      %v1207 = vmax.f32 %v1143, 0.0
      %v1208 = vmax.f32 %v1144, 0.0
      %v1209 = vmax.f32 %v1145, 0.0
      %v1210 = vmax.f32 %v1146, 0.0
      %v1211 = vmax.f32 %v1147, 0.0
      %v1212 = vpack.c.bf16 %v1149, %v1148
      %v1213 = vpack.c.bf16 %v1151, %v1150
      %v1214 = vpack.c.bf16 %v1153, %v1152
      %v1215 = vpack.c.bf16 %v1155, %v1154
      %v1216 = vpack.c.bf16 %v1157, %v1156
      %v1217 = vpack.c.bf16 %v1159, %v1158
      %v1218 = vpack.c.bf16 %v1161, %v1160
      %v1219 = vpack.c.bf16 %v1163, %v1162
      %v1220 = vpack.c.bf16 %v1165, %v1164
      %v1221 = vpack.c.bf16 %v1167, %v1166
      %v1222 = vpack.c.bf16 %v1169, %v1168
      %v1223 = vpack.c.bf16 %v1171, %v1170
      %v1224 = vpack.c.bf16 %v1173, %v1172
      %v1225 = vpack.c.bf16 %v1175, %v1174
      %v1226 = vpack.c.bf16 %v1177, %v1176
      %v1227 = vpack.c.bf16 %v1179, %v1178
      %v1228 = vpack.c.bf16 %v1181, %v1180
      %v1229 = vpack.c.bf16 %v1183, %v1182
      %v1230 = vpack.c.bf16 %v1185, %v1184
      %v1231 = vpack.c.bf16 %v1187, %v1186
      %v1232 = vpack.c.bf16 %v1189, %v1188
      %v1233 = vpack.c.bf16 %v1191, %v1190
      %v1234 = vpack.c.bf16 %v1193, %v1192
      %v1235 = vpack.c.bf16 %v1195, %v1194
      %v1236 = vpack.c.bf16 %v1197, %v1196
      %v1237 = vpack.c.bf16 %v1199, %v1198
      %v1238 = vpack.c.bf16 %v1201, %v1200
      %v1239 = vpack.c.bf16 %v1203, %v1202
      %v1240 = vpack.c.bf16 %v1205, %v1204
      %v1241 = vpack.c.bf16 %v1207, %v1206
      %v1242 = vpack.c.bf16 %v1209, %v1208
      %v1243 = vpack.c.bf16 %v1211, %v1210
      %v1276 = vunpack.c.l.b16 %v1212
      %v1277 = vunpack.c.h.b16 %v1212
      %v1278 = vunpack.c.l.b16 %v1213
      %v1279 = vunpack.c.h.b16 %v1213
      %v1280 = vunpack.c.l.b16 %v1214
      %v1281 = vunpack.c.h.b16 %v1214
      %v1282 = vunpack.c.l.b16 %v1215
      %v1283 = vunpack.c.h.b16 %v1215
      %v1284 = vunpack.c.l.b16 %v1216
      %v1285 = vunpack.c.h.b16 %v1216
      %v1286 = vunpack.c.l.b16 %v1217
      %v1287 = vunpack.c.h.b16 %v1217
      %v1288 = vunpack.c.l.b16 %v1218
      %v1289 = vunpack.c.h.b16 %v1218
      %v1290 = vunpack.c.l.b16 %v1219
      %v1291 = vunpack.c.h.b16 %v1219
      %v1292 = vunpack.c.l.b16 %v1220
      %v1293 = vunpack.c.h.b16 %v1220
      %v1294 = vunpack.c.l.b16 %v1221
      %v1295 = vunpack.c.h.b16 %v1221
      %v1296 = vunpack.c.l.b16 %v1222
      %v1297 = vunpack.c.h.b16 %v1222
      %v1298 = vunpack.c.l.b16 %v1223
      %v1299 = vunpack.c.h.b16 %v1223
      %v1300 = vunpack.c.l.b16 %v1224
      %v1301 = vunpack.c.h.b16 %v1224
      %v1302 = vunpack.c.l.b16 %v1225
      %v1303 = vunpack.c.h.b16 %v1225
      %v1304 = vunpack.c.l.b16 %v1226
      %v1305 = vunpack.c.h.b16 %v1226
      %v1306 = vunpack.c.l.b16 %v1227
      %v1307 = vunpack.c.h.b16 %v1227
      %v1308 = vunpack.c.l.b16 %v1228
      %v1309 = vunpack.c.h.b16 %v1228
      %v1310 = vunpack.c.l.b16 %v1229
      %v1311 = vunpack.c.h.b16 %v1229
      %v1312 = vunpack.c.l.b16 %v1230
      %v1313 = vunpack.c.h.b16 %v1230
      %v1314 = vunpack.c.l.b16 %v1231
      %v1315 = vunpack.c.h.b16 %v1231
      %v1316 = vunpack.c.l.b16 %v1232
      %v1317 = vunpack.c.h.b16 %v1232
      %v1318 = vunpack.c.l.b16 %v1233
      %v1319 = vunpack.c.h.b16 %v1233
      %v1320 = vunpack.c.l.b16 %v1234
      %v1321 = vunpack.c.h.b16 %v1234
      %v1322 = vunpack.c.l.b16 %v1235
      %v1323 = vunpack.c.h.b16 %v1235
      %v1324 = vunpack.c.l.b16 %v1236
      %v1325 = vunpack.c.h.b16 %v1236
      %v1326 = vunpack.c.l.b16 %v1237
      %v1327 = vunpack.c.h.b16 %v1237
      %v1328 = vunpack.c.l.b16 %v1238
      %v1329 = vunpack.c.h.b16 %v1238
      %v1330 = vunpack.c.l.b16 %v1239
      %v1331 = vunpack.c.h.b16 %v1239
      %v1332 = vunpack.c.l.b16 %v1240
      %v1333 = vunpack.c.h.b16 %v1240
      %v1334 = vunpack.c.l.b16 %v1241
      %v1335 = vunpack.c.h.b16 %v1241
      %v1336 = vunpack.c.l.b16 %v1242
      %v1337 = vunpack.c.h.b16 %v1242
      %v1338 = vunpack.c.l.b16 %v1243
      %v1339 = vunpack.c.h.b16 %v1243
      %v1340 = vpack.c.b16 %v1276, %v1276
      %v1341 = vpack.c.b16 %v1277, %v1277
      %v1342 = vpack.c.b16 %v1278, %v1278
      %v1343 = vpack.c.b16 %v1279, %v1279
      %v1344 = vpack.c.b16 %v1280, %v1280
      %v1345 = vpack.c.b16 %v1281, %v1281
      %v1346 = vpack.c.b16 %v1282, %v1282
      %v1347 = vpack.c.b16 %v1283, %v1283
      %v1348 = vpack.c.b16 %v1284, %v1284
      %v1349 = vpack.c.b16 %v1285, %v1285
      %v1350 = vpack.c.b16 %v1286, %v1286
      %v1351 = vpack.c.b16 %v1287, %v1287
      %v1352 = vpack.c.b16 %v1288, %v1288
      %v1353 = vpack.c.b16 %v1289, %v1289
      %v1354 = vpack.c.b16 %v1290, %v1290
      %v1355 = vpack.c.b16 %v1291, %v1291
      %v1356 = vpack.c.b16 %v1292, %v1292
      %v1357 = vpack.c.b16 %v1293, %v1293
      %v1358 = vpack.c.b16 %v1294, %v1294
      %v1359 = vpack.c.b16 %v1295, %v1295
      %v1360 = vpack.c.b16 %v1296, %v1296
      %v1361 = vpack.c.b16 %v1297, %v1297
      %v1362 = vpack.c.b16 %v1298, %v1298
      %v1363 = vpack.c.b16 %v1299, %v1299
      %v1364 = vpack.c.b16 %v1300, %v1300
      %v1365 = vpack.c.b16 %v1301, %v1301
      %v1366 = vpack.c.b16 %v1302, %v1302
      %v1367 = vpack.c.b16 %v1303, %v1303
      %v1368 = vpack.c.b16 %v1304, %v1304
      %v1369 = vpack.c.b16 %v1305, %v1305
      %v1370 = vpack.c.b16 %v1306, %v1306
      %v1371 = vpack.c.b16 %v1307, %v1307
      %v1372 = vpack.c.b16 %v1308, %v1308
      %v1373 = vpack.c.b16 %v1309, %v1309
      %v1374 = vpack.c.b16 %v1310, %v1310
      %v1375 = vpack.c.b16 %v1311, %v1311
      %v1376 = vpack.c.b16 %v1312, %v1312
      %v1377 = vpack.c.b16 %v1313, %v1313
      %v1378 = vpack.c.b16 %v1314, %v1314
      %v1379 = vpack.c.b16 %v1315, %v1315
      %v1380 = vpack.c.b16 %v1316, %v1316
      %v1381 = vpack.c.b16 %v1317, %v1317
      %v1382 = vpack.c.b16 %v1318, %v1318
      %v1383 = vpack.c.b16 %v1319, %v1319
      %v1384 = vpack.c.b16 %v1320, %v1320
      %v1385 = vpack.c.b16 %v1321, %v1321
      %v1386 = vpack.c.b16 %v1322, %v1322
      %v1387 = vpack.c.b16 %v1323, %v1323
      %v1388 = vpack.c.b16 %v1324, %v1324
      %v1389 = vpack.c.b16 %v1325, %v1325
      %v1390 = vpack.c.b16 %v1326, %v1326
      %v1391 = vpack.c.b16 %v1327, %v1327
      %v1392 = vpack.c.b16 %v1328, %v1328
      %v1393 = vpack.c.b16 %v1329, %v1329
      %v1394 = vpack.c.b16 %v1330, %v1330
      %v1395 = vpack.c.b16 %v1331, %v1331
      %v1396 = vpack.c.b16 %v1332, %v1332
      %v1397 = vpack.c.b16 %v1333, %v1333
      %v1398 = vpack.c.b16 %v1334, %v1334
      %v1399 = vpack.c.b16 %v1335, %v1335
      %v1400 = vpack.c.b16 %v1336, %v1336
      %v1401 = vpack.c.b16 %v1337, %v1337
      %v1402 = vpack.c.b16 %v1338, %v1338
      %v1403 = vpack.c.b16 %v1339, %v1339
      %1468 = vst [vmem:[%s202] sm:$0xf] %v1340
      %1469 = vst [vmem:[%s202 + $0x4] sm:$0xf] %v1341
      %1470 = vst [vmem:[%s202 + $0x8] sm:$0xf] %v1342
      %1471 = vst [vmem:[%s202 + $0xc] sm:$0xf] %v1343
      %1472 = vst [vmem:[%s202 + $0x10] sm:$0xf] %v1344
      %1473 = vst [vmem:[%s202 + $0x14] sm:$0xf] %v1345
      %1474 = vst [vmem:[%s202 + $0x18] sm:$0xf] %v1346
      %1475 = vst [vmem:[%s202 + $0x1c] sm:$0xf] %v1347
      %1476 = vst [vmem:[%s202 + $0x20] sm:$0xf] %v1348
      %1477 = vst [vmem:[%s202 + $0x24] sm:$0xf] %v1349
      %1478 = vst [vmem:[%s202 + $0x28] sm:$0xf] %v1350
      %1479 = vst [vmem:[%s202 + $0x2c] sm:$0xf] %v1351
      %1480 = vst [vmem:[%s202 + $0x30] sm:$0xf] %v1352
      %1481 = vst [vmem:[%s202 + $0x34] sm:$0xf] %v1353
      %1482 = vst [vmem:[%s202 + $0x38] sm:$0xf] %v1354
      %1483 = vst [vmem:[%s202 + $0x3c] sm:$0xf] %v1355
      %1484 = vst [vmem:[%s202 + $0x40] sm:$0xf] %v1356
      %1485 = vst [vmem:[%s202 + $0x44] sm:$0xf] %v1357
      %1486 = vst [vmem:[%s202 + $0x48] sm:$0xf] %v1358
      %1487 = vst [vmem:[%s202 + $0x4c] sm:$0xf] %v1359
      %1488 = vst [vmem:[%s202 + $0x50] sm:$0xf] %v1360
      %1489 = vst [vmem:[%s202 + $0x54] sm:$0xf] %v1361
      %1490 = vst [vmem:[%s202 + $0x58] sm:$0xf] %v1362
      %1491 = vst [vmem:[%s202 + $0x5c] sm:$0xf] %v1363
      %1492 = vst [vmem:[%s202 + $0x60] sm:$0xf] %v1364
      %1493 = vst [vmem:[%s202 + $0x64] sm:$0xf] %v1365
      %1494 = vst [vmem:[%s202 + $0x68] sm:$0xf] %v1366
      %1495 = vst [vmem:[%s202 + $0x6c] sm:$0xf] %v1367
      %1496 = vst [vmem:[%s202 + $0x70] sm:$0xf] %v1368
      %1497 = vst [vmem:[%s202 + $0x74] sm:$0xf] %v1369
      %1498 = vst [vmem:[%s202 + $0x78] sm:$0xf] %v1370
      %1499 = vst [vmem:[%s202 + $0x7c] sm:$0xf] %v1371
      %1500 = vst [vmem:[%s202 + $0x80] sm:$0xf] %v1372
      %1501 = vst [vmem:[%s202 + $0x84] sm:$0xf] %v1373
      %1502 = vst [vmem:[%s202 + $0x88] sm:$0xf] %v1374
      %1503 = vst [vmem:[%s202 + $0x8c] sm:$0xf] %v1375
      %1504 = vst [vmem:[%s202 + $0x90] sm:$0xf] %v1376
      %1505 = vst [vmem:[%s202 + $0x94] sm:$0xf] %v1377
      %1506 = vst [vmem:[%s202 + $0x98] sm:$0xf] %v1378
      %1507 = vst [vmem:[%s202 + $0x9c] sm:$0xf] %v1379
      %1508 = vst [vmem:[%s202 + $0xa0] sm:$0xf] %v1380
      %1509 = vst [vmem:[%s202 + $0xa4] sm:$0xf] %v1381
      %1510 = vst [vmem:[%s202 + $0xa8] sm:$0xf] %v1382
      %1511 = vst [vmem:[%s202 + $0xac] sm:$0xf] %v1383
      %1512 = vst [vmem:[%s202 + $0xb0] sm:$0xf] %v1384
      %1513 = vst [vmem:[%s202 + $0xb4] sm:$0xf] %v1385
      %1514 = vst [vmem:[%s202 + $0xb8] sm:$0xf] %v1386
      %1515 = vst [vmem:[%s202 + $0xbc] sm:$0xf] %v1387
      %1516 = vst [vmem:[%s202 + $0xc0] sm:$0xf] %v1388
      %1517 = vst [vmem:[%s202 + $0xc4] sm:$0xf] %v1389
      %1518 = vst [vmem:[%s202 + $0xc8] sm:$0xf] %v1390
      %1519 = vst [vmem:[%s202 + $0xcc] sm:$0xf] %v1391
      %1520 = vst [vmem:[%s202 + $0xd0] sm:$0xf] %v1392
      %1521 = vst [vmem:[%s202 + $0xd4] sm:$0xf] %v1393
      %1522 = vst [vmem:[%s202 + $0xd8] sm:$0xf] %v1394
      %1523 = vst [vmem:[%s202 + $0xdc] sm:$0xf] %v1395
      %1524 = vst [vmem:[%s202 + $0xe0] sm:$0xf] %v1396
      %1525 = vst [vmem:[%s202 + $0xe4] sm:$0xf] %v1397
      %1526 = vst [vmem:[%s202 + $0xe8] sm:$0xf] %v1398
      %1527 = vst [vmem:[%s202 + $0xec] sm:$0xf] %v1399
      %1528 = vst [vmem:[%s202 + $0xf0] sm:$0xf] %v1400
      %1529 = vst [vmem:[%s202 + $0xf4] sm:$0xf] %v1401
      %1530 = vst [vmem:[%s202 + $0xf8] sm:$0xf] %v1402
      %1531 = vst [vmem:[%s202 + $0xfc] sm:$0xf] %v1403
      %s1532 = smul.u32 64, %s15
      %p1533 = scmp.lt.s32.totalorder %s1532, 319
      %s1534 = scalar_select %p1533, %s1532, 319
      %s1535 = smul.addr %s1534, 4
      %s1536 = scalar_lea.vmem %s4, %s1535
      // Predicated region
      $region37: #{segmentation_forward.16} parent=35 // pred_check
        %p1537 = pneg %p122
      $region38: #{segmentation_forward.16} parent=35 // pred_check_branch
        %1539 = sbr.rel (%p1537) target = $region40
      $region39: #{segmentation_forward.16} parent=35 // pred_region
        %s1540 = smul.u32 64, %s15
      $region40: #{segmentation_forward.16} parent=35 // pred_fallthru
        _
    $region36: #{segmentation_forward.16} parent=5 // pred_fallthru
      _
    %p1541 = scmp.le.s32.totalorder 2, %s10
    // Predicated region
    $region41: #{segmentation_forward.16} parent=5 // pred_check
      %p1542 = pneg %p1541
    $region42: #{segmentation_forward.16} parent=5 // pred_check_branch
      %1544 = sbr.rel (%p1542) target = $region44
    $region43: #{segmentation_forward.16} parent=5 // pred_region
      %s1545 = ssub.s32 %s10, 2
      // Predicated region
      $region45: #{segmentation_forward.16} parent=43 // pred_check
        %p1546 = pneg %p128
      $region46: #{segmentation_forward.16} parent=43 // pred_check_branch
        %1548 = sbr.rel (%p1546) target = $region48
      $region47: #{segmentation_forward.16} parent=43 // pred_region
        %s1549 = smul.u32 64, %s16
        %p1550 = scmp.lt.s32.totalorder %s1549, 319
        %s1551 = scalar_select %p1550, %s1549, 319
        %s1552 = smul.addr %s1551, 4
        %s1553 = scalar_lea.vmem %s4, %s1552
      $region48: #{segmentation_forward.16} parent=43 // pred_fallthru
        _
    $region44: #{segmentation_forward.16} parent=5 // pred_fallthru
      _
  $region6: #{segmentation_forward.16} parent=0 // loop_footer
    %s14 = sadd.s32 1, %s10
  $region7: #{segmentation_forward.16} parent=0 // loop_footer_branch
    %9 = sbr.rel target = $region3
  $region8: #{segmentation_forward.16} parent=0 // loop_exit
    _

// kernel: segmentation_forward.17
$region0: #{segmentation_forward.17}
  #allocation0 [shape = 'u32[]', space=smem, size = 0x4, offset = 0x4, fixed_abs, tag = 'smem constant byte address 0x4 - core index']
  #allocation1 [shape = 'u32[144,128]{1,0:T(1,128)}', space=vmem, size = 0x12000, scoped, tag = 'internal scratch']
  %s0 = inlined_call_operand.vmem [shape: bf16[8192,288], index: 0, kind: input, shape index: {}]
  %s1 = inlined_call_operand.vmem [shape: bf16[288,32], index: 1, kind: input, shape index: {}]
  %s2 = inlined_call_operand.vmem [shape: f32[1,32], index: 2, kind: input, shape index: {}]
  %s3 = inlined_call_operand.vmem [shape: f32[1,32], index: 3, kind: input, shape index: {}]
  %s4 = inlined_call_operand.vmem [shape: bf16[8192,32], index: 4, kind: output, shape index: {}]
  %s5 = sld [smem:[#allocation0]]
  $region49: #{segmentation_forward.17} parent=0
    _
  %s7 = ssub.s32 1, %s5
  %s8 = scalar_select 0, %s7, %s5
  loop: start=0, step=1, limit=18
  $region2: #{segmentation_forward.17} parent=0 // loop_pre_header
    _
  $region3: #{segmentation_forward.17} parent=0 // loop_header
    %s10 = sphi 0, %s14
    %p11 = scmp.ge.s32.totalorder %s10, 18
    %s20 = sphi 0, %s22
    %s23 = sphi 0, %s20
    %s24 = sphi 0, %s23
    %s40 = sphi 0, %s24
    %s44 = sphi 0, %s44
    %s46 = sphi 0, %s44
    %s47 = sphi 0, %s46
    %s61 = sphi 0, %s47
    %s65 = sphi 0, %s65
    %s67 = sphi 0, %s65
    %s68 = sphi 0, %s67
    %s82 = sphi 0, %s68
    %s86 = sphi 0, %s86
    %s88 = sphi 0, %s86
    %s89 = sphi 0, %s88
    %s103 = sphi 0, %s89
    %s109 = sphi 0, %s111
    %s112 = sphi 0, %s109
    %s113 = sphi 0, %s112
    %s129 = sphi 0, %s113
  $region4: #{segmentation_forward.17} parent=0 // loop_header_branch
    %13 = sbr.rel (%p11) target = $region8
  $region5: #{segmentation_forward.17} parent=0 // loop_body
    %s15 = ssub.s32 %s10, 1
    %s16 = ssub.s32 %s10, 2
    %s17 = sadd.s32 %s10, 1
    %s18 = ssub.s32 %s10, %s17
    %p19 = scmp.eq.s32.totalorder %s18, 0
    %s21 = sadd.s32 %s20, 1
    %s22 = scalar_select %p19, %s20, %s21
    %p25 = pneg %p19
    %p26 = scmp.eq.s32.totalorder %s10, 15
    %p27 = por %p25, %p26
    %p28 = scmp.ne.s32.totalorder %s20, %s23
    %p29 = scmp.eq.s32.totalorder %s10, 0
    %p30 = por %p28, %p29
    %p31 = scmp.ne.s32.totalorder %s20, %s23
    %p32 = scmp.eq.s32.totalorder %s15, 15
    %p33 = por %p31, %p32
    %p34 = scmp.ne.s32.totalorder %s23, %s24
    %p35 = scmp.eq.s32.totalorder %s15, 0
    %p36 = por %p34, %p35
    %p37 = scmp.ne.s32.totalorder %s23, %s24
    %p38 = scmp.eq.s32.totalorder %s16, 15
    %p39 = por %p37, %p38
    %p41 = scmp.ne.s32.totalorder %s24, %s40
    %p42 = scmp.eq.s32.totalorder %s16, 0
    %p43 = por %p41, %p42
    %s45 = sadd.s32 %s44, 1
    %p48 = scmp.eq.s32.totalorder %s10, 15
    %p49 = scmp.ne.s32.totalorder %s44, %s46
    %p50 = scmp.eq.s32.totalorder %s10, 0
    %p51 = por %p49, %p50
    %p52 = scmp.ne.s32.totalorder %s44, %s46
    %p53 = scmp.eq.s32.totalorder %s15, 15
    %p54 = por %p52, %p53
    %p55 = scmp.ne.s32.totalorder %s46, %s47
    %p56 = scmp.eq.s32.totalorder %s15, 0
    %p57 = por %p55, %p56
    %p58 = scmp.ne.s32.totalorder %s46, %s47
    %p59 = scmp.eq.s32.totalorder %s16, 15
    %p60 = por %p58, %p59
    %p62 = scmp.ne.s32.totalorder %s47, %s61
    %p63 = scmp.eq.s32.totalorder %s16, 0
    %p64 = por %p62, %p63
    %s66 = sadd.s32 %s65, 1
    %p69 = scmp.eq.s32.totalorder %s10, 15
    %p70 = scmp.ne.s32.totalorder %s65, %s67
    %p71 = scmp.eq.s32.totalorder %s10, 0
    %p72 = por %p70, %p71
    %p73 = scmp.ne.s32.totalorder %s65, %s67
    %p74 = scmp.eq.s32.totalorder %s15, 15
    %p75 = por %p73, %p74
    %p76 = scmp.ne.s32.totalorder %s67, %s68
    %p77 = scmp.eq.s32.totalorder %s15, 0
    %p78 = por %p76, %p77
    %p79 = scmp.ne.s32.totalorder %s67, %s68
    %p80 = scmp.eq.s32.totalorder %s16, 15
    %p81 = por %p79, %p80
    %p83 = scmp.ne.s32.totalorder %s68, %s82
    %p84 = scmp.eq.s32.totalorder %s16, 0
    %p85 = por %p83, %p84
    %s87 = sadd.s32 %s86, 1
    %p90 = scmp.eq.s32.totalorder %s10, 15
    %p91 = scmp.ne.s32.totalorder %s86, %s88
    %p92 = scmp.eq.s32.totalorder %s10, 0
    %p93 = por %p91, %p92
    %p94 = scmp.ne.s32.totalorder %s86, %s88
    %p95 = scmp.eq.s32.totalorder %s15, 15
    %p96 = por %p94, %p95
    %p97 = scmp.ne.s32.totalorder %s88, %s89
    %p98 = scmp.eq.s32.totalorder %s15, 0
    %p99 = por %p97, %p98
    %p100 = scmp.ne.s32.totalorder %s88, %s89
    %p101 = scmp.eq.s32.totalorder %s16, 15
    %p102 = por %p100, %p101
    %p104 = scmp.ne.s32.totalorder %s89, %s103
    %p105 = scmp.eq.s32.totalorder %s16, 0
    %p106 = por %p104, %p105
    %s107 = ssub.s32 %s10, %s17
    %p108 = scmp.eq.s32.totalorder %s107, 0
    %s110 = sadd.s32 %s109, 1
    %s111 = scalar_select %p108, %s109, %s110
    %p114 = pneg %p108
    %p115 = scmp.eq.s32.totalorder %s10, 15
    %p116 = por %p114, %p115
    %p117 = scmp.ne.s32.totalorder %s109, %s112
    %p118 = scmp.eq.s32.totalorder %s10, 0
    %p119 = por %p117, %p118
    %p120 = scmp.ne.s32.totalorder %s109, %s112
    %p121 = scmp.eq.s32.totalorder %s15, 15
    %p122 = por %p120, %p121
    %p123 = scmp.ne.s32.totalorder %s112, %s113
    %p124 = scmp.eq.s32.totalorder %s15, 0
    %p125 = por %p123, %p124
    %p126 = scmp.ne.s32.totalorder %s112, %s113
    %p127 = scmp.eq.s32.totalorder %s16, 15
    %p128 = por %p126, %p127
    %p130 = scmp.ne.s32.totalorder %s113, %s129
    %p131 = scmp.eq.s32.totalorder %s16, 0
    %p132 = por %p130, %p131
    %p133 = scmp.le.s32.totalorder 1, %s10
    %p134 = scmp.lt.s32.totalorder %s10, 17
    %p135 = pnand %p133, %p134
    %p136 = pneg %p135
    // Predicated region
    $region9: #{segmentation_forward.17} parent=5 // pred_check
      _
    $region10: #{segmentation_forward.17} parent=5 // pred_check_branch
      %138 = sbr.rel (%p135) target = $region12
    $region11: #{segmentation_forward.17} parent=5 // pred_region
      %s139 = ssub.s32 %s10, 1
      // Predicated region
      $region13: #{segmentation_forward.17} parent=11 // pred_check
        %p140 = pneg %p57
      $region14: #{segmentation_forward.17} parent=11 // pred_check_branch
        %142 = sbr.rel (%p140) target = $region16
      $region15: #{segmentation_forward.17} parent=11 // pred_region
        _
      $region16: #{segmentation_forward.17} parent=11 // pred_fallthru
        _
      // Predicated region
      $region17: #{segmentation_forward.17} parent=11 // pred_check
        %p143 = pneg %p78
      $region18: #{segmentation_forward.17} parent=11 // pred_check_branch
        %145 = sbr.rel (%p143) target = $region20
      $region19: #{segmentation_forward.17} parent=11 // pred_region
        _
      $region20: #{segmentation_forward.17} parent=11 // pred_fallthru
        _
      // Predicated region
      $region21: #{segmentation_forward.17} parent=11 // pred_check
        %p146 = pneg %p99
      $region22: #{segmentation_forward.17} parent=11 // pred_check_branch
        %148 = sbr.rel (%p146) target = $region24
      $region23: #{segmentation_forward.17} parent=11 // pred_region
        _
      $region24: #{segmentation_forward.17} parent=11 // pred_fallthru
        _
    $region12: #{segmentation_forward.17} parent=5 // pred_fallthru
      _
    %p149 = scmp.lt.s32.totalorder %s10, 16
    // Predicated region
    $region25: #{segmentation_forward.17} parent=5 // pred_check
      %p150 = pneg %p149
    $region26: #{segmentation_forward.17} parent=5 // pred_check_branch
      %152 = sbr.rel (%p150) target = $region28
    $region27: #{segmentation_forward.17} parent=5 // pred_region
      // Predicated region
      $region29: #{segmentation_forward.17} parent=27 // pred_check
        %p153 = pneg %p30
      $region30: #{segmentation_forward.17} parent=27 // pred_check_branch
        %155 = sbr.rel (%p153) target = $region32
      $region31: #{segmentation_forward.17} parent=27 // pred_region
        %s156 = smul.u32 64, %s10
        %p157 = scmp.lt.s32.totalorder %s156, 1023
        %s158 = scalar_select %p157, %s156, 1023
        %s159 = smul.addr %s158, 3
        %s160 = smul.addr %s159, 4
        %s161 = scalar_lea.vmem %s0, %s160
        %s162 = smul.u32 64, %s10
      $region32: #{segmentation_forward.17} parent=27 // pred_fallthru
        _
    $region28: #{segmentation_forward.17} parent=5 // pred_fallthru
      _
    %p163 = scmp.le.s32.totalorder 1, %s10
    %p164 = scmp.lt.s32.totalorder %s10, 17
    %p165 = pnand %p163, %p164
    %p166 = pneg %p165
    // Predicated region
    $region33: #{segmentation_forward.17} parent=5 // pred_check
      _
    $region34: #{segmentation_forward.17} parent=5 // pred_check_branch
      %168 = sbr.rel (%p165) target = $region36
    $region35: #{segmentation_forward.17} parent=5 // pred_region
      %s169 = ssub.s32 %s10, 1
      %s170 = smul.u32 64, %s15
      %p171 = scmp.lt.s32.totalorder %s170, 1023
      %s172 = scalar_select %p171, %s170, 1023
      %s173 = smul.addr %s172, 3
      %s174 = smul.addr %s173, 4
      %s175 = scalar_lea.vmem %s0, %s174
      %p176 = pneg %p36
      %p177 = pneg %p33
      %p178 = pneg %p57
      %p179 = pneg %p54
      %p180 = pneg %p78
      %p181 = pneg %p75
      %p182 = pneg %p99
      %p183 = pneg %p96
      %p184 = pneg %p125
      %p185 = pneg %p122
      %s186 = smul.u32 64, %s15
      %p187 = scmp.lt.s32.totalorder %s186, 1023
      %s188 = scalar_select %p187, %s186, 1023
      %s189 = smul.addr %s188, 4
      %s190 = scalar_lea.vmem %s4, %s189
      %s191 = smul.u32 64, %s15
      %p192 = scmp.lt.s32.totalorder %s191, 1023
      %s193 = scalar_select %p192, %s191, 1023
      %s194 = smul.addr %s193, 3
      %s195 = smul.addr %s194, 4
      %s196 = scalar_lea.vmem %s0, %s195
      %s197 = smul.u32 64, %s15
      %s198 = smul.u32 64, %s15
      %p199 = scmp.lt.s32.totalorder %s198, 1023
      %s200 = scalar_select %p199, %s198, 1023
      %s201 = smul.addr %s200, 4
      %s202 = scalar_lea.vmem %s4, %s201
      %s203 = smul.u32 64, %s15
      %v205 = vld [vmem:[%s196] sm:$0xff]
      %v206 = vld [vmem:[%s196 + $0x8] sm:$0xf]
      %v207 = vld [vmem:[%s196 + $0xc] sm:$0xff]
      %v208 = vld [vmem:[%s196 + $0x14] sm:$0xf]
      %v209 = vld [vmem:[%s196 + $0x18] sm:$0xff]
      %v210 = vld [vmem:[%s196 + $0x20] sm:$0xf]
      %v211 = vld [vmem:[%s196 + $0x24] sm:$0xff]
      %v212 = vld [vmem:[%s196 + $0x2c] sm:$0xf]
      %v213 = vld [vmem:[%s196 + $0x30] sm:$0xff]
      %v214 = vld [vmem:[%s196 + $0x38] sm:$0xf]
      %v215 = vld [vmem:[%s196 + $0x3c] sm:$0xff]
      %v216 = vld [vmem:[%s196 + $0x44] sm:$0xf]
      %v217 = vld [vmem:[%s196 + $0x48] sm:$0xff]
      %v218 = vld [vmem:[%s196 + $0x50] sm:$0xf]
      %v219 = vld [vmem:[%s196 + $0x54] sm:$0xff]
      %v220 = vld [vmem:[%s196 + $0x5c] sm:$0xf]
      %v221 = vld [vmem:[%s196 + $0x60] sm:$0xff]
      %v222 = vld [vmem:[%s196 + $0x68] sm:$0xf]
      %v223 = vld [vmem:[%s196 + $0x6c] sm:$0xff]
      %v224 = vld [vmem:[%s196 + $0x74] sm:$0xf]
      %v225 = vld [vmem:[%s196 + $0x78] sm:$0xff]
      %v226 = vld [vmem:[%s196 + $0x80] sm:$0xf]
      %v227 = vld [vmem:[%s196 + $0x84] sm:$0xff]
      %v228 = vld [vmem:[%s196 + $0x8c] sm:$0xf]
      %v229 = vld [vmem:[%s196 + $0x90] sm:$0xff]
      %v230 = vld [vmem:[%s196 + $0x98] sm:$0xf]
      %v231 = vld [vmem:[%s196 + $0x9c] sm:$0xff]
      %v232 = vld [vmem:[%s196 + $0xa4] sm:$0xf]
      %v233 = vld [vmem:[%s196 + $0xa8] sm:$0xff]
      %v234 = vld [vmem:[%s196 + $0xb0] sm:$0xf]
      %v235 = vld [vmem:[%s196 + $0xb4] sm:$0xff]
      %v236 = vld [vmem:[%s196 + $0xbc] sm:$0xf]
      %v237 = vld [vmem:[%s196 + $0xc0] sm:$0xff]
      %v238 = vld [vmem:[%s196 + $0xc8] sm:$0xf]
      %v239 = vld [vmem:[%s196 + $0xcc] sm:$0xff]
      %v240 = vld [vmem:[%s196 + $0xd4] sm:$0xf]
      %v241 = vld [vmem:[%s196 + $0xd8] sm:$0xff]
      %v242 = vld [vmem:[%s196 + $0xe0] sm:$0xf]
      %v243 = vld [vmem:[%s196 + $0xe4] sm:$0xff]
      %v244 = vld [vmem:[%s196 + $0xec] sm:$0xf]
      %v245 = vld [vmem:[%s196 + $0xf0] sm:$0xff]
      %v246 = vld [vmem:[%s196 + $0xf8] sm:$0xf]
      %v247 = vld [vmem:[%s196 + $0xfc] sm:$0xff]
      %v248 = vld [vmem:[%s196 + $0x104] sm:$0xf]
      %v249 = vld [vmem:[%s196 + $0x108] sm:$0xff]
      %v250 = vld [vmem:[%s196 + $0x110] sm:$0xf]
      %v251 = vld [vmem:[%s196 + $0x114] sm:$0xff]
      %v252 = vld [vmem:[%s196 + $0x11c] sm:$0xf]
      %v253 = vld [vmem:[%s196 + $0x120] sm:$0xff]
      %v254 = vld [vmem:[%s196 + $0x128] sm:$0xf]
      %v255 = vld [vmem:[%s196 + $0x12c] sm:$0xff]
      %v256 = vld [vmem:[%s196 + $0x134] sm:$0xf]
      %v257 = vld [vmem:[%s196 + $0x138] sm:$0xff]
      %v258 = vld [vmem:[%s196 + $0x140] sm:$0xf]
      %v259 = vld [vmem:[%s196 + $0x144] sm:$0xff]
      %v260 = vld [vmem:[%s196 + $0x14c] sm:$0xf]
      %v261 = vld [vmem:[%s196 + $0x150] sm:$0xff]
      %v262 = vld [vmem:[%s196 + $0x158] sm:$0xf]
      %v263 = vld [vmem:[%s196 + $0x15c] sm:$0xff]
      %v264 = vld [vmem:[%s196 + $0x164] sm:$0xf]
      %v265 = vld [vmem:[%s196 + $0x168] sm:$0xff]
      %v266 = vld [vmem:[%s196 + $0x170] sm:$0xf]
      %v267 = vld [vmem:[%s196 + $0x174] sm:$0xff]
      %v268 = vld [vmem:[%s196 + $0x17c] sm:$0xf]
      %v269 = vld [vmem:[%s196 + $0x180] sm:$0xff]
      %v270 = vld [vmem:[%s196 + $0x188] sm:$0xf]
      %v271 = vld [vmem:[%s196 + $0x18c] sm:$0xff]
      %v272 = vld [vmem:[%s196 + $0x194] sm:$0xf]
      %v273 = vld [vmem:[%s196 + $0x198] sm:$0xff]
      %v274 = vld [vmem:[%s196 + $0x1a0] sm:$0xf]
      %v275 = vld [vmem:[%s196 + $0x1a4] sm:$0xff]
      %v276 = vld [vmem:[%s196 + $0x1ac] sm:$0xf]
      %v277 = vld [vmem:[%s196 + $0x1b0] sm:$0xff]
      %v278 = vld [vmem:[%s196 + $0x1b8] sm:$0xf]
      %v279 = vld [vmem:[%s196 + $0x1bc] sm:$0xff]
      %v280 = vld [vmem:[%s196 + $0x1c4] sm:$0xf]
      %v281 = vld [vmem:[%s196 + $0x1c8] sm:$0xff]
      %v282 = vld [vmem:[%s196 + $0x1d0] sm:$0xf]
      %v283 = vld [vmem:[%s196 + $0x1d4] sm:$0xff]
      %v284 = vld [vmem:[%s196 + $0x1dc] sm:$0xf]
      %v285 = vld [vmem:[%s196 + $0x1e0] sm:$0xff]
      %v286 = vld [vmem:[%s196 + $0x1e8] sm:$0xf]
      %v287 = vld [vmem:[%s196 + $0x1ec] sm:$0xff]
      %v288 = vld [vmem:[%s196 + $0x1f4] sm:$0xf]
      %v289 = vld [vmem:[%s196 + $0x1f8] sm:$0xff]
      %v290 = vld [vmem:[%s196 + $0x200] sm:$0xf]
      %v291 = vld [vmem:[%s196 + $0x204] sm:$0xff]
      %v292 = vld [vmem:[%s196 + $0x20c] sm:$0xf]
      %v293 = vld [vmem:[%s196 + $0x210] sm:$0xff]
      %v294 = vld [vmem:[%s196 + $0x218] sm:$0xf]
      %v295 = vld [vmem:[%s196 + $0x21c] sm:$0xff]
      %v296 = vld [vmem:[%s196 + $0x224] sm:$0xf]
      %v297 = vld [vmem:[%s196 + $0x228] sm:$0xff]
      %v298 = vld [vmem:[%s196 + $0x230] sm:$0xf]
      %v299 = vld [vmem:[%s196 + $0x234] sm:$0xff]
      %v300 = vld [vmem:[%s196 + $0x23c] sm:$0xf]
      %v301 = vld [vmem:[%s196 + $0x240] sm:$0xff]
      %v302 = vld [vmem:[%s196 + $0x248] sm:$0xf]
      %v303 = vld [vmem:[%s196 + $0x24c] sm:$0xff]
      %v304 = vld [vmem:[%s196 + $0x254] sm:$0xf]
      %v305 = vld [vmem:[%s196 + $0x258] sm:$0xff]
      %v306 = vld [vmem:[%s196 + $0x260] sm:$0xf]
      %v307 = vld [vmem:[%s196 + $0x264] sm:$0xff]
      %v308 = vld [vmem:[%s196 + $0x26c] sm:$0xf]
      %v309 = vld [vmem:[%s196 + $0x270] sm:$0xff]
      %v310 = vld [vmem:[%s196 + $0x278] sm:$0xf]
      %v311 = vld [vmem:[%s196 + $0x27c] sm:$0xff]
      %v312 = vld [vmem:[%s196 + $0x284] sm:$0xf]
      %v313 = vld [vmem:[%s196 + $0x288] sm:$0xff]
      %v314 = vld [vmem:[%s196 + $0x290] sm:$0xf]
      %v315 = vld [vmem:[%s196 + $0x294] sm:$0xff]
      %v316 = vld [vmem:[%s196 + $0x29c] sm:$0xf]
      %v317 = vld [vmem:[%s196 + $0x2a0] sm:$0xff]
      %v318 = vld [vmem:[%s196 + $0x2a8] sm:$0xf]
      %v319 = vld [vmem:[%s196 + $0x2ac] sm:$0xff]
      %v320 = vld [vmem:[%s196 + $0x2b4] sm:$0xf]
      %v321 = vld [vmem:[%s196 + $0x2b8] sm:$0xff]
      %v322 = vld [vmem:[%s196 + $0x2c0] sm:$0xf]
      %v323 = vld [vmem:[%s196 + $0x2c4] sm:$0xff]
      %v324 = vld [vmem:[%s196 + $0x2cc] sm:$0xf]
      %v325 = vld [vmem:[%s196 + $0x2d0] sm:$0xff]
      %v326 = vld [vmem:[%s196 + $0x2d8] sm:$0xf]
      %v327 = vld [vmem:[%s196 + $0x2dc] sm:$0xff]
      %v328 = vld [vmem:[%s196 + $0x2e4] sm:$0xf]
      %v329 = vld [vmem:[%s196 + $0x2e8] sm:$0xff]
      %v330 = vld [vmem:[%s196 + $0x2f0] sm:$0xf]
      %v331 = vld [vmem:[%s196 + $0x2f4] sm:$0xff]
      %v332 = vld [vmem:[%s196 + $0x2fc] sm:$0xf]
      %v333 = vld [vmem:[%s1] sm:$0xf]
      %v334 = vld [vmem:[%s1 + $0x4] sm:$0xf]
      %v335 = vld [vmem:[%s1 + $0x8] sm:$0xf]
      %v336 = vld [vmem:[%s1 + $0xc] sm:$0xf]
      %v337 = vld [vmem:[%s1 + $0x10] sm:$0xf]
      %v338 = vld [vmem:[%s1 + $0x14] sm:$0xf]
      %v339 = vld [vmem:[%s1 + $0x18] sm:$0xf]
      %v340 = vld [vmem:[%s1 + $0x1c] sm:$0xf]
      %v341 = vld [vmem:[%s1 + $0x20] sm:$0xf]
      %v342 = vld [vmem:[%s1 + $0x24] sm:$0xf]
      %v343 = vld [vmem:[%s1 + $0x28] sm:$0xf]
      %v344 = vld [vmem:[%s1 + $0x2c] sm:$0xf]
      %v345 = vld [vmem:[%s1 + $0x30] sm:$0xf]
      %v346 = vld [vmem:[%s1 + $0x34] sm:$0xf]
      %v347 = vld [vmem:[%s1 + $0x38] sm:$0xf]
      %v348 = vld [vmem:[%s1 + $0x3c] sm:$0xf]
      %v349 = vld [vmem:[%s1 + $0x40] sm:$0xf]
      %v350 = vld [vmem:[%s1 + $0x44] sm:$0xf]
      %v351 = vld [vmem:[%s1 + $0x48] sm:$0xf]
      %v352 = vld [vmem:[%s1 + $0x4c] sm:$0xf]
      %v353 = vld [vmem:[%s1 + $0x50] sm:$0xf]
      %v354 = vld [vmem:[%s1 + $0x54] sm:$0xf]
      %v355 = vld [vmem:[%s1 + $0x58] sm:$0xf]
      %v356 = vld [vmem:[%s1 + $0x5c] sm:$0xf]
      %v357 = vld [vmem:[%s1 + $0x60] sm:$0xf]
      %v358 = vld [vmem:[%s1 + $0x64] sm:$0xf]
      %v359 = vld [vmem:[%s1 + $0x68] sm:$0xf]
      %v360 = vld [vmem:[%s1 + $0x6c] sm:$0xf]
      %v361 = vld [vmem:[%s1 + $0x70] sm:$0xf]
      %v362 = vld [vmem:[%s1 + $0x74] sm:$0xf]
      %v363 = vld [vmem:[%s1 + $0x78] sm:$0xf]
      %v364 = vld [vmem:[%s1 + $0x7c] sm:$0xf]
      %v365 = vld [vmem:[%s1 + $0x80] sm:$0xf]
      %v366 = vld [vmem:[%s1 + $0x84] sm:$0xf]
      %v367 = vld [vmem:[%s1 + $0x88] sm:$0xf]
      %v368 = vld [vmem:[%s1 + $0x8c] sm:$0xf]
      %v497 = vunpack.c.l.b16 %v205
      %v498 = vunpack.c.h.b16 %v205
      %v499 = vunpack.c.l.b16 %v206
      %v500 = vunpack.c.l.b16 %v207
      %v501 = vunpack.c.h.b16 %v207
      %v502 = vunpack.c.l.b16 %v208
      %v503 = vunpack.c.l.b16 %v209
      %v504 = vunpack.c.h.b16 %v209
      %v505 = vunpack.c.l.b16 %v210
      %v506 = vunpack.c.l.b16 %v211
      %v507 = vunpack.c.h.b16 %v211
      %v508 = vunpack.c.l.b16 %v212
      %v509 = vunpack.c.l.b16 %v213
      %v510 = vunpack.c.h.b16 %v213
      %v511 = vunpack.c.l.b16 %v214
      %v512 = vunpack.c.l.b16 %v215
      %v513 = vunpack.c.h.b16 %v215
      %v514 = vunpack.c.l.b16 %v216
      %v515 = vunpack.c.l.b16 %v217
      %v516 = vunpack.c.h.b16 %v217
      %v517 = vunpack.c.l.b16 %v218
      %v518 = vunpack.c.l.b16 %v219
      %v519 = vunpack.c.h.b16 %v219
      %v520 = vunpack.c.l.b16 %v220
      %v521 = vunpack.c.l.b16 %v221
      %v522 = vunpack.c.h.b16 %v221
      %v523 = vunpack.c.l.b16 %v222
      %v524 = vunpack.c.l.b16 %v223
      %v525 = vunpack.c.h.b16 %v223
      %v526 = vunpack.c.l.b16 %v224
      %v527 = vunpack.c.l.b16 %v225
      %v528 = vunpack.c.h.b16 %v225
      %v529 = vunpack.c.l.b16 %v226
      %v530 = vunpack.c.l.b16 %v227
      %v531 = vunpack.c.h.b16 %v227
      %v532 = vunpack.c.l.b16 %v228
      %v533 = vunpack.c.l.b16 %v229
      %v534 = vunpack.c.h.b16 %v229
      %v535 = vunpack.c.l.b16 %v230
      %v536 = vunpack.c.l.b16 %v231
      %v537 = vunpack.c.h.b16 %v231
      %v538 = vunpack.c.l.b16 %v232
      %v539 = vunpack.c.l.b16 %v233
      %v540 = vunpack.c.h.b16 %v233
      %v541 = vunpack.c.l.b16 %v234
      %v542 = vunpack.c.l.b16 %v235
      %v543 = vunpack.c.h.b16 %v235
      %v544 = vunpack.c.l.b16 %v236
      %v545 = vunpack.c.l.b16 %v237
      %v546 = vunpack.c.h.b16 %v237
      %v547 = vunpack.c.l.b16 %v238
      %v548 = vunpack.c.l.b16 %v239
      %v549 = vunpack.c.h.b16 %v239
      %v550 = vunpack.c.l.b16 %v240
      %v551 = vunpack.c.l.b16 %v241
      %v552 = vunpack.c.h.b16 %v241
      %v553 = vunpack.c.l.b16 %v242
      %v554 = vunpack.c.l.b16 %v243
      %v555 = vunpack.c.h.b16 %v243
      %v556 = vunpack.c.l.b16 %v244
      %v557 = vunpack.c.l.b16 %v245
      %v558 = vunpack.c.h.b16 %v245
      %v559 = vunpack.c.l.b16 %v246
      %v560 = vunpack.c.l.b16 %v247
      %v561 = vunpack.c.h.b16 %v247
      %v562 = vunpack.c.l.b16 %v248
      %v563 = vunpack.c.l.b16 %v249
      %v564 = vunpack.c.h.b16 %v249
      %v565 = vunpack.c.l.b16 %v250
      %v566 = vunpack.c.l.b16 %v251
      %v567 = vunpack.c.h.b16 %v251
      %v568 = vunpack.c.l.b16 %v252
      %v569 = vunpack.c.l.b16 %v253
      %v570 = vunpack.c.h.b16 %v253
      %v571 = vunpack.c.l.b16 %v254
      %v572 = vunpack.c.l.b16 %v255
      %v573 = vunpack.c.h.b16 %v255
      %v574 = vunpack.c.l.b16 %v256
      %v575 = vunpack.c.l.b16 %v257
      %v576 = vunpack.c.h.b16 %v257
      %v577 = vunpack.c.l.b16 %v258
      %v578 = vunpack.c.l.b16 %v259
      %v579 = vunpack.c.h.b16 %v259
      %v580 = vunpack.c.l.b16 %v260
      %v581 = vunpack.c.l.b16 %v261
      %v582 = vunpack.c.h.b16 %v261
      %v583 = vunpack.c.l.b16 %v262
      %v584 = vunpack.c.l.b16 %v263
      %v585 = vunpack.c.h.b16 %v263
      %v586 = vunpack.c.l.b16 %v264
      %v587 = vunpack.c.l.b16 %v265
      %v588 = vunpack.c.h.b16 %v265
      %v589 = vunpack.c.l.b16 %v266
      %v590 = vunpack.c.l.b16 %v267
      %v591 = vunpack.c.h.b16 %v267
      %v592 = vunpack.c.l.b16 %v268
      %v593 = vunpack.c.l.b16 %v269
      %v594 = vunpack.c.h.b16 %v269
      %v595 = vunpack.c.l.b16 %v270
      %v596 = vunpack.c.l.b16 %v271
      %v597 = vunpack.c.h.b16 %v271
      %v598 = vunpack.c.l.b16 %v272
      %v599 = vunpack.c.l.b16 %v273
      %v600 = vunpack.c.h.b16 %v273
      %v601 = vunpack.c.l.b16 %v274
      %v602 = vunpack.c.l.b16 %v275
      %v603 = vunpack.c.h.b16 %v275
      %v604 = vunpack.c.l.b16 %v276
      %v605 = vunpack.c.l.b16 %v277
      %v606 = vunpack.c.h.b16 %v277
      %v607 = vunpack.c.l.b16 %v278
      %v608 = vunpack.c.l.b16 %v279
      %v609 = vunpack.c.h.b16 %v279
      %v610 = vunpack.c.l.b16 %v280
      %v611 = vunpack.c.l.b16 %v281
      %v612 = vunpack.c.h.b16 %v281
      %v613 = vunpack.c.l.b16 %v282
      %v614 = vunpack.c.l.b16 %v283
      %v615 = vunpack.c.h.b16 %v283
      %v616 = vunpack.c.l.b16 %v284
      %v617 = vunpack.c.l.b16 %v285
      %v618 = vunpack.c.h.b16 %v285
      %v619 = vunpack.c.l.b16 %v286
      %v620 = vunpack.c.l.b16 %v287
      %v621 = vunpack.c.h.b16 %v287
      %v622 = vunpack.c.l.b16 %v288
      %v623 = vunpack.c.l.b16 %v289
      %v624 = vunpack.c.h.b16 %v289
      %v625 = vunpack.c.l.b16 %v290
      %v626 = vunpack.c.l.b16 %v291
      %v627 = vunpack.c.h.b16 %v291
      %v628 = vunpack.c.l.b16 %v292
      %v629 = vunpack.c.l.b16 %v293
      %v630 = vunpack.c.h.b16 %v293
      %v631 = vunpack.c.l.b16 %v294
      %v632 = vunpack.c.l.b16 %v295
      %v633 = vunpack.c.h.b16 %v295
      %v634 = vunpack.c.l.b16 %v296
      %v635 = vunpack.c.l.b16 %v297
      %v636 = vunpack.c.h.b16 %v297
      %v637 = vunpack.c.l.b16 %v298
      %v638 = vunpack.c.l.b16 %v299
      %v639 = vunpack.c.h.b16 %v299
      %v640 = vunpack.c.l.b16 %v300
      %v641 = vunpack.c.l.b16 %v301
      %v642 = vunpack.c.h.b16 %v301
      %v643 = vunpack.c.l.b16 %v302
      %v644 = vunpack.c.l.b16 %v303
      %v645 = vunpack.c.h.b16 %v303
      %v646 = vunpack.c.l.b16 %v304
      %v647 = vunpack.c.l.b16 %v305
      %v648 = vunpack.c.h.b16 %v305
      %v649 = vunpack.c.l.b16 %v306
      %v650 = vunpack.c.l.b16 %v307
      %v651 = vunpack.c.h.b16 %v307
      %v652 = vunpack.c.l.b16 %v308
      %v653 = vunpack.c.l.b16 %v309
      %v654 = vunpack.c.h.b16 %v309
      %v655 = vunpack.c.l.b16 %v310
      %v656 = vunpack.c.l.b16 %v311
      %v657 = vunpack.c.h.b16 %v311
      %v658 = vunpack.c.l.b16 %v312
      %v659 = vunpack.c.l.b16 %v313
      %v660 = vunpack.c.h.b16 %v313
      %v661 = vunpack.c.l.b16 %v314
      %v662 = vunpack.c.l.b16 %v315
      %v663 = vunpack.c.h.b16 %v315
      %v664 = vunpack.c.l.b16 %v316
      %v665 = vunpack.c.l.b16 %v317
      %v666 = vunpack.c.h.b16 %v317
      %v667 = vunpack.c.l.b16 %v318
      %v668 = vunpack.c.l.b16 %v319
      %v669 = vunpack.c.h.b16 %v319
      %v670 = vunpack.c.l.b16 %v320
      %v671 = vunpack.c.l.b16 %v321
      %v672 = vunpack.c.h.b16 %v321
      %v673 = vunpack.c.l.b16 %v322
      %v674 = vunpack.c.l.b16 %v323
      %v675 = vunpack.c.h.b16 %v323
      %v676 = vunpack.c.l.b16 %v324
      %v677 = vunpack.c.l.b16 %v325
      %v678 = vunpack.c.h.b16 %v325
      %v679 = vunpack.c.l.b16 %v326
      %v680 = vunpack.c.l.b16 %v327
      %v681 = vunpack.c.h.b16 %v327
      %v682 = vunpack.c.l.b16 %v328
      %v683 = vunpack.c.l.b16 %v329
      %v684 = vunpack.c.h.b16 %v329
      %v685 = vunpack.c.l.b16 %v330
      %v686 = vunpack.c.l.b16 %v331
      %v687 = vunpack.c.h.b16 %v331
      %v688 = vunpack.c.l.b16 %v332
      %v689 = vpack.c.b16 %v500, %v497
      %v690 = vpack.c.b16 %v501, %v498
      %v691 = vpack.c.b16 %v502, %v499
      %v692 = vpack.c.b16 %v506, %v503
      %v693 = vpack.c.b16 %v507, %v504
      %v694 = vpack.c.b16 %v508, %v505
      %v695 = vpack.c.b16 %v512, %v509
      %v696 = vpack.c.b16 %v513, %v510
      %v697 = vpack.c.b16 %v514, %v511
      %v698 = vpack.c.b16 %v518, %v515
      %v699 = vpack.c.b16 %v519, %v516
      %v700 = vpack.c.b16 %v520, %v517
      %v701 = vpack.c.b16 %v524, %v521
      %v702 = vpack.c.b16 %v525, %v522
      %v703 = vpack.c.b16 %v526, %v523
      %v704 = vpack.c.b16 %v530, %v527
      %v705 = vpack.c.b16 %v531, %v528
      %v706 = vpack.c.b16 %v532, %v529
      %v707 = vpack.c.b16 %v536, %v533
      %v708 = vpack.c.b16 %v537, %v534
      %v709 = vpack.c.b16 %v538, %v535
      %v710 = vpack.c.b16 %v542, %v539
      %v711 = vpack.c.b16 %v543, %v540
      %v712 = vpack.c.b16 %v544, %v541
      %v713 = vpack.c.b16 %v548, %v545
      %v714 = vpack.c.b16 %v549, %v546
      %v715 = vpack.c.b16 %v550, %v547
      %v716 = vpack.c.b16 %v554, %v551
      %v717 = vpack.c.b16 %v555, %v552
      %v718 = vpack.c.b16 %v556, %v553
      %v719 = vpack.c.b16 %v560, %v557
      %v720 = vpack.c.b16 %v561, %v558
      %v721 = vpack.c.b16 %v562, %v559
      %v722 = vpack.c.b16 %v566, %v563
      %v723 = vpack.c.b16 %v567, %v564
      %v724 = vpack.c.b16 %v568, %v565
      %v725 = vpack.c.b16 %v572, %v569
      %v726 = vpack.c.b16 %v573, %v570
      %v727 = vpack.c.b16 %v574, %v571
      %v728 = vpack.c.b16 %v578, %v575
      %v729 = vpack.c.b16 %v579, %v576
      %v730 = vpack.c.b16 %v580, %v577
      %v731 = vpack.c.b16 %v584, %v581
      %v732 = vpack.c.b16 %v585, %v582
      %v733 = vpack.c.b16 %v586, %v583
      %v734 = vpack.c.b16 %v590, %v587
      %v735 = vpack.c.b16 %v591, %v588
      %v736 = vpack.c.b16 %v592, %v589
      %v737 = vpack.c.b16 %v596, %v593
      %v738 = vpack.c.b16 %v597, %v594
      %v739 = vpack.c.b16 %v598, %v595
      %v740 = vpack.c.b16 %v602, %v599
      %v741 = vpack.c.b16 %v603, %v600
      %v742 = vpack.c.b16 %v604, %v601
      %v743 = vpack.c.b16 %v608, %v605
      %v744 = vpack.c.b16 %v609, %v606
      %v745 = vpack.c.b16 %v610, %v607
      %v746 = vpack.c.b16 %v614, %v611
      %v747 = vpack.c.b16 %v615, %v612
      %v748 = vpack.c.b16 %v616, %v613
      %v749 = vpack.c.b16 %v620, %v617
      %v750 = vpack.c.b16 %v621, %v618
      %v751 = vpack.c.b16 %v622, %v619
      %v752 = vpack.c.b16 %v626, %v623
      %v753 = vpack.c.b16 %v627, %v624
      %v754 = vpack.c.b16 %v628, %v625
      %v755 = vpack.c.b16 %v632, %v629
      %v756 = vpack.c.b16 %v633, %v630
      %v757 = vpack.c.b16 %v634, %v631
      %v758 = vpack.c.b16 %v638, %v635
      %v759 = vpack.c.b16 %v639, %v636
      %v760 = vpack.c.b16 %v640, %v637
      %v761 = vpack.c.b16 %v644, %v641
      %v762 = vpack.c.b16 %v645, %v642
      %v763 = vpack.c.b16 %v646, %v643
      %v764 = vpack.c.b16 %v650, %v647
      %v765 = vpack.c.b16 %v651, %v648
      %v766 = vpack.c.b16 %v652, %v649
      %v767 = vpack.c.b16 %v656, %v653
      %v768 = vpack.c.b16 %v657, %v654
      %v769 = vpack.c.b16 %v658, %v655
      %v770 = vpack.c.b16 %v662, %v659
      %v771 = vpack.c.b16 %v663, %v660
      %v772 = vpack.c.b16 %v664, %v661
      %v773 = vpack.c.b16 %v668, %v665
      %v774 = vpack.c.b16 %v669, %v666
      %v775 = vpack.c.b16 %v670, %v667
      %v776 = vpack.c.b16 %v674, %v671
      %v777 = vpack.c.b16 %v675, %v672
      %v778 = vpack.c.b16 %v676, %v673
      %v779 = vpack.c.b16 %v680, %v677
      %v780 = vpack.c.b16 %v681, %v678
      %v781 = vpack.c.b16 %v682, %v679
      %v782 = vpack.c.b16 %v686, %v683
      %v783 = vpack.c.b16 %v687, %v684
      %v784 = vpack.c.b16 %v688, %v685
      %v885 = vunpack.c.l.b16 %v333
      %v886 = vunpack.c.l.b16 %v334
      %v887 = vunpack.c.l.b16 %v335
      %v888 = vunpack.c.l.b16 %v336
      %v889 = vunpack.c.l.b16 %v337
      %v890 = vunpack.c.l.b16 %v338
      %v891 = vunpack.c.l.b16 %v339
      %v892 = vunpack.c.l.b16 %v340
      %v893 = vunpack.c.l.b16 %v341
      %v894 = vunpack.c.l.b16 %v342
      %v895 = vunpack.c.l.b16 %v343
      %v896 = vunpack.c.l.b16 %v344
      %v897 = vunpack.c.l.b16 %v345
      %v898 = vunpack.c.l.b16 %v346
      %v899 = vunpack.c.l.b16 %v347
      %v900 = vunpack.c.l.b16 %v348
      %v901 = vunpack.c.l.b16 %v349
      %v902 = vunpack.c.l.b16 %v350
      %v903 = vunpack.c.l.b16 %v351
      %v904 = vunpack.c.l.b16 %v352
      %v905 = vunpack.c.l.b16 %v353
      %v906 = vunpack.c.l.b16 %v354
      %v907 = vunpack.c.l.b16 %v355
      %v908 = vunpack.c.l.b16 %v356
      %v909 = vunpack.c.l.b16 %v357
      %v910 = vunpack.c.l.b16 %v358
      %v911 = vunpack.c.l.b16 %v359
      %v912 = vunpack.c.l.b16 %v360
      %v913 = vunpack.c.l.b16 %v361
      %v914 = vunpack.c.l.b16 %v362
      %v915 = vunpack.c.l.b16 %v363
      %v916 = vunpack.c.l.b16 %v364
      %v917 = vunpack.c.l.b16 %v365
      %v918 = vunpack.c.l.b16 %v366
      %v919 = vunpack.c.l.b16 %v367
      %v920 = vunpack.c.l.b16 %v368
      %v921 = vpack.c.b16 %v886, %v885
      %v922 = vpack.c.b16 %v888, %v887
      %v923 = vpack.c.b16 %v890, %v889
      %v924 = vpack.c.b16 %v892, %v891
      %v925 = vpack.c.b16 %v894, %v893
      %v926 = vpack.c.b16 %v896, %v895
      %v927 = vpack.c.b16 %v898, %v897
      %v928 = vpack.c.b16 %v900, %v899
      %v929 = vpack.c.b16 %v902, %v901
      %v930 = vpack.c.b16 %v904, %v903
      %v931 = vpack.c.b16 %v906, %v905
      %v932 = vpack.c.b16 %v908, %v907
      %v933 = vpack.c.b16 %v910, %v909
      %v934 = vpack.c.b16 %v912, %v911
      %v935 = vpack.c.b16 %v914, %v913
      %v936 = vpack.c.b16 %v916, %v915
      %v937 = vpack.c.b16 %v918, %v917
      %v938 = vpack.c.b16 %v920, %v919
      %vm957 = vcmask 261120
      %v959 = vsel %vm957, %v691, 0
      %v962 = vsel %vm957, %v694, 0
      %v965 = vsel %vm957, %v697, 0
      %v968 = vsel %vm957, %v700, 0
      %v971 = vsel %vm957, %v703, 0
      %v974 = vsel %vm957, %v706, 0
      %v977 = vsel %vm957, %v709, 0
      %v980 = vsel %vm957, %v712, 0
      %v983 = vsel %vm957, %v715, 0
      %v986 = vsel %vm957, %v718, 0
      %v989 = vsel %vm957, %v721, 0
      %v992 = vsel %vm957, %v724, 0
      %v995 = vsel %vm957, %v727, 0
      %v998 = vsel %vm957, %v730, 0
      %v1001 = vsel %vm957, %v733, 0
      %v1004 = vsel %vm957, %v736, 0
      %v1007 = vsel %vm957, %v739, 0
      %v1010 = vsel %vm957, %v742, 0
      %v1013 = vsel %vm957, %v745, 0
      %v1016 = vsel %vm957, %v748, 0
      %v1019 = vsel %vm957, %v751, 0
      %v1022 = vsel %vm957, %v754, 0
      %v1025 = vsel %vm957, %v757, 0
      %v1028 = vsel %vm957, %v760, 0
      %v1031 = vsel %vm957, %v763, 0
      %v1034 = vsel %vm957, %v766, 0
      %v1037 = vsel %vm957, %v769, 0
      %v1040 = vsel %vm957, %v772, 0
      %v1043 = vsel %vm957, %v775, 0
      %v1046 = vsel %vm957, %v778, 0
      %v1049 = vsel %vm957, %v781, 0
      %v1052 = vsel %vm957, %v784, 0
      %1054 = vmatprep.subr.bf16.mxu0 0
      %1055 = vmatpush1.bf16.msra.mxu0 %v921
      %1056 = vmatprep.subr.bf16.mxu0 0
      %1057 = vmatpush1.bf16.msra.mxu0 %v922
      %1058 = vmatprep.subr.bf16.mxu0 0
      %1059 = vmatpush1.bf16.msra.mxu0 %v923
      %1060 = vmatprep.subr.bf16.mxu0 0
      %1061 = vmatpush1.bf16.msra.mxu0 %v924
      %1062 = vmatprep.subr.bf16.mxu0 0
      %1063 = vmatpush1.bf16.msra.mxu0 %v925
      %1064 = vmatprep.subr.bf16.mxu0 0
      %1065 = vmatpush1.bf16.msra.mxu0 %v926
      %1066 = vmatprep.subr.bf16.mxu0 0
      %1067 = vmatpush1.bf16.msra.mxu0 %v927
      %1068 = vmatprep.subr.bf16.mxu0 0
      %1069 = vmatpush1.bf16.msra.mxu0 %v928
      %1070 = vmatprep.subr.bf16.mxu0 0
      %1071 = vmatpush1.bf16.msra.mxu0 %v929
      %1072 = vmatprep.subr.bf16.mxu0 0
      %1073 = vmatpush1.bf16.msra.mxu0 %v930
      %1074 = vmatprep.subr.bf16.mxu0 0
      %1075 = vmatpush1.bf16.msra.mxu0 %v931
      %1076 = vmatprep.subr.bf16.mxu0 0
      %1077 = vmatpush1.bf16.msra.mxu0 %v932
      %1078 = vmatprep.subr.bf16.mxu0 0
      %1079 = vmatpush1.bf16.msra.mxu0 %v933
      %1080 = vmatprep.subr.bf16.mxu0 0
      %1081 = vmatpush1.bf16.msra.mxu0 %v934
      %1082 = vmatprep.subr.bf16.mxu0 0
      %1083 = vmatpush1.bf16.msra.mxu0 %v935
      %1084 = vmatprep.subr.bf16.mxu0 0
      %1085 = vmatpush1.bf16.msra.mxu0 %v936
      %1086 = vmatprep.mubr.bf16.mxu0 %v690
      %1087 = vmatmul.mubr.bf16.gmra.mrb[0].mxu0 %v689
      %v1088 = vpop.f32.mrb[0].mxu0
      %v1089 = vadd.f32 0.0, %v1088
      %v1090 = vpop.f32.mrb[0].mxu0
      %v1091 = vpop.f32.mrb[0].mxu0
      %v1092 = vadd.f32 0.0, %v1091
      %v1093 = vpop.f32.mrb[0].mxu0
      %1094 = vmatprep.mubr.bf16.mxu0 %v693
      %1095 = vmatmul.mubr.bf16.gmra.mrb[0].mxu0 %v692
      %v1096 = vpop.f32.mrb[0].mxu0
      %v1097 = vadd.f32 0.0, %v1096
      %v1098 = vpop.f32.mrb[0].mxu0
      %v1099 = vpop.f32.mrb[0].mxu0
      %v1100 = vadd.f32 0.0, %v1099
      %v1101 = vpop.f32.mrb[0].mxu0
      %1102 = vmatprep.mubr.bf16.mxu0 %v696
      %1103 = vmatmul.mubr.bf16.gmra.mrb[0].mxu0 %v695
      %v1104 = vpop.f32.mrb[0].mxu0
      %v1105 = vadd.f32 0.0, %v1104
      %v1106 = vpop.f32.mrb[0].mxu0
      %v1107 = vpop.f32.mrb[0].mxu0
      %v1108 = vadd.f32 0.0, %v1107
      %v1109 = vpop.f32.mrb[0].mxu0
      %1110 = vmatprep.mubr.bf16.mxu0 %v699
      %1111 = vmatmul.mubr.bf16.gmra.mrb[0].mxu0 %v698
      %v1112 = vpop.f32.mrb[0].mxu0
      %v1113 = vadd.f32 0.0, %v1112
      %v1114 = vpop.f32.mrb[0].mxu0
      %v1115 = vpop.f32.mrb[0].mxu0
      %v1116 = vadd.f32 0.0, %v1115
      %v1117 = vpop.f32.mrb[0].mxu0
      %1118 = vmatprep.mubr.bf16.mxu0 %v702
      %1119 = vmatmul.mubr.bf16.gmra.mrb[0].mxu0 %v701
      %v1120 = vpop.f32.mrb[0].mxu0
      %v1121 = vadd.f32 0.0, %v1120
      %v1122 = vpop.f32.mrb[0].mxu0
      %v1123 = vpop.f32.mrb[0].mxu0
      %v1124 = vadd.f32 0.0, %v1123
      %v1125 = vpop.f32.mrb[0].mxu0
      %1126 = vmatprep.mubr.bf16.mxu0 %v705
      %1127 = vmatmul.mubr.bf16.gmra.mrb[0].mxu0 %v704
      %v1128 = vpop.f32.mrb[0].mxu0
      %v1129 = vadd.f32 0.0, %v1128
      %v1130 = vpop.f32.mrb[0].mxu0
      %v1131 = vpop.f32.mrb[0].mxu0
      %v1132 = vadd.f32 0.0, %v1131
      %v1133 = vpop.f32.mrb[0].mxu0
      %1134 = vmatprep.mubr.bf16.mxu0 %v708
      %1135 = vmatmul.mubr.bf16.gmra.mrb[0].mxu0 %v707
      %v1136 = vpop.f32.mrb[0].mxu0
      %v1137 = vadd.f32 0.0, %v1136
      %v1138 = vpop.f32.mrb[0].mxu0
      %v1139 = vpop.f32.mrb[0].mxu0
      %v1140 = vadd.f32 0.0, %v1139
      %v1141 = vpop.f32.mrb[0].mxu0
      %1142 = vmatprep.mubr.bf16.mxu0 %v711
      %1143 = vmatmul.mubr.bf16.gmra.mrb[0].mxu0 %v710
      %v1144 = vpop.f32.mrb[0].mxu0
      %v1145 = vadd.f32 0.0, %v1144
      %v1146 = vpop.f32.mrb[0].mxu0
      %v1147 = vpop.f32.mrb[0].mxu0
      %v1148 = vadd.f32 0.0, %v1147
      %v1149 = vpop.f32.mrb[0].mxu0
      %1150 = vmatprep.mubr.bf16.mxu0 %v714
      %1151 = vmatmul.mubr.bf16.gmra.mrb[0].mxu0 %v713
      %v1152 = vpop.f32.mrb[0].mxu0
      %v1153 = vadd.f32 0.0, %v1152
      %v1154 = vpop.f32.mrb[0].mxu0
      %v1155 = vpop.f32.mrb[0].mxu0
      %v1156 = vadd.f32 0.0, %v1155
      %v1157 = vpop.f32.mrb[0].mxu0
      %1158 = vmatprep.mubr.bf16.mxu0 %v717
      %1159 = vmatmul.mubr.bf16.gmra.mrb[0].mxu0 %v716
      %v1160 = vpop.f32.mrb[0].mxu0
      %v1161 = vadd.f32 0.0, %v1160
      %v1162 = vpop.f32.mrb[0].mxu0
      %v1163 = vpop.f32.mrb[0].mxu0
      %v1164 = vadd.f32 0.0, %v1163
      %v1165 = vpop.f32.mrb[0].mxu0
      %1166 = vmatprep.mubr.bf16.mxu0 %v720
      %1167 = vmatmul.mubr.bf16.gmra.mrb[0].mxu0 %v719
      %v1168 = vpop.f32.mrb[0].mxu0
      %v1169 = vadd.f32 0.0, %v1168
      %v1170 = vpop.f32.mrb[0].mxu0
      %v1171 = vpop.f32.mrb[0].mxu0
      %v1172 = vadd.f32 0.0, %v1171
      %v1173 = vpop.f32.mrb[0].mxu0
      %1174 = vmatprep.mubr.bf16.mxu0 %v723
      %1175 = vmatmul.mubr.bf16.gmra.mrb[0].mxu0 %v722
      %v1176 = vpop.f32.mrb[0].mxu0
      %v1177 = vadd.f32 0.0, %v1176
      %v1178 = vpop.f32.mrb[0].mxu0
      %v1179 = vpop.f32.mrb[0].mxu0
      %v1180 = vadd.f32 0.0, %v1179
      %v1181 = vpop.f32.mrb[0].mxu0
      %1182 = vmatprep.mubr.bf16.mxu0 %v726
      %1183 = vmatmul.mubr.bf16.gmra.mrb[0].mxu0 %v725
      %v1184 = vpop.f32.mrb[0].mxu0
      %v1185 = vadd.f32 0.0, %v1184
      %v1186 = vpop.f32.mrb[0].mxu0
      %v1187 = vpop.f32.mrb[0].mxu0
      %v1188 = vadd.f32 0.0, %v1187
      %v1189 = vpop.f32.mrb[0].mxu0
      %1190 = vmatprep.mubr.bf16.mxu0 %v729
      %1191 = vmatmul.mubr.bf16.gmra.mrb[0].mxu0 %v728
      %v1192 = vpop.f32.mrb[0].mxu0
      %v1193 = vadd.f32 0.0, %v1192
      %v1194 = vpop.f32.mrb[0].mxu0
      %v1195 = vpop.f32.mrb[0].mxu0
      %v1196 = vadd.f32 0.0, %v1195
      %v1197 = vpop.f32.mrb[0].mxu0
      %1198 = vmatprep.mubr.bf16.mxu0 %v732
      %1199 = vmatmul.mubr.bf16.gmra.mrb[0].mxu0 %v731
      %v1200 = vpop.f32.mrb[0].mxu0
      %v1201 = vadd.f32 0.0, %v1200
      %v1202 = vpop.f32.mrb[0].mxu0
      %v1203 = vpop.f32.mrb[0].mxu0
      %v1204 = vadd.f32 0.0, %v1203
      %v1205 = vpop.f32.mrb[0].mxu0
      %1206 = vmatprep.mubr.bf16.mxu0 %v735
      %1207 = vmatmul.mubr.bf16.gmra.mrb[0].mxu0 %v734
      %v1208 = vpop.f32.mrb[0].mxu0
      %v1209 = vadd.f32 0.0, %v1208
      %v1210 = vpop.f32.mrb[0].mxu0
      %v1211 = vpop.f32.mrb[0].mxu0
      %v1212 = vadd.f32 0.0, %v1211
      %v1213 = vpop.f32.mrb[0].mxu0
      %1214 = vmatprep.mubr.bf16.mxu0 %v738
      %1215 = vmatmul.mubr.bf16.gmra.mrb[0].mxu0 %v737
      %v1216 = vpop.f32.mrb[0].mxu0
      %v1217 = vadd.f32 0.0, %v1216
      %v1218 = vpop.f32.mrb[0].mxu0
      %v1219 = vpop.f32.mrb[0].mxu0
      %v1220 = vadd.f32 0.0, %v1219
      %v1221 = vpop.f32.mrb[0].mxu0
      %1222 = vmatprep.mubr.bf16.mxu0 %v741
      %1223 = vmatmul.mubr.bf16.gmra.mrb[0].mxu0 %v740
      %v1224 = vpop.f32.mrb[0].mxu0
      %v1225 = vadd.f32 0.0, %v1224
      %v1226 = vpop.f32.mrb[0].mxu0
      %v1227 = vpop.f32.mrb[0].mxu0
      %v1228 = vadd.f32 0.0, %v1227
      %v1229 = vpop.f32.mrb[0].mxu0
      %1230 = vmatprep.mubr.bf16.mxu0 %v744
      %1231 = vmatmul.mubr.bf16.gmra.mrb[0].mxu0 %v743
      %v1232 = vpop.f32.mrb[0].mxu0
      %v1233 = vadd.f32 0.0, %v1232
      %v1234 = vpop.f32.mrb[0].mxu0
      %v1235 = vpop.f32.mrb[0].mxu0
      %v1236 = vadd.f32 0.0, %v1235
      %v1237 = vpop.f32.mrb[0].mxu0
      %1238 = vmatprep.mubr.bf16.mxu0 %v747
      %1239 = vmatmul.mubr.bf16.gmra.mrb[0].mxu0 %v746
      %v1240 = vpop.f32.mrb[0].mxu0
      %v1241 = vadd.f32 0.0, %v1240
      %v1242 = vpop.f32.mrb[0].mxu0
      %v1243 = vpop.f32.mrb[0].mxu0
      %v1244 = vadd.f32 0.0, %v1243
      %v1245 = vpop.f32.mrb[0].mxu0
      %1246 = vmatprep.mubr.bf16.mxu0 %v750
      %1247 = vmatmul.mubr.bf16.gmra.mrb[0].mxu0 %v749
      %v1248 = vpop.f32.mrb[0].mxu0
      %v1249 = vadd.f32 0.0, %v1248
      %v1250 = vpop.f32.mrb[0].mxu0
      %v1251 = vpop.f32.mrb[0].mxu0
      %v1252 = vadd.f32 0.0, %v1251
      %v1253 = vpop.f32.mrb[0].mxu0
      %1254 = vmatprep.mubr.bf16.mxu0 %v753
      %1255 = vmatmul.mubr.bf16.gmra.mrb[0].mxu0 %v752
      %v1256 = vpop.f32.mrb[0].mxu0
      %v1257 = vadd.f32 0.0, %v1256
      %v1258 = vpop.f32.mrb[0].mxu0
      %v1259 = vpop.f32.mrb[0].mxu0
      %v1260 = vadd.f32 0.0, %v1259
      %v1261 = vpop.f32.mrb[0].mxu0
      %1262 = vmatprep.mubr.bf16.mxu0 %v756
      %1263 = vmatmul.mubr.bf16.gmra.mrb[0].mxu0 %v755
      %v1264 = vpop.f32.mrb[0].mxu0
      %v1265 = vadd.f32 0.0, %v1264
      %v1266 = vpop.f32.mrb[0].mxu0
      %v1267 = vpop.f32.mrb[0].mxu0
      %v1268 = vadd.f32 0.0, %v1267
      %v1269 = vpop.f32.mrb[0].mxu0
      %1270 = vmatprep.mubr.bf16.mxu0 %v759
      %1271 = vmatmul.mubr.bf16.gmra.mrb[0].mxu0 %v758
      %v1272 = vpop.f32.mrb[0].mxu0
      %v1273 = vadd.f32 0.0, %v1272
      %v1274 = vpop.f32.mrb[0].mxu0
      %v1275 = vpop.f32.mrb[0].mxu0
      %v1276 = vadd.f32 0.0, %v1275
      %v1277 = vpop.f32.mrb[0].mxu0
      %1278 = vmatprep.mubr.bf16.mxu0 %v762
      %1279 = vmatmul.mubr.bf16.gmra.mrb[0].mxu0 %v761
      %v1280 = vpop.f32.mrb[0].mxu0
      %v1281 = vadd.f32 0.0, %v1280
      %v1282 = vpop.f32.mrb[0].mxu0
      %v1283 = vpop.f32.mrb[0].mxu0
      %v1284 = vadd.f32 0.0, %v1283
      %v1285 = vpop.f32.mrb[0].mxu0
      %1286 = vmatprep.mubr.bf16.mxu0 %v765
      %1287 = vmatmul.mubr.bf16.gmra.mrb[0].mxu0 %v764
      %v1288 = vpop.f32.mrb[0].mxu0
      %v1289 = vadd.f32 0.0, %v1288
      %v1290 = vpop.f32.mrb[0].mxu0
      %v1291 = vpop.f32.mrb[0].mxu0
      %v1292 = vadd.f32 0.0, %v1291
      %v1293 = vpop.f32.mrb[0].mxu0
      %1294 = vmatprep.mubr.bf16.mxu0 %v768
      %1295 = vmatmul.mubr.bf16.gmra.mrb[0].mxu0 %v767
      %v1296 = vpop.f32.mrb[0].mxu0
      %v1297 = vadd.f32 0.0, %v1296
      %v1298 = vpop.f32.mrb[0].mxu0
      %v1299 = vpop.f32.mrb[0].mxu0
      %v1300 = vadd.f32 0.0, %v1299
      %v1301 = vpop.f32.mrb[0].mxu0
      %1302 = vmatprep.mubr.bf16.mxu0 %v771
      %1303 = vmatmul.mubr.bf16.gmra.mrb[0].mxu0 %v770
      %v1304 = vpop.f32.mrb[0].mxu0
      %v1305 = vadd.f32 0.0, %v1304
      %v1306 = vpop.f32.mrb[0].mxu0
      %v1307 = vpop.f32.mrb[0].mxu0
      %v1308 = vadd.f32 0.0, %v1307
      %v1309 = vpop.f32.mrb[0].mxu0
      %1310 = vmatprep.mubr.bf16.mxu0 %v774
      %1311 = vmatmul.mubr.bf16.gmra.mrb[0].mxu0 %v773
      %v1312 = vpop.f32.mrb[0].mxu0
      %v1313 = vadd.f32 0.0, %v1312
      %v1314 = vpop.f32.mrb[0].mxu0
      %v1315 = vpop.f32.mrb[0].mxu0
      %v1316 = vadd.f32 0.0, %v1315
      %v1317 = vpop.f32.mrb[0].mxu0
      %1318 = vmatprep.mubr.bf16.mxu0 %v777
      %1319 = vmatmul.mubr.bf16.gmra.mrb[0].mxu0 %v776
      %v1320 = vpop.f32.mrb[0].mxu0
      %v1321 = vadd.f32 0.0, %v1320
      %v1322 = vpop.f32.mrb[0].mxu0
      %v1323 = vpop.f32.mrb[0].mxu0
      %v1324 = vadd.f32 0.0, %v1323
      %v1325 = vpop.f32.mrb[0].mxu0
      %1326 = vmatprep.mubr.bf16.mxu0 %v780
      %1327 = vmatmul.mubr.bf16.gmra.mrb[0].mxu0 %v779
      %v1328 = vpop.f32.mrb[0].mxu0
      %v1329 = vadd.f32 0.0, %v1328
      %v1330 = vpop.f32.mrb[0].mxu0
      %v1331 = vpop.f32.mrb[0].mxu0
      %v1332 = vadd.f32 0.0, %v1331
      %v1333 = vpop.f32.mrb[0].mxu0
      %1334 = vmatprep.mubr.bf16.mxu0 %v783
      %1335 = vmatmul.mubr.bf16.gmra.mrb[0].mxu0 %v782
      %v1336 = vpop.f32.mrb[0].mxu0
      %v1337 = vadd.f32 0.0, %v1336
      %v1338 = vpop.f32.mrb[0].mxu0
      %v1339 = vpop.f32.mrb[0].mxu0
      %v1340 = vadd.f32 0.0, %v1339
      %v1341 = vpop.f32.mrb[0].mxu0
      %1342 = vdwg.mxu0
      %1343 = vmatprep.subr.bf16.mxu0 0
      %1344 = vmatpush1.bf16.msra.mxu0 %v937
      %1345 = vmatprep.subr.bf16.mxu0 0
      %1346 = vmatpush1.bf16.msra.mxu0 %v938
      %1347 = vmatprep.subr.bf16.mxu0 0
      %1348 = vmatpush1.bf16.msra.mxu0 0
      %1349 = vmatprep.subr.bf16.mxu0 0
      %1350 = vmatpush1.bf16.msra.mxu0 0
      %1351 = vmatprep.subr.bf16.mxu0 0
      %1352 = vmatpush1.bf16.msra.mxu0 0
      %1353 = vmatprep.subr.bf16.mxu0 0
      %1354 = vmatpush1.bf16.msra.mxu0 0
      %1355 = vmatprep.subr.bf16.mxu0 0
      %1356 = vmatpush1.bf16.msra.mxu0 0
      %1357 = vmatprep.subr.bf16.mxu0 0
      %1358 = vmatpush1.bf16.msra.mxu0 0
      %1359 = vmatprep.subr.bf16.mxu0 0
      %1360 = vmatpush1.bf16.msra.mxu0 0
      %1361 = vmatprep.subr.bf16.mxu0 0
      %1362 = vmatpush1.bf16.msra.mxu0 0
      %1363 = vmatprep.subr.bf16.mxu0 0
      %1364 = vmatpush1.bf16.msra.mxu0 0
      %1365 = vmatprep.subr.bf16.mxu0 0
      %1366 = vmatpush1.bf16.msra.mxu0 0
      %1367 = vmatprep.subr.bf16.mxu0 0
      %1368 = vmatpush1.bf16.msra.mxu0 0
      %1369 = vmatprep.subr.bf16.mxu0 0
      %1370 = vmatpush1.bf16.msra.mxu0 0
      %1371 = vmatprep.subr.bf16.mxu0 0
      %1372 = vmatpush1.bf16.msra.mxu0 0
      %1373 = vmatprep.subr.bf16.mxu0 0
      %1374 = vmatpush1.bf16.msra.mxu0 0
      %1375 = vmatprep.mubr.bf16.mxu0 0
      %1376 = vmatmul.mubr.bf16.gmra.mrb[0].mxu0 %v959
      %v1377 = vpop.f32.mrb[0].mxu0
      %v1378 = vadd.f32 %v1089, %v1377
      %v1379 = vpop.f32.mrb[0].mxu0
      %v1380 = vpop.f32.mrb[0].mxu0
      %v1381 = vadd.f32 %v1092, %v1380
      %v1382 = vpop.f32.mrb[0].mxu0
      %1383 = vmatprep.mubr.bf16.mxu0 0
      %1384 = vmatmul.mubr.bf16.gmra.mrb[0].mxu0 %v962
      %v1385 = vpop.f32.mrb[0].mxu0
      %v1386 = vadd.f32 %v1097, %v1385
      %v1387 = vpop.f32.mrb[0].mxu0
      %v1388 = vpop.f32.mrb[0].mxu0
      %v1389 = vadd.f32 %v1100, %v1388
      %v1390 = vpop.f32.mrb[0].mxu0
      %1391 = vmatprep.mubr.bf16.mxu0 0
      %1392 = vmatmul.mubr.bf16.gmra.mrb[0].mxu0 %v965
      %v1393 = vpop.f32.mrb[0].mxu0
      %v1394 = vadd.f32 %v1105, %v1393
      %v1395 = vpop.f32.mrb[0].mxu0
      %v1396 = vpop.f32.mrb[0].mxu0
      %v1397 = vadd.f32 %v1108, %v1396
      %v1398 = vpop.f32.mrb[0].mxu0
      %1399 = vmatprep.mubr.bf16.mxu0 0
      %1400 = vmatmul.mubr.bf16.gmra.mrb[0].mxu0 %v968
      %v1401 = vpop.f32.mrb[0].mxu0
      %v1402 = vadd.f32 %v1113, %v1401
      %v1403 = vpop.f32.mrb[0].mxu0
      %v1404 = vpop.f32.mrb[0].mxu0
      %v1405 = vadd.f32 %v1116, %v1404
      %v1406 = vpop.f32.mrb[0].mxu0
      %1407 = vmatprep.mubr.bf16.mxu0 0
      %1408 = vmatmul.mubr.bf16.gmra.mrb[0].mxu0 %v971
      %v1409 = vpop.f32.mrb[0].mxu0
      %v1410 = vadd.f32 %v1121, %v1409
      %v1411 = vpop.f32.mrb[0].mxu0
      %v1412 = vpop.f32.mrb[0].mxu0
      %v1413 = vadd.f32 %v1124, %v1412
      %v1414 = vpop.f32.mrb[0].mxu0
      %1415 = vmatprep.mubr.bf16.mxu0 0
      %1416 = vmatmul.mubr.bf16.gmra.mrb[0].mxu0 %v974
      %v1417 = vpop.f32.mrb[0].mxu0
      %v1418 = vadd.f32 %v1129, %v1417
      %v1419 = vpop.f32.mrb[0].mxu0
      %v1420 = vpop.f32.mrb[0].mxu0
      %v1421 = vadd.f32 %v1132, %v1420
      %v1422 = vpop.f32.mrb[0].mxu0
      %1423 = vmatprep.mubr.bf16.mxu0 0
      %1424 = vmatmul.mubr.bf16.gmra.mrb[0].mxu0 %v977
      %v1425 = vpop.f32.mrb[0].mxu0
      %v1426 = vadd.f32 %v1137, %v1425
      %v1427 = vpop.f32.mrb[0].mxu0
      %v1428 = vpop.f32.mrb[0].mxu0
      %v1429 = vadd.f32 %v1140, %v1428
      %v1430 = vpop.f32.mrb[0].mxu0
      %1431 = vmatprep.mubr.bf16.mxu0 0
      %1432 = vmatmul.mubr.bf16.gmra.mrb[0].mxu0 %v980
      %v1433 = vpop.f32.mrb[0].mxu0
      %v1434 = vadd.f32 %v1145, %v1433
      %v1435 = vpop.f32.mrb[0].mxu0
      %v1436 = vpop.f32.mrb[0].mxu0
      %v1437 = vadd.f32 %v1148, %v1436
      %v1438 = vpop.f32.mrb[0].mxu0
      %1439 = vmatprep.mubr.bf16.mxu0 0
      %1440 = vmatmul.mubr.bf16.gmra.mrb[0].mxu0 %v983
      %v1441 = vpop.f32.mrb[0].mxu0
      %v1442 = vadd.f32 %v1153, %v1441
      %v1443 = vpop.f32.mrb[0].mxu0
      %v1444 = vpop.f32.mrb[0].mxu0
      %v1445 = vadd.f32 %v1156, %v1444
      %v1446 = vpop.f32.mrb[0].mxu0
      %1447 = vmatprep.mubr.bf16.mxu0 0
      %1448 = vmatmul.mubr.bf16.gmra.mrb[0].mxu0 %v986
      %v1449 = vpop.f32.mrb[0].mxu0
      %v1450 = vadd.f32 %v1161, %v1449
      %v1451 = vpop.f32.mrb[0].mxu0
      %v1452 = vpop.f32.mrb[0].mxu0
      %v1453 = vadd.f32 %v1164, %v1452
      %v1454 = vpop.f32.mrb[0].mxu0
      %1455 = vmatprep.mubr.bf16.mxu0 0
      %1456 = vmatmul.mubr.bf16.gmra.mrb[0].mxu0 %v989
      %v1457 = vpop.f32.mrb[0].mxu0
      %v1458 = vadd.f32 %v1169, %v1457
      %v1459 = vpop.f32.mrb[0].mxu0
      %v1460 = vpop.f32.mrb[0].mxu0
      %v1461 = vadd.f32 %v1172, %v1460
      %v1462 = vpop.f32.mrb[0].mxu0
      %1463 = vmatprep.mubr.bf16.mxu0 0
      %1464 = vmatmul.mubr.bf16.gmra.mrb[0].mxu0 %v992
      %v1465 = vpop.f32.mrb[0].mxu0
      %v1466 = vadd.f32 %v1177, %v1465
      %v1467 = vpop.f32.mrb[0].mxu0
      %v1468 = vpop.f32.mrb[0].mxu0
      %v1469 = vadd.f32 %v1180, %v1468
      %v1470 = vpop.f32.mrb[0].mxu0
      %1471 = vmatprep.mubr.bf16.mxu0 0
      %1472 = vmatmul.mubr.bf16.gmra.mrb[0].mxu0 %v995
      %v1473 = vpop.f32.mrb[0].mxu0
      %v1474 = vadd.f32 %v1185, %v1473
      %v1475 = vpop.f32.mrb[0].mxu0
      %v1476 = vpop.f32.mrb[0].mxu0
      %v1477 = vadd.f32 %v1188, %v1476
      %v1478 = vpop.f32.mrb[0].mxu0
      %1479 = vmatprep.mubr.bf16.mxu0 0
      %1480 = vmatmul.mubr.bf16.gmra.mrb[0].mxu0 %v998
      %v1481 = vpop.f32.mrb[0].mxu0
      %v1482 = vadd.f32 %v1193, %v1481
      %v1483 = vpop.f32.mrb[0].mxu0
      %v1484 = vpop.f32.mrb[0].mxu0
      %v1485 = vadd.f32 %v1196, %v1484
      %v1486 = vpop.f32.mrb[0].mxu0
      %1487 = vmatprep.mubr.bf16.mxu0 0
      %1488 = vmatmul.mubr.bf16.gmra.mrb[0].mxu0 %v1001
      %v1489 = vpop.f32.mrb[0].mxu0
      %v1490 = vadd.f32 %v1201, %v1489
      %v1491 = vpop.f32.mrb[0].mxu0
      %v1492 = vpop.f32.mrb[0].mxu0
      %v1493 = vadd.f32 %v1204, %v1492
      %v1494 = vpop.f32.mrb[0].mxu0
      %1495 = vmatprep.mubr.bf16.mxu0 0
      %1496 = vmatmul.mubr.bf16.gmra.mrb[0].mxu0 %v1004
      %v1497 = vpop.f32.mrb[0].mxu0
      %v1498 = vadd.f32 %v1209, %v1497
      %v1499 = vpop.f32.mrb[0].mxu0
      %v1500 = vpop.f32.mrb[0].mxu0
      %v1501 = vadd.f32 %v1212, %v1500
      %v1502 = vpop.f32.mrb[0].mxu0
      %1503 = vmatprep.mubr.bf16.mxu0 0
      %1504 = vmatmul.mubr.bf16.gmra.mrb[0].mxu0 %v1007
      %v1505 = vpop.f32.mrb[0].mxu0
      %v1506 = vadd.f32 %v1217, %v1505
      %v1507 = vpop.f32.mrb[0].mxu0
      %v1508 = vpop.f32.mrb[0].mxu0
      %v1509 = vadd.f32 %v1220, %v1508
      %v1510 = vpop.f32.mrb[0].mxu0
      %1511 = vmatprep.mubr.bf16.mxu0 0
      %1512 = vmatmul.mubr.bf16.gmra.mrb[0].mxu0 %v1010
      %v1513 = vpop.f32.mrb[0].mxu0
      %v1514 = vadd.f32 %v1225, %v1513
      %v1515 = vpop.f32.mrb[0].mxu0
      %v1516 = vpop.f32.mrb[0].mxu0
      %v1517 = vadd.f32 %v1228, %v1516
      %v1518 = vpop.f32.mrb[0].mxu0
      %1519 = vmatprep.mubr.bf16.mxu0 0
      %1520 = vmatmul.mubr.bf16.gmra.mrb[0].mxu0 %v1013
      %v1521 = vpop.f32.mrb[0].mxu0
      %v1522 = vadd.f32 %v1233, %v1521
      %v1523 = vpop.f32.mrb[0].mxu0
      %v1524 = vpop.f32.mrb[0].mxu0
      %v1525 = vadd.f32 %v1236, %v1524
      %v1526 = vpop.f32.mrb[0].mxu0
      %1527 = vmatprep.mubr.bf16.mxu0 0
      %1528 = vmatmul.mubr.bf16.gmra.mrb[0].mxu0 %v1016
      %v1529 = vpop.f32.mrb[0].mxu0
      %v1530 = vadd.f32 %v1241, %v1529
      %v1531 = vpop.f32.mrb[0].mxu0
      %v1532 = vpop.f32.mrb[0].mxu0
      %v1533 = vadd.f32 %v1244, %v1532
      %v1534 = vpop.f32.mrb[0].mxu0
      %1535 = vmatprep.mubr.bf16.mxu0 0
      %1536 = vmatmul.mubr.bf16.gmra.mrb[0].mxu0 %v1019
      %v1537 = vpop.f32.mrb[0].mxu0
      %v1538 = vadd.f32 %v1249, %v1537
      %v1539 = vpop.f32.mrb[0].mxu0
      %v1540 = vpop.f32.mrb[0].mxu0
      %v1541 = vadd.f32 %v1252, %v1540
      %v1542 = vpop.f32.mrb[0].mxu0
      %1543 = vmatprep.mubr.bf16.mxu0 0
      %1544 = vmatmul.mubr.bf16.gmra.mrb[0].mxu0 %v1022
      %v1545 = vpop.f32.mrb[0].mxu0
      %v1546 = vadd.f32 %v1257, %v1545
      %v1547 = vpop.f32.mrb[0].mxu0
      %v1548 = vpop.f32.mrb[0].mxu0
      %v1549 = vadd.f32 %v1260, %v1548
      %v1550 = vpop.f32.mrb[0].mxu0
      %1551 = vmatprep.mubr.bf16.mxu0 0
      %1552 = vmatmul.mubr.bf16.gmra.mrb[0].mxu0 %v1025
      %v1553 = vpop.f32.mrb[0].mxu0
      %v1554 = vadd.f32 %v1265, %v1553
      %v1555 = vpop.f32.mrb[0].mxu0
      %v1556 = vpop.f32.mrb[0].mxu0
      %v1557 = vadd.f32 %v1268, %v1556
      %v1558 = vpop.f32.mrb[0].mxu0
      %1559 = vmatprep.mubr.bf16.mxu0 0
      %1560 = vmatmul.mubr.bf16.gmra.mrb[0].mxu0 %v1028
      %v1561 = vpop.f32.mrb[0].mxu0
      %v1562 = vadd.f32 %v1273, %v1561
      %v1563 = vpop.f32.mrb[0].mxu0
      %v1564 = vpop.f32.mrb[0].mxu0
      %v1565 = vadd.f32 %v1276, %v1564
      %v1566 = vpop.f32.mrb[0].mxu0
      %1567 = vmatprep.mubr.bf16.mxu0 0
      %1568 = vmatmul.mubr.bf16.gmra.mrb[0].mxu0 %v1031
      %v1569 = vpop.f32.mrb[0].mxu0
      %v1570 = vadd.f32 %v1281, %v1569
      %v1571 = vpop.f32.mrb[0].mxu0
      %v1572 = vpop.f32.mrb[0].mxu0
      %v1573 = vadd.f32 %v1284, %v1572
      %v1574 = vpop.f32.mrb[0].mxu0
      %1575 = vmatprep.mubr.bf16.mxu0 0
      %1576 = vmatmul.mubr.bf16.gmra.mrb[0].mxu0 %v1034
      %v1577 = vpop.f32.mrb[0].mxu0
      %v1578 = vadd.f32 %v1289, %v1577
      %v1579 = vpop.f32.mrb[0].mxu0
      %v1580 = vpop.f32.mrb[0].mxu0
      %v1581 = vadd.f32 %v1292, %v1580
      %v1582 = vpop.f32.mrb[0].mxu0
      %1583 = vmatprep.mubr.bf16.mxu0 0
      %1584 = vmatmul.mubr.bf16.gmra.mrb[0].mxu0 %v1037
      %v1585 = vpop.f32.mrb[0].mxu0
      %v1586 = vadd.f32 %v1297, %v1585
      %v1587 = vpop.f32.mrb[0].mxu0
      %v1588 = vpop.f32.mrb[0].mxu0
      %v1589 = vadd.f32 %v1300, %v1588
      %v1590 = vpop.f32.mrb[0].mxu0
      %1591 = vmatprep.mubr.bf16.mxu0 0
      %1592 = vmatmul.mubr.bf16.gmra.mrb[0].mxu0 %v1040
      %v1593 = vpop.f32.mrb[0].mxu0
      %v1594 = vadd.f32 %v1305, %v1593
      %v1595 = vpop.f32.mrb[0].mxu0
      %v1596 = vpop.f32.mrb[0].mxu0
      %v1597 = vadd.f32 %v1308, %v1596
      %v1598 = vpop.f32.mrb[0].mxu0
      %1599 = vmatprep.mubr.bf16.mxu0 0
      %1600 = vmatmul.mubr.bf16.gmra.mrb[0].mxu0 %v1043
      %v1601 = vpop.f32.mrb[0].mxu0
      %v1602 = vadd.f32 %v1313, %v1601
      %v1603 = vpop.f32.mrb[0].mxu0
      %v1604 = vpop.f32.mrb[0].mxu0
      %v1605 = vadd.f32 %v1316, %v1604
      %v1606 = vpop.f32.mrb[0].mxu0
      %1607 = vmatprep.mubr.bf16.mxu0 0
      %1608 = vmatmul.mubr.bf16.gmra.mrb[0].mxu0 %v1046
      %v1609 = vpop.f32.mrb[0].mxu0
      %v1610 = vadd.f32 %v1321, %v1609
      %v1611 = vpop.f32.mrb[0].mxu0
      %v1612 = vpop.f32.mrb[0].mxu0
      %v1613 = vadd.f32 %v1324, %v1612
      %v1614 = vpop.f32.mrb[0].mxu0
      %1615 = vmatprep.mubr.bf16.mxu0 0
      %1616 = vmatmul.mubr.bf16.gmra.mrb[0].mxu0 %v1049
      %v1617 = vpop.f32.mrb[0].mxu0
      %v1618 = vadd.f32 %v1329, %v1617
      %v1619 = vpop.f32.mrb[0].mxu0
      %v1620 = vpop.f32.mrb[0].mxu0
      %v1621 = vadd.f32 %v1332, %v1620
      %v1622 = vpop.f32.mrb[0].mxu0
      %1623 = vmatprep.mubr.bf16.mxu0 0
      %1624 = vmatmul.mubr.bf16.gmra.mrb[0].mxu0 %v1052
      %v1625 = vpop.f32.mrb[0].mxu0
      %v1626 = vadd.f32 %v1337, %v1625
      %v1627 = vpop.f32.mrb[0].mxu0
      %v1628 = vpop.f32.mrb[0].mxu0
      %v1629 = vadd.f32 %v1340, %v1628
      %v1630 = vpop.f32.mrb[0].mxu0
      %1631 = vdwg.mxu0
      %v1632 = vld [vmem:[%s2] sm:$0x1]
      %v1634 = vlaneseq
      %v1635 = vshrl.u32 %v1634, 7
      %v1636 = vsub.s32 0, %v1635
      %v1637 = vrot.slane %v1632, %v1636
      %v1639 = vmul.f32 %v1378, %v1637
      %v1640 = vmul.f32 %v1381, %v1637
      %v1641 = vmul.f32 %v1386, %v1637
      %v1642 = vmul.f32 %v1389, %v1637
      %v1643 = vmul.f32 %v1394, %v1637
      %v1644 = vmul.f32 %v1397, %v1637
      %v1645 = vmul.f32 %v1402, %v1637
      %v1646 = vmul.f32 %v1405, %v1637
      %v1647 = vmul.f32 %v1410, %v1637
      %v1648 = vmul.f32 %v1413, %v1637
      %v1649 = vmul.f32 %v1418, %v1637
      %v1650 = vmul.f32 %v1421, %v1637
      %v1651 = vmul.f32 %v1426, %v1637
      %v1652 = vmul.f32 %v1429, %v1637
      %v1653 = vmul.f32 %v1434, %v1637
      %v1654 = vmul.f32 %v1437, %v1637
      %v1655 = vmul.f32 %v1442, %v1637
      %v1656 = vmul.f32 %v1445, %v1637
      %v1657 = vmul.f32 %v1450, %v1637
      %v1658 = vmul.f32 %v1453, %v1637
      %v1659 = vmul.f32 %v1458, %v1637
      %v1660 = vmul.f32 %v1461, %v1637
      %v1661 = vmul.f32 %v1466, %v1637
      %v1662 = vmul.f32 %v1469, %v1637
      %v1663 = vmul.f32 %v1474, %v1637
      %v1664 = vmul.f32 %v1477, %v1637
      %v1665 = vmul.f32 %v1482, %v1637
      %v1666 = vmul.f32 %v1485, %v1637
      %v1667 = vmul.f32 %v1490, %v1637
      %v1668 = vmul.f32 %v1493, %v1637
      %v1669 = vmul.f32 %v1498, %v1637
      %v1670 = vmul.f32 %v1501, %v1637
      %v1671 = vmul.f32 %v1506, %v1637
      %v1672 = vmul.f32 %v1509, %v1637
      %v1673 = vmul.f32 %v1514, %v1637
      %v1674 = vmul.f32 %v1517, %v1637
      %v1675 = vmul.f32 %v1522, %v1637
      %v1676 = vmul.f32 %v1525, %v1637
      %v1677 = vmul.f32 %v1530, %v1637
      %v1678 = vmul.f32 %v1533, %v1637
      %v1679 = vmul.f32 %v1538, %v1637
      %v1680 = vmul.f32 %v1541, %v1637
      %v1681 = vmul.f32 %v1546, %v1637
      %v1682 = vmul.f32 %v1549, %v1637
      %v1683 = vmul.f32 %v1554, %v1637
      %v1684 = vmul.f32 %v1557, %v1637
      %v1685 = vmul.f32 %v1562, %v1637
      %v1686 = vmul.f32 %v1565, %v1637
      %v1687 = vmul.f32 %v1570, %v1637
      %v1688 = vmul.f32 %v1573, %v1637
      %v1689 = vmul.f32 %v1578, %v1637
      %v1690 = vmul.f32 %v1581, %v1637
      %v1691 = vmul.f32 %v1586, %v1637
      %v1692 = vmul.f32 %v1589, %v1637
      %v1693 = vmul.f32 %v1594, %v1637
      %v1694 = vmul.f32 %v1597, %v1637
      %v1695 = vmul.f32 %v1602, %v1637
      %v1696 = vmul.f32 %v1605, %v1637
      %v1697 = vmul.f32 %v1610, %v1637
      %v1698 = vmul.f32 %v1613, %v1637
      %v1699 = vmul.f32 %v1618, %v1637
      %v1700 = vmul.f32 %v1621, %v1637
      %v1701 = vmul.f32 %v1626, %v1637
      %v1702 = vmul.f32 %v1629, %v1637
      %v1703 = vld [vmem:[%s3] sm:$0x1]
      %v1705 = vlaneseq
      %v1706 = vshrl.u32 %v1705, 7
      %v1707 = vsub.s32 0, %v1706
      %v1708 = vrot.slane %v1703, %v1707
      %v1710 = vadd.f32 %v1639, %v1708
      %v1711 = vadd.f32 %v1640, %v1708
      %v1712 = vadd.f32 %v1641, %v1708
      %v1713 = vadd.f32 %v1642, %v1708
      %v1714 = vadd.f32 %v1643, %v1708
      %v1715 = vadd.f32 %v1644, %v1708
      %v1716 = vadd.f32 %v1645, %v1708
      %v1717 = vadd.f32 %v1646, %v1708
      %v1718 = vadd.f32 %v1647, %v1708
      %v1719 = vadd.f32 %v1648, %v1708
      %v1720 = vadd.f32 %v1649, %v1708
      %v1721 = vadd.f32 %v1650, %v1708
      %v1722 = vadd.f32 %v1651, %v1708
      %v1723 = vadd.f32 %v1652, %v1708
      %v1724 = vadd.f32 %v1653, %v1708
      %v1725 = vadd.f32 %v1654, %v1708
      %v1726 = vadd.f32 %v1655, %v1708
      %v1727 = vadd.f32 %v1656, %v1708
      %v1728 = vadd.f32 %v1657, %v1708
      %v1729 = vadd.f32 %v1658, %v1708
      %v1730 = vadd.f32 %v1659, %v1708
      %v1731 = vadd.f32 %v1660, %v1708
      %v1732 = vadd.f32 %v1661, %v1708
      %v1733 = vadd.f32 %v1662, %v1708
      %v1734 = vadd.f32 %v1663, %v1708
      %v1735 = vadd.f32 %v1664, %v1708
      %v1736 = vadd.f32 %v1665, %v1708
      %v1737 = vadd.f32 %v1666, %v1708
      %v1738 = vadd.f32 %v1667, %v1708
      %v1739 = vadd.f32 %v1668, %v1708
      %v1740 = vadd.f32 %v1669, %v1708
      %v1741 = vadd.f32 %v1670, %v1708
      %v1742 = vadd.f32 %v1671, %v1708
      %v1743 = vadd.f32 %v1672, %v1708
      %v1744 = vadd.f32 %v1673, %v1708
      %v1745 = vadd.f32 %v1674, %v1708
      %v1746 = vadd.f32 %v1675, %v1708
      %v1747 = vadd.f32 %v1676, %v1708
      %v1748 = vadd.f32 %v1677, %v1708
      %v1749 = vadd.f32 %v1678, %v1708
      %v1750 = vadd.f32 %v1679, %v1708
      %v1751 = vadd.f32 %v1680, %v1708
      %v1752 = vadd.f32 %v1681, %v1708
      %v1753 = vadd.f32 %v1682, %v1708
      %v1754 = vadd.f32 %v1683, %v1708
      %v1755 = vadd.f32 %v1684, %v1708
      %v1756 = vadd.f32 %v1685, %v1708
      %v1757 = vadd.f32 %v1686, %v1708
      %v1758 = vadd.f32 %v1687, %v1708
      %v1759 = vadd.f32 %v1688, %v1708
      %v1760 = vadd.f32 %v1689, %v1708
      %v1761 = vadd.f32 %v1690, %v1708
      %v1762 = vadd.f32 %v1691, %v1708
      %v1763 = vadd.f32 %v1692, %v1708
      %v1764 = vadd.f32 %v1693, %v1708
      %v1765 = vadd.f32 %v1694, %v1708
      %v1766 = vadd.f32 %v1695, %v1708
      %v1767 = vadd.f32 %v1696, %v1708
      %v1768 = vadd.f32 %v1697, %v1708
      %v1769 = vadd.f32 %v1698, %v1708
      %v1770 = vadd.f32 %v1699, %v1708
      %v1771 = vadd.f32 %v1700, %v1708
      %v1772 = vadd.f32 %v1701, %v1708
      %v1773 = vadd.f32 %v1702, %v1708
      %v1774 = vmax.f32 %v1710, 0.0
      %v1775 = vmax.f32 %v1711, 0.0
      %v1776 = vmax.f32 %v1712, 0.0
      %v1777 = vmax.f32 %v1713, 0.0
      %v1778 = vmax.f32 %v1714, 0.0
      %v1779 = vmax.f32 %v1715, 0.0
      %v1780 = vmax.f32 %v1716, 0.0
      %v1781 = vmax.f32 %v1717, 0.0
      %v1782 = vmax.f32 %v1718, 0.0
      %v1783 = vmax.f32 %v1719, 0.0
      %v1784 = vmax.f32 %v1720, 0.0
      %v1785 = vmax.f32 %v1721, 0.0
      %v1786 = vmax.f32 %v1722, 0.0
      %v1787 = vmax.f32 %v1723, 0.0
      %v1788 = vmax.f32 %v1724, 0.0
      %v1789 = vmax.f32 %v1725, 0.0
      %v1790 = vmax.f32 %v1726, 0.0
      %v1791 = vmax.f32 %v1727, 0.0
      %v1792 = vmax.f32 %v1728, 0.0
      %v1793 = vmax.f32 %v1729, 0.0
      %v1794 = vmax.f32 %v1730, 0.0
      %v1795 = vmax.f32 %v1731, 0.0
      %v1796 = vmax.f32 %v1732, 0.0
      %v1797 = vmax.f32 %v1733, 0.0
      %v1798 = vmax.f32 %v1734, 0.0
      %v1799 = vmax.f32 %v1735, 0.0
      %v1800 = vmax.f32 %v1736, 0.0
      %v1801 = vmax.f32 %v1737, 0.0
      %v1802 = vmax.f32 %v1738, 0.0
      %v1803 = vmax.f32 %v1739, 0.0
      %v1804 = vmax.f32 %v1740, 0.0
      %v1805 = vmax.f32 %v1741, 0.0
      %v1806 = vmax.f32 %v1742, 0.0
      %v1807 = vmax.f32 %v1743, 0.0
      %v1808 = vmax.f32 %v1744, 0.0
      %v1809 = vmax.f32 %v1745, 0.0
      %v1810 = vmax.f32 %v1746, 0.0
      %v1811 = vmax.f32 %v1747, 0.0
      %v1812 = vmax.f32 %v1748, 0.0
      %v1813 = vmax.f32 %v1749, 0.0
      %v1814 = vmax.f32 %v1750, 0.0
      %v1815 = vmax.f32 %v1751, 0.0
      %v1816 = vmax.f32 %v1752, 0.0
      %v1817 = vmax.f32 %v1753, 0.0
      %v1818 = vmax.f32 %v1754, 0.0
      %v1819 = vmax.f32 %v1755, 0.0
      %v1820 = vmax.f32 %v1756, 0.0
      %v1821 = vmax.f32 %v1757, 0.0
      %v1822 = vmax.f32 %v1758, 0.0
      %v1823 = vmax.f32 %v1759, 0.0
      %v1824 = vmax.f32 %v1760, 0.0
      %v1825 = vmax.f32 %v1761, 0.0
      %v1826 = vmax.f32 %v1762, 0.0
      %v1827 = vmax.f32 %v1763, 0.0
      %v1828 = vmax.f32 %v1764, 0.0
      %v1829 = vmax.f32 %v1765, 0.0
      %v1830 = vmax.f32 %v1766, 0.0
      %v1831 = vmax.f32 %v1767, 0.0
      %v1832 = vmax.f32 %v1768, 0.0
      %v1833 = vmax.f32 %v1769, 0.0
      %v1834 = vmax.f32 %v1770, 0.0
      %v1835 = vmax.f32 %v1771, 0.0
      %v1836 = vmax.f32 %v1772, 0.0
      %v1837 = vmax.f32 %v1773, 0.0
      %v1838 = vpack.c.bf16 %v1775, %v1774
      %v1839 = vpack.c.bf16 %v1777, %v1776
      %v1840 = vpack.c.bf16 %v1779, %v1778
      %v1841 = vpack.c.bf16 %v1781, %v1780
      %v1842 = vpack.c.bf16 %v1783, %v1782
      %v1843 = vpack.c.bf16 %v1785, %v1784
      %v1844 = vpack.c.bf16 %v1787, %v1786
      %v1845 = vpack.c.bf16 %v1789, %v1788
      %v1846 = vpack.c.bf16 %v1791, %v1790
      %v1847 = vpack.c.bf16 %v1793, %v1792
      %v1848 = vpack.c.bf16 %v1795, %v1794
      %v1849 = vpack.c.bf16 %v1797, %v1796
      %v1850 = vpack.c.bf16 %v1799, %v1798
      %v1851 = vpack.c.bf16 %v1801, %v1800
      %v1852 = vpack.c.bf16 %v1803, %v1802
      %v1853 = vpack.c.bf16 %v1805, %v1804
      %v1854 = vpack.c.bf16 %v1807, %v1806
      %v1855 = vpack.c.bf16 %v1809, %v1808
      %v1856 = vpack.c.bf16 %v1811, %v1810
      %v1857 = vpack.c.bf16 %v1813, %v1812
      %v1858 = vpack.c.bf16 %v1815, %v1814
      %v1859 = vpack.c.bf16 %v1817, %v1816
      %v1860 = vpack.c.bf16 %v1819, %v1818
      %v1861 = vpack.c.bf16 %v1821, %v1820
      %v1862 = vpack.c.bf16 %v1823, %v1822
      %v1863 = vpack.c.bf16 %v1825, %v1824
      %v1864 = vpack.c.bf16 %v1827, %v1826
      %v1865 = vpack.c.bf16 %v1829, %v1828
      %v1866 = vpack.c.bf16 %v1831, %v1830
      %v1867 = vpack.c.bf16 %v1833, %v1832
      %v1868 = vpack.c.bf16 %v1835, %v1834
      %v1869 = vpack.c.bf16 %v1837, %v1836
      %v1902 = vunpack.c.l.b16 %v1838
      %v1903 = vunpack.c.h.b16 %v1838
      %v1904 = vunpack.c.l.b16 %v1839
      %v1905 = vunpack.c.h.b16 %v1839
      %v1906 = vunpack.c.l.b16 %v1840
      %v1907 = vunpack.c.h.b16 %v1840
      %v1908 = vunpack.c.l.b16 %v1841
      %v1909 = vunpack.c.h.b16 %v1841
      %v1910 = vunpack.c.l.b16 %v1842
      %v1911 = vunpack.c.h.b16 %v1842
      %v1912 = vunpack.c.l.b16 %v1843
      %v1913 = vunpack.c.h.b16 %v1843
      %v1914 = vunpack.c.l.b16 %v1844
      %v1915 = vunpack.c.h.b16 %v1844
      %v1916 = vunpack.c.l.b16 %v1845
      %v1917 = vunpack.c.h.b16 %v1845
      %v1918 = vunpack.c.l.b16 %v1846
      %v1919 = vunpack.c.h.b16 %v1846
      %v1920 = vunpack.c.l.b16 %v1847
      %v1921 = vunpack.c.h.b16 %v1847
      %v1922 = vunpack.c.l.b16 %v1848
      %v1923 = vunpack.c.h.b16 %v1848
      %v1924 = vunpack.c.l.b16 %v1849
      %v1925 = vunpack.c.h.b16 %v1849
      %v1926 = vunpack.c.l.b16 %v1850
      %v1927 = vunpack.c.h.b16 %v1850
      %v1928 = vunpack.c.l.b16 %v1851
      %v1929 = vunpack.c.h.b16 %v1851
      %v1930 = vunpack.c.l.b16 %v1852
      %v1931 = vunpack.c.h.b16 %v1852
      %v1932 = vunpack.c.l.b16 %v1853
      %v1933 = vunpack.c.h.b16 %v1853
      %v1934 = vunpack.c.l.b16 %v1854
      %v1935 = vunpack.c.h.b16 %v1854
      %v1936 = vunpack.c.l.b16 %v1855
      %v1937 = vunpack.c.h.b16 %v1855
      %v1938 = vunpack.c.l.b16 %v1856
      %v1939 = vunpack.c.h.b16 %v1856
      %v1940 = vunpack.c.l.b16 %v1857
      %v1941 = vunpack.c.h.b16 %v1857
      %v1942 = vunpack.c.l.b16 %v1858
      %v1943 = vunpack.c.h.b16 %v1858
      %v1944 = vunpack.c.l.b16 %v1859
      %v1945 = vunpack.c.h.b16 %v1859
      %v1946 = vunpack.c.l.b16 %v1860
      %v1947 = vunpack.c.h.b16 %v1860
      %v1948 = vunpack.c.l.b16 %v1861
      %v1949 = vunpack.c.h.b16 %v1861
      %v1950 = vunpack.c.l.b16 %v1862
      %v1951 = vunpack.c.h.b16 %v1862
      %v1952 = vunpack.c.l.b16 %v1863
      %v1953 = vunpack.c.h.b16 %v1863
      %v1954 = vunpack.c.l.b16 %v1864
      %v1955 = vunpack.c.h.b16 %v1864
      %v1956 = vunpack.c.l.b16 %v1865
      %v1957 = vunpack.c.h.b16 %v1865
      %v1958 = vunpack.c.l.b16 %v1866
      %v1959 = vunpack.c.h.b16 %v1866
      %v1960 = vunpack.c.l.b16 %v1867
      %v1961 = vunpack.c.h.b16 %v1867
      %v1962 = vunpack.c.l.b16 %v1868
      %v1963 = vunpack.c.h.b16 %v1868
      %v1964 = vunpack.c.l.b16 %v1869
      %v1965 = vunpack.c.h.b16 %v1869
      %v1966 = vpack.c.b16 %v1902, %v1902
      %v1967 = vpack.c.b16 %v1903, %v1903
      %v1968 = vpack.c.b16 %v1904, %v1904
      %v1969 = vpack.c.b16 %v1905, %v1905
      %v1970 = vpack.c.b16 %v1906, %v1906
      %v1971 = vpack.c.b16 %v1907, %v1907
      %v1972 = vpack.c.b16 %v1908, %v1908
      %v1973 = vpack.c.b16 %v1909, %v1909
      %v1974 = vpack.c.b16 %v1910, %v1910
      %v1975 = vpack.c.b16 %v1911, %v1911
      %v1976 = vpack.c.b16 %v1912, %v1912
      %v1977 = vpack.c.b16 %v1913, %v1913
      %v1978 = vpack.c.b16 %v1914, %v1914
      %v1979 = vpack.c.b16 %v1915, %v1915
      %v1980 = vpack.c.b16 %v1916, %v1916
      %v1981 = vpack.c.b16 %v1917, %v1917
      %v1982 = vpack.c.b16 %v1918, %v1918
      %v1983 = vpack.c.b16 %v1919, %v1919
      %v1984 = vpack.c.b16 %v1920, %v1920
      %v1985 = vpack.c.b16 %v1921, %v1921
      %v1986 = vpack.c.b16 %v1922, %v1922
      %v1987 = vpack.c.b16 %v1923, %v1923
      %v1988 = vpack.c.b16 %v1924, %v1924
      %v1989 = vpack.c.b16 %v1925, %v1925
      %v1990 = vpack.c.b16 %v1926, %v1926
      %v1991 = vpack.c.b16 %v1927, %v1927
      %v1992 = vpack.c.b16 %v1928, %v1928
      %v1993 = vpack.c.b16 %v1929, %v1929
      %v1994 = vpack.c.b16 %v1930, %v1930
      %v1995 = vpack.c.b16 %v1931, %v1931
      %v1996 = vpack.c.b16 %v1932, %v1932
      %v1997 = vpack.c.b16 %v1933, %v1933
      %v1998 = vpack.c.b16 %v1934, %v1934
      %v1999 = vpack.c.b16 %v1935, %v1935
      %v2000 = vpack.c.b16 %v1936, %v1936
      %v2001 = vpack.c.b16 %v1937, %v1937
      %v2002 = vpack.c.b16 %v1938, %v1938
      %v2003 = vpack.c.b16 %v1939, %v1939
      %v2004 = vpack.c.b16 %v1940, %v1940
      %v2005 = vpack.c.b16 %v1941, %v1941
      %v2006 = vpack.c.b16 %v1942, %v1942
      %v2007 = vpack.c.b16 %v1943, %v1943
      %v2008 = vpack.c.b16 %v1944, %v1944
      %v2009 = vpack.c.b16 %v1945, %v1945
      %v2010 = vpack.c.b16 %v1946, %v1946
      %v2011 = vpack.c.b16 %v1947, %v1947
      %v2012 = vpack.c.b16 %v1948, %v1948
      %v2013 = vpack.c.b16 %v1949, %v1949
      %v2014 = vpack.c.b16 %v1950, %v1950
      %v2015 = vpack.c.b16 %v1951, %v1951
      %v2016 = vpack.c.b16 %v1952, %v1952
      %v2017 = vpack.c.b16 %v1953, %v1953
      %v2018 = vpack.c.b16 %v1954, %v1954
      %v2019 = vpack.c.b16 %v1955, %v1955
      %v2020 = vpack.c.b16 %v1956, %v1956
      %v2021 = vpack.c.b16 %v1957, %v1957
      %v2022 = vpack.c.b16 %v1958, %v1958
      %v2023 = vpack.c.b16 %v1959, %v1959
      %v2024 = vpack.c.b16 %v1960, %v1960
      %v2025 = vpack.c.b16 %v1961, %v1961
      %v2026 = vpack.c.b16 %v1962, %v1962
      %v2027 = vpack.c.b16 %v1963, %v1963
      %v2028 = vpack.c.b16 %v1964, %v1964
      %v2029 = vpack.c.b16 %v1965, %v1965
      %vm2094 = vcmask 257024
      %2095 = vst.msk [vmem:[%s202] sm:$0xf] %vm2094, %v1966
      %2096 = vst.msk [vmem:[%s202 + $0x4] sm:$0xf] %vm2094, %v1967
      %2097 = vst.msk [vmem:[%s202 + $0x8] sm:$0xf] %vm2094, %v1968
      %2098 = vst.msk [vmem:[%s202 + $0xc] sm:$0xf] %vm2094, %v1969
      %2099 = vst.msk [vmem:[%s202 + $0x10] sm:$0xf] %vm2094, %v1970
      %2100 = vst.msk [vmem:[%s202 + $0x14] sm:$0xf] %vm2094, %v1971
      %2101 = vst.msk [vmem:[%s202 + $0x18] sm:$0xf] %vm2094, %v1972
      %2102 = vst.msk [vmem:[%s202 + $0x1c] sm:$0xf] %vm2094, %v1973
      %2103 = vst.msk [vmem:[%s202 + $0x20] sm:$0xf] %vm2094, %v1974
      %2104 = vst.msk [vmem:[%s202 + $0x24] sm:$0xf] %vm2094, %v1975
      %2105 = vst.msk [vmem:[%s202 + $0x28] sm:$0xf] %vm2094, %v1976
      %2106 = vst.msk [vmem:[%s202 + $0x2c] sm:$0xf] %vm2094, %v1977
      %2107 = vst.msk [vmem:[%s202 + $0x30] sm:$0xf] %vm2094, %v1978
      %2108 = vst.msk [vmem:[%s202 + $0x34] sm:$0xf] %vm2094, %v1979
      %2109 = vst.msk [vmem:[%s202 + $0x38] sm:$0xf] %vm2094, %v1980
      %2110 = vst.msk [vmem:[%s202 + $0x3c] sm:$0xf] %vm2094, %v1981
      %2111 = vst.msk [vmem:[%s202 + $0x40] sm:$0xf] %vm2094, %v1982
      %2112 = vst.msk [vmem:[%s202 + $0x44] sm:$0xf] %vm2094, %v1983
      %2113 = vst.msk [vmem:[%s202 + $0x48] sm:$0xf] %vm2094, %v1984
      %2114 = vst.msk [vmem:[%s202 + $0x4c] sm:$0xf] %vm2094, %v1985
      %2115 = vst.msk [vmem:[%s202 + $0x50] sm:$0xf] %vm2094, %v1986
      %2116 = vst.msk [vmem:[%s202 + $0x54] sm:$0xf] %vm2094, %v1987
      %2117 = vst.msk [vmem:[%s202 + $0x58] sm:$0xf] %vm2094, %v1988
      %2118 = vst.msk [vmem:[%s202 + $0x5c] sm:$0xf] %vm2094, %v1989
      %2119 = vst.msk [vmem:[%s202 + $0x60] sm:$0xf] %vm2094, %v1990
      %2120 = vst.msk [vmem:[%s202 + $0x64] sm:$0xf] %vm2094, %v1991
      %2121 = vst.msk [vmem:[%s202 + $0x68] sm:$0xf] %vm2094, %v1992
      %2122 = vst.msk [vmem:[%s202 + $0x6c] sm:$0xf] %vm2094, %v1993
      %2123 = vst.msk [vmem:[%s202 + $0x70] sm:$0xf] %vm2094, %v1994
      %2124 = vst.msk [vmem:[%s202 + $0x74] sm:$0xf] %vm2094, %v1995
      %2125 = vst.msk [vmem:[%s202 + $0x78] sm:$0xf] %vm2094, %v1996
      %2126 = vst.msk [vmem:[%s202 + $0x7c] sm:$0xf] %vm2094, %v1997
      %2127 = vst.msk [vmem:[%s202 + $0x80] sm:$0xf] %vm2094, %v1998
      %2128 = vst.msk [vmem:[%s202 + $0x84] sm:$0xf] %vm2094, %v1999
      %2129 = vst.msk [vmem:[%s202 + $0x88] sm:$0xf] %vm2094, %v2000
      %2130 = vst.msk [vmem:[%s202 + $0x8c] sm:$0xf] %vm2094, %v2001
      %2131 = vst.msk [vmem:[%s202 + $0x90] sm:$0xf] %vm2094, %v2002
      %2132 = vst.msk [vmem:[%s202 + $0x94] sm:$0xf] %vm2094, %v2003
      %2133 = vst.msk [vmem:[%s202 + $0x98] sm:$0xf] %vm2094, %v2004
      %2134 = vst.msk [vmem:[%s202 + $0x9c] sm:$0xf] %vm2094, %v2005
      %2135 = vst.msk [vmem:[%s202 + $0xa0] sm:$0xf] %vm2094, %v2006
      %2136 = vst.msk [vmem:[%s202 + $0xa4] sm:$0xf] %vm2094, %v2007
      %2137 = vst.msk [vmem:[%s202 + $0xa8] sm:$0xf] %vm2094, %v2008
      %2138 = vst.msk [vmem:[%s202 + $0xac] sm:$0xf] %vm2094, %v2009
      %2139 = vst.msk [vmem:[%s202 + $0xb0] sm:$0xf] %vm2094, %v2010
      %2140 = vst.msk [vmem:[%s202 + $0xb4] sm:$0xf] %vm2094, %v2011
      %2141 = vst.msk [vmem:[%s202 + $0xb8] sm:$0xf] %vm2094, %v2012
      %2142 = vst.msk [vmem:[%s202 + $0xbc] sm:$0xf] %vm2094, %v2013
      %2143 = vst.msk [vmem:[%s202 + $0xc0] sm:$0xf] %vm2094, %v2014
      %2144 = vst.msk [vmem:[%s202 + $0xc4] sm:$0xf] %vm2094, %v2015
      %2145 = vst.msk [vmem:[%s202 + $0xc8] sm:$0xf] %vm2094, %v2016
      %2146 = vst.msk [vmem:[%s202 + $0xcc] sm:$0xf] %vm2094, %v2017
      %2147 = vst.msk [vmem:[%s202 + $0xd0] sm:$0xf] %vm2094, %v2018
      %2148 = vst.msk [vmem:[%s202 + $0xd4] sm:$0xf] %vm2094, %v2019
      %2149 = vst.msk [vmem:[%s202 + $0xd8] sm:$0xf] %vm2094, %v2020
      %2150 = vst.msk [vmem:[%s202 + $0xdc] sm:$0xf] %vm2094, %v2021
      %2151 = vst.msk [vmem:[%s202 + $0xe0] sm:$0xf] %vm2094, %v2022
      %2152 = vst.msk [vmem:[%s202 + $0xe4] sm:$0xf] %vm2094, %v2023
      %2153 = vst.msk [vmem:[%s202 + $0xe8] sm:$0xf] %vm2094, %v2024
      %2154 = vst.msk [vmem:[%s202 + $0xec] sm:$0xf] %vm2094, %v2025
      %2155 = vst.msk [vmem:[%s202 + $0xf0] sm:$0xf] %vm2094, %v2026
      %2156 = vst.msk [vmem:[%s202 + $0xf4] sm:$0xf] %vm2094, %v2027
      %2157 = vst.msk [vmem:[%s202 + $0xf8] sm:$0xf] %vm2094, %v2028
      %2158 = vst.msk [vmem:[%s202 + $0xfc] sm:$0xf] %vm2094, %v2029
      %s2159 = smul.u32 64, %s15
      %p2160 = scmp.lt.s32.totalorder %s2159, 1023
      %s2161 = scalar_select %p2160, %s2159, 1023
      %s2162 = smul.addr %s2161, 4
      %s2163 = scalar_lea.vmem %s4, %s2162
      // Predicated region
      $region37: #{segmentation_forward.17} parent=35 // pred_check
        %p2164 = pneg %p122
      $region38: #{segmentation_forward.17} parent=35 // pred_check_branch
        %2166 = sbr.rel (%p2164) target = $region40
      $region39: #{segmentation_forward.17} parent=35 // pred_region
        %s2167 = smul.u32 64, %s15
      $region40: #{segmentation_forward.17} parent=35 // pred_fallthru
        _
    $region36: #{segmentation_forward.17} parent=5 // pred_fallthru
      _
    %p2168 = scmp.le.s32.totalorder 2, %s10
    // Predicated region
    $region41: #{segmentation_forward.17} parent=5 // pred_check
      %p2169 = pneg %p2168
    $region42: #{segmentation_forward.17} parent=5 // pred_check_branch
      %2171 = sbr.rel (%p2169) target = $region44
    $region43: #{segmentation_forward.17} parent=5 // pred_region
      %s2172 = ssub.s32 %s10, 2
      // Predicated region
      $region45: #{segmentation_forward.17} parent=43 // pred_check
        %p2173 = pneg %p128
      $region46: #{segmentation_forward.17} parent=43 // pred_check_branch
        %2175 = sbr.rel (%p2173) target = $region48
      $region47: #{segmentation_forward.17} parent=43 // pred_region
        %s2176 = smul.u32 64, %s16
        %p2177 = scmp.lt.s32.totalorder %s2176, 1023
        %s2178 = scalar_select %p2177, %s2176, 1023
        %s2179 = smul.addr %s2178, 4
        %s2180 = scalar_lea.vmem %s4, %s2179
      $region48: #{segmentation_forward.17} parent=43 // pred_fallthru
        _
    $region44: #{segmentation_forward.17} parent=5 // pred_fallthru
      _
  $region6: #{segmentation_forward.17} parent=0 // loop_footer
    %s14 = sadd.s32 1, %s10
  $region7: #{segmentation_forward.17} parent=0 // loop_footer_branch
    %9 = sbr.rel target = $region3
  $region8: #{segmentation_forward.17} parent=0 // loop_exit
    _

</llo_original>
